<compile_context>
chip_gen: v7x
topology: tpu7x:2x2x1
jax: 0.10.0
libtpu: 0.0.40
codegen_flags: <defaults>
</compile_context>

<pallas_src>
import jax
import jax.numpy as jnp
from jax.experimental import pallas as pl
from jax.experimental.pallas import tpu as pltpu

EMBD_DIM = 32
CONTEXT_SIZE = 8
N_HEAD = 4
HEAD_DIM = EMBD_DIM // N_HEAD
HIDDEN_DIM = 4 * EMBD_DIM
LN_EPS = 1e-5


def _layernorm(x, gamma, beta):
    mu = jnp.mean(x, axis=-1, keepdims=True)
    var = jnp.mean((x - mu) ** 2, axis=-1, keepdims=True)
    return (x - mu) * jax.lax.rsqrt(var + LN_EPS) * gamma + beta


def block_kernel(x_ref, ln1_g_ref, ln1_b_ref, wqkv_ref, wp_ref, bp_ref,
                 ln2_g_ref, ln2_b_ref, w1_ref, b1_ref, w2_ref, b2_ref, out_ref):
    xb = x_ref[...]                              # (B_BLK, T, C)
    Bb, T, C = xb.shape
    x2d = xb.reshape(Bb * T, C)                  # fold batch into matmul M dim

    # ---- LayerNorm 1 ----
    h = _layernorm(x2d, ln1_g_ref[...], ln1_b_ref[...])

    # ---- fused QKV projection: one (rows, C) @ (C, 3C) matmul ----
    qkv = jnp.dot(h, wqkv_ref[...], preferred_element_type=jnp.float32)   # (rows, 3C)
    qkv3 = qkv.reshape(Bb, T, 3 * C)

    # ---- multi-head causal self-attention ----
    # NOTE: scale uses C = embd_dim (matches the PyTorch code, not head_dim).
    scale = C ** (-0.5)
    row = jax.lax.broadcasted_iota(jnp.int32, (T, T), 0)
    col = jax.lax.broadcasted_iota(jnp.int32, (T, T), 1)
    neg_mask = jnp.where(col <= row, 0.0, -jnp.inf).astype(jnp.float32)   # additive mask

    head_outs = []
    for hi in range(N_HEAD):                     # static unroll over heads (tiny)
        q = qkv3[:, :, hi * HEAD_DIM:(hi + 1) * HEAD_DIM]                  # (Bb, T, hd)
        k = qkv3[:, :, C + hi * HEAD_DIM:C + (hi + 1) * HEAD_DIM]
        v = qkv3[:, :, 2 * C + hi * HEAD_DIM:2 * C + (hi + 1) * HEAD_DIM]
        # batched over the Bb sequences in this block
        s = jnp.einsum('bqd,bkd->bqk', q, k,
                       preferred_element_type=jnp.float32) * scale        # (Bb, T, T)
        s = s + neg_mask[None, :, :]
        s = s - jnp.max(s, axis=-1, keepdims=True)
        p = jnp.exp(s)
        p = p * pl.reciprocal(jnp.sum(p, axis=-1, keepdims=True), approx=True)
        o = jnp.einsum('bqk,bkd->bqd', p, v,
                       preferred_element_type=jnp.float32)                # (Bb, T, hd)
        head_outs.append(o)

    # concat over heads, then a single output projection
    cat = jnp.concatenate(head_outs, axis=-1).reshape(Bb * T, C)          # (rows, C)
    attn = jnp.dot(cat, wp_ref[...], preferred_element_type=jnp.float32) + bp_ref[...]
    x1 = x2d + attn                              # residual 1

    # ---- LayerNorm 2 + FeedForward ----
    h2 = _layernorm(x1, ln2_g_ref[...], ln2_b_ref[...])
    ff = jnp.dot(h2, w1_ref[...], preferred_element_type=jnp.float32) + b1_ref[...]
    ff = jnp.maximum(ff, 0.0)
    ff = jnp.dot(ff, w2_ref[...], preferred_element_type=jnp.float32) + b2_ref[...]

    out_ref[...] = (x1 + ff).reshape(Bb, T, C)   # residual 2


def _full_spec(shape):
    # whole-array block, constant index across the batch grid
    return pl.BlockSpec(shape, lambda b: tuple(0 for _ in shape))


@jax.jit
def transformer_block(x, params):
    B, T, C = x.shape
    (ln1_g, ln1_b, wq, wk, wv, wp, bp, ln2_g, ln2_b, w1, b1, w2, b2) = params

    # wrapper-side weight fusion: per-head (C, hd) weights -> single (C, 3C) matrix
    # layout: [ Q(head0..headN) | K(head0..headN) | V(head0..headN) ]
    wq_f = jnp.transpose(wq, (1, 0, 2)).reshape(C, C)
    wk_f = jnp.transpose(wk, (1, 0, 2)).reshape(C, C)
    wv_f = jnp.transpose(wv, (1, 0, 2)).reshape(C, C)
    wqkv = jnp.concatenate([wq_f, wk_f, wv_f], axis=-1)        # (C, 3C)

    # fold as many sequences as possible into each grid step (amortize step overhead)
    B_BLK = min(B, 128)
    grid = (pl.cdiv(B, B_BLK),)

    in_specs = [
        pl.BlockSpec((B_BLK, T, C), lambda b: (b, 0, 0)),      # x
        _full_spec(ln1_g.shape), _full_spec(ln1_b.shape),
        _full_spec(wqkv.shape),
        _full_spec(wp.shape), _full_spec(bp.shape),
        _full_spec(ln2_g.shape), _full_spec(ln2_b.shape),
        _full_spec(w1.shape), _full_spec(b1.shape),
        _full_spec(w2.shape), _full_spec(b2.shape),
    ]

    return pl.pallas_call(
        block_kernel,
        out_shape=jax.ShapeDtypeStruct((B, T, C), jnp.float32),
        grid=grid,
        in_specs=in_specs,
        out_specs=pl.BlockSpec((B_BLK, T, C), lambda b: (b, 0, 0)),
        compiler_params=pltpu.CompilerParams(
            dimension_semantics=("parallel",)),
    )(x, ln1_g, ln1_b, wqkv, wp, bp, ln2_g, ln2_b, w1, b1, w2, b2)


def reference_block(x, params):
    (ln1_g, ln1_b, wq, wk, wv, wp, bp, ln2_g, ln2_b, w1, b1, w2, b2) = params
    B, T, C = x.shape

    def ln(v, g, b):
        mu = jnp.mean(v, axis=-1, keepdims=True)
        var = jnp.mean((v - mu) ** 2, axis=-1, keepdims=True)
        return (v - mu) * jax.lax.rsqrt(var + LN_EPS) * g + b

    h = ln(x, ln1_g, ln1_b)
    mask = jnp.tril(jnp.ones((T, T), bool))
    outs = []
    for i in range(N_HEAD):
        q = h @ wq[i]; k = h @ wk[i]; v = h @ wv[i]
        s = q @ jnp.swapaxes(k, -1, -2) * C ** (-0.5)
        s = jnp.where(mask, s, -jnp.inf)
        p = jax.nn.softmax(s, axis=-1)
        outs.append(p @ v)
    cat = jnp.concatenate(outs, axis=-1)
    x1 = x + cat @ wp + bp
    h2 = ln(x1, ln2_g, ln2_b)
    ff = jax.nn.relu(h2 @ w1 + b1) @ w2 + b2
    return x1 + ff


def init_params(key):
    ks = jax.random.split(key, 8)
    s = 0.02
    ln1_g = jnp.ones((1, EMBD_DIM), jnp.float32)
    ln1_b = jnp.zeros((1, EMBD_DIM), jnp.float32)
    wq = jax.random.normal(ks[0], (N_HEAD, EMBD_DIM, HEAD_DIM), jnp.float32) * s
    wk = jax.random.normal(ks[1], (N_HEAD, EMBD_DIM, HEAD_DIM), jnp.float32) * s
    wv = jax.random.normal(ks[2], (N_HEAD, EMBD_DIM, HEAD_DIM), jnp.float32) * s
    wp = jax.random.normal(ks[3], (EMBD_DIM, EMBD_DIM), jnp.float32) * s
    bp = jax.random.normal(ks[4], (1, EMBD_DIM), jnp.float32) * s
    ln2_g = jnp.ones((1, EMBD_DIM), jnp.float32)
    ln2_b = jnp.zeros((1, EMBD_DIM), jnp.float32)
    w1 = jax.random.normal(ks[5], (EMBD_DIM, HIDDEN_DIM), jnp.float32) * s
    b1 = jax.random.normal(ks[6], (1, HIDDEN_DIM), jnp.float32) * s
    w2 = jax.random.normal(ks[7], (HIDDEN_DIM, EMBD_DIM), jnp.float32) * s
    b2 = jnp.zeros((1, EMBD_DIM), jnp.float32)
    return (ln1_g, ln1_b, wq, wk, wv, wp, bp, ln2_g, ln2_b, w1, b1, w2, b2)


if __name__ == "__main__":
    key = jax.random.PRNGKey(0)
    kx, kp = jax.random.split(key)
    B, T, C = 8, CONTEXT_SIZE, EMBD_DIM
    x = jax.random.normal(kx, (B, T, C), jnp.float32)
    params = init_params(kp)

    out = transformer_block(x, params)
    out = jax.block_until_ready(out)

    ref = reference_block(x, params)
    assert out.shape == (B, T, C)
    assert jnp.allclose(out, ref, atol=2e-4, rtol=2e-4), "mismatch vs JAX reference"
    print("KERNEL_OK")
</pallas_src>

<mosaic_0001>
module attributes {stable_mosaic.version = 11 : i64} {
  func.func @block_kernel(%arg0: i32, %arg1: memref<8x8x32xf32, #tpu.memory_space<vmem>>, %arg2: memref<1x32xf32, #tpu.memory_space<vmem>>, %arg3: memref<1x32xf32, #tpu.memory_space<vmem>>, %arg4: memref<32x96xf32, #tpu.memory_space<vmem>>, %arg5: memref<32x32xf32, #tpu.memory_space<vmem>>, %arg6: memref<1x32xf32, #tpu.memory_space<vmem>>, %arg7: memref<1x32xf32, #tpu.memory_space<vmem>>, %arg8: memref<1x32xf32, #tpu.memory_space<vmem>>, %arg9: memref<32x128xf32, #tpu.memory_space<vmem>>, %arg10: memref<1x128xf32, #tpu.memory_space<vmem>>, %arg11: memref<128x32xf32, #tpu.memory_space<vmem>>, %arg12: memref<1x32xf32, #tpu.memory_space<vmem>>, %arg13: memref<8x8x32xf32, #tpu.memory_space<vmem>>) attributes {dimension_semantics = [#tpu.dimension_semantics<parallel>], iteration_bounds = array<i64: 1>, scalar_prefetch = 0 : i64, scratch_operands = 0 : i64, tpu.core_type = #tpu.core_type<tc>, window_params = [{transform_indices = @transform_0, window_bounds = array<i64: 8, 8, 32>}, {pipeline_mode = #tpu.pipeline_mode<synchronous>, transform_indices = @transform_1, window_bounds = array<i64: 1, 32>}, {pipeline_mode = #tpu.pipeline_mode<synchronous>, transform_indices = @transform_2, window_bounds = array<i64: 1, 32>}, {pipeline_mode = #tpu.pipeline_mode<synchronous>, transform_indices = @transform_3, window_bounds = array<i64: 32, 96>}, {pipeline_mode = #tpu.pipeline_mode<synchronous>, transform_indices = @transform_4, window_bounds = array<i64: 32, 32>}, {pipeline_mode = #tpu.pipeline_mode<synchronous>, transform_indices = @transform_5, window_bounds = array<i64: 1, 32>}, {pipeline_mode = #tpu.pipeline_mode<synchronous>, transform_indices = @transform_6, window_bounds = array<i64: 1, 32>}, {pipeline_mode = #tpu.pipeline_mode<synchronous>, transform_indices = @transform_7, window_bounds = array<i64: 1, 32>}, {pipeline_mode = #tpu.pipeline_mode<synchronous>, transform_indices = @transform_8, window_bounds = array<i64: 32, 128>}, {pipeline_mode = #tpu.pipeline_mode<synchronous>, transform_indices = @transform_9, window_bounds = array<i64: 1, 128>}, {pipeline_mode = #tpu.pipeline_mode<synchronous>, transform_indices = @transform_10, window_bounds = array<i64: 128, 32>}, {pipeline_mode = #tpu.pipeline_mode<synchronous>, transform_indices = @transform_11, window_bounds = array<i64: 1, 32>}, {transform_indices = @transform_12, window_bounds = array<i64: 8, 8, 32>}]} {
    %c0 = arith.constant 0 : index
    %c0_0 = arith.constant 0 : index
    %c0_1 = arith.constant 0 : index
    %0 = vector.load %arg1[%c0, %c0_0, %c0_1] : memref<8x8x32xf32, #tpu.memory_space<vmem>>, vector<8x8x32xf32>
    %1 = vector.shape_cast %0 : vector<8x8x32xf32> to vector<64x32xf32>
    %c0_2 = arith.constant 0 : index
    %c0_3 = arith.constant 0 : index
    %2 = vector.load %arg2[%c0_2, %c0_3] : memref<1x32xf32, #tpu.memory_space<vmem>>, vector<1x32xf32>
    %c0_4 = arith.constant 0 : index
    %c0_5 = arith.constant 0 : index
    %3 = vector.load %arg3[%c0_4, %c0_5] : memref<1x32xf32, #tpu.memory_space<vmem>>, vector<1x32xf32>
    %cst = arith.constant dense<0.000000e+00> : vector<64xf32>
    %4 = vector.multi_reduction <add>, %1, %cst [1] : vector<64x32xf32> to vector<64xf32>
    %5 = vector.shape_cast %4 : vector<64xf32> to vector<64x1xf32>
    %cst_6 = arith.constant 3.200000e+01 : f32
    %6 = vector.broadcast %cst_6 : f32 to vector<64x1xf32>
    %7 = arith.divf %5, %6 : vector<64x1xf32>
    %8 = vector.broadcast %7 : vector<64x1xf32> to vector<64x32xf32>
    %9 = arith.subf %1, %8 : vector<64x32xf32>
    %10 = arith.mulf %9, %9 : vector<64x32xf32>
    %cst_7 = arith.constant dense<0.000000e+00> : vector<64xf32>
    %11 = vector.multi_reduction <add>, %10, %cst_7 [1] : vector<64x32xf32> to vector<64xf32>
    %12 = vector.shape_cast %11 : vector<64xf32> to vector<64x1xf32>
    %cst_8 = arith.constant 3.200000e+01 : f32
    %13 = vector.broadcast %cst_8 : f32 to vector<64x1xf32>
    %14 = arith.divf %12, %13 : vector<64x1xf32>
    %15 = vector.broadcast %7 : vector<64x1xf32> to vector<64x32xf32>
    %16 = arith.subf %1, %15 : vector<64x32xf32>
    %cst_9 = arith.constant 9.99999974E-6 : f32
    %17 = vector.broadcast %cst_9 : f32 to vector<64x1xf32>
    %18 = arith.addf %14, %17 : vector<64x1xf32>
    %19 = math.rsqrt %18 : vector<64x1xf32>
    %20 = vector.broadcast %19 : vector<64x1xf32> to vector<64x32xf32>
    %21 = arith.mulf %16, %20 : vector<64x32xf32>
    %22 = vector.broadcast %2 : vector<1x32xf32> to vector<64x32xf32>
    %23 = arith.mulf %21, %22 : vector<64x32xf32>
    %24 = vector.broadcast %3 : vector<1x32xf32> to vector<64x32xf32>
    %25 = arith.addf %23, %24 : vector<64x32xf32>
    %c0_10 = arith.constant 0 : index
    %c0_11 = arith.constant 0 : index
    %26 = vector.load %arg4[%c0_10, %c0_11] : memref<32x96xf32, #tpu.memory_space<vmem>>, vector<32x96xf32>
    %cst_12 = arith.constant dense<0.000000e+00> : vector<64x96xf32>
    %27 = tpu.matmul %25, %26, %cst_12 {dimension_numbers = #tpu.dot_dimension_numbers<[1], [0], [0], [1], [0, 0, 1, 1], [], []>} : vector<64x32xf32>, vector<32x96xf32>, vector<64x96xf32> -> vector<64x96xf32>
    %28 = vector.shape_cast %27 : vector<64x96xf32> to vector<8x8x96xf32>
    %29 = tpu.iota {dimensions = array<i32: 0>} : vector<8x8xi32>
    %30 = tpu.iota {dimensions = array<i32: 1>} : vector<8x8xi32>
    %31 = arith.cmpi sle, %30, %29 : vector<8x8xi32>
    %cst_13 = arith.constant 0.000000e+00 : f32
    %cst_14 = arith.constant 0xFF800000 : f32
    %32 = vector.broadcast %cst_13 : f32 to vector<8x8xf32>
    %33 = vector.broadcast %cst_14 : f32 to vector<8x8xf32>
    %34 = arith.select %31, %32, %33 : vector<8x8xi1>, vector<8x8xf32>
    %35 = vector.extract_strided_slice %28 {offsets = [0, 0, 0], sizes = [8, 8, 8], strides = [1, 1, 1]} : vector<8x8x96xf32> to vector<8x8x8xf32>
    %36 = vector.extract_strided_slice %28 {offsets = [0, 0, 32], sizes = [8, 8, 8], strides = [1, 1, 1]} : vector<8x8x96xf32> to vector<8x8x8xf32>
    %37 = vector.extract_strided_slice %28 {offsets = [0, 0, 64], sizes = [8, 8, 8], strides = [1, 1, 1]} : vector<8x8x96xf32> to vector<8x8x8xf32>
    "tpu.trace_start"() <{level = 10 : i32, message = "bqd,bkd->bqk"}> : () -> ()
    %cst_15 = arith.constant dense<0.000000e+00> : vector<8x8x8xf32>
    %38 = tpu.matmul %35, %36, %cst_15 {dimension_numbers = #tpu.dot_dimension_numbers<[2], [2], [1], [1], [0, 0, 0, 1, 1, 1], [0], [0]>} : vector<8x8x8xf32>, vector<8x8x8xf32>, vector<8x8x8xf32> -> vector<8x8x8xf32>
    "tpu.trace_stop"() : () -> ()
    %cst_16 = arith.constant 0.176776692 : f32
    %39 = vector.broadcast %cst_16 : f32 to vector<8x8x8xf32>
    %40 = arith.mulf %38, %39 : vector<8x8x8xf32>
    %41 = vector.shape_cast %34 : vector<8x8xf32> to vector<1x8x8xf32>
    %42 = vector.broadcast %41 : vector<1x8x8xf32> to vector<8x8x8xf32>
    %43 = arith.addf %40, %42 : vector<8x8x8xf32>
    %cst_17 = arith.constant dense<0xFF800000> : vector<8x8xf32>
    %44 = vector.multi_reduction <maximumf>, %43, %cst_17 [2] : vector<8x8x8xf32> to vector<8x8xf32>
    %45 = vector.shape_cast %44 : vector<8x8xf32> to vector<8x8x1xf32>
    %46 = vector.broadcast %45 : vector<8x8x1xf32> to vector<8x8x8xf32>
    %47 = arith.subf %43, %46 : vector<8x8x8xf32>
    %48 = math.exp %47 : vector<8x8x8xf32>
    %cst_18 = arith.constant dense<0.000000e+00> : vector<8x8xf32>
    %49 = vector.multi_reduction <add>, %48, %cst_18 [2] : vector<8x8x8xf32> to vector<8x8xf32>
    %50 = vector.shape_cast %49 : vector<8x8xf32> to vector<8x8x1xf32>
    %51 = tpu.reciprocal %50 {approx = true} : vector<8x8x1xf32> -> vector<8x8x1xf32>
    %52 = vector.broadcast %51 : vector<8x8x1xf32> to vector<8x8x8xf32>
    %53 = arith.mulf %48, %52 : vector<8x8x8xf32>
    "tpu.trace_start"() <{level = 10 : i32, message = "bqk,bkd->bqd"}> : () -> ()
    %cst_19 = arith.constant dense<0.000000e+00> : vector<8x8x8xf32>
    %54 = tpu.matmul %53, %37, %cst_19 {dimension_numbers = #tpu.dot_dimension_numbers<[2], [1], [1], [2], [0, 0, 0, 1, 1, 2], [0], [0]>} : vector<8x8x8xf32>, vector<8x8x8xf32>, vector<8x8x8xf32> -> vector<8x8x8xf32>
    "tpu.trace_stop"() : () -> ()
    %55 = vector.extract_strided_slice %28 {offsets = [0, 0, 8], sizes = [8, 8, 8], strides = [1, 1, 1]} : vector<8x8x96xf32> to vector<8x8x8xf32>
    %56 = vector.extract_strided_slice %28 {offsets = [0, 0, 40], sizes = [8, 8, 8], strides = [1, 1, 1]} : vector<8x8x96xf32> to vector<8x8x8xf32>
    %57 = vector.extract_strided_slice %28 {offsets = [0, 0, 72], sizes = [8, 8, 8], strides = [1, 1, 1]} : vector<8x8x96xf32> to vector<8x8x8xf32>
    "tpu.trace_start"() <{level = 10 : i32, message = "bqd,bkd->bqk"}> : () -> ()
    %cst_20 = arith.constant dense<0.000000e+00> : vector<8x8x8xf32>
    %58 = tpu.matmul %55, %56, %cst_20 {dimension_numbers = #tpu.dot_dimension_numbers<[2], [2], [1], [1], [0, 0, 0, 1, 1, 1], [0], [0]>} : vector<8x8x8xf32>, vector<8x8x8xf32>, vector<8x8x8xf32> -> vector<8x8x8xf32>
    "tpu.trace_stop"() : () -> ()
    %cst_21 = arith.constant 0.176776692 : f32
    %59 = vector.broadcast %cst_21 : f32 to vector<8x8x8xf32>
    %60 = arith.mulf %58, %59 : vector<8x8x8xf32>
    %61 = vector.shape_cast %34 : vector<8x8xf32> to vector<1x8x8xf32>
    %62 = vector.broadcast %61 : vector<1x8x8xf32> to vector<8x8x8xf32>
    %63 = arith.addf %60, %62 : vector<8x8x8xf32>
    %cst_22 = arith.constant dense<0xFF800000> : vector<8x8xf32>
    %64 = vector.multi_reduction <maximumf>, %63, %cst_22 [2] : vector<8x8x8xf32> to vector<8x8xf32>
    %65 = vector.shape_cast %64 : vector<8x8xf32> to vector<8x8x1xf32>
    %66 = vector.broadcast %65 : vector<8x8x1xf32> to vector<8x8x8xf32>
    %67 = arith.subf %63, %66 : vector<8x8x8xf32>
    %68 = math.exp %67 : vector<8x8x8xf32>
    %cst_23 = arith.constant dense<0.000000e+00> : vector<8x8xf32>
    %69 = vector.multi_reduction <add>, %68, %cst_23 [2] : vector<8x8x8xf32> to vector<8x8xf32>
    %70 = vector.shape_cast %69 : vector<8x8xf32> to vector<8x8x1xf32>
    %71 = tpu.reciprocal %70 {approx = true} : vector<8x8x1xf32> -> vector<8x8x1xf32>
    %72 = vector.broadcast %71 : vector<8x8x1xf32> to vector<8x8x8xf32>
    %73 = arith.mulf %68, %72 : vector<8x8x8xf32>
    "tpu.trace_start"() <{level = 10 : i32, message = "bqk,bkd->bqd"}> : () -> ()
    %cst_24 = arith.constant dense<0.000000e+00> : vector<8x8x8xf32>
    %74 = tpu.matmul %73, %57, %cst_24 {dimension_numbers = #tpu.dot_dimension_numbers<[2], [1], [1], [2], [0, 0, 0, 1, 1, 2], [0], [0]>} : vector<8x8x8xf32>, vector<8x8x8xf32>, vector<8x8x8xf32> -> vector<8x8x8xf32>
    "tpu.trace_stop"() : () -> ()
    %75 = vector.extract_strided_slice %28 {offsets = [0, 0, 16], sizes = [8, 8, 8], strides = [1, 1, 1]} : vector<8x8x96xf32> to vector<8x8x8xf32>
    %76 = vector.extract_strided_slice %28 {offsets = [0, 0, 48], sizes = [8, 8, 8], strides = [1, 1, 1]} : vector<8x8x96xf32> to vector<8x8x8xf32>
    %77 = vector.extract_strided_slice %28 {offsets = [0, 0, 80], sizes = [8, 8, 8], strides = [1, 1, 1]} : vector<8x8x96xf32> to vector<8x8x8xf32>
    "tpu.trace_start"() <{level = 10 : i32, message = "bqd,bkd->bqk"}> : () -> ()
    %cst_25 = arith.constant dense<0.000000e+00> : vector<8x8x8xf32>
    %78 = tpu.matmul %75, %76, %cst_25 {dimension_numbers = #tpu.dot_dimension_numbers<[2], [2], [1], [1], [0, 0, 0, 1, 1, 1], [0], [0]>} : vector<8x8x8xf32>, vector<8x8x8xf32>, vector<8x8x8xf32> -> vector<8x8x8xf32>
    "tpu.trace_stop"() : () -> ()
    %cst_26 = arith.constant 0.176776692 : f32
    %79 = vector.broadcast %cst_26 : f32 to vector<8x8x8xf32>
    %80 = arith.mulf %78, %79 : vector<8x8x8xf32>
    %81 = vector.shape_cast %34 : vector<8x8xf32> to vector<1x8x8xf32>
    %82 = vector.broadcast %81 : vector<1x8x8xf32> to vector<8x8x8xf32>
    %83 = arith.addf %80, %82 : vector<8x8x8xf32>
    %cst_27 = arith.constant dense<0xFF800000> : vector<8x8xf32>
    %84 = vector.multi_reduction <maximumf>, %83, %cst_27 [2] : vector<8x8x8xf32> to vector<8x8xf32>
    %85 = vector.shape_cast %84 : vector<8x8xf32> to vector<8x8x1xf32>
    %86 = vector.broadcast %85 : vector<8x8x1xf32> to vector<8x8x8xf32>
    %87 = arith.subf %83, %86 : vector<8x8x8xf32>
    %88 = math.exp %87 : vector<8x8x8xf32>
    %cst_28 = arith.constant dense<0.000000e+00> : vector<8x8xf32>
    %89 = vector.multi_reduction <add>, %88, %cst_28 [2] : vector<8x8x8xf32> to vector<8x8xf32>
    %90 = vector.shape_cast %89 : vector<8x8xf32> to vector<8x8x1xf32>
    %91 = tpu.reciprocal %90 {approx = true} : vector<8x8x1xf32> -> vector<8x8x1xf32>
    %92 = vector.broadcast %91 : vector<8x8x1xf32> to vector<8x8x8xf32>
    %93 = arith.mulf %88, %92 : vector<8x8x8xf32>
    "tpu.trace_start"() <{level = 10 : i32, message = "bqk,bkd->bqd"}> : () -> ()
    %cst_29 = arith.constant dense<0.000000e+00> : vector<8x8x8xf32>
    %94 = tpu.matmul %93, %77, %cst_29 {dimension_numbers = #tpu.dot_dimension_numbers<[2], [1], [1], [2], [0, 0, 0, 1, 1, 2], [0], [0]>} : vector<8x8x8xf32>, vector<8x8x8xf32>, vector<8x8x8xf32> -> vector<8x8x8xf32>
    "tpu.trace_stop"() : () -> ()
    %95 = vector.extract_strided_slice %28 {offsets = [0, 0, 24], sizes = [8, 8, 8], strides = [1, 1, 1]} : vector<8x8x96xf32> to vector<8x8x8xf32>
    %96 = vector.extract_strided_slice %28 {offsets = [0, 0, 56], sizes = [8, 8, 8], strides = [1, 1, 1]} : vector<8x8x96xf32> to vector<8x8x8xf32>
    %97 = vector.extract_strided_slice %28 {offsets = [0, 0, 88], sizes = [8, 8, 8], strides = [1, 1, 1]} : vector<8x8x96xf32> to vector<8x8x8xf32>
    "tpu.trace_start"() <{level = 10 : i32, message = "bqd,bkd->bqk"}> : () -> ()
    %cst_30 = arith.constant dense<0.000000e+00> : vector<8x8x8xf32>
    %98 = tpu.matmul %95, %96, %cst_30 {dimension_numbers = #tpu.dot_dimension_numbers<[2], [2], [1], [1], [0, 0, 0, 1, 1, 1], [0], [0]>} : vector<8x8x8xf32>, vector<8x8x8xf32>, vector<8x8x8xf32> -> vector<8x8x8xf32>
    "tpu.trace_stop"() : () -> ()
    %cst_31 = arith.constant 0.176776692 : f32
    %99 = vector.broadcast %cst_31 : f32 to vector<8x8x8xf32>
    %100 = arith.mulf %98, %99 : vector<8x8x8xf32>
    %101 = vector.shape_cast %34 : vector<8x8xf32> to vector<1x8x8xf32>
    %102 = vector.broadcast %101 : vector<1x8x8xf32> to vector<8x8x8xf32>
    %103 = arith.addf %100, %102 : vector<8x8x8xf32>
    %cst_32 = arith.constant dense<0xFF800000> : vector<8x8xf32>
    %104 = vector.multi_reduction <maximumf>, %103, %cst_32 [2] : vector<8x8x8xf32> to vector<8x8xf32>
    %105 = vector.shape_cast %104 : vector<8x8xf32> to vector<8x8x1xf32>
    %106 = vector.broadcast %105 : vector<8x8x1xf32> to vector<8x8x8xf32>
    %107 = arith.subf %103, %106 : vector<8x8x8xf32>
    %108 = math.exp %107 : vector<8x8x8xf32>
    %cst_33 = arith.constant dense<0.000000e+00> : vector<8x8xf32>
    %109 = vector.multi_reduction <add>, %108, %cst_33 [2] : vector<8x8x8xf32> to vector<8x8xf32>
    %110 = vector.shape_cast %109 : vector<8x8xf32> to vector<8x8x1xf32>
    %111 = tpu.reciprocal %110 {approx = true} : vector<8x8x1xf32> -> vector<8x8x1xf32>
    %112 = vector.broadcast %111 : vector<8x8x1xf32> to vector<8x8x8xf32>
    %113 = arith.mulf %108, %112 : vector<8x8x8xf32>
    "tpu.trace_start"() <{level = 10 : i32, message = "bqk,bkd->bqd"}> : () -> ()
    %cst_34 = arith.constant dense<0.000000e+00> : vector<8x8x8xf32>
    %114 = tpu.matmul %113, %97, %cst_34 {dimension_numbers = #tpu.dot_dimension_numbers<[2], [1], [1], [2], [0, 0, 0, 1, 1, 2], [0], [0]>} : vector<8x8x8xf32>, vector<8x8x8xf32>, vector<8x8x8xf32> -> vector<8x8x8xf32>
    "tpu.trace_stop"() : () -> ()
    %115 = tpu.concatenate %54, %74, %94, %114 in 2 : vector<8x8x8xf32>, vector<8x8x8xf32>, vector<8x8x8xf32>, vector<8x8x8xf32> -> vector<8x8x32xf32>
    %116 = vector.shape_cast %115 : vector<8x8x32xf32> to vector<64x32xf32>
    %c0_35 = arith.constant 0 : index
    %c0_36 = arith.constant 0 : index
    %117 = vector.load %arg5[%c0_35, %c0_36] : memref<32x32xf32, #tpu.memory_space<vmem>>, vector<32x32xf32>
    %cst_37 = arith.constant dense<0.000000e+00> : vector<64x32xf32>
    %118 = tpu.matmul %116, %117, %cst_37 {dimension_numbers = #tpu.dot_dimension_numbers<[1], [0], [0], [1], [0, 0, 1, 1], [], []>} : vector<64x32xf32>, vector<32x32xf32>, vector<64x32xf32> -> vector<64x32xf32>
    %c0_38 = arith.constant 0 : index
    %c0_39 = arith.constant 0 : index
    %119 = vector.load %arg6[%c0_38, %c0_39] : memref<1x32xf32, #tpu.memory_space<vmem>>, vector<1x32xf32>
    %120 = vector.broadcast %119 : vector<1x32xf32> to vector<64x32xf32>
    %121 = arith.addf %118, %120 : vector<64x32xf32>
    %122 = arith.addf %1, %121 : vector<64x32xf32>
    %c0_40 = arith.constant 0 : index
    %c0_41 = arith.constant 0 : index
    %123 = vector.load %arg7[%c0_40, %c0_41] : memref<1x32xf32, #tpu.memory_space<vmem>>, vector<1x32xf32>
    %c0_42 = arith.constant 0 : index
    %c0_43 = arith.constant 0 : index
    %124 = vector.load %arg8[%c0_42, %c0_43] : memref<1x32xf32, #tpu.memory_space<vmem>>, vector<1x32xf32>
    %cst_44 = arith.constant dense<0.000000e+00> : vector<64xf32>
    %125 = vector.multi_reduction <add>, %122, %cst_44 [1] : vector<64x32xf32> to vector<64xf32>
    %126 = vector.shape_cast %125 : vector<64xf32> to vector<64x1xf32>
    %cst_45 = arith.constant 3.200000e+01 : f32
    %127 = vector.broadcast %cst_45 : f32 to vector<64x1xf32>
    %128 = arith.divf %126, %127 : vector<64x1xf32>
    %129 = vector.broadcast %128 : vector<64x1xf32> to vector<64x32xf32>
    %130 = arith.subf %122, %129 : vector<64x32xf32>
    %131 = arith.mulf %130, %130 : vector<64x32xf32>
    %cst_46 = arith.constant dense<0.000000e+00> : vector<64xf32>
    %132 = vector.multi_reduction <add>, %131, %cst_46 [1] : vector<64x32xf32> to vector<64xf32>
    %133 = vector.shape_cast %132 : vector<64xf32> to vector<64x1xf32>
    %cst_47 = arith.constant 3.200000e+01 : f32
    %134 = vector.broadcast %cst_47 : f32 to vector<64x1xf32>
    %135 = arith.divf %133, %134 : vector<64x1xf32>
    %136 = vector.broadcast %128 : vector<64x1xf32> to vector<64x32xf32>
    %137 = arith.subf %122, %136 : vector<64x32xf32>
    %cst_48 = arith.constant 9.99999974E-6 : f32
    %138 = vector.broadcast %cst_48 : f32 to vector<64x1xf32>
    %139 = arith.addf %135, %138 : vector<64x1xf32>
    %140 = math.rsqrt %139 : vector<64x1xf32>
    %141 = vector.broadcast %140 : vector<64x1xf32> to vector<64x32xf32>
    %142 = arith.mulf %137, %141 : vector<64x32xf32>
    %143 = vector.broadcast %123 : vector<1x32xf32> to vector<64x32xf32>
    %144 = arith.mulf %142, %143 : vector<64x32xf32>
    %145 = vector.broadcast %124 : vector<1x32xf32> to vector<64x32xf32>
    %146 = arith.addf %144, %145 : vector<64x32xf32>
    %c0_49 = arith.constant 0 : index
    %c0_50 = arith.constant 0 : index
    %147 = vector.load %arg9[%c0_49, %c0_50] : memref<32x128xf32, #tpu.memory_space<vmem>>, vector<32x128xf32>
    %cst_51 = arith.constant dense<0.000000e+00> : vector<64x128xf32>
    %148 = tpu.matmul %146, %147, %cst_51 {dimension_numbers = #tpu.dot_dimension_numbers<[1], [0], [0], [1], [0, 0, 1, 1], [], []>} : vector<64x32xf32>, vector<32x128xf32>, vector<64x128xf32> -> vector<64x128xf32>
    %c0_52 = arith.constant 0 : index
    %c0_53 = arith.constant 0 : index
    %149 = vector.load %arg10[%c0_52, %c0_53] : memref<1x128xf32, #tpu.memory_space<vmem>>, vector<1x128xf32>
    %150 = vector.broadcast %149 : vector<1x128xf32> to vector<64x128xf32>
    %151 = arith.addf %148, %150 : vector<64x128xf32>
    %cst_54 = arith.constant 0.000000e+00 : f32
    %152 = vector.broadcast %cst_54 : f32 to vector<64x128xf32>
    %153 = arith.maximumf %151, %152 : vector<64x128xf32>
    %c0_55 = arith.constant 0 : index
    %c0_56 = arith.constant 0 : index
    %154 = vector.load %arg11[%c0_55, %c0_56] : memref<128x32xf32, #tpu.memory_space<vmem>>, vector<128x32xf32>
    %cst_57 = arith.constant dense<0.000000e+00> : vector<64x32xf32>
    %155 = tpu.matmul %153, %154, %cst_57 {dimension_numbers = #tpu.dot_dimension_numbers<[1], [0], [0], [1], [0, 0, 1, 1], [], []>} : vector<64x128xf32>, vector<128x32xf32>, vector<64x32xf32> -> vector<64x32xf32>
    %c0_58 = arith.constant 0 : index
    %c0_59 = arith.constant 0 : index
    %156 = vector.load %arg12[%c0_58, %c0_59] : memref<1x32xf32, #tpu.memory_space<vmem>>, vector<1x32xf32>
    %157 = vector.broadcast %156 : vector<1x32xf32> to vector<64x32xf32>
    %158 = arith.addf %155, %157 : vector<64x32xf32>
    %159 = arith.addf %122, %158 : vector<64x32xf32>
    %160 = vector.shape_cast %159 : vector<64x32xf32> to vector<8x8x32xf32>
    %c0_60 = arith.constant 0 : index
    %c0_61 = arith.constant 0 : index
    %c0_62 = arith.constant 0 : index
    %161 = vector.load %arg13[%c0_60, %c0_61, %c0_62] : memref<8x8x32xf32, #tpu.memory_space<vmem>>, vector<8x8x32xf32>
    tpu.vector_store %arg13[%c0_60, %c0_61, %c0_62], %160 {strides = array<i32>} : memref<8x8x32xf32, #tpu.memory_space<vmem>>, vector<8x8x32xf32>,
    return
  }
  func.func @transform_0(%arg0: i32) -> (i32, i32, i32) {
    %c0_i32 = arith.constant 0 : i32
    %c0_i32_0 = arith.constant 0 : i32
    %c0_i32_1 = arith.constant 0 : i32
    return %arg0, %c0_i32, %c0_i32_0 : i32, i32, i32
  }
  func.func @transform_1(%arg0: i32) -> (i32, i32) {
    %c0_i32 = arith.constant 0 : i32
    %c0_i32_0 = arith.constant 0 : i32
    %c0_i32_1 = arith.constant 0 : i32
    return %c0_i32, %c0_i32_0 : i32, i32
  }
  func.func @transform_2(%arg0: i32) -> (i32, i32) {
    %c0_i32 = arith.constant 0 : i32
    %c0_i32_0 = arith.constant 0 : i32
    %c0_i32_1 = arith.constant 0 : i32
    return %c0_i32, %c0_i32_0 : i32, i32
  }
  func.func @transform_3(%arg0: i32) -> (i32, i32) {
    %c0_i32 = arith.constant 0 : i32
    %c0_i32_0 = arith.constant 0 : i32
    %c0_i32_1 = arith.constant 0 : i32
    return %c0_i32, %c0_i32_0 : i32, i32
  }
  func.func @transform_4(%arg0: i32) -> (i32, i32) {
    %c0_i32 = arith.constant 0 : i32
    %c0_i32_0 = arith.constant 0 : i32
    %c0_i32_1 = arith.constant 0 : i32
    return %c0_i32, %c0_i32_0 : i32, i32
  }
  func.func @transform_5(%arg0: i32) -> (i32, i32) {
    %c0_i32 = arith.constant 0 : i32
    %c0_i32_0 = arith.constant 0 : i32
    %c0_i32_1 = arith.constant 0 : i32
    return %c0_i32, %c0_i32_0 : i32, i32
  }
  func.func @transform_6(%arg0: i32) -> (i32, i32) {
    %c0_i32 = arith.constant 0 : i32
    %c0_i32_0 = arith.constant 0 : i32
    %c0_i32_1 = arith.constant 0 : i32
    return %c0_i32, %c0_i32_0 : i32, i32
  }
  func.func @transform_7(%arg0: i32) -> (i32, i32) {
    %c0_i32 = arith.constant 0 : i32
    %c0_i32_0 = arith.constant 0 : i32
    %c0_i32_1 = arith.constant 0 : i32
    return %c0_i32, %c0_i32_0 : i32, i32
  }
  func.func @transform_8(%arg0: i32) -> (i32, i32) {
    %c0_i32 = arith.constant 0 : i32
    %c0_i32_0 = arith.constant 0 : i32
    %c0_i32_1 = arith.constant 0 : i32
    return %c0_i32, %c0_i32_0 : i32, i32
  }
  func.func @transform_9(%arg0: i32) -> (i32, i32) {
    %c0_i32 = arith.constant 0 : i32
    %c0_i32_0 = arith.constant 0 : i32
    %c0_i32_1 = arith.constant 0 : i32
    return %c0_i32, %c0_i32_0 : i32, i32
  }
  func.func @transform_10(%arg0: i32) -> (i32, i32) {
    %c0_i32 = arith.constant 0 : i32
    %c0_i32_0 = arith.constant 0 : i32
    %c0_i32_1 = arith.constant 0 : i32
    return %c0_i32, %c0_i32_0 : i32, i32
  }
  func.func @transform_11(%arg0: i32) -> (i32, i32) {
    %c0_i32 = arith.constant 0 : i32
    %c0_i32_0 = arith.constant 0 : i32
    %c0_i32_1 = arith.constant 0 : i32
    return %c0_i32, %c0_i32_0 : i32, i32
  }
  func.func @transform_12(%arg0: i32) -> (i32, i32, i32) {
    %c0_i32 = arith.constant 0 : i32
    %c0_i32_0 = arith.constant 0 : i32
    %c0_i32_1 = arith.constant 0 : i32
    return %arg0, %c0_i32, %c0_i32_0 : i32, i32, i32
  }
}

</mosaic_0001>

<llo_original>
// kernel: transformer_block.1
$region0: #{transformer_block.1}
  #allocation0 [shape = 'u32[]', space=smem, size = 0x4, offset = 0x4, fixed_abs, tag = 'smem constant byte address 0x4 - core index']
  #allocation1 [shape = 'u32[144,128]{1,0:T(1,128)}', space=vmem, size = 0x12000, scoped, tag = 'internal scratch']
  %s0 = inlined_call_operand.vmem [shape: f32[8,8,32], index: 0, kind: input, shape index: {}]
  %s1 = inlined_call_operand.vmem [shape: f32[1,32], index: 1, kind: input, shape index: {}]
  %s2 = inlined_call_operand.vmem [shape: f32[1,32], index: 2, kind: input, shape index: {}]
  %s3 = inlined_call_operand.vmem [shape: f32[32,96], index: 3, kind: input, shape index: {}]
  %s4 = inlined_call_operand.vmem [shape: f32[32,32], index: 4, kind: input, shape index: {}]
  %s5 = inlined_call_operand.vmem [shape: f32[1,32], index: 5, kind: input, shape index: {}]
  %s6 = inlined_call_operand.vmem [shape: f32[1,32], index: 6, kind: input, shape index: {}]
  %s7 = inlined_call_operand.vmem [shape: f32[1,32], index: 7, kind: input, shape index: {}]
  %s8 = inlined_call_operand.vmem [shape: f32[32,128], index: 8, kind: input, shape index: {}]
  %s9 = inlined_call_operand.vmem [shape: f32[1,128], index: 9, kind: input, shape index: {}]
  %s10 = inlined_call_operand.vmem [shape: f32[128,32], index: 10, kind: input, shape index: {}]
  %s11 = inlined_call_operand.vmem [shape: f32[1,32], index: 11, kind: input, shape index: {}]
  %s12 = inlined_call_operand.hbm [shape: f32[8,8,32], index: 12, kind: output, shape index: {}]
  %s13 = sld [smem:[#allocation0]]
  $region58: #{transformer_block.1} parent=0
    _
  %s15 = ssub.s32 1, %s13
  %s16 = scalar_select 0, %s15, %s13
  $region1: #{transformer_block.1} parent=0
    #allocation2 [shape = 'u8[32768]{0}', space=vmem, size = 0x8000, scoped, tag = 'output window, operand 0, single buffered']
    #allocation3 [shape = 's32[1]{0}', space=sflag, size = 0x4, scoped, tag = 'scoped memory for transformer_block.1']
    %17 = vsyncpa [#allocation3], 0
    // Predicated region
    $region2: #{transformer_block.1} parent=1 // pred_check
      _
    $region3: #{transformer_block.1} parent=1 // pred_check_branch
      %19 = sbr.rel (0) target = $region5
    $region4: #{transformer_block.1} parent=1 // pred_region
      _
    $region5: #{transformer_block.1} parent=1 // pred_fallthru
      _
    // Predicated region
    $region6: #{transformer_block.1} parent=1 // pred_check
      _
    $region7: #{transformer_block.1} parent=1 // pred_check_branch
      %21 = sbr.rel (0) target = $region9
    $region8: #{transformer_block.1} parent=1 // pred_region
      _
    $region9: #{transformer_block.1} parent=1 // pred_fallthru
      _
    // Predicated region
    $region10: #{transformer_block.1} parent=1 // pred_check
      _
    $region11: #{transformer_block.1} parent=1 // pred_check_branch
      %23 = sbr.rel (0) target = $region13
    $region12: #{transformer_block.1} parent=1 // pred_region
      _
    $region13: #{transformer_block.1} parent=1 // pred_fallthru
      _
    // Predicated region
    $region14: #{transformer_block.1} parent=1 // pred_check
      _
    $region15: #{transformer_block.1} parent=1 // pred_check_branch
      %25 = sbr.rel (0) target = $region17
    $region16: #{transformer_block.1} parent=1 // pred_region
      _
    $region17: #{transformer_block.1} parent=1 // pred_fallthru
      _
    // Predicated region
    $region18: #{transformer_block.1} parent=1 // pred_check
      _
    $region19: #{transformer_block.1} parent=1 // pred_check_branch
      %27 = sbr.rel (0) target = $region21
    $region20: #{transformer_block.1} parent=1 // pred_region
      _
    $region21: #{transformer_block.1} parent=1 // pred_fallthru
      _
    // Predicated region
    $region22: #{transformer_block.1} parent=1 // pred_check
      _
    $region23: #{transformer_block.1} parent=1 // pred_check_branch
      %29 = sbr.rel (0) target = $region25
    $region24: #{transformer_block.1} parent=1 // pred_region
      _
    $region25: #{transformer_block.1} parent=1 // pred_fallthru
      _
    // Predicated region
    $region26: #{transformer_block.1} parent=1 // pred_check
      _
    $region27: #{transformer_block.1} parent=1 // pred_check_branch
      %31 = sbr.rel (0) target = $region29
    $region28: #{transformer_block.1} parent=1 // pred_region
      _
    $region29: #{transformer_block.1} parent=1 // pred_fallthru
      _
    // Predicated region
    $region30: #{transformer_block.1} parent=1 // pred_check
      _
    $region31: #{transformer_block.1} parent=1 // pred_check_branch
      %33 = sbr.rel (0) target = $region33
    $region32: #{transformer_block.1} parent=1 // pred_region
      _
    $region33: #{transformer_block.1} parent=1 // pred_fallthru
      _
    // Predicated region
    $region34: #{transformer_block.1} parent=1 // pred_check
      _
    $region35: #{transformer_block.1} parent=1 // pred_check_branch
      %35 = sbr.rel (0) target = $region37
    $region36: #{transformer_block.1} parent=1 // pred_region
      _
    $region37: #{transformer_block.1} parent=1 // pred_fallthru
      _
    // Predicated region
    $region38: #{transformer_block.1} parent=1 // pred_check
      _
    $region39: #{transformer_block.1} parent=1 // pred_check_branch
      %37 = sbr.rel (0) target = $region41
    $region40: #{transformer_block.1} parent=1 // pred_region
      _
    $region41: #{transformer_block.1} parent=1 // pred_fallthru
      _
    // Predicated region
    $region42: #{transformer_block.1} parent=1 // pred_check
      _
    $region43: #{transformer_block.1} parent=1 // pred_check_branch
      %39 = sbr.rel (0) target = $region45
    $region44: #{transformer_block.1} parent=1 // pred_region
      _
    $region45: #{transformer_block.1} parent=1 // pred_fallthru
      _
    // Predicated region
    $region46: #{transformer_block.1} parent=1 // pred_check
      _
    $region47: #{transformer_block.1} parent=1 // pred_check_branch
      %41 = sbr.rel (0) target = $region49
    $region48: #{transformer_block.1} parent=1 // pred_region
      _
    $region49: #{transformer_block.1} parent=1 // pred_fallthru
      _
    %v42 = vld [vmem:[%s0] sm:$0xff]
    %v43 = vld [vmem:[%s0 + $0x8] sm:$0xff]
    %v44 = vld [vmem:[%s0 + $0x10] sm:$0xff]
    %v45 = vld [vmem:[%s0 + $0x18] sm:$0xff]
    %v46 = vld [vmem:[%s0 + $0x20] sm:$0xff]
    %v47 = vld [vmem:[%s0 + $0x28] sm:$0xff]
    %v48 = vld [vmem:[%s0 + $0x30] sm:$0xff]
    %v49 = vld [vmem:[%s0 + $0x38] sm:$0xff]
    %v50 = vld [vmem:[%s1] sm:$0x1]
    %v51 = vld [vmem:[%s2] sm:$0x1]
    %vm52 = vcmask 261120
    %v53 = vsel %vm52, %v42, 0.0
    %54 = vadd.xlane.f32.xlu0 %v53
    %v55 = vpop.xlane.xlu0 %54
    %v56 = vsel %vm52, %v43, 0.0
    %57 = vadd.xlane.f32.xlu0 %v56
    %v58 = vpop.xlane.xlu0 %57
    %v59 = vsel %vm52, %v44, 0.0
    %60 = vadd.xlane.f32.xlu0 %v59
    %v61 = vpop.xlane.xlu0 %60
    %v62 = vsel %vm52, %v45, 0.0
    %63 = vadd.xlane.f32.xlu0 %v62
    %v64 = vpop.xlane.xlu0 %63
    %v65 = vsel %vm52, %v46, 0.0
    %66 = vadd.xlane.f32.xlu0 %v65
    %v67 = vpop.xlane.xlu0 %66
    %v68 = vsel %vm52, %v47, 0.0
    %69 = vadd.xlane.f32.xlu0 %v68
    %v70 = vpop.xlane.xlu0 %69
    %v71 = vsel %vm52, %v48, 0.0
    %72 = vadd.xlane.f32.xlu0 %v71
    %v73 = vpop.xlane.xlu0 %72
    %v74 = vsel %vm52, %v49, 0.0
    %75 = vadd.xlane.f32.xlu0 %v74
    %v76 = vpop.xlane.xlu0 %75
    %v77 = vrcp.pop 32.0
    %v78 = vmul.f32 %v55, %v77
    %v79 = vmul.f32 %v58, %v77
    %v80 = vmul.f32 %v61, %v77
    %v81 = vmul.f32 %v64, %v77
    %v82 = vmul.f32 %v67, %v77
    %v83 = vmul.f32 %v70, %v77
    %v84 = vmul.f32 %v73, %v77
    %v85 = vmul.f32 %v76, %v77
    %v86 = vsub.f32 %v42, %v78
    %v87 = vsub.f32 %v43, %v79
    %v88 = vsub.f32 %v44, %v80
    %v89 = vsub.f32 %v45, %v81
    %v90 = vsub.f32 %v46, %v82
    %v91 = vsub.f32 %v47, %v83
    %v92 = vsub.f32 %v48, %v84
    %v93 = vsub.f32 %v49, %v85
    %v94 = vmul.f32 %v86, %v86
    %v95 = vmul.f32 %v87, %v87
    %v96 = vmul.f32 %v88, %v88
    %v97 = vmul.f32 %v89, %v89
    %v98 = vmul.f32 %v90, %v90
    %v99 = vmul.f32 %v91, %v91
    %v100 = vmul.f32 %v92, %v92
    %v101 = vmul.f32 %v93, %v93
    %v102 = vsel %vm52, %v94, 0.0
    %103 = vadd.xlane.f32.xlu0 %v102
    %v104 = vpop.xlane.xlu0 %103
    %v105 = vsel %vm52, %v95, 0.0
    %106 = vadd.xlane.f32.xlu0 %v105
    %v107 = vpop.xlane.xlu0 %106
    %v108 = vsel %vm52, %v96, 0.0
    %109 = vadd.xlane.f32.xlu0 %v108
    %v110 = vpop.xlane.xlu0 %109
    %v111 = vsel %vm52, %v97, 0.0
    %112 = vadd.xlane.f32.xlu0 %v111
    %v113 = vpop.xlane.xlu0 %112
    %v114 = vsel %vm52, %v98, 0.0
    %115 = vadd.xlane.f32.xlu0 %v114
    %v116 = vpop.xlane.xlu0 %115
    %v117 = vsel %vm52, %v99, 0.0
    %118 = vadd.xlane.f32.xlu0 %v117
    %v119 = vpop.xlane.xlu0 %118
    %v120 = vsel %vm52, %v100, 0.0
    %121 = vadd.xlane.f32.xlu0 %v120
    %v122 = vpop.xlane.xlu0 %121
    %v123 = vsel %vm52, %v101, 0.0
    %124 = vadd.xlane.f32.xlu0 %v123
    %v125 = vpop.xlane.xlu0 %124
    %v126 = vmul.f32 %v104, %v77
    %v127 = vmul.f32 %v107, %v77
    %v128 = vmul.f32 %v110, %v77
    %v129 = vmul.f32 %v113, %v77
    %v130 = vmul.f32 %v116, %v77
    %v131 = vmul.f32 %v119, %v77
    %v132 = vmul.f32 %v122, %v77
    %v133 = vmul.f32 %v125, %v77
    %v134 = vadd.f32 %v126, 1e-05
    %v135 = vadd.f32 %v127, 1e-05
    %v136 = vadd.f32 %v128, 1e-05
    %v137 = vadd.f32 %v129, 1e-05
    %v138 = vadd.f32 %v130, 1e-05
    %v139 = vadd.f32 %v131, 1e-05
    %v140 = vadd.f32 %v132, 1e-05
    %v141 = vadd.f32 %v133, 1e-05
    %v142 = vrsqrt.pop %v134
    %v143 = vrsqrt.pop %v135
    %v144 = vrsqrt.pop %v136
    %v145 = vrsqrt.pop %v137
    %v146 = vrsqrt.pop %v138
    %v147 = vrsqrt.pop %v139
    %v148 = vrsqrt.pop %v140
    %v149 = vrsqrt.pop %v141
    %v150 = vmul.f32 %v86, %v142
    %v151 = vmul.f32 %v87, %v143
    %v152 = vmul.f32 %v88, %v144
    %v153 = vmul.f32 %v89, %v145
    %v154 = vmul.f32 %v90, %v146
    %v155 = vmul.f32 %v91, %v147
    %v156 = vmul.f32 %v92, %v148
    %v157 = vmul.f32 %v93, %v149
    %v159 = vlaneseq
    %v160 = vshrl.u32 %v159, 7
    %v161 = vsub.s32 0, %v160
    %v162 = vrot.slane %v50, %v161
    %v164 = vmul.f32 %v150, %v162
    %v165 = vmul.f32 %v151, %v162
    %v166 = vmul.f32 %v152, %v162
    %v167 = vmul.f32 %v153, %v162
    %v168 = vmul.f32 %v154, %v162
    %v169 = vmul.f32 %v155, %v162
    %v170 = vmul.f32 %v156, %v162
    %v171 = vmul.f32 %v157, %v162
    %v173 = vlaneseq
    %v174 = vshrl.u32 %v173, 7
    %v175 = vsub.s32 0, %v174
    %v176 = vrot.slane %v51, %v175
    %v178 = vadd.f32 %v164, %v176
    %v179 = vadd.f32 %v165, %v176
    %v180 = vadd.f32 %v166, %v176
    %v181 = vadd.f32 %v167, %v176
    %v182 = vadd.f32 %v168, %v176
    %v183 = vadd.f32 %v169, %v176
    %v184 = vadd.f32 %v170, %v176
    %v185 = vadd.f32 %v171, %v176
    %v186 = vld [vmem:[%s3] sm:$0xff]
    %v187 = vld [vmem:[%s3 + $0x8] sm:$0xff]
    %v188 = vld [vmem:[%s3 + $0x10] sm:$0xff]
    %v189 = vld [vmem:[%s3 + $0x18] sm:$0xff]
    %v191 = vsel %vm52, %v178, 0
    %v194 = vsel %vm52, %v179, 0
    %v197 = vsel %vm52, %v180, 0
    %v200 = vsel %vm52, %v181, 0
    %v203 = vsel %vm52, %v182, 0
    %v206 = vsel %vm52, %v183, 0
    %v209 = vsel %vm52, %v184, 0
    %v212 = vsel %vm52, %v185, 0
    %214 = vmatprep.subr.mxu0 0.0
    %215 = vmatpush1.msra.mxu0 %v186
    %216 = vmatprep.subr.mxu0 0.0
    %217 = vmatpush1.msra.mxu0 %v187
    %218 = vmatprep.subr.mxu0 0.0
    %219 = vmatpush1.msra.mxu0 %v188
    %220 = vmatprep.subr.mxu0 0.0
    %221 = vmatpush1.msra.mxu0 %v189
    %222 = vmatprep.subr.mxu0 0.0
    %223 = vmatpush1.msra.mxu0 0.0
    %224 = vmatprep.subr.mxu0 0.0
    %225 = vmatpush1.msra.mxu0 0.0
    %226 = vmatprep.subr.mxu0 0.0
    %227 = vmatpush1.msra.mxu0 0.0
    %228 = vmatprep.subr.mxu0 0.0
    %229 = vmatpush1.msra.mxu0 0.0
    %230 = vmatprep.subr.mxu0 0.0
    %231 = vmatpush1.msra.mxu0 0.0
    %232 = vmatprep.subr.mxu0 0.0
    %233 = vmatpush1.msra.mxu0 0.0
    %234 = vmatprep.subr.mxu0 0.0
    %235 = vmatpush1.msra.mxu0 0.0
    %236 = vmatprep.subr.mxu0 0.0
    %237 = vmatpush1.msra.mxu0 0.0
    %238 = vmatprep.subr.mxu0 0.0
    %239 = vmatpush1.msra.mxu0 0.0
    %240 = vmatprep.subr.mxu0 0.0
    %241 = vmatpush1.msra.mxu0 0.0
    %242 = vmatprep.subr.mxu0 0.0
    %243 = vmatpush1.msra.mxu0 0.0
    %244 = vmatprep.subr.mxu0 0.0
    %245 = vmatpush1.msra.mxu0 0.0
    %246 = vmatprep.subr.mxu0 0.0
    %247 = vmatpush1.msra.mxu0 0.0
    %248 = vmatprep.subr.mxu0 0.0
    %249 = vmatpush1.msra.mxu0 0.0
    %250 = vmatprep.subr.mxu0 0.0
    %251 = vmatpush1.msra.mxu0 0.0
    %252 = vmatprep.subr.mxu0 0.0
    %253 = vmatpush1.msra.mxu0 0.0
    %254 = vmatprep.subr.mxu0 0.0
    %255 = vmatpush1.msra.mxu0 0.0
    %256 = vmatprep.subr.mxu0 0.0
    %257 = vmatpush1.msra.mxu0 0.0
    %258 = vmatprep.subr.mxu0 0.0
    %259 = vmatpush1.msra.mxu0 0.0
    %260 = vmatprep.subr.mxu0 0.0
    %261 = vmatpush1.msra.mxu0 0.0
    %262 = vmatprep.subr.mxu0 0.0
    %263 = vmatpush1.msra.mxu0 0.0
    %264 = vmatprep.subr.mxu0 0.0
    %265 = vmatpush1.msra.mxu0 0.0
    %266 = vmatprep.subr.mxu0 0.0
    %267 = vmatpush1.msra.mxu0 0.0
    %268 = vmatprep.subr.mxu0 0.0
    %269 = vmatpush1.msra.mxu0 0.0
    %270 = vmatprep.subr.mxu0 0.0
    %271 = vmatpush1.msra.mxu0 0.0
    %272 = vmatprep.subr.mxu0 0.0
    %273 = vmatpush1.msra.mxu0 0.0
    %274 = vmatprep.subr.mxu0 0.0
    %275 = vmatpush1.msra.mxu0 0.0
    %276 = vmatprep.subr.mxu0 0.0
    %277 = vmatpush1.msra.mxu0 0.0
    %278 = vmatprep.mubr.f32.mxu0 0.0
    %279 = vmatmul.mubr.f32.gmra.mrb[0].mxu0 %v191
    %v280 = vpop.f32.mrb[0].mxu0
    %v281 = vadd.f32 0.0, %v280
    %v282 = vpop.f32.mrb[0].mxu0
    %283 = vmatprep.mubr.f32.mxu0 0.0
    %284 = vmatmul.mubr.f32.gmra.mrb[0].mxu0 %v194
    %v285 = vpop.f32.mrb[0].mxu0
    %v286 = vadd.f32 0.0, %v285
    %v287 = vpop.f32.mrb[0].mxu0
    %288 = vmatprep.mubr.f32.mxu0 0.0
    %289 = vmatmul.mubr.f32.gmra.mrb[0].mxu0 %v197
    %v290 = vpop.f32.mrb[0].mxu0
    %v291 = vadd.f32 0.0, %v290
    %v292 = vpop.f32.mrb[0].mxu0
    %293 = vmatprep.mubr.f32.mxu0 0.0
    %294 = vmatmul.mubr.f32.gmra.mrb[0].mxu0 %v200
    %v295 = vpop.f32.mrb[0].mxu0
    %v296 = vadd.f32 0.0, %v295
    %v297 = vpop.f32.mrb[0].mxu0
    %298 = vmatprep.mubr.f32.mxu0 0.0
    %299 = vmatmul.mubr.f32.gmra.mrb[0].mxu0 %v203
    %v300 = vpop.f32.mrb[0].mxu0
    %v301 = vadd.f32 0.0, %v300
    %v302 = vpop.f32.mrb[0].mxu0
    %303 = vmatprep.mubr.f32.mxu0 0.0
    %304 = vmatmul.mubr.f32.gmra.mrb[0].mxu0 %v206
    %v305 = vpop.f32.mrb[0].mxu0
    %v306 = vadd.f32 0.0, %v305
    %v307 = vpop.f32.mrb[0].mxu0
    %308 = vmatprep.mubr.f32.mxu0 0.0
    %309 = vmatmul.mubr.f32.gmra.mrb[0].mxu0 %v209
    %v310 = vpop.f32.mrb[0].mxu0
    %v311 = vadd.f32 0.0, %v310
    %v312 = vpop.f32.mrb[0].mxu0
    %313 = vmatprep.mubr.f32.mxu0 0.0
    %314 = vmatmul.mubr.f32.gmra.mrb[0].mxu0 %v212
    %v315 = vpop.f32.mrb[0].mxu0
    %v316 = vadd.f32 0.0, %v315
    %v317 = vpop.f32.mrb[0].mxu0
    %318 = vdwg.mxu0
    %v319 = vlaneseq
    %v320 = vshrl.u32 %v319, 7
    %v321 = vlaneseq
    %v322 = vand.u32 %v321, 127
    %vm323 = vcmp.le.s32.totalorder %v322, %v320
    %v324 = vsel %vm323, 0.0, -inf
    %326 = vrot.lane.b32.xlu0 %v281, 96
    %v327 = vpop.permute.xlu0 %326
    %vm328 = vcmask 64512
    %v329 = vsel %vm328, %v281, 0
    %v331 = vsel %vm328, %v327, 0
    %333 = vmatprep.subr.mxu0 0.0
    %334 = vmatpush1.xpose.msra.mxu0 %v331
    %335 = vmatprep.subr.mxu0 0.0
    %336 = vmatpush1.xpose.msra.mxu0 0.0
    %337 = vmatprep.subr.mxu0 0.0
    %338 = vmatpush1.xpose.msra.mxu0 0.0
    %339 = vmatprep.subr.mxu0 0.0
    %340 = vmatpush1.xpose.msra.mxu0 0.0
    %341 = vmatprep.subr.mxu0 0.0
    %342 = vmatpush1.xpose.msra.mxu0 0.0
    %343 = vmatprep.subr.mxu0 0.0
    %344 = vmatpush1.xpose.msra.mxu0 0.0
    %345 = vmatprep.subr.mxu0 0.0
    %346 = vmatpush1.xpose.msra.mxu0 0.0
    %347 = vmatprep.subr.mxu0 0.0
    %348 = vmatpush1.xpose.msra.mxu0 0.0
    %349 = vmatprep.subr.mxu0 0.0
    %350 = vmatpush1.xpose.msra.mxu0 0.0
    %351 = vmatprep.subr.mxu0 0.0
    %352 = vmatpush1.xpose.msra.mxu0 0.0
    %353 = vmatprep.subr.mxu0 0.0
    %354 = vmatpush1.xpose.msra.mxu0 0.0
    %355 = vmatprep.subr.mxu0 0.0
    %356 = vmatpush1.xpose.msra.mxu0 0.0
    %357 = vmatprep.subr.mxu0 0.0
    %358 = vmatpush1.xpose.msra.mxu0 0.0
    %359 = vmatprep.subr.mxu0 0.0
    %360 = vmatpush1.xpose.msra.mxu0 0.0
    %361 = vmatprep.subr.mxu0 0.0
    %362 = vmatpush1.xpose.msra.mxu0 0.0
    %363 = vmatprep.subr.mxu0 0.0
    %364 = vmatpush1.xpose.msra.mxu0 0.0
    %365 = vmatprep.subr.mxu0 0.0
    %366 = vmatpush1.xpose.msra.mxu0 0.0
    %367 = vmatprep.subr.mxu0 0.0
    %368 = vmatpush1.xpose.msra.mxu0 0.0
    %369 = vmatprep.subr.mxu0 0.0
    %370 = vmatpush1.xpose.msra.mxu0 0.0
    %371 = vmatprep.subr.mxu0 0.0
    %372 = vmatpush1.xpose.msra.mxu0 0.0
    %373 = vmatprep.subr.mxu0 0.0
    %374 = vmatpush1.xpose.msra.mxu0 0.0
    %375 = vmatprep.subr.mxu0 0.0
    %376 = vmatpush1.xpose.msra.mxu0 0.0
    %377 = vmatprep.subr.mxu0 0.0
    %378 = vmatpush1.xpose.msra.mxu0 0.0
    %379 = vmatprep.subr.mxu0 0.0
    %380 = vmatpush1.xpose.msra.mxu0 0.0
    %381 = vmatprep.subr.mxu0 0.0
    %382 = vmatpush1.xpose.msra.mxu0 0.0
    %383 = vmatprep.subr.mxu0 0.0
    %384 = vmatpush1.xpose.msra.mxu0 0.0
    %385 = vmatprep.subr.mxu0 0.0
    %386 = vmatpush1.xpose.msra.mxu0 0.0
    %387 = vmatprep.subr.mxu0 0.0
    %388 = vmatpush1.xpose.msra.mxu0 0.0
    %389 = vmatprep.subr.mxu0 0.0
    %390 = vmatpush1.xpose.msra.mxu0 0.0
    %391 = vmatprep.subr.mxu0 0.0
    %392 = vmatpush1.xpose.msra.mxu0 0.0
    %393 = vmatprep.subr.mxu0 0.0
    %394 = vmatpush1.xpose.msra.mxu0 0.0
    %395 = vmatprep.subr.mxu0 0.0
    %396 = vmatpush1.xpose.msra.mxu0 0.0
    %397 = vmatprep.mubr.f32.mxu0 0.0
    %398 = vmatmul.mubr.f32.gmra.mrb[0].mxu0 %v329
    %v399 = vpop.f32.mrb[0].mxu0
    %v400 = vadd.f32 0.0, %v399
    %v401 = vpop.f32.mrb[0].mxu0
    %402 = vdwg.mxu0
    %404 = vrot.lane.b32.xlu0 %v286, 96
    %v405 = vpop.permute.xlu0 %404
    %v406 = vsel %vm328, %v286, 0
    %v408 = vsel %vm328, %v405, 0
    %410 = vmatprep.subr.mxu0 0.0
    %411 = vmatpush1.xpose.msra.mxu0 %v408
    %412 = vmatprep.subr.mxu0 0.0
    %413 = vmatpush1.xpose.msra.mxu0 0.0
    %414 = vmatprep.subr.mxu0 0.0
    %415 = vmatpush1.xpose.msra.mxu0 0.0
    %416 = vmatprep.subr.mxu0 0.0
    %417 = vmatpush1.xpose.msra.mxu0 0.0
    %418 = vmatprep.subr.mxu0 0.0
    %419 = vmatpush1.xpose.msra.mxu0 0.0
    %420 = vmatprep.subr.mxu0 0.0
    %421 = vmatpush1.xpose.msra.mxu0 0.0
    %422 = vmatprep.subr.mxu0 0.0
    %423 = vmatpush1.xpose.msra.mxu0 0.0
    %424 = vmatprep.subr.mxu0 0.0
    %425 = vmatpush1.xpose.msra.mxu0 0.0
    %426 = vmatprep.subr.mxu0 0.0
    %427 = vmatpush1.xpose.msra.mxu0 0.0
    %428 = vmatprep.subr.mxu0 0.0
    %429 = vmatpush1.xpose.msra.mxu0 0.0
    %430 = vmatprep.subr.mxu0 0.0
    %431 = vmatpush1.xpose.msra.mxu0 0.0
    %432 = vmatprep.subr.mxu0 0.0
    %433 = vmatpush1.xpose.msra.mxu0 0.0
    %434 = vmatprep.subr.mxu0 0.0
    %435 = vmatpush1.xpose.msra.mxu0 0.0
    %436 = vmatprep.subr.mxu0 0.0
    %437 = vmatpush1.xpose.msra.mxu0 0.0
    %438 = vmatprep.subr.mxu0 0.0
    %439 = vmatpush1.xpose.msra.mxu0 0.0
    %440 = vmatprep.subr.mxu0 0.0
    %441 = vmatpush1.xpose.msra.mxu0 0.0
    %442 = vmatprep.subr.mxu0 0.0
    %443 = vmatpush1.xpose.msra.mxu0 0.0
    %444 = vmatprep.subr.mxu0 0.0
    %445 = vmatpush1.xpose.msra.mxu0 0.0
    %446 = vmatprep.subr.mxu0 0.0
    %447 = vmatpush1.xpose.msra.mxu0 0.0
    %448 = vmatprep.subr.mxu0 0.0
    %449 = vmatpush1.xpose.msra.mxu0 0.0
    %450 = vmatprep.subr.mxu0 0.0
    %451 = vmatpush1.xpose.msra.mxu0 0.0
    %452 = vmatprep.subr.mxu0 0.0
    %453 = vmatpush1.xpose.msra.mxu0 0.0
    %454 = vmatprep.subr.mxu0 0.0
    %455 = vmatpush1.xpose.msra.mxu0 0.0
    %456 = vmatprep.subr.mxu0 0.0
    %457 = vmatpush1.xpose.msra.mxu0 0.0
    %458 = vmatprep.subr.mxu0 0.0
    %459 = vmatpush1.xpose.msra.mxu0 0.0
    %460 = vmatprep.subr.mxu0 0.0
    %461 = vmatpush1.xpose.msra.mxu0 0.0
    %462 = vmatprep.subr.mxu0 0.0
    %463 = vmatpush1.xpose.msra.mxu0 0.0
    %464 = vmatprep.subr.mxu0 0.0
    %465 = vmatpush1.xpose.msra.mxu0 0.0
    %466 = vmatprep.subr.mxu0 0.0
    %467 = vmatpush1.xpose.msra.mxu0 0.0
    %468 = vmatprep.subr.mxu0 0.0
    %469 = vmatpush1.xpose.msra.mxu0 0.0
    %470 = vmatprep.subr.mxu0 0.0
    %471 = vmatpush1.xpose.msra.mxu0 0.0
    %472 = vmatprep.subr.mxu0 0.0
    %473 = vmatpush1.xpose.msra.mxu0 0.0
    %474 = vmatprep.mubr.f32.mxu0 0.0
    %475 = vmatmul.mubr.f32.gmra.mrb[0].mxu0 %v406
    %v476 = vpop.f32.mrb[0].mxu0
    %v477 = vadd.f32 0.0, %v476
    %v478 = vpop.f32.mrb[0].mxu0
    %479 = vdwg.mxu0
    %481 = vrot.lane.b32.xlu0 %v291, 96
    %v482 = vpop.permute.xlu0 %481
    %v483 = vsel %vm328, %v291, 0
    %v485 = vsel %vm328, %v482, 0
    %487 = vmatprep.subr.mxu0 0.0
    %488 = vmatpush1.xpose.msra.mxu0 %v485
    %489 = vmatprep.subr.mxu0 0.0
    %490 = vmatpush1.xpose.msra.mxu0 0.0
    %491 = vmatprep.subr.mxu0 0.0
    %492 = vmatpush1.xpose.msra.mxu0 0.0
    %493 = vmatprep.subr.mxu0 0.0
    %494 = vmatpush1.xpose.msra.mxu0 0.0
    %495 = vmatprep.subr.mxu0 0.0
    %496 = vmatpush1.xpose.msra.mxu0 0.0
    %497 = vmatprep.subr.mxu0 0.0
    %498 = vmatpush1.xpose.msra.mxu0 0.0
    %499 = vmatprep.subr.mxu0 0.0
    %500 = vmatpush1.xpose.msra.mxu0 0.0
    %501 = vmatprep.subr.mxu0 0.0
    %502 = vmatpush1.xpose.msra.mxu0 0.0
    %503 = vmatprep.subr.mxu0 0.0
    %504 = vmatpush1.xpose.msra.mxu0 0.0
    %505 = vmatprep.subr.mxu0 0.0
    %506 = vmatpush1.xpose.msra.mxu0 0.0
    %507 = vmatprep.subr.mxu0 0.0
    %508 = vmatpush1.xpose.msra.mxu0 0.0
    %509 = vmatprep.subr.mxu0 0.0
    %510 = vmatpush1.xpose.msra.mxu0 0.0
    %511 = vmatprep.subr.mxu0 0.0
    %512 = vmatpush1.xpose.msra.mxu0 0.0
    %513 = vmatprep.subr.mxu0 0.0
    %514 = vmatpush1.xpose.msra.mxu0 0.0
    %515 = vmatprep.subr.mxu0 0.0
    %516 = vmatpush1.xpose.msra.mxu0 0.0
    %517 = vmatprep.subr.mxu0 0.0
    %518 = vmatpush1.xpose.msra.mxu0 0.0
    %519 = vmatprep.subr.mxu0 0.0
    %520 = vmatpush1.xpose.msra.mxu0 0.0
    %521 = vmatprep.subr.mxu0 0.0
    %522 = vmatpush1.xpose.msra.mxu0 0.0
    %523 = vmatprep.subr.mxu0 0.0
    %524 = vmatpush1.xpose.msra.mxu0 0.0
    %525 = vmatprep.subr.mxu0 0.0
    %526 = vmatpush1.xpose.msra.mxu0 0.0
    %527 = vmatprep.subr.mxu0 0.0
    %528 = vmatpush1.xpose.msra.mxu0 0.0
    %529 = vmatprep.subr.mxu0 0.0
    %530 = vmatpush1.xpose.msra.mxu0 0.0
    %531 = vmatprep.subr.mxu0 0.0
    %532 = vmatpush1.xpose.msra.mxu0 0.0
    %533 = vmatprep.subr.mxu0 0.0
    %534 = vmatpush1.xpose.msra.mxu0 0.0
    %535 = vmatprep.subr.mxu0 0.0
    %536 = vmatpush1.xpose.msra.mxu0 0.0
    %537 = vmatprep.subr.mxu0 0.0
    %538 = vmatpush1.xpose.msra.mxu0 0.0
    %539 = vmatprep.subr.mxu0 0.0
    %540 = vmatpush1.xpose.msra.mxu0 0.0
    %541 = vmatprep.subr.mxu0 0.0
    %542 = vmatpush1.xpose.msra.mxu0 0.0
    %543 = vmatprep.subr.mxu0 0.0
    %544 = vmatpush1.xpose.msra.mxu0 0.0
    %545 = vmatprep.subr.mxu0 0.0
    %546 = vmatpush1.xpose.msra.mxu0 0.0
    %547 = vmatprep.subr.mxu0 0.0
    %548 = vmatpush1.xpose.msra.mxu0 0.0
    %549 = vmatprep.subr.mxu0 0.0
    %550 = vmatpush1.xpose.msra.mxu0 0.0
    %551 = vmatprep.mubr.f32.mxu0 0.0
    %552 = vmatmul.mubr.f32.gmra.mrb[0].mxu0 %v483
    %v553 = vpop.f32.mrb[0].mxu0
    %v554 = vadd.f32 0.0, %v553
    %v555 = vpop.f32.mrb[0].mxu0
    %556 = vdwg.mxu0
    %558 = vrot.lane.b32.xlu0 %v296, 96
    %v559 = vpop.permute.xlu0 %558
    %v560 = vsel %vm328, %v296, 0
    %v562 = vsel %vm328, %v559, 0
    %564 = vmatprep.subr.mxu0 0.0
    %565 = vmatpush1.xpose.msra.mxu0 %v562
    %566 = vmatprep.subr.mxu0 0.0
    %567 = vmatpush1.xpose.msra.mxu0 0.0
    %568 = vmatprep.subr.mxu0 0.0
    %569 = vmatpush1.xpose.msra.mxu0 0.0
    %570 = vmatprep.subr.mxu0 0.0
    %571 = vmatpush1.xpose.msra.mxu0 0.0
    %572 = vmatprep.subr.mxu0 0.0
    %573 = vmatpush1.xpose.msra.mxu0 0.0
    %574 = vmatprep.subr.mxu0 0.0
    %575 = vmatpush1.xpose.msra.mxu0 0.0
    %576 = vmatprep.subr.mxu0 0.0
    %577 = vmatpush1.xpose.msra.mxu0 0.0
    %578 = vmatprep.subr.mxu0 0.0
    %579 = vmatpush1.xpose.msra.mxu0 0.0
    %580 = vmatprep.subr.mxu0 0.0
    %581 = vmatpush1.xpose.msra.mxu0 0.0
    %582 = vmatprep.subr.mxu0 0.0
    %583 = vmatpush1.xpose.msra.mxu0 0.0
    %584 = vmatprep.subr.mxu0 0.0
    %585 = vmatpush1.xpose.msra.mxu0 0.0
    %586 = vmatprep.subr.mxu0 0.0
    %587 = vmatpush1.xpose.msra.mxu0 0.0
    %588 = vmatprep.subr.mxu0 0.0
    %589 = vmatpush1.xpose.msra.mxu0 0.0
    %590 = vmatprep.subr.mxu0 0.0
    %591 = vmatpush1.xpose.msra.mxu0 0.0
    %592 = vmatprep.subr.mxu0 0.0
    %593 = vmatpush1.xpose.msra.mxu0 0.0
    %594 = vmatprep.subr.mxu0 0.0
    %595 = vmatpush1.xpose.msra.mxu0 0.0
    %596 = vmatprep.subr.mxu0 0.0
    %597 = vmatpush1.xpose.msra.mxu0 0.0
    %598 = vmatprep.subr.mxu0 0.0
    %599 = vmatpush1.xpose.msra.mxu0 0.0
    %600 = vmatprep.subr.mxu0 0.0
    %601 = vmatpush1.xpose.msra.mxu0 0.0
    %602 = vmatprep.subr.mxu0 0.0
    %603 = vmatpush1.xpose.msra.mxu0 0.0
    %604 = vmatprep.subr.mxu0 0.0
    %605 = vmatpush1.xpose.msra.mxu0 0.0
    %606 = vmatprep.subr.mxu0 0.0
    %607 = vmatpush1.xpose.msra.mxu0 0.0
    %608 = vmatprep.subr.mxu0 0.0
    %609 = vmatpush1.xpose.msra.mxu0 0.0
    %610 = vmatprep.subr.mxu0 0.0
    %611 = vmatpush1.xpose.msra.mxu0 0.0
    %612 = vmatprep.subr.mxu0 0.0
    %613 = vmatpush1.xpose.msra.mxu0 0.0
    %614 = vmatprep.subr.mxu0 0.0
    %615 = vmatpush1.xpose.msra.mxu0 0.0
    %616 = vmatprep.subr.mxu0 0.0
    %617 = vmatpush1.xpose.msra.mxu0 0.0
    %618 = vmatprep.subr.mxu0 0.0
    %619 = vmatpush1.xpose.msra.mxu0 0.0
    %620 = vmatprep.subr.mxu0 0.0
    %621 = vmatpush1.xpose.msra.mxu0 0.0
    %622 = vmatprep.subr.mxu0 0.0
    %623 = vmatpush1.xpose.msra.mxu0 0.0
    %624 = vmatprep.subr.mxu0 0.0
    %625 = vmatpush1.xpose.msra.mxu0 0.0
    %626 = vmatprep.subr.mxu0 0.0
    %627 = vmatpush1.xpose.msra.mxu0 0.0
    %628 = vmatprep.mubr.f32.mxu0 0.0
    %629 = vmatmul.mubr.f32.gmra.mrb[0].mxu0 %v560
    %v630 = vpop.f32.mrb[0].mxu0
    %v631 = vadd.f32 0.0, %v630
    %v632 = vpop.f32.mrb[0].mxu0
    %633 = vdwg.mxu0
    %635 = vrot.lane.b32.xlu0 %v301, 96
    %v636 = vpop.permute.xlu0 %635
    %v637 = vsel %vm328, %v301, 0
    %v639 = vsel %vm328, %v636, 0
    %641 = vmatprep.subr.mxu0 0.0
    %642 = vmatpush1.xpose.msra.mxu0 %v639
    %643 = vmatprep.subr.mxu0 0.0
    %644 = vmatpush1.xpose.msra.mxu0 0.0
    %645 = vmatprep.subr.mxu0 0.0
    %646 = vmatpush1.xpose.msra.mxu0 0.0
    %647 = vmatprep.subr.mxu0 0.0
    %648 = vmatpush1.xpose.msra.mxu0 0.0
    %649 = vmatprep.subr.mxu0 0.0
    %650 = vmatpush1.xpose.msra.mxu0 0.0
    %651 = vmatprep.subr.mxu0 0.0
    %652 = vmatpush1.xpose.msra.mxu0 0.0
    %653 = vmatprep.subr.mxu0 0.0
    %654 = vmatpush1.xpose.msra.mxu0 0.0
    %655 = vmatprep.subr.mxu0 0.0
    %656 = vmatpush1.xpose.msra.mxu0 0.0
    %657 = vmatprep.subr.mxu0 0.0
    %658 = vmatpush1.xpose.msra.mxu0 0.0
    %659 = vmatprep.subr.mxu0 0.0
    %660 = vmatpush1.xpose.msra.mxu0 0.0
    %661 = vmatprep.subr.mxu0 0.0
    %662 = vmatpush1.xpose.msra.mxu0 0.0
    %663 = vmatprep.subr.mxu0 0.0
    %664 = vmatpush1.xpose.msra.mxu0 0.0
    %665 = vmatprep.subr.mxu0 0.0
    %666 = vmatpush1.xpose.msra.mxu0 0.0
    %667 = vmatprep.subr.mxu0 0.0
    %668 = vmatpush1.xpose.msra.mxu0 0.0
    %669 = vmatprep.subr.mxu0 0.0
    %670 = vmatpush1.xpose.msra.mxu0 0.0
    %671 = vmatprep.subr.mxu0 0.0
    %672 = vmatpush1.xpose.msra.mxu0 0.0
    %673 = vmatprep.subr.mxu0 0.0
    %674 = vmatpush1.xpose.msra.mxu0 0.0
    %675 = vmatprep.subr.mxu0 0.0
    %676 = vmatpush1.xpose.msra.mxu0 0.0
    %677 = vmatprep.subr.mxu0 0.0
    %678 = vmatpush1.xpose.msra.mxu0 0.0
    %679 = vmatprep.subr.mxu0 0.0
    %680 = vmatpush1.xpose.msra.mxu0 0.0
    %681 = vmatprep.subr.mxu0 0.0
    %682 = vmatpush1.xpose.msra.mxu0 0.0
    %683 = vmatprep.subr.mxu0 0.0
    %684 = vmatpush1.xpose.msra.mxu0 0.0
    %685 = vmatprep.subr.mxu0 0.0
    %686 = vmatpush1.xpose.msra.mxu0 0.0
    %687 = vmatprep.subr.mxu0 0.0
    %688 = vmatpush1.xpose.msra.mxu0 0.0
    %689 = vmatprep.subr.mxu0 0.0
    %690 = vmatpush1.xpose.msra.mxu0 0.0
    %691 = vmatprep.subr.mxu0 0.0
    %692 = vmatpush1.xpose.msra.mxu0 0.0
    %693 = vmatprep.subr.mxu0 0.0
    %694 = vmatpush1.xpose.msra.mxu0 0.0
    %695 = vmatprep.subr.mxu0 0.0
    %696 = vmatpush1.xpose.msra.mxu0 0.0
    %697 = vmatprep.subr.mxu0 0.0
    %698 = vmatpush1.xpose.msra.mxu0 0.0
    %699 = vmatprep.subr.mxu0 0.0
    %700 = vmatpush1.xpose.msra.mxu0 0.0
    %701 = vmatprep.subr.mxu0 0.0
    %702 = vmatpush1.xpose.msra.mxu0 0.0
    %703 = vmatprep.subr.mxu0 0.0
    %704 = vmatpush1.xpose.msra.mxu0 0.0
    %705 = vmatprep.mubr.f32.mxu0 0.0
    %706 = vmatmul.mubr.f32.gmra.mrb[0].mxu0 %v637
    %v707 = vpop.f32.mrb[0].mxu0
    %v708 = vadd.f32 0.0, %v707
    %v709 = vpop.f32.mrb[0].mxu0
    %710 = vdwg.mxu0
    %712 = vrot.lane.b32.xlu0 %v306, 96
    %v713 = vpop.permute.xlu0 %712
    %v714 = vsel %vm328, %v306, 0
    %v716 = vsel %vm328, %v713, 0
    %718 = vmatprep.subr.mxu0 0.0
    %719 = vmatpush1.xpose.msra.mxu0 %v716
    %720 = vmatprep.subr.mxu0 0.0
    %721 = vmatpush1.xpose.msra.mxu0 0.0
    %722 = vmatprep.subr.mxu0 0.0
    %723 = vmatpush1.xpose.msra.mxu0 0.0
    %724 = vmatprep.subr.mxu0 0.0
    %725 = vmatpush1.xpose.msra.mxu0 0.0
    %726 = vmatprep.subr.mxu0 0.0
    %727 = vmatpush1.xpose.msra.mxu0 0.0
    %728 = vmatprep.subr.mxu0 0.0
    %729 = vmatpush1.xpose.msra.mxu0 0.0
    %730 = vmatprep.subr.mxu0 0.0
    %731 = vmatpush1.xpose.msra.mxu0 0.0
    %732 = vmatprep.subr.mxu0 0.0
    %733 = vmatpush1.xpose.msra.mxu0 0.0
    %734 = vmatprep.subr.mxu0 0.0
    %735 = vmatpush1.xpose.msra.mxu0 0.0
    %736 = vmatprep.subr.mxu0 0.0
    %737 = vmatpush1.xpose.msra.mxu0 0.0
    %738 = vmatprep.subr.mxu0 0.0
    %739 = vmatpush1.xpose.msra.mxu0 0.0
    %740 = vmatprep.subr.mxu0 0.0
    %741 = vmatpush1.xpose.msra.mxu0 0.0
    %742 = vmatprep.subr.mxu0 0.0
    %743 = vmatpush1.xpose.msra.mxu0 0.0
    %744 = vmatprep.subr.mxu0 0.0
    %745 = vmatpush1.xpose.msra.mxu0 0.0
    %746 = vmatprep.subr.mxu0 0.0
    %747 = vmatpush1.xpose.msra.mxu0 0.0
    %748 = vmatprep.subr.mxu0 0.0
    %749 = vmatpush1.xpose.msra.mxu0 0.0
    %750 = vmatprep.subr.mxu0 0.0
    %751 = vmatpush1.xpose.msra.mxu0 0.0
    %752 = vmatprep.subr.mxu0 0.0
    %753 = vmatpush1.xpose.msra.mxu0 0.0
    %754 = vmatprep.subr.mxu0 0.0
    %755 = vmatpush1.xpose.msra.mxu0 0.0
    %756 = vmatprep.subr.mxu0 0.0
    %757 = vmatpush1.xpose.msra.mxu0 0.0
    %758 = vmatprep.subr.mxu0 0.0
    %759 = vmatpush1.xpose.msra.mxu0 0.0
    %760 = vmatprep.subr.mxu0 0.0
    %761 = vmatpush1.xpose.msra.mxu0 0.0
    %762 = vmatprep.subr.mxu0 0.0
    %763 = vmatpush1.xpose.msra.mxu0 0.0
    %764 = vmatprep.subr.mxu0 0.0
    %765 = vmatpush1.xpose.msra.mxu0 0.0
    %766 = vmatprep.subr.mxu0 0.0
    %767 = vmatpush1.xpose.msra.mxu0 0.0
    %768 = vmatprep.subr.mxu0 0.0
    %769 = vmatpush1.xpose.msra.mxu0 0.0
    %770 = vmatprep.subr.mxu0 0.0
    %771 = vmatpush1.xpose.msra.mxu0 0.0
    %772 = vmatprep.subr.mxu0 0.0
    %773 = vmatpush1.xpose.msra.mxu0 0.0
    %774 = vmatprep.subr.mxu0 0.0
    %775 = vmatpush1.xpose.msra.mxu0 0.0
    %776 = vmatprep.subr.mxu0 0.0
    %777 = vmatpush1.xpose.msra.mxu0 0.0
    %778 = vmatprep.subr.mxu0 0.0
    %779 = vmatpush1.xpose.msra.mxu0 0.0
    %780 = vmatprep.subr.mxu0 0.0
    %781 = vmatpush1.xpose.msra.mxu0 0.0
    %782 = vmatprep.mubr.f32.mxu0 0.0
    %783 = vmatmul.mubr.f32.gmra.mrb[0].mxu0 %v714
    %v784 = vpop.f32.mrb[0].mxu0
    %v785 = vadd.f32 0.0, %v784
    %v786 = vpop.f32.mrb[0].mxu0
    %787 = vdwg.mxu0
    %789 = vrot.lane.b32.xlu0 %v311, 96
    %v790 = vpop.permute.xlu0 %789
    %v791 = vsel %vm328, %v311, 0
    %v793 = vsel %vm328, %v790, 0
    %795 = vmatprep.subr.mxu0 0.0
    %796 = vmatpush1.xpose.msra.mxu0 %v793
    %797 = vmatprep.subr.mxu0 0.0
    %798 = vmatpush1.xpose.msra.mxu0 0.0
    %799 = vmatprep.subr.mxu0 0.0
    %800 = vmatpush1.xpose.msra.mxu0 0.0
    %801 = vmatprep.subr.mxu0 0.0
    %802 = vmatpush1.xpose.msra.mxu0 0.0
    %803 = vmatprep.subr.mxu0 0.0
    %804 = vmatpush1.xpose.msra.mxu0 0.0
    %805 = vmatprep.subr.mxu0 0.0
    %806 = vmatpush1.xpose.msra.mxu0 0.0
    %807 = vmatprep.subr.mxu0 0.0
    %808 = vmatpush1.xpose.msra.mxu0 0.0
    %809 = vmatprep.subr.mxu0 0.0
    %810 = vmatpush1.xpose.msra.mxu0 0.0
    %811 = vmatprep.subr.mxu0 0.0
    %812 = vmatpush1.xpose.msra.mxu0 0.0
    %813 = vmatprep.subr.mxu0 0.0
    %814 = vmatpush1.xpose.msra.mxu0 0.0
    %815 = vmatprep.subr.mxu0 0.0
    %816 = vmatpush1.xpose.msra.mxu0 0.0
    %817 = vmatprep.subr.mxu0 0.0
    %818 = vmatpush1.xpose.msra.mxu0 0.0
    %819 = vmatprep.subr.mxu0 0.0
    %820 = vmatpush1.xpose.msra.mxu0 0.0
    %821 = vmatprep.subr.mxu0 0.0
    %822 = vmatpush1.xpose.msra.mxu0 0.0
    %823 = vmatprep.subr.mxu0 0.0
    %824 = vmatpush1.xpose.msra.mxu0 0.0
    %825 = vmatprep.subr.mxu0 0.0
    %826 = vmatpush1.xpose.msra.mxu0 0.0
    %827 = vmatprep.subr.mxu0 0.0
    %828 = vmatpush1.xpose.msra.mxu0 0.0
    %829 = vmatprep.subr.mxu0 0.0
    %830 = vmatpush1.xpose.msra.mxu0 0.0
    %831 = vmatprep.subr.mxu0 0.0
    %832 = vmatpush1.xpose.msra.mxu0 0.0
    %833 = vmatprep.subr.mxu0 0.0
    %834 = vmatpush1.xpose.msra.mxu0 0.0
    %835 = vmatprep.subr.mxu0 0.0
    %836 = vmatpush1.xpose.msra.mxu0 0.0
    %837 = vmatprep.subr.mxu0 0.0
    %838 = vmatpush1.xpose.msra.mxu0 0.0
    %839 = vmatprep.subr.mxu0 0.0
    %840 = vmatpush1.xpose.msra.mxu0 0.0
    %841 = vmatprep.subr.mxu0 0.0
    %842 = vmatpush1.xpose.msra.mxu0 0.0
    %843 = vmatprep.subr.mxu0 0.0
    %844 = vmatpush1.xpose.msra.mxu0 0.0
    %845 = vmatprep.subr.mxu0 0.0
    %846 = vmatpush1.xpose.msra.mxu0 0.0
    %847 = vmatprep.subr.mxu0 0.0
    %848 = vmatpush1.xpose.msra.mxu0 0.0
    %849 = vmatprep.subr.mxu0 0.0
    %850 = vmatpush1.xpose.msra.mxu0 0.0
    %851 = vmatprep.subr.mxu0 0.0
    %852 = vmatpush1.xpose.msra.mxu0 0.0
    %853 = vmatprep.subr.mxu0 0.0
    %854 = vmatpush1.xpose.msra.mxu0 0.0
    %855 = vmatprep.subr.mxu0 0.0
    %856 = vmatpush1.xpose.msra.mxu0 0.0
    %857 = vmatprep.subr.mxu0 0.0
    %858 = vmatpush1.xpose.msra.mxu0 0.0
    %859 = vmatprep.mubr.f32.mxu0 0.0
    %860 = vmatmul.mubr.f32.gmra.mrb[0].mxu0 %v791
    %v861 = vpop.f32.mrb[0].mxu0
    %v862 = vadd.f32 0.0, %v861
    %v863 = vpop.f32.mrb[0].mxu0
    %864 = vdwg.mxu0
    %866 = vrot.lane.b32.xlu0 %v316, 96
    %v867 = vpop.permute.xlu0 %866
    %v868 = vsel %vm328, %v316, 0
    %v870 = vsel %vm328, %v867, 0
    %872 = vmatprep.subr.mxu0 0.0
    %873 = vmatpush1.xpose.msra.mxu0 %v870
    %874 = vmatprep.subr.mxu0 0.0
    %875 = vmatpush1.xpose.msra.mxu0 0.0
    %876 = vmatprep.subr.mxu0 0.0
    %877 = vmatpush1.xpose.msra.mxu0 0.0
    %878 = vmatprep.subr.mxu0 0.0
    %879 = vmatpush1.xpose.msra.mxu0 0.0
    %880 = vmatprep.subr.mxu0 0.0
    %881 = vmatpush1.xpose.msra.mxu0 0.0
    %882 = vmatprep.subr.mxu0 0.0
    %883 = vmatpush1.xpose.msra.mxu0 0.0
    %884 = vmatprep.subr.mxu0 0.0
    %885 = vmatpush1.xpose.msra.mxu0 0.0
    %886 = vmatprep.subr.mxu0 0.0
    %887 = vmatpush1.xpose.msra.mxu0 0.0
    %888 = vmatprep.subr.mxu0 0.0
    %889 = vmatpush1.xpose.msra.mxu0 0.0
    %890 = vmatprep.subr.mxu0 0.0
    %891 = vmatpush1.xpose.msra.mxu0 0.0
    %892 = vmatprep.subr.mxu0 0.0
    %893 = vmatpush1.xpose.msra.mxu0 0.0
    %894 = vmatprep.subr.mxu0 0.0
    %895 = vmatpush1.xpose.msra.mxu0 0.0
    %896 = vmatprep.subr.mxu0 0.0
    %897 = vmatpush1.xpose.msra.mxu0 0.0
    %898 = vmatprep.subr.mxu0 0.0
    %899 = vmatpush1.xpose.msra.mxu0 0.0
    %900 = vmatprep.subr.mxu0 0.0
    %901 = vmatpush1.xpose.msra.mxu0 0.0
    %902 = vmatprep.subr.mxu0 0.0
    %903 = vmatpush1.xpose.msra.mxu0 0.0
    %904 = vmatprep.subr.mxu0 0.0
    %905 = vmatpush1.xpose.msra.mxu0 0.0
    %906 = vmatprep.subr.mxu0 0.0
    %907 = vmatpush1.xpose.msra.mxu0 0.0
    %908 = vmatprep.subr.mxu0 0.0
    %909 = vmatpush1.xpose.msra.mxu0 0.0
    %910 = vmatprep.subr.mxu0 0.0
    %911 = vmatpush1.xpose.msra.mxu0 0.0
    %912 = vmatprep.subr.mxu0 0.0
    %913 = vmatpush1.xpose.msra.mxu0 0.0
    %914 = vmatprep.subr.mxu0 0.0
    %915 = vmatpush1.xpose.msra.mxu0 0.0
    %916 = vmatprep.subr.mxu0 0.0
    %917 = vmatpush1.xpose.msra.mxu0 0.0
    %918 = vmatprep.subr.mxu0 0.0
    %919 = vmatpush1.xpose.msra.mxu0 0.0
    %920 = vmatprep.subr.mxu0 0.0
    %921 = vmatpush1.xpose.msra.mxu0 0.0
    %922 = vmatprep.subr.mxu0 0.0
    %923 = vmatpush1.xpose.msra.mxu0 0.0
    %924 = vmatprep.subr.mxu0 0.0
    %925 = vmatpush1.xpose.msra.mxu0 0.0
    %926 = vmatprep.subr.mxu0 0.0
    %927 = vmatpush1.xpose.msra.mxu0 0.0
    %928 = vmatprep.subr.mxu0 0.0
    %929 = vmatpush1.xpose.msra.mxu0 0.0
    %930 = vmatprep.subr.mxu0 0.0
    %931 = vmatpush1.xpose.msra.mxu0 0.0
    %932 = vmatprep.subr.mxu0 0.0
    %933 = vmatpush1.xpose.msra.mxu0 0.0
    %934 = vmatprep.subr.mxu0 0.0
    %935 = vmatpush1.xpose.msra.mxu0 0.0
    %936 = vmatprep.mubr.f32.mxu0 0.0
    %937 = vmatmul.mubr.f32.gmra.mrb[0].mxu0 %v868
    %v938 = vpop.f32.mrb[0].mxu0
    %v939 = vadd.f32 0.0, %v938
    %v940 = vpop.f32.mrb[0].mxu0
    %941 = vdwg.mxu0
    %v942 = vmul.f32 %v400, 0.17677669
    %v943 = vmul.f32 %v477, 0.17677669
    %v944 = vmul.f32 %v554, 0.17677669
    %v945 = vmul.f32 %v631, 0.17677669
    %v946 = vmul.f32 %v708, 0.17677669
    %v947 = vmul.f32 %v785, 0.17677669
    %v948 = vmul.f32 %v862, 0.17677669
    %v949 = vmul.f32 %v939, 0.17677669
    %v950 = vadd.f32 %v942, %v324
    %v951 = vadd.f32 %v943, %v324
    %v952 = vadd.f32 %v944, %v324
    %v953 = vadd.f32 %v945, %v324
    %v954 = vadd.f32 %v946, %v324
    %v955 = vadd.f32 %v947, %v324
    %v956 = vadd.f32 %v948, %v324
    %v957 = vadd.f32 %v949, %v324
    %v958 = vsel %vm328, %v950, -inf
    %959 = vmax.xlane.f32.xlu0 %v958
    %v960 = vpop.xlane.xlu0 %959
    %v961 = vsel %vm328, %v951, -inf
    %962 = vmax.xlane.f32.xlu0 %v961
    %v963 = vpop.xlane.xlu0 %962
    %v964 = vsel %vm328, %v952, -inf
    %965 = vmax.xlane.f32.xlu0 %v964
    %v966 = vpop.xlane.xlu0 %965
    %v967 = vsel %vm328, %v953, -inf
    %968 = vmax.xlane.f32.xlu0 %v967
    %v969 = vpop.xlane.xlu0 %968
    %v970 = vsel %vm328, %v954, -inf
    %971 = vmax.xlane.f32.xlu0 %v970
    %v972 = vpop.xlane.xlu0 %971
    %v973 = vsel %vm328, %v955, -inf
    %974 = vmax.xlane.f32.xlu0 %v973
    %v975 = vpop.xlane.xlu0 %974
    %v976 = vsel %vm328, %v956, -inf
    %977 = vmax.xlane.f32.xlu0 %v976
    %v978 = vpop.xlane.xlu0 %977
    %v979 = vsel %vm328, %v957, -inf
    %980 = vmax.xlane.f32.xlu0 %v979
    %v981 = vpop.xlane.xlu0 %980
    %v982 = vsub.f32 %v950, %v960
    %v983 = vsub.f32 %v951, %v963
    %v984 = vsub.f32 %v952, %v966
    %v985 = vsub.f32 %v953, %v969
    %v986 = vsub.f32 %v954, %v972
    %v987 = vsub.f32 %v955, %v975
    %v988 = vsub.f32 %v956, %v978
    %v989 = vsub.f32 %v957, %v981
    %v990 = vmul.f32 %v982, 1.442695
    %v991 = vpow.pop %v990
    %v992 = vmul.f32 %v983, 1.442695
    %v993 = vpow.pop %v992
    %v994 = vmul.f32 %v984, 1.442695
    %v995 = vpow.pop %v994
    %v996 = vmul.f32 %v985, 1.442695
    %v997 = vpow.pop %v996
    %v998 = vmul.f32 %v986, 1.442695
    %v999 = vpow.pop %v998
    %v1000 = vmul.f32 %v987, 1.442695
    %v1001 = vpow.pop %v1000
    %v1002 = vmul.f32 %v988, 1.442695
    %v1003 = vpow.pop %v1002
    %v1004 = vmul.f32 %v989, 1.442695
    %v1005 = vpow.pop %v1004
    %v1006 = vsel %vm328, %v991, 0.0
    %1007 = vadd.xlane.f32.xlu0 %v1006
    %v1008 = vpop.xlane.xlu0 %1007
    %v1009 = vsel %vm328, %v993, 0.0
    %1010 = vadd.xlane.f32.xlu0 %v1009
    %v1011 = vpop.xlane.xlu0 %1010
    %v1012 = vsel %vm328, %v995, 0.0
    %1013 = vadd.xlane.f32.xlu0 %v1012
    %v1014 = vpop.xlane.xlu0 %1013
    %v1015 = vsel %vm328, %v997, 0.0
    %1016 = vadd.xlane.f32.xlu0 %v1015
    %v1017 = vpop.xlane.xlu0 %1016
    %v1018 = vsel %vm328, %v999, 0.0
    %1019 = vadd.xlane.f32.xlu0 %v1018
    %v1020 = vpop.xlane.xlu0 %1019
    %v1021 = vsel %vm328, %v1001, 0.0
    %1022 = vadd.xlane.f32.xlu0 %v1021
    %v1023 = vpop.xlane.xlu0 %1022
    %v1024 = vsel %vm328, %v1003, 0.0
    %1025 = vadd.xlane.f32.xlu0 %v1024
    %v1026 = vpop.xlane.xlu0 %1025
    %v1027 = vsel %vm328, %v1005, 0.0
    %1028 = vadd.xlane.f32.xlu0 %v1027
    %v1029 = vpop.xlane.xlu0 %1028
    %v1030 = vrcp.pop %v1008
    %v1031 = vrcp.pop %v1011
    %v1032 = vrcp.pop %v1014
    %v1033 = vrcp.pop %v1017
    %v1034 = vrcp.pop %v1020
    %v1035 = vrcp.pop %v1023
    %v1036 = vrcp.pop %v1026
    %v1037 = vrcp.pop %v1029
    %v1038 = vmul.f32 %v991, %v1030
    %v1039 = vmul.f32 %v993, %v1031
    %v1040 = vmul.f32 %v995, %v1032
    %v1041 = vmul.f32 %v997, %v1033
    %v1042 = vmul.f32 %v999, %v1034
    %v1043 = vmul.f32 %v1001, %v1035
    %v1044 = vmul.f32 %v1003, %v1036
    %v1045 = vmul.f32 %v1005, %v1037
    %1046 = vrot.lane.b32.xlu0 %v281, 64
    %v1047 = vpop.permute.xlu0 %1046
    %v1050 = vsel %vm328, %v1038, 0
    %1052 = vmatprep.subr.mxu0 0.0
    %1053 = vmatpush1.msra.mxu0 %v1047
    %1054 = vmatprep.subr.mxu0 0.0
    %1055 = vmatpush1.msra.mxu0 0.0
    %1056 = vmatprep.subr.mxu0 0.0
    %1057 = vmatpush1.msra.mxu0 0.0
    %1058 = vmatprep.subr.mxu0 0.0
    %1059 = vmatpush1.msra.mxu0 0.0
    %1060 = vmatprep.subr.mxu0 0.0
    %1061 = vmatpush1.msra.mxu0 0.0
    %1062 = vmatprep.subr.mxu0 0.0
    %1063 = vmatpush1.msra.mxu0 0.0
    %1064 = vmatprep.subr.mxu0 0.0
    %1065 = vmatpush1.msra.mxu0 0.0
    %1066 = vmatprep.subr.mxu0 0.0
    %1067 = vmatpush1.msra.mxu0 0.0
    %1068 = vmatprep.subr.mxu0 0.0
    %1069 = vmatpush1.msra.mxu0 0.0
    %1070 = vmatprep.subr.mxu0 0.0
    %1071 = vmatpush1.msra.mxu0 0.0
    %1072 = vmatprep.subr.mxu0 0.0
    %1073 = vmatpush1.msra.mxu0 0.0
    %1074 = vmatprep.subr.mxu0 0.0
    %1075 = vmatpush1.msra.mxu0 0.0
    %1076 = vmatprep.subr.mxu0 0.0
    %1077 = vmatpush1.msra.mxu0 0.0
    %1078 = vmatprep.subr.mxu0 0.0
    %1079 = vmatpush1.msra.mxu0 0.0
    %1080 = vmatprep.subr.mxu0 0.0
    %1081 = vmatpush1.msra.mxu0 0.0
    %1082 = vmatprep.subr.mxu0 0.0
    %1083 = vmatpush1.msra.mxu0 0.0
    %1084 = vmatprep.subr.mxu0 0.0
    %1085 = vmatpush1.msra.mxu0 0.0
    %1086 = vmatprep.subr.mxu0 0.0
    %1087 = vmatpush1.msra.mxu0 0.0
    %1088 = vmatprep.subr.mxu0 0.0
    %1089 = vmatpush1.msra.mxu0 0.0
    %1090 = vmatprep.subr.mxu0 0.0
    %1091 = vmatpush1.msra.mxu0 0.0
    %1092 = vmatprep.subr.mxu0 0.0
    %1093 = vmatpush1.msra.mxu0 0.0
    %1094 = vmatprep.subr.mxu0 0.0
    %1095 = vmatpush1.msra.mxu0 0.0
    %1096 = vmatprep.subr.mxu0 0.0
    %1097 = vmatpush1.msra.mxu0 0.0
    %1098 = vmatprep.subr.mxu0 0.0
    %1099 = vmatpush1.msra.mxu0 0.0
    %1100 = vmatprep.subr.mxu0 0.0
    %1101 = vmatpush1.msra.mxu0 0.0
    %1102 = vmatprep.subr.mxu0 0.0
    %1103 = vmatpush1.msra.mxu0 0.0
    %1104 = vmatprep.subr.mxu0 0.0
    %1105 = vmatpush1.msra.mxu0 0.0
    %1106 = vmatprep.subr.mxu0 0.0
    %1107 = vmatpush1.msra.mxu0 0.0
    %1108 = vmatprep.subr.mxu0 0.0
    %1109 = vmatpush1.msra.mxu0 0.0
    %1110 = vmatprep.subr.mxu0 0.0
    %1111 = vmatpush1.msra.mxu0 0.0
    %1112 = vmatprep.subr.mxu0 0.0
    %1113 = vmatpush1.msra.mxu0 0.0
    %1114 = vmatprep.subr.mxu0 0.0
    %1115 = vmatpush1.msra.mxu0 0.0
    %1116 = vmatprep.mubr.f32.mxu0 0.0
    %1117 = vmatmul.mubr.f32.gmra.mrb[0].mxu0 %v1050
    %v1118 = vpop.f32.mrb[0].mxu0
    %v1119 = vadd.f32 0.0, %v1118
    %v1120 = vpop.f32.mrb[0].mxu0
    %1121 = vdwg.mxu0
    %1122 = vrot.lane.b32.xlu0 %v286, 64
    %v1123 = vpop.permute.xlu0 %1122
    %v1126 = vsel %vm328, %v1039, 0
    %1128 = vmatprep.subr.mxu0 0.0
    %1129 = vmatpush1.msra.mxu0 %v1123
    %1130 = vmatprep.subr.mxu0 0.0
    %1131 = vmatpush1.msra.mxu0 0.0
    %1132 = vmatprep.subr.mxu0 0.0
    %1133 = vmatpush1.msra.mxu0 0.0
    %1134 = vmatprep.subr.mxu0 0.0
    %1135 = vmatpush1.msra.mxu0 0.0
    %1136 = vmatprep.subr.mxu0 0.0
    %1137 = vmatpush1.msra.mxu0 0.0
    %1138 = vmatprep.subr.mxu0 0.0
    %1139 = vmatpush1.msra.mxu0 0.0
    %1140 = vmatprep.subr.mxu0 0.0
    %1141 = vmatpush1.msra.mxu0 0.0
    %1142 = vmatprep.subr.mxu0 0.0
    %1143 = vmatpush1.msra.mxu0 0.0
    %1144 = vmatprep.subr.mxu0 0.0
    %1145 = vmatpush1.msra.mxu0 0.0
    %1146 = vmatprep.subr.mxu0 0.0
    %1147 = vmatpush1.msra.mxu0 0.0
    %1148 = vmatprep.subr.mxu0 0.0
    %1149 = vmatpush1.msra.mxu0 0.0
    %1150 = vmatprep.subr.mxu0 0.0
    %1151 = vmatpush1.msra.mxu0 0.0
    %1152 = vmatprep.subr.mxu0 0.0
    %1153 = vmatpush1.msra.mxu0 0.0
    %1154 = vmatprep.subr.mxu0 0.0
    %1155 = vmatpush1.msra.mxu0 0.0
    %1156 = vmatprep.subr.mxu0 0.0
    %1157 = vmatpush1.msra.mxu0 0.0
    %1158 = vmatprep.subr.mxu0 0.0
    %1159 = vmatpush1.msra.mxu0 0.0
    %1160 = vmatprep.subr.mxu0 0.0
    %1161 = vmatpush1.msra.mxu0 0.0
    %1162 = vmatprep.subr.mxu0 0.0
    %1163 = vmatpush1.msra.mxu0 0.0
    %1164 = vmatprep.subr.mxu0 0.0
    %1165 = vmatpush1.msra.mxu0 0.0
    %1166 = vmatprep.subr.mxu0 0.0
    %1167 = vmatpush1.msra.mxu0 0.0
    %1168 = vmatprep.subr.mxu0 0.0
    %1169 = vmatpush1.msra.mxu0 0.0
    %1170 = vmatprep.subr.mxu0 0.0
    %1171 = vmatpush1.msra.mxu0 0.0
    %1172 = vmatprep.subr.mxu0 0.0
    %1173 = vmatpush1.msra.mxu0 0.0
    %1174 = vmatprep.subr.mxu0 0.0
    %1175 = vmatpush1.msra.mxu0 0.0
    %1176 = vmatprep.subr.mxu0 0.0
    %1177 = vmatpush1.msra.mxu0 0.0
    %1178 = vmatprep.subr.mxu0 0.0
    %1179 = vmatpush1.msra.mxu0 0.0
    %1180 = vmatprep.subr.mxu0 0.0
    %1181 = vmatpush1.msra.mxu0 0.0
    %1182 = vmatprep.subr.mxu0 0.0
    %1183 = vmatpush1.msra.mxu0 0.0
    %1184 = vmatprep.subr.mxu0 0.0
    %1185 = vmatpush1.msra.mxu0 0.0
    %1186 = vmatprep.subr.mxu0 0.0
    %1187 = vmatpush1.msra.mxu0 0.0
    %1188 = vmatprep.subr.mxu0 0.0
    %1189 = vmatpush1.msra.mxu0 0.0
    %1190 = vmatprep.subr.mxu0 0.0
    %1191 = vmatpush1.msra.mxu0 0.0
    %1192 = vmatprep.mubr.f32.mxu0 0.0
    %1193 = vmatmul.mubr.f32.gmra.mrb[0].mxu0 %v1126
    %v1194 = vpop.f32.mrb[0].mxu0
    %v1195 = vadd.f32 0.0, %v1194
    %v1196 = vpop.f32.mrb[0].mxu0
    %1197 = vdwg.mxu0
    %1198 = vrot.lane.b32.xlu0 %v291, 64
    %v1199 = vpop.permute.xlu0 %1198
    %v1202 = vsel %vm328, %v1040, 0
    %1204 = vmatprep.subr.mxu0 0.0
    %1205 = vmatpush1.msra.mxu0 %v1199
    %1206 = vmatprep.subr.mxu0 0.0
    %1207 = vmatpush1.msra.mxu0 0.0
    %1208 = vmatprep.subr.mxu0 0.0
    %1209 = vmatpush1.msra.mxu0 0.0
    %1210 = vmatprep.subr.mxu0 0.0
    %1211 = vmatpush1.msra.mxu0 0.0
    %1212 = vmatprep.subr.mxu0 0.0
    %1213 = vmatpush1.msra.mxu0 0.0
    %1214 = vmatprep.subr.mxu0 0.0
    %1215 = vmatpush1.msra.mxu0 0.0
    %1216 = vmatprep.subr.mxu0 0.0
    %1217 = vmatpush1.msra.mxu0 0.0
    %1218 = vmatprep.subr.mxu0 0.0
    %1219 = vmatpush1.msra.mxu0 0.0
    %1220 = vmatprep.subr.mxu0 0.0
    %1221 = vmatpush1.msra.mxu0 0.0
    %1222 = vmatprep.subr.mxu0 0.0
    %1223 = vmatpush1.msra.mxu0 0.0
    %1224 = vmatprep.subr.mxu0 0.0
    %1225 = vmatpush1.msra.mxu0 0.0
    %1226 = vmatprep.subr.mxu0 0.0
    %1227 = vmatpush1.msra.mxu0 0.0
    %1228 = vmatprep.subr.mxu0 0.0
    %1229 = vmatpush1.msra.mxu0 0.0
    %1230 = vmatprep.subr.mxu0 0.0
    %1231 = vmatpush1.msra.mxu0 0.0
    %1232 = vmatprep.subr.mxu0 0.0
    %1233 = vmatpush1.msra.mxu0 0.0
    %1234 = vmatprep.subr.mxu0 0.0
    %1235 = vmatpush1.msra.mxu0 0.0
    %1236 = vmatprep.subr.mxu0 0.0
    %1237 = vmatpush1.msra.mxu0 0.0
    %1238 = vmatprep.subr.mxu0 0.0
    %1239 = vmatpush1.msra.mxu0 0.0
    %1240 = vmatprep.subr.mxu0 0.0
    %1241 = vmatpush1.msra.mxu0 0.0
    %1242 = vmatprep.subr.mxu0 0.0
    %1243 = vmatpush1.msra.mxu0 0.0
    %1244 = vmatprep.subr.mxu0 0.0
    %1245 = vmatpush1.msra.mxu0 0.0
    %1246 = vmatprep.subr.mxu0 0.0
    %1247 = vmatpush1.msra.mxu0 0.0
    %1248 = vmatprep.subr.mxu0 0.0
    %1249 = vmatpush1.msra.mxu0 0.0
    %1250 = vmatprep.subr.mxu0 0.0
    %1251 = vmatpush1.msra.mxu0 0.0
    %1252 = vmatprep.subr.mxu0 0.0
    %1253 = vmatpush1.msra.mxu0 0.0
    %1254 = vmatprep.subr.mxu0 0.0
    %1255 = vmatpush1.msra.mxu0 0.0
    %1256 = vmatprep.subr.mxu0 0.0
    %1257 = vmatpush1.msra.mxu0 0.0
    %1258 = vmatprep.subr.mxu0 0.0
    %1259 = vmatpush1.msra.mxu0 0.0
    %1260 = vmatprep.subr.mxu0 0.0
    %1261 = vmatpush1.msra.mxu0 0.0
    %1262 = vmatprep.subr.mxu0 0.0
    %1263 = vmatpush1.msra.mxu0 0.0
    %1264 = vmatprep.subr.mxu0 0.0
    %1265 = vmatpush1.msra.mxu0 0.0
    %1266 = vmatprep.subr.mxu0 0.0
    %1267 = vmatpush1.msra.mxu0 0.0
    %1268 = vmatprep.mubr.f32.mxu0 0.0
    %1269 = vmatmul.mubr.f32.gmra.mrb[0].mxu0 %v1202
    %v1270 = vpop.f32.mrb[0].mxu0
    %v1271 = vadd.f32 0.0, %v1270
    %v1272 = vpop.f32.mrb[0].mxu0
    %1273 = vdwg.mxu0
    %1274 = vrot.lane.b32.xlu0 %v296, 64
    %v1275 = vpop.permute.xlu0 %1274
    %v1278 = vsel %vm328, %v1041, 0
    %1280 = vmatprep.subr.mxu0 0.0
    %1281 = vmatpush1.msra.mxu0 %v1275
    %1282 = vmatprep.subr.mxu0 0.0
    %1283 = vmatpush1.msra.mxu0 0.0
    %1284 = vmatprep.subr.mxu0 0.0
    %1285 = vmatpush1.msra.mxu0 0.0
    %1286 = vmatprep.subr.mxu0 0.0
    %1287 = vmatpush1.msra.mxu0 0.0
    %1288 = vmatprep.subr.mxu0 0.0
    %1289 = vmatpush1.msra.mxu0 0.0
    %1290 = vmatprep.subr.mxu0 0.0
    %1291 = vmatpush1.msra.mxu0 0.0
    %1292 = vmatprep.subr.mxu0 0.0
    %1293 = vmatpush1.msra.mxu0 0.0
    %1294 = vmatprep.subr.mxu0 0.0
    %1295 = vmatpush1.msra.mxu0 0.0
    %1296 = vmatprep.subr.mxu0 0.0
    %1297 = vmatpush1.msra.mxu0 0.0
    %1298 = vmatprep.subr.mxu0 0.0
    %1299 = vmatpush1.msra.mxu0 0.0
    %1300 = vmatprep.subr.mxu0 0.0
    %1301 = vmatpush1.msra.mxu0 0.0
    %1302 = vmatprep.subr.mxu0 0.0
    %1303 = vmatpush1.msra.mxu0 0.0
    %1304 = vmatprep.subr.mxu0 0.0
    %1305 = vmatpush1.msra.mxu0 0.0
    %1306 = vmatprep.subr.mxu0 0.0
    %1307 = vmatpush1.msra.mxu0 0.0
    %1308 = vmatprep.subr.mxu0 0.0
    %1309 = vmatpush1.msra.mxu0 0.0
    %1310 = vmatprep.subr.mxu0 0.0
    %1311 = vmatpush1.msra.mxu0 0.0
    %1312 = vmatprep.subr.mxu0 0.0
    %1313 = vmatpush1.msra.mxu0 0.0
    %1314 = vmatprep.subr.mxu0 0.0
    %1315 = vmatpush1.msra.mxu0 0.0
    %1316 = vmatprep.subr.mxu0 0.0
    %1317 = vmatpush1.msra.mxu0 0.0
    %1318 = vmatprep.subr.mxu0 0.0
    %1319 = vmatpush1.msra.mxu0 0.0
    %1320 = vmatprep.subr.mxu0 0.0
    %1321 = vmatpush1.msra.mxu0 0.0
    %1322 = vmatprep.subr.mxu0 0.0
    %1323 = vmatpush1.msra.mxu0 0.0
    %1324 = vmatprep.subr.mxu0 0.0
    %1325 = vmatpush1.msra.mxu0 0.0
    %1326 = vmatprep.subr.mxu0 0.0
    %1327 = vmatpush1.msra.mxu0 0.0
    %1328 = vmatprep.subr.mxu0 0.0
    %1329 = vmatpush1.msra.mxu0 0.0
    %1330 = vmatprep.subr.mxu0 0.0
    %1331 = vmatpush1.msra.mxu0 0.0
    %1332 = vmatprep.subr.mxu0 0.0
    %1333 = vmatpush1.msra.mxu0 0.0
    %1334 = vmatprep.subr.mxu0 0.0
    %1335 = vmatpush1.msra.mxu0 0.0
    %1336 = vmatprep.subr.mxu0 0.0
    %1337 = vmatpush1.msra.mxu0 0.0
    %1338 = vmatprep.subr.mxu0 0.0
    %1339 = vmatpush1.msra.mxu0 0.0
    %1340 = vmatprep.subr.mxu0 0.0
    %1341 = vmatpush1.msra.mxu0 0.0
    %1342 = vmatprep.subr.mxu0 0.0
    %1343 = vmatpush1.msra.mxu0 0.0
    %1344 = vmatprep.mubr.f32.mxu0 0.0
    %1345 = vmatmul.mubr.f32.gmra.mrb[0].mxu0 %v1278
    %v1346 = vpop.f32.mrb[0].mxu0
    %v1347 = vadd.f32 0.0, %v1346
    %v1348 = vpop.f32.mrb[0].mxu0
    %1349 = vdwg.mxu0
    %1350 = vrot.lane.b32.xlu0 %v301, 64
    %v1351 = vpop.permute.xlu0 %1350
    %v1354 = vsel %vm328, %v1042, 0
    %1356 = vmatprep.subr.mxu0 0.0
    %1357 = vmatpush1.msra.mxu0 %v1351
    %1358 = vmatprep.subr.mxu0 0.0
    %1359 = vmatpush1.msra.mxu0 0.0
    %1360 = vmatprep.subr.mxu0 0.0
    %1361 = vmatpush1.msra.mxu0 0.0
    %1362 = vmatprep.subr.mxu0 0.0
    %1363 = vmatpush1.msra.mxu0 0.0
    %1364 = vmatprep.subr.mxu0 0.0
    %1365 = vmatpush1.msra.mxu0 0.0
    %1366 = vmatprep.subr.mxu0 0.0
    %1367 = vmatpush1.msra.mxu0 0.0
    %1368 = vmatprep.subr.mxu0 0.0
    %1369 = vmatpush1.msra.mxu0 0.0
    %1370 = vmatprep.subr.mxu0 0.0
    %1371 = vmatpush1.msra.mxu0 0.0
    %1372 = vmatprep.subr.mxu0 0.0
    %1373 = vmatpush1.msra.mxu0 0.0
    %1374 = vmatprep.subr.mxu0 0.0
    %1375 = vmatpush1.msra.mxu0 0.0
    %1376 = vmatprep.subr.mxu0 0.0
    %1377 = vmatpush1.msra.mxu0 0.0
    %1378 = vmatprep.subr.mxu0 0.0
    %1379 = vmatpush1.msra.mxu0 0.0
    %1380 = vmatprep.subr.mxu0 0.0
    %1381 = vmatpush1.msra.mxu0 0.0
    %1382 = vmatprep.subr.mxu0 0.0
    %1383 = vmatpush1.msra.mxu0 0.0
    %1384 = vmatprep.subr.mxu0 0.0
    %1385 = vmatpush1.msra.mxu0 0.0
    %1386 = vmatprep.subr.mxu0 0.0
    %1387 = vmatpush1.msra.mxu0 0.0
    %1388 = vmatprep.subr.mxu0 0.0
    %1389 = vmatpush1.msra.mxu0 0.0
    %1390 = vmatprep.subr.mxu0 0.0
    %1391 = vmatpush1.msra.mxu0 0.0
    %1392 = vmatprep.subr.mxu0 0.0
    %1393 = vmatpush1.msra.mxu0 0.0
    %1394 = vmatprep.subr.mxu0 0.0
    %1395 = vmatpush1.msra.mxu0 0.0
    %1396 = vmatprep.subr.mxu0 0.0
    %1397 = vmatpush1.msra.mxu0 0.0
    %1398 = vmatprep.subr.mxu0 0.0
    %1399 = vmatpush1.msra.mxu0 0.0
    %1400 = vmatprep.subr.mxu0 0.0
    %1401 = vmatpush1.msra.mxu0 0.0
    %1402 = vmatprep.subr.mxu0 0.0
    %1403 = vmatpush1.msra.mxu0 0.0
    %1404 = vmatprep.subr.mxu0 0.0
    %1405 = vmatpush1.msra.mxu0 0.0
    %1406 = vmatprep.subr.mxu0 0.0
    %1407 = vmatpush1.msra.mxu0 0.0
    %1408 = vmatprep.subr.mxu0 0.0
    %1409 = vmatpush1.msra.mxu0 0.0
    %1410 = vmatprep.subr.mxu0 0.0
    %1411 = vmatpush1.msra.mxu0 0.0
    %1412 = vmatprep.subr.mxu0 0.0
    %1413 = vmatpush1.msra.mxu0 0.0
    %1414 = vmatprep.subr.mxu0 0.0
    %1415 = vmatpush1.msra.mxu0 0.0
    %1416 = vmatprep.subr.mxu0 0.0
    %1417 = vmatpush1.msra.mxu0 0.0
    %1418 = vmatprep.subr.mxu0 0.0
    %1419 = vmatpush1.msra.mxu0 0.0
    %1420 = vmatprep.mubr.f32.mxu0 0.0
    %1421 = vmatmul.mubr.f32.gmra.mrb[0].mxu0 %v1354
    %v1422 = vpop.f32.mrb[0].mxu0
    %v1423 = vadd.f32 0.0, %v1422
    %v1424 = vpop.f32.mrb[0].mxu0
    %1425 = vdwg.mxu0
    %1426 = vrot.lane.b32.xlu0 %v306, 64
    %v1427 = vpop.permute.xlu0 %1426
    %v1430 = vsel %vm328, %v1043, 0
    %1432 = vmatprep.subr.mxu0 0.0
    %1433 = vmatpush1.msra.mxu0 %v1427
    %1434 = vmatprep.subr.mxu0 0.0
    %1435 = vmatpush1.msra.mxu0 0.0
    %1436 = vmatprep.subr.mxu0 0.0
    %1437 = vmatpush1.msra.mxu0 0.0
    %1438 = vmatprep.subr.mxu0 0.0
    %1439 = vmatpush1.msra.mxu0 0.0
    %1440 = vmatprep.subr.mxu0 0.0
    %1441 = vmatpush1.msra.mxu0 0.0
    %1442 = vmatprep.subr.mxu0 0.0
    %1443 = vmatpush1.msra.mxu0 0.0
    %1444 = vmatprep.subr.mxu0 0.0
    %1445 = vmatpush1.msra.mxu0 0.0
    %1446 = vmatprep.subr.mxu0 0.0
    %1447 = vmatpush1.msra.mxu0 0.0
    %1448 = vmatprep.subr.mxu0 0.0
    %1449 = vmatpush1.msra.mxu0 0.0
    %1450 = vmatprep.subr.mxu0 0.0
    %1451 = vmatpush1.msra.mxu0 0.0
    %1452 = vmatprep.subr.mxu0 0.0
    %1453 = vmatpush1.msra.mxu0 0.0
    %1454 = vmatprep.subr.mxu0 0.0
    %1455 = vmatpush1.msra.mxu0 0.0
    %1456 = vmatprep.subr.mxu0 0.0
    %1457 = vmatpush1.msra.mxu0 0.0
    %1458 = vmatprep.subr.mxu0 0.0
    %1459 = vmatpush1.msra.mxu0 0.0
    %1460 = vmatprep.subr.mxu0 0.0
    %1461 = vmatpush1.msra.mxu0 0.0
    %1462 = vmatprep.subr.mxu0 0.0
    %1463 = vmatpush1.msra.mxu0 0.0
    %1464 = vmatprep.subr.mxu0 0.0
    %1465 = vmatpush1.msra.mxu0 0.0
    %1466 = vmatprep.subr.mxu0 0.0
    %1467 = vmatpush1.msra.mxu0 0.0
    %1468 = vmatprep.subr.mxu0 0.0
    %1469 = vmatpush1.msra.mxu0 0.0
    %1470 = vmatprep.subr.mxu0 0.0
    %1471 = vmatpush1.msra.mxu0 0.0
    %1472 = vmatprep.subr.mxu0 0.0
    %1473 = vmatpush1.msra.mxu0 0.0
    %1474 = vmatprep.subr.mxu0 0.0
    %1475 = vmatpush1.msra.mxu0 0.0
    %1476 = vmatprep.subr.mxu0 0.0
    %1477 = vmatpush1.msra.mxu0 0.0
    %1478 = vmatprep.subr.mxu0 0.0
    %1479 = vmatpush1.msra.mxu0 0.0
    %1480 = vmatprep.subr.mxu0 0.0
    %1481 = vmatpush1.msra.mxu0 0.0
    %1482 = vmatprep.subr.mxu0 0.0
    %1483 = vmatpush1.msra.mxu0 0.0
    %1484 = vmatprep.subr.mxu0 0.0
    %1485 = vmatpush1.msra.mxu0 0.0
    %1486 = vmatprep.subr.mxu0 0.0
    %1487 = vmatpush1.msra.mxu0 0.0
    %1488 = vmatprep.subr.mxu0 0.0
    %1489 = vmatpush1.msra.mxu0 0.0
    %1490 = vmatprep.subr.mxu0 0.0
    %1491 = vmatpush1.msra.mxu0 0.0
    %1492 = vmatprep.subr.mxu0 0.0
    %1493 = vmatpush1.msra.mxu0 0.0
    %1494 = vmatprep.subr.mxu0 0.0
    %1495 = vmatpush1.msra.mxu0 0.0
    %1496 = vmatprep.mubr.f32.mxu0 0.0
    %1497 = vmatmul.mubr.f32.gmra.mrb[0].mxu0 %v1430
    %v1498 = vpop.f32.mrb[0].mxu0
    %v1499 = vadd.f32 0.0, %v1498
    %v1500 = vpop.f32.mrb[0].mxu0
    %1501 = vdwg.mxu0
    %1502 = vrot.lane.b32.xlu0 %v311, 64
    %v1503 = vpop.permute.xlu0 %1502
    %v1506 = vsel %vm328, %v1044, 0
    %1508 = vmatprep.subr.mxu0 0.0
    %1509 = vmatpush1.msra.mxu0 %v1503
    %1510 = vmatprep.subr.mxu0 0.0
    %1511 = vmatpush1.msra.mxu0 0.0
    %1512 = vmatprep.subr.mxu0 0.0
    %1513 = vmatpush1.msra.mxu0 0.0
    %1514 = vmatprep.subr.mxu0 0.0
    %1515 = vmatpush1.msra.mxu0 0.0
    %1516 = vmatprep.subr.mxu0 0.0
    %1517 = vmatpush1.msra.mxu0 0.0
    %1518 = vmatprep.subr.mxu0 0.0
    %1519 = vmatpush1.msra.mxu0 0.0
    %1520 = vmatprep.subr.mxu0 0.0
    %1521 = vmatpush1.msra.mxu0 0.0
    %1522 = vmatprep.subr.mxu0 0.0
    %1523 = vmatpush1.msra.mxu0 0.0
    %1524 = vmatprep.subr.mxu0 0.0
    %1525 = vmatpush1.msra.mxu0 0.0
    %1526 = vmatprep.subr.mxu0 0.0
    %1527 = vmatpush1.msra.mxu0 0.0
    %1528 = vmatprep.subr.mxu0 0.0
    %1529 = vmatpush1.msra.mxu0 0.0
    %1530 = vmatprep.subr.mxu0 0.0
    %1531 = vmatpush1.msra.mxu0 0.0
    %1532 = vmatprep.subr.mxu0 0.0
    %1533 = vmatpush1.msra.mxu0 0.0
    %1534 = vmatprep.subr.mxu0 0.0
    %1535 = vmatpush1.msra.mxu0 0.0
    %1536 = vmatprep.subr.mxu0 0.0
    %1537 = vmatpush1.msra.mxu0 0.0
    %1538 = vmatprep.subr.mxu0 0.0
    %1539 = vmatpush1.msra.mxu0 0.0
    %1540 = vmatprep.subr.mxu0 0.0
    %1541 = vmatpush1.msra.mxu0 0.0
    %1542 = vmatprep.subr.mxu0 0.0
    %1543 = vmatpush1.msra.mxu0 0.0
    %1544 = vmatprep.subr.mxu0 0.0
    %1545 = vmatpush1.msra.mxu0 0.0
    %1546 = vmatprep.subr.mxu0 0.0
    %1547 = vmatpush1.msra.mxu0 0.0
    %1548 = vmatprep.subr.mxu0 0.0
    %1549 = vmatpush1.msra.mxu0 0.0
    %1550 = vmatprep.subr.mxu0 0.0
    %1551 = vmatpush1.msra.mxu0 0.0
    %1552 = vmatprep.subr.mxu0 0.0
    %1553 = vmatpush1.msra.mxu0 0.0
    %1554 = vmatprep.subr.mxu0 0.0
    %1555 = vmatpush1.msra.mxu0 0.0
    %1556 = vmatprep.subr.mxu0 0.0
    %1557 = vmatpush1.msra.mxu0 0.0
    %1558 = vmatprep.subr.mxu0 0.0
    %1559 = vmatpush1.msra.mxu0 0.0
    %1560 = vmatprep.subr.mxu0 0.0
    %1561 = vmatpush1.msra.mxu0 0.0
    %1562 = vmatprep.subr.mxu0 0.0
    %1563 = vmatpush1.msra.mxu0 0.0
    %1564 = vmatprep.subr.mxu0 0.0
    %1565 = vmatpush1.msra.mxu0 0.0
    %1566 = vmatprep.subr.mxu0 0.0
    %1567 = vmatpush1.msra.mxu0 0.0
    %1568 = vmatprep.subr.mxu0 0.0
    %1569 = vmatpush1.msra.mxu0 0.0
    %1570 = vmatprep.subr.mxu0 0.0
    %1571 = vmatpush1.msra.mxu0 0.0
    %1572 = vmatprep.mubr.f32.mxu0 0.0
    %1573 = vmatmul.mubr.f32.gmra.mrb[0].mxu0 %v1506
    %v1574 = vpop.f32.mrb[0].mxu0
    %v1575 = vadd.f32 0.0, %v1574
    %v1576 = vpop.f32.mrb[0].mxu0
    %1577 = vdwg.mxu0
    %1578 = vrot.lane.b32.xlu0 %v316, 64
    %v1579 = vpop.permute.xlu0 %1578
    %v1582 = vsel %vm328, %v1045, 0
    %1584 = vmatprep.subr.mxu0 0.0
    %1585 = vmatpush1.msra.mxu0 %v1579
    %1586 = vmatprep.subr.mxu0 0.0
    %1587 = vmatpush1.msra.mxu0 0.0
    %1588 = vmatprep.subr.mxu0 0.0
    %1589 = vmatpush1.msra.mxu0 0.0
    %1590 = vmatprep.subr.mxu0 0.0
    %1591 = vmatpush1.msra.mxu0 0.0
    %1592 = vmatprep.subr.mxu0 0.0
    %1593 = vmatpush1.msra.mxu0 0.0
    %1594 = vmatprep.subr.mxu0 0.0
    %1595 = vmatpush1.msra.mxu0 0.0
    %1596 = vmatprep.subr.mxu0 0.0
    %1597 = vmatpush1.msra.mxu0 0.0
    %1598 = vmatprep.subr.mxu0 0.0
    %1599 = vmatpush1.msra.mxu0 0.0
    %1600 = vmatprep.subr.mxu0 0.0
    %1601 = vmatpush1.msra.mxu0 0.0
    %1602 = vmatprep.subr.mxu0 0.0
    %1603 = vmatpush1.msra.mxu0 0.0
    %1604 = vmatprep.subr.mxu0 0.0
    %1605 = vmatpush1.msra.mxu0 0.0
    %1606 = vmatprep.subr.mxu0 0.0
    %1607 = vmatpush1.msra.mxu0 0.0
    %1608 = vmatprep.subr.mxu0 0.0
    %1609 = vmatpush1.msra.mxu0 0.0
    %1610 = vmatprep.subr.mxu0 0.0
    %1611 = vmatpush1.msra.mxu0 0.0
    %1612 = vmatprep.subr.mxu0 0.0
    %1613 = vmatpush1.msra.mxu0 0.0
    %1614 = vmatprep.subr.mxu0 0.0
    %1615 = vmatpush1.msra.mxu0 0.0
    %1616 = vmatprep.subr.mxu0 0.0
    %1617 = vmatpush1.msra.mxu0 0.0
    %1618 = vmatprep.subr.mxu0 0.0
    %1619 = vmatpush1.msra.mxu0 0.0
    %1620 = vmatprep.subr.mxu0 0.0
    %1621 = vmatpush1.msra.mxu0 0.0
    %1622 = vmatprep.subr.mxu0 0.0
    %1623 = vmatpush1.msra.mxu0 0.0
    %1624 = vmatprep.subr.mxu0 0.0
    %1625 = vmatpush1.msra.mxu0 0.0
    %1626 = vmatprep.subr.mxu0 0.0
    %1627 = vmatpush1.msra.mxu0 0.0
    %1628 = vmatprep.subr.mxu0 0.0
    %1629 = vmatpush1.msra.mxu0 0.0
    %1630 = vmatprep.subr.mxu0 0.0
    %1631 = vmatpush1.msra.mxu0 0.0
    %1632 = vmatprep.subr.mxu0 0.0
    %1633 = vmatpush1.msra.mxu0 0.0
    %1634 = vmatprep.subr.mxu0 0.0
    %1635 = vmatpush1.msra.mxu0 0.0
    %1636 = vmatprep.subr.mxu0 0.0
    %1637 = vmatpush1.msra.mxu0 0.0
    %1638 = vmatprep.subr.mxu0 0.0
    %1639 = vmatpush1.msra.mxu0 0.0
    %1640 = vmatprep.subr.mxu0 0.0
    %1641 = vmatpush1.msra.mxu0 0.0
    %1642 = vmatprep.subr.mxu0 0.0
    %1643 = vmatpush1.msra.mxu0 0.0
    %1644 = vmatprep.subr.mxu0 0.0
    %1645 = vmatpush1.msra.mxu0 0.0
    %1646 = vmatprep.subr.mxu0 0.0
    %1647 = vmatpush1.msra.mxu0 0.0
    %1648 = vmatprep.mubr.f32.mxu0 0.0
    %1649 = vmatmul.mubr.f32.gmra.mrb[0].mxu0 %v1582
    %v1650 = vpop.f32.mrb[0].mxu0
    %v1651 = vadd.f32 0.0, %v1650
    %v1652 = vpop.f32.mrb[0].mxu0
    %1653 = vdwg.mxu0
    %1654 = vrot.lane.b32.xlu0 %v281, 120
    %v1655 = vpop.permute.xlu0 %1654
    %1656 = vrot.lane.b32.xlu0 %v281, 88
    %v1657 = vpop.permute.xlu0 %1656
    %v1658 = vsel %vm328, %v1655, 0
    %v1660 = vsel %vm328, %v1657, 0
    %1662 = vmatprep.subr.mxu0 0.0
    %1663 = vmatpush1.xpose.msra.mxu0 %v1660
    %1664 = vmatprep.subr.mxu0 0.0
    %1665 = vmatpush1.xpose.msra.mxu0 0.0
    %1666 = vmatprep.subr.mxu0 0.0
    %1667 = vmatpush1.xpose.msra.mxu0 0.0
    %1668 = vmatprep.subr.mxu0 0.0
    %1669 = vmatpush1.xpose.msra.mxu0 0.0
    %1670 = vmatprep.subr.mxu0 0.0
    %1671 = vmatpush1.xpose.msra.mxu0 0.0
    %1672 = vmatprep.subr.mxu0 0.0
    %1673 = vmatpush1.xpose.msra.mxu0 0.0
    %1674 = vmatprep.subr.mxu0 0.0
    %1675 = vmatpush1.xpose.msra.mxu0 0.0
    %1676 = vmatprep.subr.mxu0 0.0
    %1677 = vmatpush1.xpose.msra.mxu0 0.0
    %1678 = vmatprep.subr.mxu0 0.0
    %1679 = vmatpush1.xpose.msra.mxu0 0.0
    %1680 = vmatprep.subr.mxu0 0.0
    %1681 = vmatpush1.xpose.msra.mxu0 0.0
    %1682 = vmatprep.subr.mxu0 0.0
    %1683 = vmatpush1.xpose.msra.mxu0 0.0
    %1684 = vmatprep.subr.mxu0 0.0
    %1685 = vmatpush1.xpose.msra.mxu0 0.0
    %1686 = vmatprep.subr.mxu0 0.0
    %1687 = vmatpush1.xpose.msra.mxu0 0.0
    %1688 = vmatprep.subr.mxu0 0.0
    %1689 = vmatpush1.xpose.msra.mxu0 0.0
    %1690 = vmatprep.subr.mxu0 0.0
    %1691 = vmatpush1.xpose.msra.mxu0 0.0
    %1692 = vmatprep.subr.mxu0 0.0
    %1693 = vmatpush1.xpose.msra.mxu0 0.0
    %1694 = vmatprep.subr.mxu0 0.0
    %1695 = vmatpush1.xpose.msra.mxu0 0.0
    %1696 = vmatprep.subr.mxu0 0.0
    %1697 = vmatpush1.xpose.msra.mxu0 0.0
    %1698 = vmatprep.subr.mxu0 0.0
    %1699 = vmatpush1.xpose.msra.mxu0 0.0
    %1700 = vmatprep.subr.mxu0 0.0
    %1701 = vmatpush1.xpose.msra.mxu0 0.0
    %1702 = vmatprep.subr.mxu0 0.0
    %1703 = vmatpush1.xpose.msra.mxu0 0.0
    %1704 = vmatprep.subr.mxu0 0.0
    %1705 = vmatpush1.xpose.msra.mxu0 0.0
    %1706 = vmatprep.subr.mxu0 0.0
    %1707 = vmatpush1.xpose.msra.mxu0 0.0
    %1708 = vmatprep.subr.mxu0 0.0
    %1709 = vmatpush1.xpose.msra.mxu0 0.0
    %1710 = vmatprep.subr.mxu0 0.0
    %1711 = vmatpush1.xpose.msra.mxu0 0.0
    %1712 = vmatprep.subr.mxu0 0.0
    %1713 = vmatpush1.xpose.msra.mxu0 0.0
    %1714 = vmatprep.subr.mxu0 0.0
    %1715 = vmatpush1.xpose.msra.mxu0 0.0
    %1716 = vmatprep.subr.mxu0 0.0
    %1717 = vmatpush1.xpose.msra.mxu0 0.0
    %1718 = vmatprep.subr.mxu0 0.0
    %1719 = vmatpush1.xpose.msra.mxu0 0.0
    %1720 = vmatprep.subr.mxu0 0.0
    %1721 = vmatpush1.xpose.msra.mxu0 0.0
    %1722 = vmatprep.subr.mxu0 0.0
    %1723 = vmatpush1.xpose.msra.mxu0 0.0
    %1724 = vmatprep.subr.mxu0 0.0
    %1725 = vmatpush1.xpose.msra.mxu0 0.0
    %1726 = vmatprep.mubr.f32.mxu0 0.0
    %1727 = vmatmul.mubr.f32.gmra.mrb[0].mxu0 %v1658
    %v1728 = vpop.f32.mrb[0].mxu0
    %v1729 = vadd.f32 0.0, %v1728
    %v1730 = vpop.f32.mrb[0].mxu0
    %1731 = vdwg.mxu0
    %1732 = vrot.lane.b32.xlu0 %v286, 120
    %v1733 = vpop.permute.xlu0 %1732
    %1734 = vrot.lane.b32.xlu0 %v286, 88
    %v1735 = vpop.permute.xlu0 %1734
    %v1736 = vsel %vm328, %v1733, 0
    %v1738 = vsel %vm328, %v1735, 0
    %1740 = vmatprep.subr.mxu0 0.0
    %1741 = vmatpush1.xpose.msra.mxu0 %v1738
    %1742 = vmatprep.subr.mxu0 0.0
    %1743 = vmatpush1.xpose.msra.mxu0 0.0
    %1744 = vmatprep.subr.mxu0 0.0
    %1745 = vmatpush1.xpose.msra.mxu0 0.0
    %1746 = vmatprep.subr.mxu0 0.0
    %1747 = vmatpush1.xpose.msra.mxu0 0.0
    %1748 = vmatprep.subr.mxu0 0.0
    %1749 = vmatpush1.xpose.msra.mxu0 0.0
    %1750 = vmatprep.subr.mxu0 0.0
    %1751 = vmatpush1.xpose.msra.mxu0 0.0
    %1752 = vmatprep.subr.mxu0 0.0
    %1753 = vmatpush1.xpose.msra.mxu0 0.0
    %1754 = vmatprep.subr.mxu0 0.0
    %1755 = vmatpush1.xpose.msra.mxu0 0.0
    %1756 = vmatprep.subr.mxu0 0.0
    %1757 = vmatpush1.xpose.msra.mxu0 0.0
    %1758 = vmatprep.subr.mxu0 0.0
    %1759 = vmatpush1.xpose.msra.mxu0 0.0
    %1760 = vmatprep.subr.mxu0 0.0
    %1761 = vmatpush1.xpose.msra.mxu0 0.0
    %1762 = vmatprep.subr.mxu0 0.0
    %1763 = vmatpush1.xpose.msra.mxu0 0.0
    %1764 = vmatprep.subr.mxu0 0.0
    %1765 = vmatpush1.xpose.msra.mxu0 0.0
    %1766 = vmatprep.subr.mxu0 0.0
    %1767 = vmatpush1.xpose.msra.mxu0 0.0
    %1768 = vmatprep.subr.mxu0 0.0
    %1769 = vmatpush1.xpose.msra.mxu0 0.0
    %1770 = vmatprep.subr.mxu0 0.0
    %1771 = vmatpush1.xpose.msra.mxu0 0.0
    %1772 = vmatprep.subr.mxu0 0.0
    %1773 = vmatpush1.xpose.msra.mxu0 0.0
    %1774 = vmatprep.subr.mxu0 0.0
    %1775 = vmatpush1.xpose.msra.mxu0 0.0
    %1776 = vmatprep.subr.mxu0 0.0
    %1777 = vmatpush1.xpose.msra.mxu0 0.0
    %1778 = vmatprep.subr.mxu0 0.0
    %1779 = vmatpush1.xpose.msra.mxu0 0.0
    %1780 = vmatprep.subr.mxu0 0.0
    %1781 = vmatpush1.xpose.msra.mxu0 0.0
    %1782 = vmatprep.subr.mxu0 0.0
    %1783 = vmatpush1.xpose.msra.mxu0 0.0
    %1784 = vmatprep.subr.mxu0 0.0
    %1785 = vmatpush1.xpose.msra.mxu0 0.0
    %1786 = vmatprep.subr.mxu0 0.0
    %1787 = vmatpush1.xpose.msra.mxu0 0.0
    %1788 = vmatprep.subr.mxu0 0.0
    %1789 = vmatpush1.xpose.msra.mxu0 0.0
    %1790 = vmatprep.subr.mxu0 0.0
    %1791 = vmatpush1.xpose.msra.mxu0 0.0
    %1792 = vmatprep.subr.mxu0 0.0
    %1793 = vmatpush1.xpose.msra.mxu0 0.0
    %1794 = vmatprep.subr.mxu0 0.0
    %1795 = vmatpush1.xpose.msra.mxu0 0.0
    %1796 = vmatprep.subr.mxu0 0.0
    %1797 = vmatpush1.xpose.msra.mxu0 0.0
    %1798 = vmatprep.subr.mxu0 0.0
    %1799 = vmatpush1.xpose.msra.mxu0 0.0
    %1800 = vmatprep.subr.mxu0 0.0
    %1801 = vmatpush1.xpose.msra.mxu0 0.0
    %1802 = vmatprep.subr.mxu0 0.0
    %1803 = vmatpush1.xpose.msra.mxu0 0.0
    %1804 = vmatprep.mubr.f32.mxu0 0.0
    %1805 = vmatmul.mubr.f32.gmra.mrb[0].mxu0 %v1736
    %v1806 = vpop.f32.mrb[0].mxu0
    %v1807 = vadd.f32 0.0, %v1806
    %v1808 = vpop.f32.mrb[0].mxu0
    %1809 = vdwg.mxu0
    %1810 = vrot.lane.b32.xlu0 %v291, 120
    %v1811 = vpop.permute.xlu0 %1810
    %1812 = vrot.lane.b32.xlu0 %v291, 88
    %v1813 = vpop.permute.xlu0 %1812
    %v1814 = vsel %vm328, %v1811, 0
    %v1816 = vsel %vm328, %v1813, 0
    %1818 = vmatprep.subr.mxu0 0.0
    %1819 = vmatpush1.xpose.msra.mxu0 %v1816
    %1820 = vmatprep.subr.mxu0 0.0
    %1821 = vmatpush1.xpose.msra.mxu0 0.0
    %1822 = vmatprep.subr.mxu0 0.0
    %1823 = vmatpush1.xpose.msra.mxu0 0.0
    %1824 = vmatprep.subr.mxu0 0.0
    %1825 = vmatpush1.xpose.msra.mxu0 0.0
    %1826 = vmatprep.subr.mxu0 0.0
    %1827 = vmatpush1.xpose.msra.mxu0 0.0
    %1828 = vmatprep.subr.mxu0 0.0
    %1829 = vmatpush1.xpose.msra.mxu0 0.0
    %1830 = vmatprep.subr.mxu0 0.0
    %1831 = vmatpush1.xpose.msra.mxu0 0.0
    %1832 = vmatprep.subr.mxu0 0.0
    %1833 = vmatpush1.xpose.msra.mxu0 0.0
    %1834 = vmatprep.subr.mxu0 0.0
    %1835 = vmatpush1.xpose.msra.mxu0 0.0
    %1836 = vmatprep.subr.mxu0 0.0
    %1837 = vmatpush1.xpose.msra.mxu0 0.0
    %1838 = vmatprep.subr.mxu0 0.0
    %1839 = vmatpush1.xpose.msra.mxu0 0.0
    %1840 = vmatprep.subr.mxu0 0.0
    %1841 = vmatpush1.xpose.msra.mxu0 0.0
    %1842 = vmatprep.subr.mxu0 0.0
    %1843 = vmatpush1.xpose.msra.mxu0 0.0
    %1844 = vmatprep.subr.mxu0 0.0
    %1845 = vmatpush1.xpose.msra.mxu0 0.0
    %1846 = vmatprep.subr.mxu0 0.0
    %1847 = vmatpush1.xpose.msra.mxu0 0.0
    %1848 = vmatprep.subr.mxu0 0.0
    %1849 = vmatpush1.xpose.msra.mxu0 0.0
    %1850 = vmatprep.subr.mxu0 0.0
    %1851 = vmatpush1.xpose.msra.mxu0 0.0
    %1852 = vmatprep.subr.mxu0 0.0
    %1853 = vmatpush1.xpose.msra.mxu0 0.0
    %1854 = vmatprep.subr.mxu0 0.0
    %1855 = vmatpush1.xpose.msra.mxu0 0.0
    %1856 = vmatprep.subr.mxu0 0.0
    %1857 = vmatpush1.xpose.msra.mxu0 0.0
    %1858 = vmatprep.subr.mxu0 0.0
    %1859 = vmatpush1.xpose.msra.mxu0 0.0
    %1860 = vmatprep.subr.mxu0 0.0
    %1861 = vmatpush1.xpose.msra.mxu0 0.0
    %1862 = vmatprep.subr.mxu0 0.0
    %1863 = vmatpush1.xpose.msra.mxu0 0.0
    %1864 = vmatprep.subr.mxu0 0.0
    %1865 = vmatpush1.xpose.msra.mxu0 0.0
    %1866 = vmatprep.subr.mxu0 0.0
    %1867 = vmatpush1.xpose.msra.mxu0 0.0
    %1868 = vmatprep.subr.mxu0 0.0
    %1869 = vmatpush1.xpose.msra.mxu0 0.0
    %1870 = vmatprep.subr.mxu0 0.0
    %1871 = vmatpush1.xpose.msra.mxu0 0.0
    %1872 = vmatprep.subr.mxu0 0.0
    %1873 = vmatpush1.xpose.msra.mxu0 0.0
    %1874 = vmatprep.subr.mxu0 0.0
    %1875 = vmatpush1.xpose.msra.mxu0 0.0
    %1876 = vmatprep.subr.mxu0 0.0
    %1877 = vmatpush1.xpose.msra.mxu0 0.0
    %1878 = vmatprep.subr.mxu0 0.0
    %1879 = vmatpush1.xpose.msra.mxu0 0.0
    %1880 = vmatprep.subr.mxu0 0.0
    %1881 = vmatpush1.xpose.msra.mxu0 0.0
    %1882 = vmatprep.mubr.f32.mxu0 0.0
    %1883 = vmatmul.mubr.f32.gmra.mrb[0].mxu0 %v1814
    %v1884 = vpop.f32.mrb[0].mxu0
    %v1885 = vadd.f32 0.0, %v1884
    %v1886 = vpop.f32.mrb[0].mxu0
    %1887 = vdwg.mxu0
    %1888 = vrot.lane.b32.xlu0 %v296, 120
    %v1889 = vpop.permute.xlu0 %1888
    %1890 = vrot.lane.b32.xlu0 %v296, 88
    %v1891 = vpop.permute.xlu0 %1890
    %v1892 = vsel %vm328, %v1889, 0
    %v1894 = vsel %vm328, %v1891, 0
    %1896 = vmatprep.subr.mxu0 0.0
    %1897 = vmatpush1.xpose.msra.mxu0 %v1894
    %1898 = vmatprep.subr.mxu0 0.0
    %1899 = vmatpush1.xpose.msra.mxu0 0.0
    %1900 = vmatprep.subr.mxu0 0.0
    %1901 = vmatpush1.xpose.msra.mxu0 0.0
    %1902 = vmatprep.subr.mxu0 0.0
    %1903 = vmatpush1.xpose.msra.mxu0 0.0
    %1904 = vmatprep.subr.mxu0 0.0
    %1905 = vmatpush1.xpose.msra.mxu0 0.0
    %1906 = vmatprep.subr.mxu0 0.0
    %1907 = vmatpush1.xpose.msra.mxu0 0.0
    %1908 = vmatprep.subr.mxu0 0.0
    %1909 = vmatpush1.xpose.msra.mxu0 0.0
    %1910 = vmatprep.subr.mxu0 0.0
    %1911 = vmatpush1.xpose.msra.mxu0 0.0
    %1912 = vmatprep.subr.mxu0 0.0
    %1913 = vmatpush1.xpose.msra.mxu0 0.0
    %1914 = vmatprep.subr.mxu0 0.0
    %1915 = vmatpush1.xpose.msra.mxu0 0.0
    %1916 = vmatprep.subr.mxu0 0.0
    %1917 = vmatpush1.xpose.msra.mxu0 0.0
    %1918 = vmatprep.subr.mxu0 0.0
    %1919 = vmatpush1.xpose.msra.mxu0 0.0
    %1920 = vmatprep.subr.mxu0 0.0
    %1921 = vmatpush1.xpose.msra.mxu0 0.0
    %1922 = vmatprep.subr.mxu0 0.0
    %1923 = vmatpush1.xpose.msra.mxu0 0.0
    %1924 = vmatprep.subr.mxu0 0.0
    %1925 = vmatpush1.xpose.msra.mxu0 0.0
    %1926 = vmatprep.subr.mxu0 0.0
    %1927 = vmatpush1.xpose.msra.mxu0 0.0
    %1928 = vmatprep.subr.mxu0 0.0
    %1929 = vmatpush1.xpose.msra.mxu0 0.0
    %1930 = vmatprep.subr.mxu0 0.0
    %1931 = vmatpush1.xpose.msra.mxu0 0.0
    %1932 = vmatprep.subr.mxu0 0.0
    %1933 = vmatpush1.xpose.msra.mxu0 0.0
    %1934 = vmatprep.subr.mxu0 0.0
    %1935 = vmatpush1.xpose.msra.mxu0 0.0
    %1936 = vmatprep.subr.mxu0 0.0
    %1937 = vmatpush1.xpose.msra.mxu0 0.0
    %1938 = vmatprep.subr.mxu0 0.0
    %1939 = vmatpush1.xpose.msra.mxu0 0.0
    %1940 = vmatprep.subr.mxu0 0.0
    %1941 = vmatpush1.xpose.msra.mxu0 0.0
    %1942 = vmatprep.subr.mxu0 0.0
    %1943 = vmatpush1.xpose.msra.mxu0 0.0
    %1944 = vmatprep.subr.mxu0 0.0
    %1945 = vmatpush1.xpose.msra.mxu0 0.0
    %1946 = vmatprep.subr.mxu0 0.0
    %1947 = vmatpush1.xpose.msra.mxu0 0.0
    %1948 = vmatprep.subr.mxu0 0.0
    %1949 = vmatpush1.xpose.msra.mxu0 0.0
    %1950 = vmatprep.subr.mxu0 0.0
    %1951 = vmatpush1.xpose.msra.mxu0 0.0
    %1952 = vmatprep.subr.mxu0 0.0
    %1953 = vmatpush1.xpose.msra.mxu0 0.0
    %1954 = vmatprep.subr.mxu0 0.0
    %1955 = vmatpush1.xpose.msra.mxu0 0.0
    %1956 = vmatprep.subr.mxu0 0.0
    %1957 = vmatpush1.xpose.msra.mxu0 0.0
    %1958 = vmatprep.subr.mxu0 0.0
    %1959 = vmatpush1.xpose.msra.mxu0 0.0
    %1960 = vmatprep.mubr.f32.mxu0 0.0
    %1961 = vmatmul.mubr.f32.gmra.mrb[0].mxu0 %v1892
    %v1962 = vpop.f32.mrb[0].mxu0
    %v1963 = vadd.f32 0.0, %v1962
    %v1964 = vpop.f32.mrb[0].mxu0
    %1965 = vdwg.mxu0
    %1966 = vrot.lane.b32.xlu0 %v301, 120
    %v1967 = vpop.permute.xlu0 %1966
    %1968 = vrot.lane.b32.xlu0 %v301, 88
    %v1969 = vpop.permute.xlu0 %1968
    %v1970 = vsel %vm328, %v1967, 0
    %v1972 = vsel %vm328, %v1969, 0
    %1974 = vmatprep.subr.mxu0 0.0
    %1975 = vmatpush1.xpose.msra.mxu0 %v1972
    %1976 = vmatprep.subr.mxu0 0.0
    %1977 = vmatpush1.xpose.msra.mxu0 0.0
    %1978 = vmatprep.subr.mxu0 0.0
    %1979 = vmatpush1.xpose.msra.mxu0 0.0
    %1980 = vmatprep.subr.mxu0 0.0
    %1981 = vmatpush1.xpose.msra.mxu0 0.0
    %1982 = vmatprep.subr.mxu0 0.0
    %1983 = vmatpush1.xpose.msra.mxu0 0.0
    %1984 = vmatprep.subr.mxu0 0.0
    %1985 = vmatpush1.xpose.msra.mxu0 0.0
    %1986 = vmatprep.subr.mxu0 0.0
    %1987 = vmatpush1.xpose.msra.mxu0 0.0
    %1988 = vmatprep.subr.mxu0 0.0
    %1989 = vmatpush1.xpose.msra.mxu0 0.0
    %1990 = vmatprep.subr.mxu0 0.0
    %1991 = vmatpush1.xpose.msra.mxu0 0.0
    %1992 = vmatprep.subr.mxu0 0.0
    %1993 = vmatpush1.xpose.msra.mxu0 0.0
    %1994 = vmatprep.subr.mxu0 0.0
    %1995 = vmatpush1.xpose.msra.mxu0 0.0
    %1996 = vmatprep.subr.mxu0 0.0
    %1997 = vmatpush1.xpose.msra.mxu0 0.0
    %1998 = vmatprep.subr.mxu0 0.0
    %1999 = vmatpush1.xpose.msra.mxu0 0.0
    %2000 = vmatprep.subr.mxu0 0.0
    %2001 = vmatpush1.xpose.msra.mxu0 0.0
    %2002 = vmatprep.subr.mxu0 0.0
    %2003 = vmatpush1.xpose.msra.mxu0 0.0
    %2004 = vmatprep.subr.mxu0 0.0
    %2005 = vmatpush1.xpose.msra.mxu0 0.0
    %2006 = vmatprep.subr.mxu0 0.0
    %2007 = vmatpush1.xpose.msra.mxu0 0.0
    %2008 = vmatprep.subr.mxu0 0.0
    %2009 = vmatpush1.xpose.msra.mxu0 0.0
    %2010 = vmatprep.subr.mxu0 0.0
    %2011 = vmatpush1.xpose.msra.mxu0 0.0
    %2012 = vmatprep.subr.mxu0 0.0
    %2013 = vmatpush1.xpose.msra.mxu0 0.0
    %2014 = vmatprep.subr.mxu0 0.0
    %2015 = vmatpush1.xpose.msra.mxu0 0.0
    %2016 = vmatprep.subr.mxu0 0.0
    %2017 = vmatpush1.xpose.msra.mxu0 0.0
    %2018 = vmatprep.subr.mxu0 0.0
    %2019 = vmatpush1.xpose.msra.mxu0 0.0
    %2020 = vmatprep.subr.mxu0 0.0
    %2021 = vmatpush1.xpose.msra.mxu0 0.0
    %2022 = vmatprep.subr.mxu0 0.0
    %2023 = vmatpush1.xpose.msra.mxu0 0.0
    %2024 = vmatprep.subr.mxu0 0.0
    %2025 = vmatpush1.xpose.msra.mxu0 0.0
    %2026 = vmatprep.subr.mxu0 0.0
    %2027 = vmatpush1.xpose.msra.mxu0 0.0
    %2028 = vmatprep.subr.mxu0 0.0
    %2029 = vmatpush1.xpose.msra.mxu0 0.0
    %2030 = vmatprep.subr.mxu0 0.0
    %2031 = vmatpush1.xpose.msra.mxu0 0.0
    %2032 = vmatprep.subr.mxu0 0.0
    %2033 = vmatpush1.xpose.msra.mxu0 0.0
    %2034 = vmatprep.subr.mxu0 0.0
    %2035 = vmatpush1.xpose.msra.mxu0 0.0
    %2036 = vmatprep.subr.mxu0 0.0
    %2037 = vmatpush1.xpose.msra.mxu0 0.0
    %2038 = vmatprep.mubr.f32.mxu0 0.0
    %2039 = vmatmul.mubr.f32.gmra.mrb[0].mxu0 %v1970
    %v2040 = vpop.f32.mrb[0].mxu0
    %v2041 = vadd.f32 0.0, %v2040
    %v2042 = vpop.f32.mrb[0].mxu0
    %2043 = vdwg.mxu0
    %2044 = vrot.lane.b32.xlu0 %v306, 120
    %v2045 = vpop.permute.xlu0 %2044
    %2046 = vrot.lane.b32.xlu0 %v306, 88
    %v2047 = vpop.permute.xlu0 %2046
    %v2048 = vsel %vm328, %v2045, 0
    %v2050 = vsel %vm328, %v2047, 0
    %2052 = vmatprep.subr.mxu0 0.0
    %2053 = vmatpush1.xpose.msra.mxu0 %v2050
    %2054 = vmatprep.subr.mxu0 0.0
    %2055 = vmatpush1.xpose.msra.mxu0 0.0
    %2056 = vmatprep.subr.mxu0 0.0
    %2057 = vmatpush1.xpose.msra.mxu0 0.0
    %2058 = vmatprep.subr.mxu0 0.0
    %2059 = vmatpush1.xpose.msra.mxu0 0.0
    %2060 = vmatprep.subr.mxu0 0.0
    %2061 = vmatpush1.xpose.msra.mxu0 0.0
    %2062 = vmatprep.subr.mxu0 0.0
    %2063 = vmatpush1.xpose.msra.mxu0 0.0
    %2064 = vmatprep.subr.mxu0 0.0
    %2065 = vmatpush1.xpose.msra.mxu0 0.0
    %2066 = vmatprep.subr.mxu0 0.0
    %2067 = vmatpush1.xpose.msra.mxu0 0.0
    %2068 = vmatprep.subr.mxu0 0.0
    %2069 = vmatpush1.xpose.msra.mxu0 0.0
    %2070 = vmatprep.subr.mxu0 0.0
    %2071 = vmatpush1.xpose.msra.mxu0 0.0
    %2072 = vmatprep.subr.mxu0 0.0
    %2073 = vmatpush1.xpose.msra.mxu0 0.0
    %2074 = vmatprep.subr.mxu0 0.0
    %2075 = vmatpush1.xpose.msra.mxu0 0.0
    %2076 = vmatprep.subr.mxu0 0.0
    %2077 = vmatpush1.xpose.msra.mxu0 0.0
    %2078 = vmatprep.subr.mxu0 0.0
    %2079 = vmatpush1.xpose.msra.mxu0 0.0
    %2080 = vmatprep.subr.mxu0 0.0
    %2081 = vmatpush1.xpose.msra.mxu0 0.0
    %2082 = vmatprep.subr.mxu0 0.0
    %2083 = vmatpush1.xpose.msra.mxu0 0.0
    %2084 = vmatprep.subr.mxu0 0.0
    %2085 = vmatpush1.xpose.msra.mxu0 0.0
    %2086 = vmatprep.subr.mxu0 0.0
    %2087 = vmatpush1.xpose.msra.mxu0 0.0
    %2088 = vmatprep.subr.mxu0 0.0
    %2089 = vmatpush1.xpose.msra.mxu0 0.0
    %2090 = vmatprep.subr.mxu0 0.0
    %2091 = vmatpush1.xpose.msra.mxu0 0.0
    %2092 = vmatprep.subr.mxu0 0.0
    %2093 = vmatpush1.xpose.msra.mxu0 0.0
    %2094 = vmatprep.subr.mxu0 0.0
    %2095 = vmatpush1.xpose.msra.mxu0 0.0
    %2096 = vmatprep.subr.mxu0 0.0
    %2097 = vmatpush1.xpose.msra.mxu0 0.0
    %2098 = vmatprep.subr.mxu0 0.0
    %2099 = vmatpush1.xpose.msra.mxu0 0.0
    %2100 = vmatprep.subr.mxu0 0.0
    %2101 = vmatpush1.xpose.msra.mxu0 0.0
    %2102 = vmatprep.subr.mxu0 0.0
    %2103 = vmatpush1.xpose.msra.mxu0 0.0
    %2104 = vmatprep.subr.mxu0 0.0
    %2105 = vmatpush1.xpose.msra.mxu0 0.0
    %2106 = vmatprep.subr.mxu0 0.0
    %2107 = vmatpush1.xpose.msra.mxu0 0.0
    %2108 = vmatprep.subr.mxu0 0.0
    %2109 = vmatpush1.xpose.msra.mxu0 0.0
    %2110 = vmatprep.subr.mxu0 0.0
    %2111 = vmatpush1.xpose.msra.mxu0 0.0
    %2112 = vmatprep.subr.mxu0 0.0
    %2113 = vmatpush1.xpose.msra.mxu0 0.0
    %2114 = vmatprep.subr.mxu0 0.0
    %2115 = vmatpush1.xpose.msra.mxu0 0.0
    %2116 = vmatprep.mubr.f32.mxu0 0.0
    %2117 = vmatmul.mubr.f32.gmra.mrb[0].mxu0 %v2048
    %v2118 = vpop.f32.mrb[0].mxu0
    %v2119 = vadd.f32 0.0, %v2118
    %v2120 = vpop.f32.mrb[0].mxu0
    %2121 = vdwg.mxu0
    %2122 = vrot.lane.b32.xlu0 %v311, 120
    %v2123 = vpop.permute.xlu0 %2122
    %2124 = vrot.lane.b32.xlu0 %v311, 88
    %v2125 = vpop.permute.xlu0 %2124
    %v2126 = vsel %vm328, %v2123, 0
    %v2128 = vsel %vm328, %v2125, 0
    %2130 = vmatprep.subr.mxu0 0.0
    %2131 = vmatpush1.xpose.msra.mxu0 %v2128
    %2132 = vmatprep.subr.mxu0 0.0
    %2133 = vmatpush1.xpose.msra.mxu0 0.0
    %2134 = vmatprep.subr.mxu0 0.0
    %2135 = vmatpush1.xpose.msra.mxu0 0.0
    %2136 = vmatprep.subr.mxu0 0.0
    %2137 = vmatpush1.xpose.msra.mxu0 0.0
    %2138 = vmatprep.subr.mxu0 0.0
    %2139 = vmatpush1.xpose.msra.mxu0 0.0
    %2140 = vmatprep.subr.mxu0 0.0
    %2141 = vmatpush1.xpose.msra.mxu0 0.0
    %2142 = vmatprep.subr.mxu0 0.0
    %2143 = vmatpush1.xpose.msra.mxu0 0.0
    %2144 = vmatprep.subr.mxu0 0.0
    %2145 = vmatpush1.xpose.msra.mxu0 0.0
    %2146 = vmatprep.subr.mxu0 0.0
    %2147 = vmatpush1.xpose.msra.mxu0 0.0
    %2148 = vmatprep.subr.mxu0 0.0
    %2149 = vmatpush1.xpose.msra.mxu0 0.0
    %2150 = vmatprep.subr.mxu0 0.0
    %2151 = vmatpush1.xpose.msra.mxu0 0.0
    %2152 = vmatprep.subr.mxu0 0.0
    %2153 = vmatpush1.xpose.msra.mxu0 0.0
    %2154 = vmatprep.subr.mxu0 0.0
    %2155 = vmatpush1.xpose.msra.mxu0 0.0
    %2156 = vmatprep.subr.mxu0 0.0
    %2157 = vmatpush1.xpose.msra.mxu0 0.0
    %2158 = vmatprep.subr.mxu0 0.0
    %2159 = vmatpush1.xpose.msra.mxu0 0.0
    %2160 = vmatprep.subr.mxu0 0.0
    %2161 = vmatpush1.xpose.msra.mxu0 0.0
    %2162 = vmatprep.subr.mxu0 0.0
    %2163 = vmatpush1.xpose.msra.mxu0 0.0
    %2164 = vmatprep.subr.mxu0 0.0
    %2165 = vmatpush1.xpose.msra.mxu0 0.0
    %2166 = vmatprep.subr.mxu0 0.0
    %2167 = vmatpush1.xpose.msra.mxu0 0.0
    %2168 = vmatprep.subr.mxu0 0.0
    %2169 = vmatpush1.xpose.msra.mxu0 0.0
    %2170 = vmatprep.subr.mxu0 0.0
    %2171 = vmatpush1.xpose.msra.mxu0 0.0
    %2172 = vmatprep.subr.mxu0 0.0
    %2173 = vmatpush1.xpose.msra.mxu0 0.0
    %2174 = vmatprep.subr.mxu0 0.0
    %2175 = vmatpush1.xpose.msra.mxu0 0.0
    %2176 = vmatprep.subr.mxu0 0.0
    %2177 = vmatpush1.xpose.msra.mxu0 0.0
    %2178 = vmatprep.subr.mxu0 0.0
    %2179 = vmatpush1.xpose.msra.mxu0 0.0
    %2180 = vmatprep.subr.mxu0 0.0
    %2181 = vmatpush1.xpose.msra.mxu0 0.0
    %2182 = vmatprep.subr.mxu0 0.0
    %2183 = vmatpush1.xpose.msra.mxu0 0.0
    %2184 = vmatprep.subr.mxu0 0.0
    %2185 = vmatpush1.xpose.msra.mxu0 0.0
    %2186 = vmatprep.subr.mxu0 0.0
    %2187 = vmatpush1.xpose.msra.mxu0 0.0
    %2188 = vmatprep.subr.mxu0 0.0
    %2189 = vmatpush1.xpose.msra.mxu0 0.0
    %2190 = vmatprep.subr.mxu0 0.0
    %2191 = vmatpush1.xpose.msra.mxu0 0.0
    %2192 = vmatprep.subr.mxu0 0.0
    %2193 = vmatpush1.xpose.msra.mxu0 0.0
    %2194 = vmatprep.mubr.f32.mxu0 0.0
    %2195 = vmatmul.mubr.f32.gmra.mrb[0].mxu0 %v2126
    %v2196 = vpop.f32.mrb[0].mxu0
    %v2197 = vadd.f32 0.0, %v2196
    %v2198 = vpop.f32.mrb[0].mxu0
    %2199 = vdwg.mxu0
    %2200 = vrot.lane.b32.xlu0 %v316, 120
    %v2201 = vpop.permute.xlu0 %2200
    %2202 = vrot.lane.b32.xlu0 %v316, 88
    %v2203 = vpop.permute.xlu0 %2202
    %v2204 = vsel %vm328, %v2201, 0
    %v2206 = vsel %vm328, %v2203, 0
    %2208 = vmatprep.subr.mxu0 0.0
    %2209 = vmatpush1.xpose.msra.mxu0 %v2206
    %2210 = vmatprep.subr.mxu0 0.0
    %2211 = vmatpush1.xpose.msra.mxu0 0.0
    %2212 = vmatprep.subr.mxu0 0.0
    %2213 = vmatpush1.xpose.msra.mxu0 0.0
    %2214 = vmatprep.subr.mxu0 0.0
    %2215 = vmatpush1.xpose.msra.mxu0 0.0
    %2216 = vmatprep.subr.mxu0 0.0
    %2217 = vmatpush1.xpose.msra.mxu0 0.0
    %2218 = vmatprep.subr.mxu0 0.0
    %2219 = vmatpush1.xpose.msra.mxu0 0.0
    %2220 = vmatprep.subr.mxu0 0.0
    %2221 = vmatpush1.xpose.msra.mxu0 0.0
    %2222 = vmatprep.subr.mxu0 0.0
    %2223 = vmatpush1.xpose.msra.mxu0 0.0
    %2224 = vmatprep.subr.mxu0 0.0
    %2225 = vmatpush1.xpose.msra.mxu0 0.0
    %2226 = vmatprep.subr.mxu0 0.0
    %2227 = vmatpush1.xpose.msra.mxu0 0.0
    %2228 = vmatprep.subr.mxu0 0.0
    %2229 = vmatpush1.xpose.msra.mxu0 0.0
    %2230 = vmatprep.subr.mxu0 0.0
    %2231 = vmatpush1.xpose.msra.mxu0 0.0
    %2232 = vmatprep.subr.mxu0 0.0
    %2233 = vmatpush1.xpose.msra.mxu0 0.0
    %2234 = vmatprep.subr.mxu0 0.0
    %2235 = vmatpush1.xpose.msra.mxu0 0.0
    %2236 = vmatprep.subr.mxu0 0.0
    %2237 = vmatpush1.xpose.msra.mxu0 0.0
    %2238 = vmatprep.subr.mxu0 0.0
    %2239 = vmatpush1.xpose.msra.mxu0 0.0
    %2240 = vmatprep.subr.mxu0 0.0
    %2241 = vmatpush1.xpose.msra.mxu0 0.0
    %2242 = vmatprep.subr.mxu0 0.0
    %2243 = vmatpush1.xpose.msra.mxu0 0.0
    %2244 = vmatprep.subr.mxu0 0.0
    %2245 = vmatpush1.xpose.msra.mxu0 0.0
    %2246 = vmatprep.subr.mxu0 0.0
    %2247 = vmatpush1.xpose.msra.mxu0 0.0
    %2248 = vmatprep.subr.mxu0 0.0
    %2249 = vmatpush1.xpose.msra.mxu0 0.0
    %2250 = vmatprep.subr.mxu0 0.0
    %2251 = vmatpush1.xpose.msra.mxu0 0.0
    %2252 = vmatprep.subr.mxu0 0.0
    %2253 = vmatpush1.xpose.msra.mxu0 0.0
    %2254 = vmatprep.subr.mxu0 0.0
    %2255 = vmatpush1.xpose.msra.mxu0 0.0
    %2256 = vmatprep.subr.mxu0 0.0
    %2257 = vmatpush1.xpose.msra.mxu0 0.0
    %2258 = vmatprep.subr.mxu0 0.0
    %2259 = vmatpush1.xpose.msra.mxu0 0.0
    %2260 = vmatprep.subr.mxu0 0.0
    %2261 = vmatpush1.xpose.msra.mxu0 0.0
    %2262 = vmatprep.subr.mxu0 0.0
    %2263 = vmatpush1.xpose.msra.mxu0 0.0
    %2264 = vmatprep.subr.mxu0 0.0
    %2265 = vmatpush1.xpose.msra.mxu0 0.0
    %2266 = vmatprep.subr.mxu0 0.0
    %2267 = vmatpush1.xpose.msra.mxu0 0.0
    %2268 = vmatprep.subr.mxu0 0.0
    %2269 = vmatpush1.xpose.msra.mxu0 0.0
    %2270 = vmatprep.subr.mxu0 0.0
    %2271 = vmatpush1.xpose.msra.mxu0 0.0
    %2272 = vmatprep.mubr.f32.mxu0 0.0
    %2273 = vmatmul.mubr.f32.gmra.mrb[0].mxu0 %v2204
    %v2274 = vpop.f32.mrb[0].mxu0
    %v2275 = vadd.f32 0.0, %v2274
    %v2276 = vpop.f32.mrb[0].mxu0
    %2277 = vdwg.mxu0
    %v2278 = vmul.f32 %v1729, 0.17677669
    %v2279 = vmul.f32 %v1807, 0.17677669
    %v2280 = vmul.f32 %v1885, 0.17677669
    %v2281 = vmul.f32 %v1963, 0.17677669
    %v2282 = vmul.f32 %v2041, 0.17677669
    %v2283 = vmul.f32 %v2119, 0.17677669
    %v2284 = vmul.f32 %v2197, 0.17677669
    %v2285 = vmul.f32 %v2275, 0.17677669
    %v2286 = vadd.f32 %v2278, %v324
    %v2287 = vadd.f32 %v2279, %v324
    %v2288 = vadd.f32 %v2280, %v324
    %v2289 = vadd.f32 %v2281, %v324
    %v2290 = vadd.f32 %v2282, %v324
    %v2291 = vadd.f32 %v2283, %v324
    %v2292 = vadd.f32 %v2284, %v324
    %v2293 = vadd.f32 %v2285, %v324
    %v2294 = vsel %vm328, %v2286, -inf
    %2295 = vmax.xlane.f32.xlu0 %v2294
    %v2296 = vpop.xlane.xlu0 %2295
    %v2297 = vsel %vm328, %v2287, -inf
    %2298 = vmax.xlane.f32.xlu0 %v2297
    %v2299 = vpop.xlane.xlu0 %2298
    %v2300 = vsel %vm328, %v2288, -inf
    %2301 = vmax.xlane.f32.xlu0 %v2300
    %v2302 = vpop.xlane.xlu0 %2301
    %v2303 = vsel %vm328, %v2289, -inf
    %2304 = vmax.xlane.f32.xlu0 %v2303
    %v2305 = vpop.xlane.xlu0 %2304
    %v2306 = vsel %vm328, %v2290, -inf
    %2307 = vmax.xlane.f32.xlu0 %v2306
    %v2308 = vpop.xlane.xlu0 %2307
    %v2309 = vsel %vm328, %v2291, -inf
    %2310 = vmax.xlane.f32.xlu0 %v2309
    %v2311 = vpop.xlane.xlu0 %2310
    %v2312 = vsel %vm328, %v2292, -inf
    %2313 = vmax.xlane.f32.xlu0 %v2312
    %v2314 = vpop.xlane.xlu0 %2313
    %v2315 = vsel %vm328, %v2293, -inf
    %2316 = vmax.xlane.f32.xlu0 %v2315
    %v2317 = vpop.xlane.xlu0 %2316
    %v2318 = vsub.f32 %v2286, %v2296
    %v2319 = vsub.f32 %v2287, %v2299
    %v2320 = vsub.f32 %v2288, %v2302
    %v2321 = vsub.f32 %v2289, %v2305
    %v2322 = vsub.f32 %v2290, %v2308
    %v2323 = vsub.f32 %v2291, %v2311
    %v2324 = vsub.f32 %v2292, %v2314
    %v2325 = vsub.f32 %v2293, %v2317
    %v2326 = vmul.f32 %v2318, 1.442695
    %v2327 = vpow.pop %v2326
    %v2328 = vmul.f32 %v2319, 1.442695
    %v2329 = vpow.pop %v2328
    %v2330 = vmul.f32 %v2320, 1.442695
    %v2331 = vpow.pop %v2330
    %v2332 = vmul.f32 %v2321, 1.442695
    %v2333 = vpow.pop %v2332
    %v2334 = vmul.f32 %v2322, 1.442695
    %v2335 = vpow.pop %v2334
    %v2336 = vmul.f32 %v2323, 1.442695
    %v2337 = vpow.pop %v2336
    %v2338 = vmul.f32 %v2324, 1.442695
    %v2339 = vpow.pop %v2338
    %v2340 = vmul.f32 %v2325, 1.442695
    %v2341 = vpow.pop %v2340
    %v2342 = vsel %vm328, %v2327, 0.0
    %2343 = vadd.xlane.f32.xlu0 %v2342
    %v2344 = vpop.xlane.xlu0 %2343
    %v2345 = vsel %vm328, %v2329, 0.0
    %2346 = vadd.xlane.f32.xlu0 %v2345
    %v2347 = vpop.xlane.xlu0 %2346
    %v2348 = vsel %vm328, %v2331, 0.0
    %2349 = vadd.xlane.f32.xlu0 %v2348
    %v2350 = vpop.xlane.xlu0 %2349
    %v2351 = vsel %vm328, %v2333, 0.0
    %2352 = vadd.xlane.f32.xlu0 %v2351
    %v2353 = vpop.xlane.xlu0 %2352
    %v2354 = vsel %vm328, %v2335, 0.0
    %2355 = vadd.xlane.f32.xlu0 %v2354
    %v2356 = vpop.xlane.xlu0 %2355
    %v2357 = vsel %vm328, %v2337, 0.0
    %2358 = vadd.xlane.f32.xlu0 %v2357
    %v2359 = vpop.xlane.xlu0 %2358
    %v2360 = vsel %vm328, %v2339, 0.0
    %2361 = vadd.xlane.f32.xlu0 %v2360
    %v2362 = vpop.xlane.xlu0 %2361
    %v2363 = vsel %vm328, %v2341, 0.0
    %2364 = vadd.xlane.f32.xlu0 %v2363
    %v2365 = vpop.xlane.xlu0 %2364
    %v2366 = vrcp.pop %v2344
    %v2367 = vrcp.pop %v2347
    %v2368 = vrcp.pop %v2350
    %v2369 = vrcp.pop %v2353
    %v2370 = vrcp.pop %v2356
    %v2371 = vrcp.pop %v2359
    %v2372 = vrcp.pop %v2362
    %v2373 = vrcp.pop %v2365
    %v2374 = vmul.f32 %v2327, %v2366
    %v2375 = vmul.f32 %v2329, %v2367
    %v2376 = vmul.f32 %v2331, %v2368
    %v2377 = vmul.f32 %v2333, %v2369
    %v2378 = vmul.f32 %v2335, %v2370
    %v2379 = vmul.f32 %v2337, %v2371
    %v2380 = vmul.f32 %v2339, %v2372
    %v2381 = vmul.f32 %v2341, %v2373
    %2382 = vrot.lane.b32.xlu0 %v281, 56
    %v2383 = vpop.permute.xlu0 %2382
    %v2386 = vsel %vm328, %v2374, 0
    %2388 = vmatprep.subr.mxu0 0.0
    %2389 = vmatpush1.msra.mxu0 %v2383
    %2390 = vmatprep.subr.mxu0 0.0
    %2391 = vmatpush1.msra.mxu0 0.0
    %2392 = vmatprep.subr.mxu0 0.0
    %2393 = vmatpush1.msra.mxu0 0.0
    %2394 = vmatprep.subr.mxu0 0.0
    %2395 = vmatpush1.msra.mxu0 0.0
    %2396 = vmatprep.subr.mxu0 0.0
    %2397 = vmatpush1.msra.mxu0 0.0
    %2398 = vmatprep.subr.mxu0 0.0
    %2399 = vmatpush1.msra.mxu0 0.0
    %2400 = vmatprep.subr.mxu0 0.0
    %2401 = vmatpush1.msra.mxu0 0.0
    %2402 = vmatprep.subr.mxu0 0.0
    %2403 = vmatpush1.msra.mxu0 0.0
    %2404 = vmatprep.subr.mxu0 0.0
    %2405 = vmatpush1.msra.mxu0 0.0
    %2406 = vmatprep.subr.mxu0 0.0
    %2407 = vmatpush1.msra.mxu0 0.0
    %2408 = vmatprep.subr.mxu0 0.0
    %2409 = vmatpush1.msra.mxu0 0.0
    %2410 = vmatprep.subr.mxu0 0.0
    %2411 = vmatpush1.msra.mxu0 0.0
    %2412 = vmatprep.subr.mxu0 0.0
    %2413 = vmatpush1.msra.mxu0 0.0
    %2414 = vmatprep.subr.mxu0 0.0
    %2415 = vmatpush1.msra.mxu0 0.0
    %2416 = vmatprep.subr.mxu0 0.0
    %2417 = vmatpush1.msra.mxu0 0.0
    %2418 = vmatprep.subr.mxu0 0.0
    %2419 = vmatpush1.msra.mxu0 0.0
    %2420 = vmatprep.subr.mxu0 0.0
    %2421 = vmatpush1.msra.mxu0 0.0
    %2422 = vmatprep.subr.mxu0 0.0
    %2423 = vmatpush1.msra.mxu0 0.0
    %2424 = vmatprep.subr.mxu0 0.0
    %2425 = vmatpush1.msra.mxu0 0.0
    %2426 = vmatprep.subr.mxu0 0.0
    %2427 = vmatpush1.msra.mxu0 0.0
    %2428 = vmatprep.subr.mxu0 0.0
    %2429 = vmatpush1.msra.mxu0 0.0
    %2430 = vmatprep.subr.mxu0 0.0
    %2431 = vmatpush1.msra.mxu0 0.0
    %2432 = vmatprep.subr.mxu0 0.0
    %2433 = vmatpush1.msra.mxu0 0.0
    %2434 = vmatprep.subr.mxu0 0.0
    %2435 = vmatpush1.msra.mxu0 0.0
    %2436 = vmatprep.subr.mxu0 0.0
    %2437 = vmatpush1.msra.mxu0 0.0
    %2438 = vmatprep.subr.mxu0 0.0
    %2439 = vmatpush1.msra.mxu0 0.0
    %2440 = vmatprep.subr.mxu0 0.0
    %2441 = vmatpush1.msra.mxu0 0.0
    %2442 = vmatprep.subr.mxu0 0.0
    %2443 = vmatpush1.msra.mxu0 0.0
    %2444 = vmatprep.subr.mxu0 0.0
    %2445 = vmatpush1.msra.mxu0 0.0
    %2446 = vmatprep.subr.mxu0 0.0
    %2447 = vmatpush1.msra.mxu0 0.0
    %2448 = vmatprep.subr.mxu0 0.0
    %2449 = vmatpush1.msra.mxu0 0.0
    %2450 = vmatprep.subr.mxu0 0.0
    %2451 = vmatpush1.msra.mxu0 0.0
    %2452 = vmatprep.mubr.f32.mxu0 0.0
    %2453 = vmatmul.mubr.f32.gmra.mrb[0].mxu0 %v2386
    %v2454 = vpop.f32.mrb[0].mxu0
    %v2455 = vadd.f32 0.0, %v2454
    %v2456 = vpop.f32.mrb[0].mxu0
    %2457 = vdwg.mxu0
    %2458 = vrot.lane.b32.xlu0 %v286, 56
    %v2459 = vpop.permute.xlu0 %2458
    %v2462 = vsel %vm328, %v2375, 0
    %2464 = vmatprep.subr.mxu0 0.0
    %2465 = vmatpush1.msra.mxu0 %v2459
    %2466 = vmatprep.subr.mxu0 0.0
    %2467 = vmatpush1.msra.mxu0 0.0
    %2468 = vmatprep.subr.mxu0 0.0
    %2469 = vmatpush1.msra.mxu0 0.0
    %2470 = vmatprep.subr.mxu0 0.0
    %2471 = vmatpush1.msra.mxu0 0.0
    %2472 = vmatprep.subr.mxu0 0.0
    %2473 = vmatpush1.msra.mxu0 0.0
    %2474 = vmatprep.subr.mxu0 0.0
    %2475 = vmatpush1.msra.mxu0 0.0
    %2476 = vmatprep.subr.mxu0 0.0
    %2477 = vmatpush1.msra.mxu0 0.0
    %2478 = vmatprep.subr.mxu0 0.0
    %2479 = vmatpush1.msra.mxu0 0.0
    %2480 = vmatprep.subr.mxu0 0.0
    %2481 = vmatpush1.msra.mxu0 0.0
    %2482 = vmatprep.subr.mxu0 0.0
    %2483 = vmatpush1.msra.mxu0 0.0
    %2484 = vmatprep.subr.mxu0 0.0
    %2485 = vmatpush1.msra.mxu0 0.0
    %2486 = vmatprep.subr.mxu0 0.0
    %2487 = vmatpush1.msra.mxu0 0.0
    %2488 = vmatprep.subr.mxu0 0.0
    %2489 = vmatpush1.msra.mxu0 0.0
    %2490 = vmatprep.subr.mxu0 0.0
    %2491 = vmatpush1.msra.mxu0 0.0
    %2492 = vmatprep.subr.mxu0 0.0
    %2493 = vmatpush1.msra.mxu0 0.0
    %2494 = vmatprep.subr.mxu0 0.0
    %2495 = vmatpush1.msra.mxu0 0.0
    %2496 = vmatprep.subr.mxu0 0.0
    %2497 = vmatpush1.msra.mxu0 0.0
    %2498 = vmatprep.subr.mxu0 0.0
    %2499 = vmatpush1.msra.mxu0 0.0
    %2500 = vmatprep.subr.mxu0 0.0
    %2501 = vmatpush1.msra.mxu0 0.0
    %2502 = vmatprep.subr.mxu0 0.0
    %2503 = vmatpush1.msra.mxu0 0.0
    %2504 = vmatprep.subr.mxu0 0.0
    %2505 = vmatpush1.msra.mxu0 0.0
    %2506 = vmatprep.subr.mxu0 0.0
    %2507 = vmatpush1.msra.mxu0 0.0
    %2508 = vmatprep.subr.mxu0 0.0
    %2509 = vmatpush1.msra.mxu0 0.0
    %2510 = vmatprep.subr.mxu0 0.0
    %2511 = vmatpush1.msra.mxu0 0.0
    %2512 = vmatprep.subr.mxu0 0.0
    %2513 = vmatpush1.msra.mxu0 0.0
    %2514 = vmatprep.subr.mxu0 0.0
    %2515 = vmatpush1.msra.mxu0 0.0
    %2516 = vmatprep.subr.mxu0 0.0
    %2517 = vmatpush1.msra.mxu0 0.0
    %2518 = vmatprep.subr.mxu0 0.0
    %2519 = vmatpush1.msra.mxu0 0.0
    %2520 = vmatprep.subr.mxu0 0.0
    %2521 = vmatpush1.msra.mxu0 0.0
    %2522 = vmatprep.subr.mxu0 0.0
    %2523 = vmatpush1.msra.mxu0 0.0
    %2524 = vmatprep.subr.mxu0 0.0
    %2525 = vmatpush1.msra.mxu0 0.0
    %2526 = vmatprep.subr.mxu0 0.0
    %2527 = vmatpush1.msra.mxu0 0.0
    %2528 = vmatprep.mubr.f32.mxu0 0.0
    %2529 = vmatmul.mubr.f32.gmra.mrb[0].mxu0 %v2462
    %v2530 = vpop.f32.mrb[0].mxu0
    %v2531 = vadd.f32 0.0, %v2530
    %v2532 = vpop.f32.mrb[0].mxu0
    %2533 = vdwg.mxu0
    %2534 = vrot.lane.b32.xlu0 %v291, 56
    %v2535 = vpop.permute.xlu0 %2534
    %v2538 = vsel %vm328, %v2376, 0
    %2540 = vmatprep.subr.mxu0 0.0
    %2541 = vmatpush1.msra.mxu0 %v2535
    %2542 = vmatprep.subr.mxu0 0.0
    %2543 = vmatpush1.msra.mxu0 0.0
    %2544 = vmatprep.subr.mxu0 0.0
    %2545 = vmatpush1.msra.mxu0 0.0
    %2546 = vmatprep.subr.mxu0 0.0
    %2547 = vmatpush1.msra.mxu0 0.0
    %2548 = vmatprep.subr.mxu0 0.0
    %2549 = vmatpush1.msra.mxu0 0.0
    %2550 = vmatprep.subr.mxu0 0.0
    %2551 = vmatpush1.msra.mxu0 0.0
    %2552 = vmatprep.subr.mxu0 0.0
    %2553 = vmatpush1.msra.mxu0 0.0
    %2554 = vmatprep.subr.mxu0 0.0
    %2555 = vmatpush1.msra.mxu0 0.0
    %2556 = vmatprep.subr.mxu0 0.0
    %2557 = vmatpush1.msra.mxu0 0.0
    %2558 = vmatprep.subr.mxu0 0.0
    %2559 = vmatpush1.msra.mxu0 0.0
    %2560 = vmatprep.subr.mxu0 0.0
    %2561 = vmatpush1.msra.mxu0 0.0
    %2562 = vmatprep.subr.mxu0 0.0
    %2563 = vmatpush1.msra.mxu0 0.0
    %2564 = vmatprep.subr.mxu0 0.0
    %2565 = vmatpush1.msra.mxu0 0.0
    %2566 = vmatprep.subr.mxu0 0.0
    %2567 = vmatpush1.msra.mxu0 0.0
    %2568 = vmatprep.subr.mxu0 0.0
    %2569 = vmatpush1.msra.mxu0 0.0
    %2570 = vmatprep.subr.mxu0 0.0
    %2571 = vmatpush1.msra.mxu0 0.0
    %2572 = vmatprep.subr.mxu0 0.0
    %2573 = vmatpush1.msra.mxu0 0.0
    %2574 = vmatprep.subr.mxu0 0.0
    %2575 = vmatpush1.msra.mxu0 0.0
    %2576 = vmatprep.subr.mxu0 0.0
    %2577 = vmatpush1.msra.mxu0 0.0
    %2578 = vmatprep.subr.mxu0 0.0
    %2579 = vmatpush1.msra.mxu0 0.0
    %2580 = vmatprep.subr.mxu0 0.0
    %2581 = vmatpush1.msra.mxu0 0.0
    %2582 = vmatprep.subr.mxu0 0.0
    %2583 = vmatpush1.msra.mxu0 0.0
    %2584 = vmatprep.subr.mxu0 0.0
    %2585 = vmatpush1.msra.mxu0 0.0
    %2586 = vmatprep.subr.mxu0 0.0
    %2587 = vmatpush1.msra.mxu0 0.0
    %2588 = vmatprep.subr.mxu0 0.0
    %2589 = vmatpush1.msra.mxu0 0.0
    %2590 = vmatprep.subr.mxu0 0.0
    %2591 = vmatpush1.msra.mxu0 0.0
    %2592 = vmatprep.subr.mxu0 0.0
    %2593 = vmatpush1.msra.mxu0 0.0
    %2594 = vmatprep.subr.mxu0 0.0
    %2595 = vmatpush1.msra.mxu0 0.0
    %2596 = vmatprep.subr.mxu0 0.0
    %2597 = vmatpush1.msra.mxu0 0.0
    %2598 = vmatprep.subr.mxu0 0.0
    %2599 = vmatpush1.msra.mxu0 0.0
    %2600 = vmatprep.subr.mxu0 0.0
    %2601 = vmatpush1.msra.mxu0 0.0
    %2602 = vmatprep.subr.mxu0 0.0
    %2603 = vmatpush1.msra.mxu0 0.0
    %2604 = vmatprep.mubr.f32.mxu0 0.0
    %2605 = vmatmul.mubr.f32.gmra.mrb[0].mxu0 %v2538
    %v2606 = vpop.f32.mrb[0].mxu0
    %v2607 = vadd.f32 0.0, %v2606
    %v2608 = vpop.f32.mrb[0].mxu0
    %2609 = vdwg.mxu0
    %2610 = vrot.lane.b32.xlu0 %v296, 56
    %v2611 = vpop.permute.xlu0 %2610
    %v2614 = vsel %vm328, %v2377, 0
    %2616 = vmatprep.subr.mxu0 0.0
    %2617 = vmatpush1.msra.mxu0 %v2611
    %2618 = vmatprep.subr.mxu0 0.0
    %2619 = vmatpush1.msra.mxu0 0.0
    %2620 = vmatprep.subr.mxu0 0.0
    %2621 = vmatpush1.msra.mxu0 0.0
    %2622 = vmatprep.subr.mxu0 0.0
    %2623 = vmatpush1.msra.mxu0 0.0
    %2624 = vmatprep.subr.mxu0 0.0
    %2625 = vmatpush1.msra.mxu0 0.0
    %2626 = vmatprep.subr.mxu0 0.0
    %2627 = vmatpush1.msra.mxu0 0.0
    %2628 = vmatprep.subr.mxu0 0.0
    %2629 = vmatpush1.msra.mxu0 0.0
    %2630 = vmatprep.subr.mxu0 0.0
    %2631 = vmatpush1.msra.mxu0 0.0
    %2632 = vmatprep.subr.mxu0 0.0
    %2633 = vmatpush1.msra.mxu0 0.0
    %2634 = vmatprep.subr.mxu0 0.0
    %2635 = vmatpush1.msra.mxu0 0.0
    %2636 = vmatprep.subr.mxu0 0.0
    %2637 = vmatpush1.msra.mxu0 0.0
    %2638 = vmatprep.subr.mxu0 0.0
    %2639 = vmatpush1.msra.mxu0 0.0
    %2640 = vmatprep.subr.mxu0 0.0
    %2641 = vmatpush1.msra.mxu0 0.0
    %2642 = vmatprep.subr.mxu0 0.0
    %2643 = vmatpush1.msra.mxu0 0.0
    %2644 = vmatprep.subr.mxu0 0.0
    %2645 = vmatpush1.msra.mxu0 0.0
    %2646 = vmatprep.subr.mxu0 0.0
    %2647 = vmatpush1.msra.mxu0 0.0
    %2648 = vmatprep.subr.mxu0 0.0
    %2649 = vmatpush1.msra.mxu0 0.0
    %2650 = vmatprep.subr.mxu0 0.0
    %2651 = vmatpush1.msra.mxu0 0.0
    %2652 = vmatprep.subr.mxu0 0.0
    %2653 = vmatpush1.msra.mxu0 0.0
    %2654 = vmatprep.subr.mxu0 0.0
    %2655 = vmatpush1.msra.mxu0 0.0
    %2656 = vmatprep.subr.mxu0 0.0
    %2657 = vmatpush1.msra.mxu0 0.0
    %2658 = vmatprep.subr.mxu0 0.0
    %2659 = vmatpush1.msra.mxu0 0.0
    %2660 = vmatprep.subr.mxu0 0.0
    %2661 = vmatpush1.msra.mxu0 0.0
    %2662 = vmatprep.subr.mxu0 0.0
    %2663 = vmatpush1.msra.mxu0 0.0
    %2664 = vmatprep.subr.mxu0 0.0
    %2665 = vmatpush1.msra.mxu0 0.0
    %2666 = vmatprep.subr.mxu0 0.0
    %2667 = vmatpush1.msra.mxu0 0.0
    %2668 = vmatprep.subr.mxu0 0.0
    %2669 = vmatpush1.msra.mxu0 0.0
    %2670 = vmatprep.subr.mxu0 0.0
    %2671 = vmatpush1.msra.mxu0 0.0
    %2672 = vmatprep.subr.mxu0 0.0
    %2673 = vmatpush1.msra.mxu0 0.0
    %2674 = vmatprep.subr.mxu0 0.0
    %2675 = vmatpush1.msra.mxu0 0.0
    %2676 = vmatprep.subr.mxu0 0.0
    %2677 = vmatpush1.msra.mxu0 0.0
    %2678 = vmatprep.subr.mxu0 0.0
    %2679 = vmatpush1.msra.mxu0 0.0
    %2680 = vmatprep.mubr.f32.mxu0 0.0
    %2681 = vmatmul.mubr.f32.gmra.mrb[0].mxu0 %v2614
    %v2682 = vpop.f32.mrb[0].mxu0
    %v2683 = vadd.f32 0.0, %v2682
    %v2684 = vpop.f32.mrb[0].mxu0
    %2685 = vdwg.mxu0
    %2686 = vrot.lane.b32.xlu0 %v301, 56
    %v2687 = vpop.permute.xlu0 %2686
    %v2690 = vsel %vm328, %v2378, 0
    %2692 = vmatprep.subr.mxu0 0.0
    %2693 = vmatpush1.msra.mxu0 %v2687
    %2694 = vmatprep.subr.mxu0 0.0
    %2695 = vmatpush1.msra.mxu0 0.0
    %2696 = vmatprep.subr.mxu0 0.0
    %2697 = vmatpush1.msra.mxu0 0.0
    %2698 = vmatprep.subr.mxu0 0.0
    %2699 = vmatpush1.msra.mxu0 0.0
    %2700 = vmatprep.subr.mxu0 0.0
    %2701 = vmatpush1.msra.mxu0 0.0
    %2702 = vmatprep.subr.mxu0 0.0
    %2703 = vmatpush1.msra.mxu0 0.0
    %2704 = vmatprep.subr.mxu0 0.0
    %2705 = vmatpush1.msra.mxu0 0.0
    %2706 = vmatprep.subr.mxu0 0.0
    %2707 = vmatpush1.msra.mxu0 0.0
    %2708 = vmatprep.subr.mxu0 0.0
    %2709 = vmatpush1.msra.mxu0 0.0
    %2710 = vmatprep.subr.mxu0 0.0
    %2711 = vmatpush1.msra.mxu0 0.0
    %2712 = vmatprep.subr.mxu0 0.0
    %2713 = vmatpush1.msra.mxu0 0.0
    %2714 = vmatprep.subr.mxu0 0.0
    %2715 = vmatpush1.msra.mxu0 0.0
    %2716 = vmatprep.subr.mxu0 0.0
    %2717 = vmatpush1.msra.mxu0 0.0
    %2718 = vmatprep.subr.mxu0 0.0
    %2719 = vmatpush1.msra.mxu0 0.0
    %2720 = vmatprep.subr.mxu0 0.0
    %2721 = vmatpush1.msra.mxu0 0.0
    %2722 = vmatprep.subr.mxu0 0.0
    %2723 = vmatpush1.msra.mxu0 0.0
    %2724 = vmatprep.subr.mxu0 0.0
    %2725 = vmatpush1.msra.mxu0 0.0
    %2726 = vmatprep.subr.mxu0 0.0
    %2727 = vmatpush1.msra.mxu0 0.0
    %2728 = vmatprep.subr.mxu0 0.0
    %2729 = vmatpush1.msra.mxu0 0.0
    %2730 = vmatprep.subr.mxu0 0.0
    %2731 = vmatpush1.msra.mxu0 0.0
    %2732 = vmatprep.subr.mxu0 0.0
    %2733 = vmatpush1.msra.mxu0 0.0
    %2734 = vmatprep.subr.mxu0 0.0
    %2735 = vmatpush1.msra.mxu0 0.0
    %2736 = vmatprep.subr.mxu0 0.0
    %2737 = vmatpush1.msra.mxu0 0.0
    %2738 = vmatprep.subr.mxu0 0.0
    %2739 = vmatpush1.msra.mxu0 0.0
    %2740 = vmatprep.subr.mxu0 0.0
    %2741 = vmatpush1.msra.mxu0 0.0
    %2742 = vmatprep.subr.mxu0 0.0
    %2743 = vmatpush1.msra.mxu0 0.0
    %2744 = vmatprep.subr.mxu0 0.0
    %2745 = vmatpush1.msra.mxu0 0.0
    %2746 = vmatprep.subr.mxu0 0.0
    %2747 = vmatpush1.msra.mxu0 0.0
    %2748 = vmatprep.subr.mxu0 0.0
    %2749 = vmatpush1.msra.mxu0 0.0
    %2750 = vmatprep.subr.mxu0 0.0
    %2751 = vmatpush1.msra.mxu0 0.0
    %2752 = vmatprep.subr.mxu0 0.0
    %2753 = vmatpush1.msra.mxu0 0.0
    %2754 = vmatprep.subr.mxu0 0.0
    %2755 = vmatpush1.msra.mxu0 0.0
    %2756 = vmatprep.mubr.f32.mxu0 0.0
    %2757 = vmatmul.mubr.f32.gmra.mrb[0].mxu0 %v2690
    %v2758 = vpop.f32.mrb[0].mxu0
    %v2759 = vadd.f32 0.0, %v2758
    %v2760 = vpop.f32.mrb[0].mxu0
    %2761 = vdwg.mxu0
    %2762 = vrot.lane.b32.xlu0 %v306, 56
    %v2763 = vpop.permute.xlu0 %2762
    %v2766 = vsel %vm328, %v2379, 0
    %2768 = vmatprep.subr.mxu0 0.0
    %2769 = vmatpush1.msra.mxu0 %v2763
    %2770 = vmatprep.subr.mxu0 0.0
    %2771 = vmatpush1.msra.mxu0 0.0
    %2772 = vmatprep.subr.mxu0 0.0
    %2773 = vmatpush1.msra.mxu0 0.0
    %2774 = vmatprep.subr.mxu0 0.0
    %2775 = vmatpush1.msra.mxu0 0.0
    %2776 = vmatprep.subr.mxu0 0.0
    %2777 = vmatpush1.msra.mxu0 0.0
    %2778 = vmatprep.subr.mxu0 0.0
    %2779 = vmatpush1.msra.mxu0 0.0
    %2780 = vmatprep.subr.mxu0 0.0
    %2781 = vmatpush1.msra.mxu0 0.0
    %2782 = vmatprep.subr.mxu0 0.0
    %2783 = vmatpush1.msra.mxu0 0.0
    %2784 = vmatprep.subr.mxu0 0.0
    %2785 = vmatpush1.msra.mxu0 0.0
    %2786 = vmatprep.subr.mxu0 0.0
    %2787 = vmatpush1.msra.mxu0 0.0
    %2788 = vmatprep.subr.mxu0 0.0
    %2789 = vmatpush1.msra.mxu0 0.0
    %2790 = vmatprep.subr.mxu0 0.0
    %2791 = vmatpush1.msra.mxu0 0.0
    %2792 = vmatprep.subr.mxu0 0.0
    %2793 = vmatpush1.msra.mxu0 0.0
    %2794 = vmatprep.subr.mxu0 0.0
    %2795 = vmatpush1.msra.mxu0 0.0
    %2796 = vmatprep.subr.mxu0 0.0
    %2797 = vmatpush1.msra.mxu0 0.0
    %2798 = vmatprep.subr.mxu0 0.0
    %2799 = vmatpush1.msra.mxu0 0.0
    %2800 = vmatprep.subr.mxu0 0.0
    %2801 = vmatpush1.msra.mxu0 0.0
    %2802 = vmatprep.subr.mxu0 0.0
    %2803 = vmatpush1.msra.mxu0 0.0
    %2804 = vmatprep.subr.mxu0 0.0
    %2805 = vmatpush1.msra.mxu0 0.0
    %2806 = vmatprep.subr.mxu0 0.0
    %2807 = vmatpush1.msra.mxu0 0.0
    %2808 = vmatprep.subr.mxu0 0.0
    %2809 = vmatpush1.msra.mxu0 0.0
    %2810 = vmatprep.subr.mxu0 0.0
    %2811 = vmatpush1.msra.mxu0 0.0
    %2812 = vmatprep.subr.mxu0 0.0
    %2813 = vmatpush1.msra.mxu0 0.0
    %2814 = vmatprep.subr.mxu0 0.0
    %2815 = vmatpush1.msra.mxu0 0.0
    %2816 = vmatprep.subr.mxu0 0.0
    %2817 = vmatpush1.msra.mxu0 0.0
    %2818 = vmatprep.subr.mxu0 0.0
    %2819 = vmatpush1.msra.mxu0 0.0
    %2820 = vmatprep.subr.mxu0 0.0
    %2821 = vmatpush1.msra.mxu0 0.0
    %2822 = vmatprep.subr.mxu0 0.0
    %2823 = vmatpush1.msra.mxu0 0.0
    %2824 = vmatprep.subr.mxu0 0.0
    %2825 = vmatpush1.msra.mxu0 0.0
    %2826 = vmatprep.subr.mxu0 0.0
    %2827 = vmatpush1.msra.mxu0 0.0
    %2828 = vmatprep.subr.mxu0 0.0
    %2829 = vmatpush1.msra.mxu0 0.0
    %2830 = vmatprep.subr.mxu0 0.0
    %2831 = vmatpush1.msra.mxu0 0.0
    %2832 = vmatprep.mubr.f32.mxu0 0.0
    %2833 = vmatmul.mubr.f32.gmra.mrb[0].mxu0 %v2766
    %v2834 = vpop.f32.mrb[0].mxu0
    %v2835 = vadd.f32 0.0, %v2834
    %v2836 = vpop.f32.mrb[0].mxu0
    %2837 = vdwg.mxu0
    %2838 = vrot.lane.b32.xlu0 %v311, 56
    %v2839 = vpop.permute.xlu0 %2838
    %v2842 = vsel %vm328, %v2380, 0
    %2844 = vmatprep.subr.mxu0 0.0
    %2845 = vmatpush1.msra.mxu0 %v2839
    %2846 = vmatprep.subr.mxu0 0.0
    %2847 = vmatpush1.msra.mxu0 0.0
    %2848 = vmatprep.subr.mxu0 0.0
    %2849 = vmatpush1.msra.mxu0 0.0
    %2850 = vmatprep.subr.mxu0 0.0
    %2851 = vmatpush1.msra.mxu0 0.0
    %2852 = vmatprep.subr.mxu0 0.0
    %2853 = vmatpush1.msra.mxu0 0.0
    %2854 = vmatprep.subr.mxu0 0.0
    %2855 = vmatpush1.msra.mxu0 0.0
    %2856 = vmatprep.subr.mxu0 0.0
    %2857 = vmatpush1.msra.mxu0 0.0
    %2858 = vmatprep.subr.mxu0 0.0
    %2859 = vmatpush1.msra.mxu0 0.0
    %2860 = vmatprep.subr.mxu0 0.0
    %2861 = vmatpush1.msra.mxu0 0.0
    %2862 = vmatprep.subr.mxu0 0.0
    %2863 = vmatpush1.msra.mxu0 0.0
    %2864 = vmatprep.subr.mxu0 0.0
    %2865 = vmatpush1.msra.mxu0 0.0
    %2866 = vmatprep.subr.mxu0 0.0
    %2867 = vmatpush1.msra.mxu0 0.0
    %2868 = vmatprep.subr.mxu0 0.0
    %2869 = vmatpush1.msra.mxu0 0.0
    %2870 = vmatprep.subr.mxu0 0.0
    %2871 = vmatpush1.msra.mxu0 0.0
    %2872 = vmatprep.subr.mxu0 0.0
    %2873 = vmatpush1.msra.mxu0 0.0
    %2874 = vmatprep.subr.mxu0 0.0
    %2875 = vmatpush1.msra.mxu0 0.0
    %2876 = vmatprep.subr.mxu0 0.0
    %2877 = vmatpush1.msra.mxu0 0.0
    %2878 = vmatprep.subr.mxu0 0.0
    %2879 = vmatpush1.msra.mxu0 0.0
    %2880 = vmatprep.subr.mxu0 0.0
    %2881 = vmatpush1.msra.mxu0 0.0
    %2882 = vmatprep.subr.mxu0 0.0
    %2883 = vmatpush1.msra.mxu0 0.0
    %2884 = vmatprep.subr.mxu0 0.0
    %2885 = vmatpush1.msra.mxu0 0.0
    %2886 = vmatprep.subr.mxu0 0.0
    %2887 = vmatpush1.msra.mxu0 0.0
    %2888 = vmatprep.subr.mxu0 0.0
    %2889 = vmatpush1.msra.mxu0 0.0
    %2890 = vmatprep.subr.mxu0 0.0
    %2891 = vmatpush1.msra.mxu0 0.0
    %2892 = vmatprep.subr.mxu0 0.0
    %2893 = vmatpush1.msra.mxu0 0.0
    %2894 = vmatprep.subr.mxu0 0.0
    %2895 = vmatpush1.msra.mxu0 0.0
    %2896 = vmatprep.subr.mxu0 0.0
    %2897 = vmatpush1.msra.mxu0 0.0
    %2898 = vmatprep.subr.mxu0 0.0
    %2899 = vmatpush1.msra.mxu0 0.0
    %2900 = vmatprep.subr.mxu0 0.0
    %2901 = vmatpush1.msra.mxu0 0.0
    %2902 = vmatprep.subr.mxu0 0.0
    %2903 = vmatpush1.msra.mxu0 0.0
    %2904 = vmatprep.subr.mxu0 0.0
    %2905 = vmatpush1.msra.mxu0 0.0
    %2906 = vmatprep.subr.mxu0 0.0
    %2907 = vmatpush1.msra.mxu0 0.0
    %2908 = vmatprep.mubr.f32.mxu0 0.0
    %2909 = vmatmul.mubr.f32.gmra.mrb[0].mxu0 %v2842
    %v2910 = vpop.f32.mrb[0].mxu0
    %v2911 = vadd.f32 0.0, %v2910
    %v2912 = vpop.f32.mrb[0].mxu0
    %2913 = vdwg.mxu0
    %2914 = vrot.lane.b32.xlu0 %v316, 56
    %v2915 = vpop.permute.xlu0 %2914
    %v2918 = vsel %vm328, %v2381, 0
    %2920 = vmatprep.subr.mxu0 0.0
    %2921 = vmatpush1.msra.mxu0 %v2915
    %2922 = vmatprep.subr.mxu0 0.0
    %2923 = vmatpush1.msra.mxu0 0.0
    %2924 = vmatprep.subr.mxu0 0.0
    %2925 = vmatpush1.msra.mxu0 0.0
    %2926 = vmatprep.subr.mxu0 0.0
    %2927 = vmatpush1.msra.mxu0 0.0
    %2928 = vmatprep.subr.mxu0 0.0
    %2929 = vmatpush1.msra.mxu0 0.0
    %2930 = vmatprep.subr.mxu0 0.0
    %2931 = vmatpush1.msra.mxu0 0.0
    %2932 = vmatprep.subr.mxu0 0.0
    %2933 = vmatpush1.msra.mxu0 0.0
    %2934 = vmatprep.subr.mxu0 0.0
    %2935 = vmatpush1.msra.mxu0 0.0
    %2936 = vmatprep.subr.mxu0 0.0
    %2937 = vmatpush1.msra.mxu0 0.0
    %2938 = vmatprep.subr.mxu0 0.0
    %2939 = vmatpush1.msra.mxu0 0.0
    %2940 = vmatprep.subr.mxu0 0.0
    %2941 = vmatpush1.msra.mxu0 0.0
    %2942 = vmatprep.subr.mxu0 0.0
    %2943 = vmatpush1.msra.mxu0 0.0
    %2944 = vmatprep.subr.mxu0 0.0
    %2945 = vmatpush1.msra.mxu0 0.0
    %2946 = vmatprep.subr.mxu0 0.0
    %2947 = vmatpush1.msra.mxu0 0.0
    %2948 = vmatprep.subr.mxu0 0.0
    %2949 = vmatpush1.msra.mxu0 0.0
    %2950 = vmatprep.subr.mxu0 0.0
    %2951 = vmatpush1.msra.mxu0 0.0
    %2952 = vmatprep.subr.mxu0 0.0
    %2953 = vmatpush1.msra.mxu0 0.0
    %2954 = vmatprep.subr.mxu0 0.0
    %2955 = vmatpush1.msra.mxu0 0.0
    %2956 = vmatprep.subr.mxu0 0.0
    %2957 = vmatpush1.msra.mxu0 0.0
    %2958 = vmatprep.subr.mxu0 0.0
    %2959 = vmatpush1.msra.mxu0 0.0
    %2960 = vmatprep.subr.mxu0 0.0
    %2961 = vmatpush1.msra.mxu0 0.0
    %2962 = vmatprep.subr.mxu0 0.0
    %2963 = vmatpush1.msra.mxu0 0.0
    %2964 = vmatprep.subr.mxu0 0.0
    %2965 = vmatpush1.msra.mxu0 0.0
    %2966 = vmatprep.subr.mxu0 0.0
    %2967 = vmatpush1.msra.mxu0 0.0
    %2968 = vmatprep.subr.mxu0 0.0
    %2969 = vmatpush1.msra.mxu0 0.0
    %2970 = vmatprep.subr.mxu0 0.0
    %2971 = vmatpush1.msra.mxu0 0.0
    %2972 = vmatprep.subr.mxu0 0.0
    %2973 = vmatpush1.msra.mxu0 0.0
    %2974 = vmatprep.subr.mxu0 0.0
    %2975 = vmatpush1.msra.mxu0 0.0
    %2976 = vmatprep.subr.mxu0 0.0
    %2977 = vmatpush1.msra.mxu0 0.0
    %2978 = vmatprep.subr.mxu0 0.0
    %2979 = vmatpush1.msra.mxu0 0.0
    %2980 = vmatprep.subr.mxu0 0.0
    %2981 = vmatpush1.msra.mxu0 0.0
    %2982 = vmatprep.subr.mxu0 0.0
    %2983 = vmatpush1.msra.mxu0 0.0
    %2984 = vmatprep.mubr.f32.mxu0 0.0
    %2985 = vmatmul.mubr.f32.gmra.mrb[0].mxu0 %v2918
    %v2986 = vpop.f32.mrb[0].mxu0
    %v2987 = vadd.f32 0.0, %v2986
    %v2988 = vpop.f32.mrb[0].mxu0
    %2989 = vdwg.mxu0
    %2990 = vrot.lane.b32.xlu0 %v281, 112
    %v2991 = vpop.permute.xlu0 %2990
    %2992 = vrot.lane.b32.xlu0 %v281, 80
    %v2993 = vpop.permute.xlu0 %2992
    %v2994 = vsel %vm328, %v2991, 0
    %v2996 = vsel %vm328, %v2993, 0
    %2998 = vmatprep.subr.mxu0 0.0
    %2999 = vmatpush1.xpose.msra.mxu0 %v2996
    %3000 = vmatprep.subr.mxu0 0.0
    %3001 = vmatpush1.xpose.msra.mxu0 0.0
    %3002 = vmatprep.subr.mxu0 0.0
    %3003 = vmatpush1.xpose.msra.mxu0 0.0
    %3004 = vmatprep.subr.mxu0 0.0
    %3005 = vmatpush1.xpose.msra.mxu0 0.0
    %3006 = vmatprep.subr.mxu0 0.0
    %3007 = vmatpush1.xpose.msra.mxu0 0.0
    %3008 = vmatprep.subr.mxu0 0.0
    %3009 = vmatpush1.xpose.msra.mxu0 0.0
    %3010 = vmatprep.subr.mxu0 0.0
    %3011 = vmatpush1.xpose.msra.mxu0 0.0
    %3012 = vmatprep.subr.mxu0 0.0
    %3013 = vmatpush1.xpose.msra.mxu0 0.0
    %3014 = vmatprep.subr.mxu0 0.0
    %3015 = vmatpush1.xpose.msra.mxu0 0.0
    %3016 = vmatprep.subr.mxu0 0.0
    %3017 = vmatpush1.xpose.msra.mxu0 0.0
    %3018 = vmatprep.subr.mxu0 0.0
    %3019 = vmatpush1.xpose.msra.mxu0 0.0
    %3020 = vmatprep.subr.mxu0 0.0
    %3021 = vmatpush1.xpose.msra.mxu0 0.0
    %3022 = vmatprep.subr.mxu0 0.0
    %3023 = vmatpush1.xpose.msra.mxu0 0.0
    %3024 = vmatprep.subr.mxu0 0.0
    %3025 = vmatpush1.xpose.msra.mxu0 0.0
    %3026 = vmatprep.subr.mxu0 0.0
    %3027 = vmatpush1.xpose.msra.mxu0 0.0
    %3028 = vmatprep.subr.mxu0 0.0
    %3029 = vmatpush1.xpose.msra.mxu0 0.0
    %3030 = vmatprep.subr.mxu0 0.0
    %3031 = vmatpush1.xpose.msra.mxu0 0.0
    %3032 = vmatprep.subr.mxu0 0.0
    %3033 = vmatpush1.xpose.msra.mxu0 0.0
    %3034 = vmatprep.subr.mxu0 0.0
    %3035 = vmatpush1.xpose.msra.mxu0 0.0
    %3036 = vmatprep.subr.mxu0 0.0
    %3037 = vmatpush1.xpose.msra.mxu0 0.0
    %3038 = vmatprep.subr.mxu0 0.0
    %3039 = vmatpush1.xpose.msra.mxu0 0.0
    %3040 = vmatprep.subr.mxu0 0.0
    %3041 = vmatpush1.xpose.msra.mxu0 0.0
    %3042 = vmatprep.subr.mxu0 0.0
    %3043 = vmatpush1.xpose.msra.mxu0 0.0
    %3044 = vmatprep.subr.mxu0 0.0
    %3045 = vmatpush1.xpose.msra.mxu0 0.0
    %3046 = vmatprep.subr.mxu0 0.0
    %3047 = vmatpush1.xpose.msra.mxu0 0.0
    %3048 = vmatprep.subr.mxu0 0.0
    %3049 = vmatpush1.xpose.msra.mxu0 0.0
    %3050 = vmatprep.subr.mxu0 0.0
    %3051 = vmatpush1.xpose.msra.mxu0 0.0
    %3052 = vmatprep.subr.mxu0 0.0
    %3053 = vmatpush1.xpose.msra.mxu0 0.0
    %3054 = vmatprep.subr.mxu0 0.0
    %3055 = vmatpush1.xpose.msra.mxu0 0.0
    %3056 = vmatprep.subr.mxu0 0.0
    %3057 = vmatpush1.xpose.msra.mxu0 0.0
    %3058 = vmatprep.subr.mxu0 0.0
    %3059 = vmatpush1.xpose.msra.mxu0 0.0
    %3060 = vmatprep.subr.mxu0 0.0
    %3061 = vmatpush1.xpose.msra.mxu0 0.0
    %3062 = vmatprep.mubr.f32.mxu0 0.0
    %3063 = vmatmul.mubr.f32.gmra.mrb[0].mxu0 %v2994
    %v3064 = vpop.f32.mrb[0].mxu0
    %v3065 = vadd.f32 0.0, %v3064
    %v3066 = vpop.f32.mrb[0].mxu0
    %3067 = vdwg.mxu0
    %3068 = vrot.lane.b32.xlu0 %v286, 112
    %v3069 = vpop.permute.xlu0 %3068
    %3070 = vrot.lane.b32.xlu0 %v286, 80
    %v3071 = vpop.permute.xlu0 %3070
    %v3072 = vsel %vm328, %v3069, 0
    %v3074 = vsel %vm328, %v3071, 0
    %3076 = vmatprep.subr.mxu0 0.0
    %3077 = vmatpush1.xpose.msra.mxu0 %v3074
    %3078 = vmatprep.subr.mxu0 0.0
    %3079 = vmatpush1.xpose.msra.mxu0 0.0
    %3080 = vmatprep.subr.mxu0 0.0
    %3081 = vmatpush1.xpose.msra.mxu0 0.0
    %3082 = vmatprep.subr.mxu0 0.0
    %3083 = vmatpush1.xpose.msra.mxu0 0.0
    %3084 = vmatprep.subr.mxu0 0.0
    %3085 = vmatpush1.xpose.msra.mxu0 0.0
    %3086 = vmatprep.subr.mxu0 0.0
    %3087 = vmatpush1.xpose.msra.mxu0 0.0
    %3088 = vmatprep.subr.mxu0 0.0
    %3089 = vmatpush1.xpose.msra.mxu0 0.0
    %3090 = vmatprep.subr.mxu0 0.0
    %3091 = vmatpush1.xpose.msra.mxu0 0.0
    %3092 = vmatprep.subr.mxu0 0.0
    %3093 = vmatpush1.xpose.msra.mxu0 0.0
    %3094 = vmatprep.subr.mxu0 0.0
    %3095 = vmatpush1.xpose.msra.mxu0 0.0
    %3096 = vmatprep.subr.mxu0 0.0
    %3097 = vmatpush1.xpose.msra.mxu0 0.0
    %3098 = vmatprep.subr.mxu0 0.0
    %3099 = vmatpush1.xpose.msra.mxu0 0.0
    %3100 = vmatprep.subr.mxu0 0.0
    %3101 = vmatpush1.xpose.msra.mxu0 0.0
    %3102 = vmatprep.subr.mxu0 0.0
    %3103 = vmatpush1.xpose.msra.mxu0 0.0
    %3104 = vmatprep.subr.mxu0 0.0
    %3105 = vmatpush1.xpose.msra.mxu0 0.0
    %3106 = vmatprep.subr.mxu0 0.0
    %3107 = vmatpush1.xpose.msra.mxu0 0.0
    %3108 = vmatprep.subr.mxu0 0.0
    %3109 = vmatpush1.xpose.msra.mxu0 0.0
    %3110 = vmatprep.subr.mxu0 0.0
    %3111 = vmatpush1.xpose.msra.mxu0 0.0
    %3112 = vmatprep.subr.mxu0 0.0
    %3113 = vmatpush1.xpose.msra.mxu0 0.0
    %3114 = vmatprep.subr.mxu0 0.0
    %3115 = vmatpush1.xpose.msra.mxu0 0.0
    %3116 = vmatprep.subr.mxu0 0.0
    %3117 = vmatpush1.xpose.msra.mxu0 0.0
    %3118 = vmatprep.subr.mxu0 0.0
    %3119 = vmatpush1.xpose.msra.mxu0 0.0
    %3120 = vmatprep.subr.mxu0 0.0
    %3121 = vmatpush1.xpose.msra.mxu0 0.0
    %3122 = vmatprep.subr.mxu0 0.0
    %3123 = vmatpush1.xpose.msra.mxu0 0.0
    %3124 = vmatprep.subr.mxu0 0.0
    %3125 = vmatpush1.xpose.msra.mxu0 0.0
    %3126 = vmatprep.subr.mxu0 0.0
    %3127 = vmatpush1.xpose.msra.mxu0 0.0
    %3128 = vmatprep.subr.mxu0 0.0
    %3129 = vmatpush1.xpose.msra.mxu0 0.0
    %3130 = vmatprep.subr.mxu0 0.0
    %3131 = vmatpush1.xpose.msra.mxu0 0.0
    %3132 = vmatprep.subr.mxu0 0.0
    %3133 = vmatpush1.xpose.msra.mxu0 0.0
    %3134 = vmatprep.subr.mxu0 0.0
    %3135 = vmatpush1.xpose.msra.mxu0 0.0
    %3136 = vmatprep.subr.mxu0 0.0
    %3137 = vmatpush1.xpose.msra.mxu0 0.0
    %3138 = vmatprep.subr.mxu0 0.0
    %3139 = vmatpush1.xpose.msra.mxu0 0.0
    %3140 = vmatprep.mubr.f32.mxu0 0.0
    %3141 = vmatmul.mubr.f32.gmra.mrb[0].mxu0 %v3072
    %v3142 = vpop.f32.mrb[0].mxu0
    %v3143 = vadd.f32 0.0, %v3142
    %v3144 = vpop.f32.mrb[0].mxu0
    %3145 = vdwg.mxu0
    %3146 = vrot.lane.b32.xlu0 %v291, 112
    %v3147 = vpop.permute.xlu0 %3146
    %3148 = vrot.lane.b32.xlu0 %v291, 80
    %v3149 = vpop.permute.xlu0 %3148
    %v3150 = vsel %vm328, %v3147, 0
    %v3152 = vsel %vm328, %v3149, 0
    %3154 = vmatprep.subr.mxu0 0.0
    %3155 = vmatpush1.xpose.msra.mxu0 %v3152
    %3156 = vmatprep.subr.mxu0 0.0
    %3157 = vmatpush1.xpose.msra.mxu0 0.0
    %3158 = vmatprep.subr.mxu0 0.0
    %3159 = vmatpush1.xpose.msra.mxu0 0.0
    %3160 = vmatprep.subr.mxu0 0.0
    %3161 = vmatpush1.xpose.msra.mxu0 0.0
    %3162 = vmatprep.subr.mxu0 0.0
    %3163 = vmatpush1.xpose.msra.mxu0 0.0
    %3164 = vmatprep.subr.mxu0 0.0
    %3165 = vmatpush1.xpose.msra.mxu0 0.0
    %3166 = vmatprep.subr.mxu0 0.0
    %3167 = vmatpush1.xpose.msra.mxu0 0.0
    %3168 = vmatprep.subr.mxu0 0.0
    %3169 = vmatpush1.xpose.msra.mxu0 0.0
    %3170 = vmatprep.subr.mxu0 0.0
    %3171 = vmatpush1.xpose.msra.mxu0 0.0
    %3172 = vmatprep.subr.mxu0 0.0
    %3173 = vmatpush1.xpose.msra.mxu0 0.0
    %3174 = vmatprep.subr.mxu0 0.0
    %3175 = vmatpush1.xpose.msra.mxu0 0.0
    %3176 = vmatprep.subr.mxu0 0.0
    %3177 = vmatpush1.xpose.msra.mxu0 0.0
    %3178 = vmatprep.subr.mxu0 0.0
    %3179 = vmatpush1.xpose.msra.mxu0 0.0
    %3180 = vmatprep.subr.mxu0 0.0
    %3181 = vmatpush1.xpose.msra.mxu0 0.0
    %3182 = vmatprep.subr.mxu0 0.0
    %3183 = vmatpush1.xpose.msra.mxu0 0.0
    %3184 = vmatprep.subr.mxu0 0.0
    %3185 = vmatpush1.xpose.msra.mxu0 0.0
    %3186 = vmatprep.subr.mxu0 0.0
    %3187 = vmatpush1.xpose.msra.mxu0 0.0
    %3188 = vmatprep.subr.mxu0 0.0
    %3189 = vmatpush1.xpose.msra.mxu0 0.0
    %3190 = vmatprep.subr.mxu0 0.0
    %3191 = vmatpush1.xpose.msra.mxu0 0.0
    %3192 = vmatprep.subr.mxu0 0.0
    %3193 = vmatpush1.xpose.msra.mxu0 0.0
    %3194 = vmatprep.subr.mxu0 0.0
    %3195 = vmatpush1.xpose.msra.mxu0 0.0
    %3196 = vmatprep.subr.mxu0 0.0
    %3197 = vmatpush1.xpose.msra.mxu0 0.0
    %3198 = vmatprep.subr.mxu0 0.0
    %3199 = vmatpush1.xpose.msra.mxu0 0.0
    %3200 = vmatprep.subr.mxu0 0.0
    %3201 = vmatpush1.xpose.msra.mxu0 0.0
    %3202 = vmatprep.subr.mxu0 0.0
    %3203 = vmatpush1.xpose.msra.mxu0 0.0
    %3204 = vmatprep.subr.mxu0 0.0
    %3205 = vmatpush1.xpose.msra.mxu0 0.0
    %3206 = vmatprep.subr.mxu0 0.0
    %3207 = vmatpush1.xpose.msra.mxu0 0.0
    %3208 = vmatprep.subr.mxu0 0.0
    %3209 = vmatpush1.xpose.msra.mxu0 0.0
    %3210 = vmatprep.subr.mxu0 0.0
    %3211 = vmatpush1.xpose.msra.mxu0 0.0
    %3212 = vmatprep.subr.mxu0 0.0
    %3213 = vmatpush1.xpose.msra.mxu0 0.0
    %3214 = vmatprep.subr.mxu0 0.0
    %3215 = vmatpush1.xpose.msra.mxu0 0.0
    %3216 = vmatprep.subr.mxu0 0.0
    %3217 = vmatpush1.xpose.msra.mxu0 0.0
    %3218 = vmatprep.mubr.f32.mxu0 0.0
    %3219 = vmatmul.mubr.f32.gmra.mrb[0].mxu0 %v3150
    %v3220 = vpop.f32.mrb[0].mxu0
    %v3221 = vadd.f32 0.0, %v3220
    %v3222 = vpop.f32.mrb[0].mxu0
    %3223 = vdwg.mxu0
    %3224 = vrot.lane.b32.xlu0 %v296, 112
    %v3225 = vpop.permute.xlu0 %3224
    %3226 = vrot.lane.b32.xlu0 %v296, 80
    %v3227 = vpop.permute.xlu0 %3226
    %v3228 = vsel %vm328, %v3225, 0
    %v3230 = vsel %vm328, %v3227, 0
    %3232 = vmatprep.subr.mxu0 0.0
    %3233 = vmatpush1.xpose.msra.mxu0 %v3230
    %3234 = vmatprep.subr.mxu0 0.0
    %3235 = vmatpush1.xpose.msra.mxu0 0.0
    %3236 = vmatprep.subr.mxu0 0.0
    %3237 = vmatpush1.xpose.msra.mxu0 0.0
    %3238 = vmatprep.subr.mxu0 0.0
    %3239 = vmatpush1.xpose.msra.mxu0 0.0
    %3240 = vmatprep.subr.mxu0 0.0
    %3241 = vmatpush1.xpose.msra.mxu0 0.0
    %3242 = vmatprep.subr.mxu0 0.0
    %3243 = vmatpush1.xpose.msra.mxu0 0.0
    %3244 = vmatprep.subr.mxu0 0.0
    %3245 = vmatpush1.xpose.msra.mxu0 0.0
    %3246 = vmatprep.subr.mxu0 0.0
    %3247 = vmatpush1.xpose.msra.mxu0 0.0
    %3248 = vmatprep.subr.mxu0 0.0
    %3249 = vmatpush1.xpose.msra.mxu0 0.0
    %3250 = vmatprep.subr.mxu0 0.0
    %3251 = vmatpush1.xpose.msra.mxu0 0.0
    %3252 = vmatprep.subr.mxu0 0.0
    %3253 = vmatpush1.xpose.msra.mxu0 0.0
    %3254 = vmatprep.subr.mxu0 0.0
    %3255 = vmatpush1.xpose.msra.mxu0 0.0
    %3256 = vmatprep.subr.mxu0 0.0
    %3257 = vmatpush1.xpose.msra.mxu0 0.0
    %3258 = vmatprep.subr.mxu0 0.0
    %3259 = vmatpush1.xpose.msra.mxu0 0.0
    %3260 = vmatprep.subr.mxu0 0.0
    %3261 = vmatpush1.xpose.msra.mxu0 0.0
    %3262 = vmatprep.subr.mxu0 0.0
    %3263 = vmatpush1.xpose.msra.mxu0 0.0
    %3264 = vmatprep.subr.mxu0 0.0
    %3265 = vmatpush1.xpose.msra.mxu0 0.0
    %3266 = vmatprep.subr.mxu0 0.0
    %3267 = vmatpush1.xpose.msra.mxu0 0.0
    %3268 = vmatprep.subr.mxu0 0.0
    %3269 = vmatpush1.xpose.msra.mxu0 0.0
    %3270 = vmatprep.subr.mxu0 0.0
    %3271 = vmatpush1.xpose.msra.mxu0 0.0
    %3272 = vmatprep.subr.mxu0 0.0
    %3273 = vmatpush1.xpose.msra.mxu0 0.0
    %3274 = vmatprep.subr.mxu0 0.0
    %3275 = vmatpush1.xpose.msra.mxu0 0.0
    %3276 = vmatprep.subr.mxu0 0.0
    %3277 = vmatpush1.xpose.msra.mxu0 0.0
    %3278 = vmatprep.subr.mxu0 0.0
    %3279 = vmatpush1.xpose.msra.mxu0 0.0
    %3280 = vmatprep.subr.mxu0 0.0
    %3281 = vmatpush1.xpose.msra.mxu0 0.0
    %3282 = vmatprep.subr.mxu0 0.0
    %3283 = vmatpush1.xpose.msra.mxu0 0.0
    %3284 = vmatprep.subr.mxu0 0.0
    %3285 = vmatpush1.xpose.msra.mxu0 0.0
    %3286 = vmatprep.subr.mxu0 0.0
    %3287 = vmatpush1.xpose.msra.mxu0 0.0
    %3288 = vmatprep.subr.mxu0 0.0
    %3289 = vmatpush1.xpose.msra.mxu0 0.0
    %3290 = vmatprep.subr.mxu0 0.0
    %3291 = vmatpush1.xpose.msra.mxu0 0.0
    %3292 = vmatprep.subr.mxu0 0.0
    %3293 = vmatpush1.xpose.msra.mxu0 0.0
    %3294 = vmatprep.subr.mxu0 0.0
    %3295 = vmatpush1.xpose.msra.mxu0 0.0
    %3296 = vmatprep.mubr.f32.mxu0 0.0
    %3297 = vmatmul.mubr.f32.gmra.mrb[0].mxu0 %v3228
    %v3298 = vpop.f32.mrb[0].mxu0
    %v3299 = vadd.f32 0.0, %v3298
    %v3300 = vpop.f32.mrb[0].mxu0
    %3301 = vdwg.mxu0
    %3302 = vrot.lane.b32.xlu0 %v301, 112
    %v3303 = vpop.permute.xlu0 %3302
    %3304 = vrot.lane.b32.xlu0 %v301, 80
    %v3305 = vpop.permute.xlu0 %3304
    %v3306 = vsel %vm328, %v3303, 0
    %v3308 = vsel %vm328, %v3305, 0
    %3310 = vmatprep.subr.mxu0 0.0
    %3311 = vmatpush1.xpose.msra.mxu0 %v3308
    %3312 = vmatprep.subr.mxu0 0.0
    %3313 = vmatpush1.xpose.msra.mxu0 0.0
    %3314 = vmatprep.subr.mxu0 0.0
    %3315 = vmatpush1.xpose.msra.mxu0 0.0
    %3316 = vmatprep.subr.mxu0 0.0
    %3317 = vmatpush1.xpose.msra.mxu0 0.0
    %3318 = vmatprep.subr.mxu0 0.0
    %3319 = vmatpush1.xpose.msra.mxu0 0.0
    %3320 = vmatprep.subr.mxu0 0.0
    %3321 = vmatpush1.xpose.msra.mxu0 0.0
    %3322 = vmatprep.subr.mxu0 0.0
    %3323 = vmatpush1.xpose.msra.mxu0 0.0
    %3324 = vmatprep.subr.mxu0 0.0
    %3325 = vmatpush1.xpose.msra.mxu0 0.0
    %3326 = vmatprep.subr.mxu0 0.0
    %3327 = vmatpush1.xpose.msra.mxu0 0.0
    %3328 = vmatprep.subr.mxu0 0.0
    %3329 = vmatpush1.xpose.msra.mxu0 0.0
    %3330 = vmatprep.subr.mxu0 0.0
    %3331 = vmatpush1.xpose.msra.mxu0 0.0
    %3332 = vmatprep.subr.mxu0 0.0
    %3333 = vmatpush1.xpose.msra.mxu0 0.0
    %3334 = vmatprep.subr.mxu0 0.0
    %3335 = vmatpush1.xpose.msra.mxu0 0.0
    %3336 = vmatprep.subr.mxu0 0.0
    %3337 = vmatpush1.xpose.msra.mxu0 0.0
    %3338 = vmatprep.subr.mxu0 0.0
    %3339 = vmatpush1.xpose.msra.mxu0 0.0
    %3340 = vmatprep.subr.mxu0 0.0
    %3341 = vmatpush1.xpose.msra.mxu0 0.0
    %3342 = vmatprep.subr.mxu0 0.0
    %3343 = vmatpush1.xpose.msra.mxu0 0.0
    %3344 = vmatprep.subr.mxu0 0.0
    %3345 = vmatpush1.xpose.msra.mxu0 0.0
    %3346 = vmatprep.subr.mxu0 0.0
    %3347 = vmatpush1.xpose.msra.mxu0 0.0
    %3348 = vmatprep.subr.mxu0 0.0
    %3349 = vmatpush1.xpose.msra.mxu0 0.0
    %3350 = vmatprep.subr.mxu0 0.0
    %3351 = vmatpush1.xpose.msra.mxu0 0.0
    %3352 = vmatprep.subr.mxu0 0.0
    %3353 = vmatpush1.xpose.msra.mxu0 0.0
    %3354 = vmatprep.subr.mxu0 0.0
    %3355 = vmatpush1.xpose.msra.mxu0 0.0
    %3356 = vmatprep.subr.mxu0 0.0
    %3357 = vmatpush1.xpose.msra.mxu0 0.0
    %3358 = vmatprep.subr.mxu0 0.0
    %3359 = vmatpush1.xpose.msra.mxu0 0.0
    %3360 = vmatprep.subr.mxu0 0.0
    %3361 = vmatpush1.xpose.msra.mxu0 0.0
    %3362 = vmatprep.subr.mxu0 0.0
    %3363 = vmatpush1.xpose.msra.mxu0 0.0
    %3364 = vmatprep.subr.mxu0 0.0
    %3365 = vmatpush1.xpose.msra.mxu0 0.0
    %3366 = vmatprep.subr.mxu0 0.0
    %3367 = vmatpush1.xpose.msra.mxu0 0.0
    %3368 = vmatprep.subr.mxu0 0.0
    %3369 = vmatpush1.xpose.msra.mxu0 0.0
    %3370 = vmatprep.subr.mxu0 0.0
    %3371 = vmatpush1.xpose.msra.mxu0 0.0
    %3372 = vmatprep.subr.mxu0 0.0
    %3373 = vmatpush1.xpose.msra.mxu0 0.0
    %3374 = vmatprep.mubr.f32.mxu0 0.0
    %3375 = vmatmul.mubr.f32.gmra.mrb[0].mxu0 %v3306
    %v3376 = vpop.f32.mrb[0].mxu0
    %v3377 = vadd.f32 0.0, %v3376
    %v3378 = vpop.f32.mrb[0].mxu0
    %3379 = vdwg.mxu0
    %3380 = vrot.lane.b32.xlu0 %v306, 112
    %v3381 = vpop.permute.xlu0 %3380
    %3382 = vrot.lane.b32.xlu0 %v306, 80
    %v3383 = vpop.permute.xlu0 %3382
    %v3384 = vsel %vm328, %v3381, 0
    %v3386 = vsel %vm328, %v3383, 0
    %3388 = vmatprep.subr.mxu0 0.0
    %3389 = vmatpush1.xpose.msra.mxu0 %v3386
    %3390 = vmatprep.subr.mxu0 0.0
    %3391 = vmatpush1.xpose.msra.mxu0 0.0
    %3392 = vmatprep.subr.mxu0 0.0
    %3393 = vmatpush1.xpose.msra.mxu0 0.0
    %3394 = vmatprep.subr.mxu0 0.0
    %3395 = vmatpush1.xpose.msra.mxu0 0.0
    %3396 = vmatprep.subr.mxu0 0.0
    %3397 = vmatpush1.xpose.msra.mxu0 0.0
    %3398 = vmatprep.subr.mxu0 0.0
    %3399 = vmatpush1.xpose.msra.mxu0 0.0
    %3400 = vmatprep.subr.mxu0 0.0
    %3401 = vmatpush1.xpose.msra.mxu0 0.0
    %3402 = vmatprep.subr.mxu0 0.0
    %3403 = vmatpush1.xpose.msra.mxu0 0.0
    %3404 = vmatprep.subr.mxu0 0.0
    %3405 = vmatpush1.xpose.msra.mxu0 0.0
    %3406 = vmatprep.subr.mxu0 0.0
    %3407 = vmatpush1.xpose.msra.mxu0 0.0
    %3408 = vmatprep.subr.mxu0 0.0
    %3409 = vmatpush1.xpose.msra.mxu0 0.0
    %3410 = vmatprep.subr.mxu0 0.0
    %3411 = vmatpush1.xpose.msra.mxu0 0.0
    %3412 = vmatprep.subr.mxu0 0.0
    %3413 = vmatpush1.xpose.msra.mxu0 0.0
    %3414 = vmatprep.subr.mxu0 0.0
    %3415 = vmatpush1.xpose.msra.mxu0 0.0
    %3416 = vmatprep.subr.mxu0 0.0
    %3417 = vmatpush1.xpose.msra.mxu0 0.0
    %3418 = vmatprep.subr.mxu0 0.0
    %3419 = vmatpush1.xpose.msra.mxu0 0.0
    %3420 = vmatprep.subr.mxu0 0.0
    %3421 = vmatpush1.xpose.msra.mxu0 0.0
    %3422 = vmatprep.subr.mxu0 0.0
    %3423 = vmatpush1.xpose.msra.mxu0 0.0
    %3424 = vmatprep.subr.mxu0 0.0
    %3425 = vmatpush1.xpose.msra.mxu0 0.0
    %3426 = vmatprep.subr.mxu0 0.0
    %3427 = vmatpush1.xpose.msra.mxu0 0.0
    %3428 = vmatprep.subr.mxu0 0.0
    %3429 = vmatpush1.xpose.msra.mxu0 0.0
    %3430 = vmatprep.subr.mxu0 0.0
    %3431 = vmatpush1.xpose.msra.mxu0 0.0
    %3432 = vmatprep.subr.mxu0 0.0
    %3433 = vmatpush1.xpose.msra.mxu0 0.0
    %3434 = vmatprep.subr.mxu0 0.0
    %3435 = vmatpush1.xpose.msra.mxu0 0.0
    %3436 = vmatprep.subr.mxu0 0.0
    %3437 = vmatpush1.xpose.msra.mxu0 0.0
    %3438 = vmatprep.subr.mxu0 0.0
    %3439 = vmatpush1.xpose.msra.mxu0 0.0
    %3440 = vmatprep.subr.mxu0 0.0
    %3441 = vmatpush1.xpose.msra.mxu0 0.0
    %3442 = vmatprep.subr.mxu0 0.0
    %3443 = vmatpush1.xpose.msra.mxu0 0.0
    %3444 = vmatprep.subr.mxu0 0.0
    %3445 = vmatpush1.xpose.msra.mxu0 0.0
    %3446 = vmatprep.subr.mxu0 0.0
    %3447 = vmatpush1.xpose.msra.mxu0 0.0
    %3448 = vmatprep.subr.mxu0 0.0
    %3449 = vmatpush1.xpose.msra.mxu0 0.0
    %3450 = vmatprep.subr.mxu0 0.0
    %3451 = vmatpush1.xpose.msra.mxu0 0.0
    %3452 = vmatprep.mubr.f32.mxu0 0.0
    %3453 = vmatmul.mubr.f32.gmra.mrb[0].mxu0 %v3384
    %v3454 = vpop.f32.mrb[0].mxu0
    %v3455 = vadd.f32 0.0, %v3454
    %v3456 = vpop.f32.mrb[0].mxu0
    %3457 = vdwg.mxu0
    %3458 = vrot.lane.b32.xlu0 %v311, 112
    %v3459 = vpop.permute.xlu0 %3458
    %3460 = vrot.lane.b32.xlu0 %v311, 80
    %v3461 = vpop.permute.xlu0 %3460
    %v3462 = vsel %vm328, %v3459, 0
    %v3464 = vsel %vm328, %v3461, 0
    %3466 = vmatprep.subr.mxu0 0.0
    %3467 = vmatpush1.xpose.msra.mxu0 %v3464
    %3468 = vmatprep.subr.mxu0 0.0
    %3469 = vmatpush1.xpose.msra.mxu0 0.0
    %3470 = vmatprep.subr.mxu0 0.0
    %3471 = vmatpush1.xpose.msra.mxu0 0.0
    %3472 = vmatprep.subr.mxu0 0.0
    %3473 = vmatpush1.xpose.msra.mxu0 0.0
    %3474 = vmatprep.subr.mxu0 0.0
    %3475 = vmatpush1.xpose.msra.mxu0 0.0
    %3476 = vmatprep.subr.mxu0 0.0
    %3477 = vmatpush1.xpose.msra.mxu0 0.0
    %3478 = vmatprep.subr.mxu0 0.0
    %3479 = vmatpush1.xpose.msra.mxu0 0.0
    %3480 = vmatprep.subr.mxu0 0.0
    %3481 = vmatpush1.xpose.msra.mxu0 0.0
    %3482 = vmatprep.subr.mxu0 0.0
    %3483 = vmatpush1.xpose.msra.mxu0 0.0
    %3484 = vmatprep.subr.mxu0 0.0
    %3485 = vmatpush1.xpose.msra.mxu0 0.0
    %3486 = vmatprep.subr.mxu0 0.0
    %3487 = vmatpush1.xpose.msra.mxu0 0.0
    %3488 = vmatprep.subr.mxu0 0.0
    %3489 = vmatpush1.xpose.msra.mxu0 0.0
    %3490 = vmatprep.subr.mxu0 0.0
    %3491 = vmatpush1.xpose.msra.mxu0 0.0
    %3492 = vmatprep.subr.mxu0 0.0
    %3493 = vmatpush1.xpose.msra.mxu0 0.0
    %3494 = vmatprep.subr.mxu0 0.0
    %3495 = vmatpush1.xpose.msra.mxu0 0.0
    %3496 = vmatprep.subr.mxu0 0.0
    %3497 = vmatpush1.xpose.msra.mxu0 0.0
    %3498 = vmatprep.subr.mxu0 0.0
    %3499 = vmatpush1.xpose.msra.mxu0 0.0
    %3500 = vmatprep.subr.mxu0 0.0
    %3501 = vmatpush1.xpose.msra.mxu0 0.0
    %3502 = vmatprep.subr.mxu0 0.0
    %3503 = vmatpush1.xpose.msra.mxu0 0.0
    %3504 = vmatprep.subr.mxu0 0.0
    %3505 = vmatpush1.xpose.msra.mxu0 0.0
    %3506 = vmatprep.subr.mxu0 0.0
    %3507 = vmatpush1.xpose.msra.mxu0 0.0
    %3508 = vmatprep.subr.mxu0 0.0
    %3509 = vmatpush1.xpose.msra.mxu0 0.0
    %3510 = vmatprep.subr.mxu0 0.0
    %3511 = vmatpush1.xpose.msra.mxu0 0.0
    %3512 = vmatprep.subr.mxu0 0.0
    %3513 = vmatpush1.xpose.msra.mxu0 0.0
    %3514 = vmatprep.subr.mxu0 0.0
    %3515 = vmatpush1.xpose.msra.mxu0 0.0
    %3516 = vmatprep.subr.mxu0 0.0
    %3517 = vmatpush1.xpose.msra.mxu0 0.0
    %3518 = vmatprep.subr.mxu0 0.0
    %3519 = vmatpush1.xpose.msra.mxu0 0.0
    %3520 = vmatprep.subr.mxu0 0.0
    %3521 = vmatpush1.xpose.msra.mxu0 0.0
    %3522 = vmatprep.subr.mxu0 0.0
    %3523 = vmatpush1.xpose.msra.mxu0 0.0
    %3524 = vmatprep.subr.mxu0 0.0
    %3525 = vmatpush1.xpose.msra.mxu0 0.0
    %3526 = vmatprep.subr.mxu0 0.0
    %3527 = vmatpush1.xpose.msra.mxu0 0.0
    %3528 = vmatprep.subr.mxu0 0.0
    %3529 = vmatpush1.xpose.msra.mxu0 0.0
    %3530 = vmatprep.mubr.f32.mxu0 0.0
    %3531 = vmatmul.mubr.f32.gmra.mrb[0].mxu0 %v3462
    %v3532 = vpop.f32.mrb[0].mxu0
    %v3533 = vadd.f32 0.0, %v3532
    %v3534 = vpop.f32.mrb[0].mxu0
    %3535 = vdwg.mxu0
    %3536 = vrot.lane.b32.xlu0 %v316, 112
    %v3537 = vpop.permute.xlu0 %3536
    %3538 = vrot.lane.b32.xlu0 %v316, 80
    %v3539 = vpop.permute.xlu0 %3538
    %v3540 = vsel %vm328, %v3537, 0
    %v3542 = vsel %vm328, %v3539, 0
    %3544 = vmatprep.subr.mxu0 0.0
    %3545 = vmatpush1.xpose.msra.mxu0 %v3542
    %3546 = vmatprep.subr.mxu0 0.0
    %3547 = vmatpush1.xpose.msra.mxu0 0.0
    %3548 = vmatprep.subr.mxu0 0.0
    %3549 = vmatpush1.xpose.msra.mxu0 0.0
    %3550 = vmatprep.subr.mxu0 0.0
    %3551 = vmatpush1.xpose.msra.mxu0 0.0
    %3552 = vmatprep.subr.mxu0 0.0
    %3553 = vmatpush1.xpose.msra.mxu0 0.0
    %3554 = vmatprep.subr.mxu0 0.0
    %3555 = vmatpush1.xpose.msra.mxu0 0.0
    %3556 = vmatprep.subr.mxu0 0.0
    %3557 = vmatpush1.xpose.msra.mxu0 0.0
    %3558 = vmatprep.subr.mxu0 0.0
    %3559 = vmatpush1.xpose.msra.mxu0 0.0
    %3560 = vmatprep.subr.mxu0 0.0
    %3561 = vmatpush1.xpose.msra.mxu0 0.0
    %3562 = vmatprep.subr.mxu0 0.0
    %3563 = vmatpush1.xpose.msra.mxu0 0.0
    %3564 = vmatprep.subr.mxu0 0.0
    %3565 = vmatpush1.xpose.msra.mxu0 0.0
    %3566 = vmatprep.subr.mxu0 0.0
    %3567 = vmatpush1.xpose.msra.mxu0 0.0
    %3568 = vmatprep.subr.mxu0 0.0
    %3569 = vmatpush1.xpose.msra.mxu0 0.0
    %3570 = vmatprep.subr.mxu0 0.0
    %3571 = vmatpush1.xpose.msra.mxu0 0.0
    %3572 = vmatprep.subr.mxu0 0.0
    %3573 = vmatpush1.xpose.msra.mxu0 0.0
    %3574 = vmatprep.subr.mxu0 0.0
    %3575 = vmatpush1.xpose.msra.mxu0 0.0
    %3576 = vmatprep.subr.mxu0 0.0
    %3577 = vmatpush1.xpose.msra.mxu0 0.0
    %3578 = vmatprep.subr.mxu0 0.0
    %3579 = vmatpush1.xpose.msra.mxu0 0.0
    %3580 = vmatprep.subr.mxu0 0.0
    %3581 = vmatpush1.xpose.msra.mxu0 0.0
    %3582 = vmatprep.subr.mxu0 0.0
    %3583 = vmatpush1.xpose.msra.mxu0 0.0
    %3584 = vmatprep.subr.mxu0 0.0
    %3585 = vmatpush1.xpose.msra.mxu0 0.0
    %3586 = vmatprep.subr.mxu0 0.0
    %3587 = vmatpush1.xpose.msra.mxu0 0.0
    %3588 = vmatprep.subr.mxu0 0.0
    %3589 = vmatpush1.xpose.msra.mxu0 0.0
    %3590 = vmatprep.subr.mxu0 0.0
    %3591 = vmatpush1.xpose.msra.mxu0 0.0
    %3592 = vmatprep.subr.mxu0 0.0
    %3593 = vmatpush1.xpose.msra.mxu0 0.0
    %3594 = vmatprep.subr.mxu0 0.0
    %3595 = vmatpush1.xpose.msra.mxu0 0.0
    %3596 = vmatprep.subr.mxu0 0.0
    %3597 = vmatpush1.xpose.msra.mxu0 0.0
    %3598 = vmatprep.subr.mxu0 0.0
    %3599 = vmatpush1.xpose.msra.mxu0 0.0
    %3600 = vmatprep.subr.mxu0 0.0
    %3601 = vmatpush1.xpose.msra.mxu0 0.0
    %3602 = vmatprep.subr.mxu0 0.0
    %3603 = vmatpush1.xpose.msra.mxu0 0.0
    %3604 = vmatprep.subr.mxu0 0.0
    %3605 = vmatpush1.xpose.msra.mxu0 0.0
    %3606 = vmatprep.subr.mxu0 0.0
    %3607 = vmatpush1.xpose.msra.mxu0 0.0
    %3608 = vmatprep.mubr.f32.mxu0 0.0
    %3609 = vmatmul.mubr.f32.gmra.mrb[0].mxu0 %v3540
    %v3610 = vpop.f32.mrb[0].mxu0
    %v3611 = vadd.f32 0.0, %v3610
    %v3612 = vpop.f32.mrb[0].mxu0
    %3613 = vdwg.mxu0
    %v3614 = vmul.f32 %v3065, 0.17677669
    %v3615 = vmul.f32 %v3143, 0.17677669
    %v3616 = vmul.f32 %v3221, 0.17677669
    %v3617 = vmul.f32 %v3299, 0.17677669
    %v3618 = vmul.f32 %v3377, 0.17677669
    %v3619 = vmul.f32 %v3455, 0.17677669
    %v3620 = vmul.f32 %v3533, 0.17677669
    %v3621 = vmul.f32 %v3611, 0.17677669
    %v3622 = vadd.f32 %v3614, %v324
    %v3623 = vadd.f32 %v3615, %v324
    %v3624 = vadd.f32 %v3616, %v324
    %v3625 = vadd.f32 %v3617, %v324
    %v3626 = vadd.f32 %v3618, %v324
    %v3627 = vadd.f32 %v3619, %v324
    %v3628 = vadd.f32 %v3620, %v324
    %v3629 = vadd.f32 %v3621, %v324
    %v3630 = vsel %vm328, %v3622, -inf
    %3631 = vmax.xlane.f32.xlu0 %v3630
    %v3632 = vpop.xlane.xlu0 %3631
    %v3633 = vsel %vm328, %v3623, -inf
    %3634 = vmax.xlane.f32.xlu0 %v3633
    %v3635 = vpop.xlane.xlu0 %3634
    %v3636 = vsel %vm328, %v3624, -inf
    %3637 = vmax.xlane.f32.xlu0 %v3636
    %v3638 = vpop.xlane.xlu0 %3637
    %v3639 = vsel %vm328, %v3625, -inf
    %3640 = vmax.xlane.f32.xlu0 %v3639
    %v3641 = vpop.xlane.xlu0 %3640
    %v3642 = vsel %vm328, %v3626, -inf
    %3643 = vmax.xlane.f32.xlu0 %v3642
    %v3644 = vpop.xlane.xlu0 %3643
    %v3645 = vsel %vm328, %v3627, -inf
    %3646 = vmax.xlane.f32.xlu0 %v3645
    %v3647 = vpop.xlane.xlu0 %3646
    %v3648 = vsel %vm328, %v3628, -inf
    %3649 = vmax.xlane.f32.xlu0 %v3648
    %v3650 = vpop.xlane.xlu0 %3649
    %v3651 = vsel %vm328, %v3629, -inf
    %3652 = vmax.xlane.f32.xlu0 %v3651
    %v3653 = vpop.xlane.xlu0 %3652
    %v3654 = vsub.f32 %v3622, %v3632
    %v3655 = vsub.f32 %v3623, %v3635
    %v3656 = vsub.f32 %v3624, %v3638
    %v3657 = vsub.f32 %v3625, %v3641
    %v3658 = vsub.f32 %v3626, %v3644
    %v3659 = vsub.f32 %v3627, %v3647
    %v3660 = vsub.f32 %v3628, %v3650
    %v3661 = vsub.f32 %v3629, %v3653
    %v3662 = vmul.f32 %v3654, 1.442695
    %v3663 = vpow.pop %v3662
    %v3664 = vmul.f32 %v3655, 1.442695
    %v3665 = vpow.pop %v3664
    %v3666 = vmul.f32 %v3656, 1.442695
    %v3667 = vpow.pop %v3666
    %v3668 = vmul.f32 %v3657, 1.442695
    %v3669 = vpow.pop %v3668
    %v3670 = vmul.f32 %v3658, 1.442695
    %v3671 = vpow.pop %v3670
    %v3672 = vmul.f32 %v3659, 1.442695
    %v3673 = vpow.pop %v3672
    %v3674 = vmul.f32 %v3660, 1.442695
    %v3675 = vpow.pop %v3674
    %v3676 = vmul.f32 %v3661, 1.442695
    %v3677 = vpow.pop %v3676
    %v3678 = vsel %vm328, %v3663, 0.0
    %3679 = vadd.xlane.f32.xlu0 %v3678
    %v3680 = vpop.xlane.xlu0 %3679
    %v3681 = vsel %vm328, %v3665, 0.0
    %3682 = vadd.xlane.f32.xlu0 %v3681
    %v3683 = vpop.xlane.xlu0 %3682
    %v3684 = vsel %vm328, %v3667, 0.0
    %3685 = vadd.xlane.f32.xlu0 %v3684
    %v3686 = vpop.xlane.xlu0 %3685
    %v3687 = vsel %vm328, %v3669, 0.0
    %3688 = vadd.xlane.f32.xlu0 %v3687
    %v3689 = vpop.xlane.xlu0 %3688
    %v3690 = vsel %vm328, %v3671, 0.0
    %3691 = vadd.xlane.f32.xlu0 %v3690
    %v3692 = vpop.xlane.xlu0 %3691
    %v3693 = vsel %vm328, %v3673, 0.0
    %3694 = vadd.xlane.f32.xlu0 %v3693
    %v3695 = vpop.xlane.xlu0 %3694
    %v3696 = vsel %vm328, %v3675, 0.0
    %3697 = vadd.xlane.f32.xlu0 %v3696
    %v3698 = vpop.xlane.xlu0 %3697
    %v3699 = vsel %vm328, %v3677, 0.0
    %3700 = vadd.xlane.f32.xlu0 %v3699
    %v3701 = vpop.xlane.xlu0 %3700
    %v3702 = vrcp.pop %v3680
    %v3703 = vrcp.pop %v3683
    %v3704 = vrcp.pop %v3686
    %v3705 = vrcp.pop %v3689
    %v3706 = vrcp.pop %v3692
    %v3707 = vrcp.pop %v3695
    %v3708 = vrcp.pop %v3698
    %v3709 = vrcp.pop %v3701
    %v3710 = vmul.f32 %v3663, %v3702
    %v3711 = vmul.f32 %v3665, %v3703
    %v3712 = vmul.f32 %v3667, %v3704
    %v3713 = vmul.f32 %v3669, %v3705
    %v3714 = vmul.f32 %v3671, %v3706
    %v3715 = vmul.f32 %v3673, %v3707
    %v3716 = vmul.f32 %v3675, %v3708
    %v3717 = vmul.f32 %v3677, %v3709
    %3718 = vrot.lane.b32.xlu0 %v281, 48
    %v3719 = vpop.permute.xlu0 %3718
    %v3722 = vsel %vm328, %v3710, 0
    %3724 = vmatprep.subr.mxu0 0.0
    %3725 = vmatpush1.msra.mxu0 %v3719
    %3726 = vmatprep.subr.mxu0 0.0
    %3727 = vmatpush1.msra.mxu0 0.0
    %3728 = vmatprep.subr.mxu0 0.0
    %3729 = vmatpush1.msra.mxu0 0.0
    %3730 = vmatprep.subr.mxu0 0.0
    %3731 = vmatpush1.msra.mxu0 0.0
    %3732 = vmatprep.subr.mxu0 0.0
    %3733 = vmatpush1.msra.mxu0 0.0
    %3734 = vmatprep.subr.mxu0 0.0
    %3735 = vmatpush1.msra.mxu0 0.0
    %3736 = vmatprep.subr.mxu0 0.0
    %3737 = vmatpush1.msra.mxu0 0.0
    %3738 = vmatprep.subr.mxu0 0.0
    %3739 = vmatpush1.msra.mxu0 0.0
    %3740 = vmatprep.subr.mxu0 0.0
    %3741 = vmatpush1.msra.mxu0 0.0
    %3742 = vmatprep.subr.mxu0 0.0
    %3743 = vmatpush1.msra.mxu0 0.0
    %3744 = vmatprep.subr.mxu0 0.0
    %3745 = vmatpush1.msra.mxu0 0.0
    %3746 = vmatprep.subr.mxu0 0.0
    %3747 = vmatpush1.msra.mxu0 0.0
    %3748 = vmatprep.subr.mxu0 0.0
    %3749 = vmatpush1.msra.mxu0 0.0
    %3750 = vmatprep.subr.mxu0 0.0
    %3751 = vmatpush1.msra.mxu0 0.0
    %3752 = vmatprep.subr.mxu0 0.0
    %3753 = vmatpush1.msra.mxu0 0.0
    %3754 = vmatprep.subr.mxu0 0.0
    %3755 = vmatpush1.msra.mxu0 0.0
    %3756 = vmatprep.subr.mxu0 0.0
    %3757 = vmatpush1.msra.mxu0 0.0
    %3758 = vmatprep.subr.mxu0 0.0
    %3759 = vmatpush1.msra.mxu0 0.0
    %3760 = vmatprep.subr.mxu0 0.0
    %3761 = vmatpush1.msra.mxu0 0.0
    %3762 = vmatprep.subr.mxu0 0.0
    %3763 = vmatpush1.msra.mxu0 0.0
    %3764 = vmatprep.subr.mxu0 0.0
    %3765 = vmatpush1.msra.mxu0 0.0
    %3766 = vmatprep.subr.mxu0 0.0
    %3767 = vmatpush1.msra.mxu0 0.0
    %3768 = vmatprep.subr.mxu0 0.0
    %3769 = vmatpush1.msra.mxu0 0.0
    %3770 = vmatprep.subr.mxu0 0.0
    %3771 = vmatpush1.msra.mxu0 0.0
    %3772 = vmatprep.subr.mxu0 0.0
    %3773 = vmatpush1.msra.mxu0 0.0
    %3774 = vmatprep.subr.mxu0 0.0
    %3775 = vmatpush1.msra.mxu0 0.0
    %3776 = vmatprep.subr.mxu0 0.0
    %3777 = vmatpush1.msra.mxu0 0.0
    %3778 = vmatprep.subr.mxu0 0.0
    %3779 = vmatpush1.msra.mxu0 0.0
    %3780 = vmatprep.subr.mxu0 0.0
    %3781 = vmatpush1.msra.mxu0 0.0
    %3782 = vmatprep.subr.mxu0 0.0
    %3783 = vmatpush1.msra.mxu0 0.0
    %3784 = vmatprep.subr.mxu0 0.0
    %3785 = vmatpush1.msra.mxu0 0.0
    %3786 = vmatprep.subr.mxu0 0.0
    %3787 = vmatpush1.msra.mxu0 0.0
    %3788 = vmatprep.mubr.f32.mxu0 0.0
    %3789 = vmatmul.mubr.f32.gmra.mrb[0].mxu0 %v3722
    %v3790 = vpop.f32.mrb[0].mxu0
    %v3791 = vadd.f32 0.0, %v3790
    %v3792 = vpop.f32.mrb[0].mxu0
    %3793 = vdwg.mxu0
    %3794 = vrot.lane.b32.xlu0 %v286, 48
    %v3795 = vpop.permute.xlu0 %3794
    %v3798 = vsel %vm328, %v3711, 0
    %3800 = vmatprep.subr.mxu0 0.0
    %3801 = vmatpush1.msra.mxu0 %v3795
    %3802 = vmatprep.subr.mxu0 0.0
    %3803 = vmatpush1.msra.mxu0 0.0
    %3804 = vmatprep.subr.mxu0 0.0
    %3805 = vmatpush1.msra.mxu0 0.0
    %3806 = vmatprep.subr.mxu0 0.0
    %3807 = vmatpush1.msra.mxu0 0.0
    %3808 = vmatprep.subr.mxu0 0.0
    %3809 = vmatpush1.msra.mxu0 0.0
    %3810 = vmatprep.subr.mxu0 0.0
    %3811 = vmatpush1.msra.mxu0 0.0
    %3812 = vmatprep.subr.mxu0 0.0
    %3813 = vmatpush1.msra.mxu0 0.0
    %3814 = vmatprep.subr.mxu0 0.0
    %3815 = vmatpush1.msra.mxu0 0.0
    %3816 = vmatprep.subr.mxu0 0.0
    %3817 = vmatpush1.msra.mxu0 0.0
    %3818 = vmatprep.subr.mxu0 0.0
    %3819 = vmatpush1.msra.mxu0 0.0
    %3820 = vmatprep.subr.mxu0 0.0
    %3821 = vmatpush1.msra.mxu0 0.0
    %3822 = vmatprep.subr.mxu0 0.0
    %3823 = vmatpush1.msra.mxu0 0.0
    %3824 = vmatprep.subr.mxu0 0.0
    %3825 = vmatpush1.msra.mxu0 0.0
    %3826 = vmatprep.subr.mxu0 0.0
    %3827 = vmatpush1.msra.mxu0 0.0
    %3828 = vmatprep.subr.mxu0 0.0
    %3829 = vmatpush1.msra.mxu0 0.0
    %3830 = vmatprep.subr.mxu0 0.0
    %3831 = vmatpush1.msra.mxu0 0.0
    %3832 = vmatprep.subr.mxu0 0.0
    %3833 = vmatpush1.msra.mxu0 0.0
    %3834 = vmatprep.subr.mxu0 0.0
    %3835 = vmatpush1.msra.mxu0 0.0
    %3836 = vmatprep.subr.mxu0 0.0
    %3837 = vmatpush1.msra.mxu0 0.0
    %3838 = vmatprep.subr.mxu0 0.0
    %3839 = vmatpush1.msra.mxu0 0.0
    %3840 = vmatprep.subr.mxu0 0.0
    %3841 = vmatpush1.msra.mxu0 0.0
    %3842 = vmatprep.subr.mxu0 0.0
    %3843 = vmatpush1.msra.mxu0 0.0
    %3844 = vmatprep.subr.mxu0 0.0
    %3845 = vmatpush1.msra.mxu0 0.0
    %3846 = vmatprep.subr.mxu0 0.0
    %3847 = vmatpush1.msra.mxu0 0.0
    %3848 = vmatprep.subr.mxu0 0.0
    %3849 = vmatpush1.msra.mxu0 0.0
    %3850 = vmatprep.subr.mxu0 0.0
    %3851 = vmatpush1.msra.mxu0 0.0
    %3852 = vmatprep.subr.mxu0 0.0
    %3853 = vmatpush1.msra.mxu0 0.0
    %3854 = vmatprep.subr.mxu0 0.0
    %3855 = vmatpush1.msra.mxu0 0.0
    %3856 = vmatprep.subr.mxu0 0.0
    %3857 = vmatpush1.msra.mxu0 0.0
    %3858 = vmatprep.subr.mxu0 0.0
    %3859 = vmatpush1.msra.mxu0 0.0
    %3860 = vmatprep.subr.mxu0 0.0
    %3861 = vmatpush1.msra.mxu0 0.0
    %3862 = vmatprep.subr.mxu0 0.0
    %3863 = vmatpush1.msra.mxu0 0.0
    %3864 = vmatprep.mubr.f32.mxu0 0.0
    %3865 = vmatmul.mubr.f32.gmra.mrb[0].mxu0 %v3798
    %v3866 = vpop.f32.mrb[0].mxu0
    %v3867 = vadd.f32 0.0, %v3866
    %v3868 = vpop.f32.mrb[0].mxu0
    %3869 = vdwg.mxu0
    %3870 = vrot.lane.b32.xlu0 %v291, 48
    %v3871 = vpop.permute.xlu0 %3870
    %v3874 = vsel %vm328, %v3712, 0
    %3876 = vmatprep.subr.mxu0 0.0
    %3877 = vmatpush1.msra.mxu0 %v3871
    %3878 = vmatprep.subr.mxu0 0.0
    %3879 = vmatpush1.msra.mxu0 0.0
    %3880 = vmatprep.subr.mxu0 0.0
    %3881 = vmatpush1.msra.mxu0 0.0
    %3882 = vmatprep.subr.mxu0 0.0
    %3883 = vmatpush1.msra.mxu0 0.0
    %3884 = vmatprep.subr.mxu0 0.0
    %3885 = vmatpush1.msra.mxu0 0.0
    %3886 = vmatprep.subr.mxu0 0.0
    %3887 = vmatpush1.msra.mxu0 0.0
    %3888 = vmatprep.subr.mxu0 0.0
    %3889 = vmatpush1.msra.mxu0 0.0
    %3890 = vmatprep.subr.mxu0 0.0
    %3891 = vmatpush1.msra.mxu0 0.0
    %3892 = vmatprep.subr.mxu0 0.0
    %3893 = vmatpush1.msra.mxu0 0.0
    %3894 = vmatprep.subr.mxu0 0.0
    %3895 = vmatpush1.msra.mxu0 0.0
    %3896 = vmatprep.subr.mxu0 0.0
    %3897 = vmatpush1.msra.mxu0 0.0
    %3898 = vmatprep.subr.mxu0 0.0
    %3899 = vmatpush1.msra.mxu0 0.0
    %3900 = vmatprep.subr.mxu0 0.0
    %3901 = vmatpush1.msra.mxu0 0.0
    %3902 = vmatprep.subr.mxu0 0.0
    %3903 = vmatpush1.msra.mxu0 0.0
    %3904 = vmatprep.subr.mxu0 0.0
    %3905 = vmatpush1.msra.mxu0 0.0
    %3906 = vmatprep.subr.mxu0 0.0
    %3907 = vmatpush1.msra.mxu0 0.0
    %3908 = vmatprep.subr.mxu0 0.0
    %3909 = vmatpush1.msra.mxu0 0.0
    %3910 = vmatprep.subr.mxu0 0.0
    %3911 = vmatpush1.msra.mxu0 0.0
    %3912 = vmatprep.subr.mxu0 0.0
    %3913 = vmatpush1.msra.mxu0 0.0
    %3914 = vmatprep.subr.mxu0 0.0
    %3915 = vmatpush1.msra.mxu0 0.0
    %3916 = vmatprep.subr.mxu0 0.0
    %3917 = vmatpush1.msra.mxu0 0.0
    %3918 = vmatprep.subr.mxu0 0.0
    %3919 = vmatpush1.msra.mxu0 0.0
    %3920 = vmatprep.subr.mxu0 0.0
    %3921 = vmatpush1.msra.mxu0 0.0
    %3922 = vmatprep.subr.mxu0 0.0
    %3923 = vmatpush1.msra.mxu0 0.0
    %3924 = vmatprep.subr.mxu0 0.0
    %3925 = vmatpush1.msra.mxu0 0.0
    %3926 = vmatprep.subr.mxu0 0.0
    %3927 = vmatpush1.msra.mxu0 0.0
    %3928 = vmatprep.subr.mxu0 0.0
    %3929 = vmatpush1.msra.mxu0 0.0
    %3930 = vmatprep.subr.mxu0 0.0
    %3931 = vmatpush1.msra.mxu0 0.0
    %3932 = vmatprep.subr.mxu0 0.0
    %3933 = vmatpush1.msra.mxu0 0.0
    %3934 = vmatprep.subr.mxu0 0.0
    %3935 = vmatpush1.msra.mxu0 0.0
    %3936 = vmatprep.subr.mxu0 0.0
    %3937 = vmatpush1.msra.mxu0 0.0
    %3938 = vmatprep.subr.mxu0 0.0
    %3939 = vmatpush1.msra.mxu0 0.0
    %3940 = vmatprep.mubr.f32.mxu0 0.0
    %3941 = vmatmul.mubr.f32.gmra.mrb[0].mxu0 %v3874
    %v3942 = vpop.f32.mrb[0].mxu0
    %v3943 = vadd.f32 0.0, %v3942
    %v3944 = vpop.f32.mrb[0].mxu0
    %3945 = vdwg.mxu0
    %3946 = vrot.lane.b32.xlu0 %v296, 48
    %v3947 = vpop.permute.xlu0 %3946
    %v3950 = vsel %vm328, %v3713, 0
    %3952 = vmatprep.subr.mxu0 0.0
    %3953 = vmatpush1.msra.mxu0 %v3947
    %3954 = vmatprep.subr.mxu0 0.0
    %3955 = vmatpush1.msra.mxu0 0.0
    %3956 = vmatprep.subr.mxu0 0.0
    %3957 = vmatpush1.msra.mxu0 0.0
    %3958 = vmatprep.subr.mxu0 0.0
    %3959 = vmatpush1.msra.mxu0 0.0
    %3960 = vmatprep.subr.mxu0 0.0
    %3961 = vmatpush1.msra.mxu0 0.0
    %3962 = vmatprep.subr.mxu0 0.0
    %3963 = vmatpush1.msra.mxu0 0.0
    %3964 = vmatprep.subr.mxu0 0.0
    %3965 = vmatpush1.msra.mxu0 0.0
    %3966 = vmatprep.subr.mxu0 0.0
    %3967 = vmatpush1.msra.mxu0 0.0
    %3968 = vmatprep.subr.mxu0 0.0
    %3969 = vmatpush1.msra.mxu0 0.0
    %3970 = vmatprep.subr.mxu0 0.0
    %3971 = vmatpush1.msra.mxu0 0.0
    %3972 = vmatprep.subr.mxu0 0.0
    %3973 = vmatpush1.msra.mxu0 0.0
    %3974 = vmatprep.subr.mxu0 0.0
    %3975 = vmatpush1.msra.mxu0 0.0
    %3976 = vmatprep.subr.mxu0 0.0
    %3977 = vmatpush1.msra.mxu0 0.0
    %3978 = vmatprep.subr.mxu0 0.0
    %3979 = vmatpush1.msra.mxu0 0.0
    %3980 = vmatprep.subr.mxu0 0.0
    %3981 = vmatpush1.msra.mxu0 0.0
    %3982 = vmatprep.subr.mxu0 0.0
    %3983 = vmatpush1.msra.mxu0 0.0
    %3984 = vmatprep.subr.mxu0 0.0
    %3985 = vmatpush1.msra.mxu0 0.0
    %3986 = vmatprep.subr.mxu0 0.0
    %3987 = vmatpush1.msra.mxu0 0.0
    %3988 = vmatprep.subr.mxu0 0.0
    %3989 = vmatpush1.msra.mxu0 0.0
    %3990 = vmatprep.subr.mxu0 0.0
    %3991 = vmatpush1.msra.mxu0 0.0
    %3992 = vmatprep.subr.mxu0 0.0
    %3993 = vmatpush1.msra.mxu0 0.0
    %3994 = vmatprep.subr.mxu0 0.0
    %3995 = vmatpush1.msra.mxu0 0.0
    %3996 = vmatprep.subr.mxu0 0.0
    %3997 = vmatpush1.msra.mxu0 0.0
    %3998 = vmatprep.subr.mxu0 0.0
    %3999 = vmatpush1.msra.mxu0 0.0
    %4000 = vmatprep.subr.mxu0 0.0
    %4001 = vmatpush1.msra.mxu0 0.0
    %4002 = vmatprep.subr.mxu0 0.0
    %4003 = vmatpush1.msra.mxu0 0.0
    %4004 = vmatprep.subr.mxu0 0.0
    %4005 = vmatpush1.msra.mxu0 0.0
    %4006 = vmatprep.subr.mxu0 0.0
    %4007 = vmatpush1.msra.mxu0 0.0
    %4008 = vmatprep.subr.mxu0 0.0
    %4009 = vmatpush1.msra.mxu0 0.0
    %4010 = vmatprep.subr.mxu0 0.0
    %4011 = vmatpush1.msra.mxu0 0.0
    %4012 = vmatprep.subr.mxu0 0.0
    %4013 = vmatpush1.msra.mxu0 0.0
    %4014 = vmatprep.subr.mxu0 0.0
    %4015 = vmatpush1.msra.mxu0 0.0
    %4016 = vmatprep.mubr.f32.mxu0 0.0
    %4017 = vmatmul.mubr.f32.gmra.mrb[0].mxu0 %v3950
    %v4018 = vpop.f32.mrb[0].mxu0
    %v4019 = vadd.f32 0.0, %v4018
    %v4020 = vpop.f32.mrb[0].mxu0
    %4021 = vdwg.mxu0
    %4022 = vrot.lane.b32.xlu0 %v301, 48
    %v4023 = vpop.permute.xlu0 %4022
    %v4026 = vsel %vm328, %v3714, 0
    %4028 = vmatprep.subr.mxu0 0.0
    %4029 = vmatpush1.msra.mxu0 %v4023
    %4030 = vmatprep.subr.mxu0 0.0
    %4031 = vmatpush1.msra.mxu0 0.0
    %4032 = vmatprep.subr.mxu0 0.0
    %4033 = vmatpush1.msra.mxu0 0.0
    %4034 = vmatprep.subr.mxu0 0.0
    %4035 = vmatpush1.msra.mxu0 0.0
    %4036 = vmatprep.subr.mxu0 0.0
    %4037 = vmatpush1.msra.mxu0 0.0
    %4038 = vmatprep.subr.mxu0 0.0
    %4039 = vmatpush1.msra.mxu0 0.0
    %4040 = vmatprep.subr.mxu0 0.0
    %4041 = vmatpush1.msra.mxu0 0.0
    %4042 = vmatprep.subr.mxu0 0.0
    %4043 = vmatpush1.msra.mxu0 0.0
    %4044 = vmatprep.subr.mxu0 0.0
    %4045 = vmatpush1.msra.mxu0 0.0
    %4046 = vmatprep.subr.mxu0 0.0
    %4047 = vmatpush1.msra.mxu0 0.0
    %4048 = vmatprep.subr.mxu0 0.0
    %4049 = vmatpush1.msra.mxu0 0.0
    %4050 = vmatprep.subr.mxu0 0.0
    %4051 = vmatpush1.msra.mxu0 0.0
    %4052 = vmatprep.subr.mxu0 0.0
    %4053 = vmatpush1.msra.mxu0 0.0
    %4054 = vmatprep.subr.mxu0 0.0
    %4055 = vmatpush1.msra.mxu0 0.0
    %4056 = vmatprep.subr.mxu0 0.0
    %4057 = vmatpush1.msra.mxu0 0.0
    %4058 = vmatprep.subr.mxu0 0.0
    %4059 = vmatpush1.msra.mxu0 0.0
    %4060 = vmatprep.subr.mxu0 0.0
    %4061 = vmatpush1.msra.mxu0 0.0
    %4062 = vmatprep.subr.mxu0 0.0
    %4063 = vmatpush1.msra.mxu0 0.0
    %4064 = vmatprep.subr.mxu0 0.0
    %4065 = vmatpush1.msra.mxu0 0.0
    %4066 = vmatprep.subr.mxu0 0.0
    %4067 = vmatpush1.msra.mxu0 0.0
    %4068 = vmatprep.subr.mxu0 0.0
    %4069 = vmatpush1.msra.mxu0 0.0
    %4070 = vmatprep.subr.mxu0 0.0
    %4071 = vmatpush1.msra.mxu0 0.0
    %4072 = vmatprep.subr.mxu0 0.0
    %4073 = vmatpush1.msra.mxu0 0.0
    %4074 = vmatprep.subr.mxu0 0.0
    %4075 = vmatpush1.msra.mxu0 0.0
    %4076 = vmatprep.subr.mxu0 0.0
    %4077 = vmatpush1.msra.mxu0 0.0
    %4078 = vmatprep.subr.mxu0 0.0
    %4079 = vmatpush1.msra.mxu0 0.0
    %4080 = vmatprep.subr.mxu0 0.0
    %4081 = vmatpush1.msra.mxu0 0.0
    %4082 = vmatprep.subr.mxu0 0.0
    %4083 = vmatpush1.msra.mxu0 0.0
    %4084 = vmatprep.subr.mxu0 0.0
    %4085 = vmatpush1.msra.mxu0 0.0
    %4086 = vmatprep.subr.mxu0 0.0
    %4087 = vmatpush1.msra.mxu0 0.0
    %4088 = vmatprep.subr.mxu0 0.0
    %4089 = vmatpush1.msra.mxu0 0.0
    %4090 = vmatprep.subr.mxu0 0.0
    %4091 = vmatpush1.msra.mxu0 0.0
    %4092 = vmatprep.mubr.f32.mxu0 0.0
    %4093 = vmatmul.mubr.f32.gmra.mrb[0].mxu0 %v4026
    %v4094 = vpop.f32.mrb[0].mxu0
    %v4095 = vadd.f32 0.0, %v4094
    %v4096 = vpop.f32.mrb[0].mxu0
    %4097 = vdwg.mxu0
    %4098 = vrot.lane.b32.xlu0 %v306, 48
    %v4099 = vpop.permute.xlu0 %4098
    %v4102 = vsel %vm328, %v3715, 0
    %4104 = vmatprep.subr.mxu0 0.0
    %4105 = vmatpush1.msra.mxu0 %v4099
    %4106 = vmatprep.subr.mxu0 0.0
    %4107 = vmatpush1.msra.mxu0 0.0
    %4108 = vmatprep.subr.mxu0 0.0
    %4109 = vmatpush1.msra.mxu0 0.0
    %4110 = vmatprep.subr.mxu0 0.0
    %4111 = vmatpush1.msra.mxu0 0.0
    %4112 = vmatprep.subr.mxu0 0.0
    %4113 = vmatpush1.msra.mxu0 0.0
    %4114 = vmatprep.subr.mxu0 0.0
    %4115 = vmatpush1.msra.mxu0 0.0
    %4116 = vmatprep.subr.mxu0 0.0
    %4117 = vmatpush1.msra.mxu0 0.0
    %4118 = vmatprep.subr.mxu0 0.0
    %4119 = vmatpush1.msra.mxu0 0.0
    %4120 = vmatprep.subr.mxu0 0.0
    %4121 = vmatpush1.msra.mxu0 0.0
    %4122 = vmatprep.subr.mxu0 0.0
    %4123 = vmatpush1.msra.mxu0 0.0
    %4124 = vmatprep.subr.mxu0 0.0
    %4125 = vmatpush1.msra.mxu0 0.0
    %4126 = vmatprep.subr.mxu0 0.0
    %4127 = vmatpush1.msra.mxu0 0.0
    %4128 = vmatprep.subr.mxu0 0.0
    %4129 = vmatpush1.msra.mxu0 0.0
    %4130 = vmatprep.subr.mxu0 0.0
    %4131 = vmatpush1.msra.mxu0 0.0
    %4132 = vmatprep.subr.mxu0 0.0
    %4133 = vmatpush1.msra.mxu0 0.0
    %4134 = vmatprep.subr.mxu0 0.0
    %4135 = vmatpush1.msra.mxu0 0.0
    %4136 = vmatprep.subr.mxu0 0.0
    %4137 = vmatpush1.msra.mxu0 0.0
    %4138 = vmatprep.subr.mxu0 0.0
    %4139 = vmatpush1.msra.mxu0 0.0
    %4140 = vmatprep.subr.mxu0 0.0
    %4141 = vmatpush1.msra.mxu0 0.0
    %4142 = vmatprep.subr.mxu0 0.0
    %4143 = vmatpush1.msra.mxu0 0.0
    %4144 = vmatprep.subr.mxu0 0.0
    %4145 = vmatpush1.msra.mxu0 0.0
    %4146 = vmatprep.subr.mxu0 0.0
    %4147 = vmatpush1.msra.mxu0 0.0
    %4148 = vmatprep.subr.mxu0 0.0
    %4149 = vmatpush1.msra.mxu0 0.0
    %4150 = vmatprep.subr.mxu0 0.0
    %4151 = vmatpush1.msra.mxu0 0.0
    %4152 = vmatprep.subr.mxu0 0.0
    %4153 = vmatpush1.msra.mxu0 0.0
    %4154 = vmatprep.subr.mxu0 0.0
    %4155 = vmatpush1.msra.mxu0 0.0
    %4156 = vmatprep.subr.mxu0 0.0
    %4157 = vmatpush1.msra.mxu0 0.0
    %4158 = vmatprep.subr.mxu0 0.0
    %4159 = vmatpush1.msra.mxu0 0.0
    %4160 = vmatprep.subr.mxu0 0.0
    %4161 = vmatpush1.msra.mxu0 0.0
    %4162 = vmatprep.subr.mxu0 0.0
    %4163 = vmatpush1.msra.mxu0 0.0
    %4164 = vmatprep.subr.mxu0 0.0
    %4165 = vmatpush1.msra.mxu0 0.0
    %4166 = vmatprep.subr.mxu0 0.0
    %4167 = vmatpush1.msra.mxu0 0.0
    %4168 = vmatprep.mubr.f32.mxu0 0.0
    %4169 = vmatmul.mubr.f32.gmra.mrb[0].mxu0 %v4102
    %v4170 = vpop.f32.mrb[0].mxu0
    %v4171 = vadd.f32 0.0, %v4170
    %v4172 = vpop.f32.mrb[0].mxu0
    %4173 = vdwg.mxu0
    %4174 = vrot.lane.b32.xlu0 %v311, 48
    %v4175 = vpop.permute.xlu0 %4174
    %v4178 = vsel %vm328, %v3716, 0
    %4180 = vmatprep.subr.mxu0 0.0
    %4181 = vmatpush1.msra.mxu0 %v4175
    %4182 = vmatprep.subr.mxu0 0.0
    %4183 = vmatpush1.msra.mxu0 0.0
    %4184 = vmatprep.subr.mxu0 0.0
    %4185 = vmatpush1.msra.mxu0 0.0
    %4186 = vmatprep.subr.mxu0 0.0
    %4187 = vmatpush1.msra.mxu0 0.0
    %4188 = vmatprep.subr.mxu0 0.0
    %4189 = vmatpush1.msra.mxu0 0.0
    %4190 = vmatprep.subr.mxu0 0.0
    %4191 = vmatpush1.msra.mxu0 0.0
    %4192 = vmatprep.subr.mxu0 0.0
    %4193 = vmatpush1.msra.mxu0 0.0
    %4194 = vmatprep.subr.mxu0 0.0
    %4195 = vmatpush1.msra.mxu0 0.0
    %4196 = vmatprep.subr.mxu0 0.0
    %4197 = vmatpush1.msra.mxu0 0.0
    %4198 = vmatprep.subr.mxu0 0.0
    %4199 = vmatpush1.msra.mxu0 0.0
    %4200 = vmatprep.subr.mxu0 0.0
    %4201 = vmatpush1.msra.mxu0 0.0
    %4202 = vmatprep.subr.mxu0 0.0
    %4203 = vmatpush1.msra.mxu0 0.0
    %4204 = vmatprep.subr.mxu0 0.0
    %4205 = vmatpush1.msra.mxu0 0.0
    %4206 = vmatprep.subr.mxu0 0.0
    %4207 = vmatpush1.msra.mxu0 0.0
    %4208 = vmatprep.subr.mxu0 0.0
    %4209 = vmatpush1.msra.mxu0 0.0
    %4210 = vmatprep.subr.mxu0 0.0
    %4211 = vmatpush1.msra.mxu0 0.0
    %4212 = vmatprep.subr.mxu0 0.0
    %4213 = vmatpush1.msra.mxu0 0.0
    %4214 = vmatprep.subr.mxu0 0.0
    %4215 = vmatpush1.msra.mxu0 0.0
    %4216 = vmatprep.subr.mxu0 0.0
    %4217 = vmatpush1.msra.mxu0 0.0
    %4218 = vmatprep.subr.mxu0 0.0
    %4219 = vmatpush1.msra.mxu0 0.0
    %4220 = vmatprep.subr.mxu0 0.0
    %4221 = vmatpush1.msra.mxu0 0.0
    %4222 = vmatprep.subr.mxu0 0.0
    %4223 = vmatpush1.msra.mxu0 0.0
    %4224 = vmatprep.subr.mxu0 0.0
    %4225 = vmatpush1.msra.mxu0 0.0
    %4226 = vmatprep.subr.mxu0 0.0
    %4227 = vmatpush1.msra.mxu0 0.0
    %4228 = vmatprep.subr.mxu0 0.0
    %4229 = vmatpush1.msra.mxu0 0.0
    %4230 = vmatprep.subr.mxu0 0.0
    %4231 = vmatpush1.msra.mxu0 0.0
    %4232 = vmatprep.subr.mxu0 0.0
    %4233 = vmatpush1.msra.mxu0 0.0
    %4234 = vmatprep.subr.mxu0 0.0
    %4235 = vmatpush1.msra.mxu0 0.0
    %4236 = vmatprep.subr.mxu0 0.0
    %4237 = vmatpush1.msra.mxu0 0.0
    %4238 = vmatprep.subr.mxu0 0.0
    %4239 = vmatpush1.msra.mxu0 0.0
    %4240 = vmatprep.subr.mxu0 0.0
    %4241 = vmatpush1.msra.mxu0 0.0
    %4242 = vmatprep.subr.mxu0 0.0
    %4243 = vmatpush1.msra.mxu0 0.0
    %4244 = vmatprep.mubr.f32.mxu0 0.0
    %4245 = vmatmul.mubr.f32.gmra.mrb[0].mxu0 %v4178
    %v4246 = vpop.f32.mrb[0].mxu0
    %v4247 = vadd.f32 0.0, %v4246
    %v4248 = vpop.f32.mrb[0].mxu0
    %4249 = vdwg.mxu0
    %4250 = vrot.lane.b32.xlu0 %v316, 48
    %v4251 = vpop.permute.xlu0 %4250
    %v4254 = vsel %vm328, %v3717, 0
    %4256 = vmatprep.subr.mxu0 0.0
    %4257 = vmatpush1.msra.mxu0 %v4251
    %4258 = vmatprep.subr.mxu0 0.0
    %4259 = vmatpush1.msra.mxu0 0.0
    %4260 = vmatprep.subr.mxu0 0.0
    %4261 = vmatpush1.msra.mxu0 0.0
    %4262 = vmatprep.subr.mxu0 0.0
    %4263 = vmatpush1.msra.mxu0 0.0
    %4264 = vmatprep.subr.mxu0 0.0
    %4265 = vmatpush1.msra.mxu0 0.0
    %4266 = vmatprep.subr.mxu0 0.0
    %4267 = vmatpush1.msra.mxu0 0.0
    %4268 = vmatprep.subr.mxu0 0.0
    %4269 = vmatpush1.msra.mxu0 0.0
    %4270 = vmatprep.subr.mxu0 0.0
    %4271 = vmatpush1.msra.mxu0 0.0
    %4272 = vmatprep.subr.mxu0 0.0
    %4273 = vmatpush1.msra.mxu0 0.0
    %4274 = vmatprep.subr.mxu0 0.0
    %4275 = vmatpush1.msra.mxu0 0.0
    %4276 = vmatprep.subr.mxu0 0.0
    %4277 = vmatpush1.msra.mxu0 0.0
    %4278 = vmatprep.subr.mxu0 0.0
    %4279 = vmatpush1.msra.mxu0 0.0
    %4280 = vmatprep.subr.mxu0 0.0
    %4281 = vmatpush1.msra.mxu0 0.0
    %4282 = vmatprep.subr.mxu0 0.0
    %4283 = vmatpush1.msra.mxu0 0.0
    %4284 = vmatprep.subr.mxu0 0.0
    %4285 = vmatpush1.msra.mxu0 0.0
    %4286 = vmatprep.subr.mxu0 0.0
    %4287 = vmatpush1.msra.mxu0 0.0
    %4288 = vmatprep.subr.mxu0 0.0
    %4289 = vmatpush1.msra.mxu0 0.0
    %4290 = vmatprep.subr.mxu0 0.0
    %4291 = vmatpush1.msra.mxu0 0.0
    %4292 = vmatprep.subr.mxu0 0.0
    %4293 = vmatpush1.msra.mxu0 0.0
    %4294 = vmatprep.subr.mxu0 0.0
    %4295 = vmatpush1.msra.mxu0 0.0
    %4296 = vmatprep.subr.mxu0 0.0
    %4297 = vmatpush1.msra.mxu0 0.0
    %4298 = vmatprep.subr.mxu0 0.0
    %4299 = vmatpush1.msra.mxu0 0.0
    %4300 = vmatprep.subr.mxu0 0.0
    %4301 = vmatpush1.msra.mxu0 0.0
    %4302 = vmatprep.subr.mxu0 0.0
    %4303 = vmatpush1.msra.mxu0 0.0
    %4304 = vmatprep.subr.mxu0 0.0
    %4305 = vmatpush1.msra.mxu0 0.0
    %4306 = vmatprep.subr.mxu0 0.0
    %4307 = vmatpush1.msra.mxu0 0.0
    %4308 = vmatprep.subr.mxu0 0.0
    %4309 = vmatpush1.msra.mxu0 0.0
    %4310 = vmatprep.subr.mxu0 0.0
    %4311 = vmatpush1.msra.mxu0 0.0
    %4312 = vmatprep.subr.mxu0 0.0
    %4313 = vmatpush1.msra.mxu0 0.0
    %4314 = vmatprep.subr.mxu0 0.0
    %4315 = vmatpush1.msra.mxu0 0.0
    %4316 = vmatprep.subr.mxu0 0.0
    %4317 = vmatpush1.msra.mxu0 0.0
    %4318 = vmatprep.subr.mxu0 0.0
    %4319 = vmatpush1.msra.mxu0 0.0
    %4320 = vmatprep.mubr.f32.mxu0 0.0
    %4321 = vmatmul.mubr.f32.gmra.mrb[0].mxu0 %v4254
    %v4322 = vpop.f32.mrb[0].mxu0
    %v4323 = vadd.f32 0.0, %v4322
    %v4324 = vpop.f32.mrb[0].mxu0
    %4325 = vdwg.mxu0
    %4326 = vrot.lane.b32.xlu0 %v281, 104
    %v4327 = vpop.permute.xlu0 %4326
    %4328 = vrot.lane.b32.xlu0 %v281, 72
    %v4329 = vpop.permute.xlu0 %4328
    %v4330 = vsel %vm328, %v4327, 0
    %v4332 = vsel %vm328, %v4329, 0
    %4334 = vmatprep.subr.mxu0 0.0
    %4335 = vmatpush1.xpose.msra.mxu0 %v4332
    %4336 = vmatprep.subr.mxu0 0.0
    %4337 = vmatpush1.xpose.msra.mxu0 0.0
    %4338 = vmatprep.subr.mxu0 0.0
    %4339 = vmatpush1.xpose.msra.mxu0 0.0
    %4340 = vmatprep.subr.mxu0 0.0
    %4341 = vmatpush1.xpose.msra.mxu0 0.0
    %4342 = vmatprep.subr.mxu0 0.0
    %4343 = vmatpush1.xpose.msra.mxu0 0.0
    %4344 = vmatprep.subr.mxu0 0.0
    %4345 = vmatpush1.xpose.msra.mxu0 0.0
    %4346 = vmatprep.subr.mxu0 0.0
    %4347 = vmatpush1.xpose.msra.mxu0 0.0
    %4348 = vmatprep.subr.mxu0 0.0
    %4349 = vmatpush1.xpose.msra.mxu0 0.0
    %4350 = vmatprep.subr.mxu0 0.0
    %4351 = vmatpush1.xpose.msra.mxu0 0.0
    %4352 = vmatprep.subr.mxu0 0.0
    %4353 = vmatpush1.xpose.msra.mxu0 0.0
    %4354 = vmatprep.subr.mxu0 0.0
    %4355 = vmatpush1.xpose.msra.mxu0 0.0
    %4356 = vmatprep.subr.mxu0 0.0
    %4357 = vmatpush1.xpose.msra.mxu0 0.0
    %4358 = vmatprep.subr.mxu0 0.0
    %4359 = vmatpush1.xpose.msra.mxu0 0.0
    %4360 = vmatprep.subr.mxu0 0.0
    %4361 = vmatpush1.xpose.msra.mxu0 0.0
    %4362 = vmatprep.subr.mxu0 0.0
    %4363 = vmatpush1.xpose.msra.mxu0 0.0
    %4364 = vmatprep.subr.mxu0 0.0
    %4365 = vmatpush1.xpose.msra.mxu0 0.0
    %4366 = vmatprep.subr.mxu0 0.0
    %4367 = vmatpush1.xpose.msra.mxu0 0.0
    %4368 = vmatprep.subr.mxu0 0.0
    %4369 = vmatpush1.xpose.msra.mxu0 0.0
    %4370 = vmatprep.subr.mxu0 0.0
    %4371 = vmatpush1.xpose.msra.mxu0 0.0
    %4372 = vmatprep.subr.mxu0 0.0
    %4373 = vmatpush1.xpose.msra.mxu0 0.0
    %4374 = vmatprep.subr.mxu0 0.0
    %4375 = vmatpush1.xpose.msra.mxu0 0.0
    %4376 = vmatprep.subr.mxu0 0.0
    %4377 = vmatpush1.xpose.msra.mxu0 0.0
    %4378 = vmatprep.subr.mxu0 0.0
    %4379 = vmatpush1.xpose.msra.mxu0 0.0
    %4380 = vmatprep.subr.mxu0 0.0
    %4381 = vmatpush1.xpose.msra.mxu0 0.0
    %4382 = vmatprep.subr.mxu0 0.0
    %4383 = vmatpush1.xpose.msra.mxu0 0.0
    %4384 = vmatprep.subr.mxu0 0.0
    %4385 = vmatpush1.xpose.msra.mxu0 0.0
    %4386 = vmatprep.subr.mxu0 0.0
    %4387 = vmatpush1.xpose.msra.mxu0 0.0
    %4388 = vmatprep.subr.mxu0 0.0
    %4389 = vmatpush1.xpose.msra.mxu0 0.0
    %4390 = vmatprep.subr.mxu0 0.0
    %4391 = vmatpush1.xpose.msra.mxu0 0.0
    %4392 = vmatprep.subr.mxu0 0.0
    %4393 = vmatpush1.xpose.msra.mxu0 0.0
    %4394 = vmatprep.subr.mxu0 0.0
    %4395 = vmatpush1.xpose.msra.mxu0 0.0
    %4396 = vmatprep.subr.mxu0 0.0
    %4397 = vmatpush1.xpose.msra.mxu0 0.0
    %4398 = vmatprep.mubr.f32.mxu0 0.0
    %4399 = vmatmul.mubr.f32.gmra.mrb[0].mxu0 %v4330
    %v4400 = vpop.f32.mrb[0].mxu0
    %v4401 = vadd.f32 0.0, %v4400
    %v4402 = vpop.f32.mrb[0].mxu0
    %4403 = vdwg.mxu0
    %4404 = vrot.lane.b32.xlu0 %v286, 104
    %v4405 = vpop.permute.xlu0 %4404
    %4406 = vrot.lane.b32.xlu0 %v286, 72
    %v4407 = vpop.permute.xlu0 %4406
    %v4408 = vsel %vm328, %v4405, 0
    %v4410 = vsel %vm328, %v4407, 0
    %4412 = vmatprep.subr.mxu0 0.0
    %4413 = vmatpush1.xpose.msra.mxu0 %v4410
    %4414 = vmatprep.subr.mxu0 0.0
    %4415 = vmatpush1.xpose.msra.mxu0 0.0
    %4416 = vmatprep.subr.mxu0 0.0
    %4417 = vmatpush1.xpose.msra.mxu0 0.0
    %4418 = vmatprep.subr.mxu0 0.0
    %4419 = vmatpush1.xpose.msra.mxu0 0.0
    %4420 = vmatprep.subr.mxu0 0.0
    %4421 = vmatpush1.xpose.msra.mxu0 0.0
    %4422 = vmatprep.subr.mxu0 0.0
    %4423 = vmatpush1.xpose.msra.mxu0 0.0
    %4424 = vmatprep.subr.mxu0 0.0
    %4425 = vmatpush1.xpose.msra.mxu0 0.0
    %4426 = vmatprep.subr.mxu0 0.0
    %4427 = vmatpush1.xpose.msra.mxu0 0.0
    %4428 = vmatprep.subr.mxu0 0.0
    %4429 = vmatpush1.xpose.msra.mxu0 0.0
    %4430 = vmatprep.subr.mxu0 0.0
    %4431 = vmatpush1.xpose.msra.mxu0 0.0
    %4432 = vmatprep.subr.mxu0 0.0
    %4433 = vmatpush1.xpose.msra.mxu0 0.0
    %4434 = vmatprep.subr.mxu0 0.0
    %4435 = vmatpush1.xpose.msra.mxu0 0.0
    %4436 = vmatprep.subr.mxu0 0.0
    %4437 = vmatpush1.xpose.msra.mxu0 0.0
    %4438 = vmatprep.subr.mxu0 0.0
    %4439 = vmatpush1.xpose.msra.mxu0 0.0
    %4440 = vmatprep.subr.mxu0 0.0
    %4441 = vmatpush1.xpose.msra.mxu0 0.0
    %4442 = vmatprep.subr.mxu0 0.0
    %4443 = vmatpush1.xpose.msra.mxu0 0.0
    %4444 = vmatprep.subr.mxu0 0.0
    %4445 = vmatpush1.xpose.msra.mxu0 0.0
    %4446 = vmatprep.subr.mxu0 0.0
    %4447 = vmatpush1.xpose.msra.mxu0 0.0
    %4448 = vmatprep.subr.mxu0 0.0
    %4449 = vmatpush1.xpose.msra.mxu0 0.0
    %4450 = vmatprep.subr.mxu0 0.0
    %4451 = vmatpush1.xpose.msra.mxu0 0.0
    %4452 = vmatprep.subr.mxu0 0.0
    %4453 = vmatpush1.xpose.msra.mxu0 0.0
    %4454 = vmatprep.subr.mxu0 0.0
    %4455 = vmatpush1.xpose.msra.mxu0 0.0
    %4456 = vmatprep.subr.mxu0 0.0
    %4457 = vmatpush1.xpose.msra.mxu0 0.0
    %4458 = vmatprep.subr.mxu0 0.0
    %4459 = vmatpush1.xpose.msra.mxu0 0.0
    %4460 = vmatprep.subr.mxu0 0.0
    %4461 = vmatpush1.xpose.msra.mxu0 0.0
    %4462 = vmatprep.subr.mxu0 0.0
    %4463 = vmatpush1.xpose.msra.mxu0 0.0
    %4464 = vmatprep.subr.mxu0 0.0
    %4465 = vmatpush1.xpose.msra.mxu0 0.0
    %4466 = vmatprep.subr.mxu0 0.0
    %4467 = vmatpush1.xpose.msra.mxu0 0.0
    %4468 = vmatprep.subr.mxu0 0.0
    %4469 = vmatpush1.xpose.msra.mxu0 0.0
    %4470 = vmatprep.subr.mxu0 0.0
    %4471 = vmatpush1.xpose.msra.mxu0 0.0
    %4472 = vmatprep.subr.mxu0 0.0
    %4473 = vmatpush1.xpose.msra.mxu0 0.0
    %4474 = vmatprep.subr.mxu0 0.0
    %4475 = vmatpush1.xpose.msra.mxu0 0.0
    %4476 = vmatprep.mubr.f32.mxu0 0.0
    %4477 = vmatmul.mubr.f32.gmra.mrb[0].mxu0 %v4408
    %v4478 = vpop.f32.mrb[0].mxu0
    %v4479 = vadd.f32 0.0, %v4478
    %v4480 = vpop.f32.mrb[0].mxu0
    %4481 = vdwg.mxu0
    %4482 = vrot.lane.b32.xlu0 %v291, 104
    %v4483 = vpop.permute.xlu0 %4482
    %4484 = vrot.lane.b32.xlu0 %v291, 72
    %v4485 = vpop.permute.xlu0 %4484
    %v4486 = vsel %vm328, %v4483, 0
    %v4488 = vsel %vm328, %v4485, 0
    %4490 = vmatprep.subr.mxu0 0.0
    %4491 = vmatpush1.xpose.msra.mxu0 %v4488
    %4492 = vmatprep.subr.mxu0 0.0
    %4493 = vmatpush1.xpose.msra.mxu0 0.0
    %4494 = vmatprep.subr.mxu0 0.0
    %4495 = vmatpush1.xpose.msra.mxu0 0.0
    %4496 = vmatprep.subr.mxu0 0.0
    %4497 = vmatpush1.xpose.msra.mxu0 0.0
    %4498 = vmatprep.subr.mxu0 0.0
    %4499 = vmatpush1.xpose.msra.mxu0 0.0
    %4500 = vmatprep.subr.mxu0 0.0
    %4501 = vmatpush1.xpose.msra.mxu0 0.0
    %4502 = vmatprep.subr.mxu0 0.0
    %4503 = vmatpush1.xpose.msra.mxu0 0.0
    %4504 = vmatprep.subr.mxu0 0.0
    %4505 = vmatpush1.xpose.msra.mxu0 0.0
    %4506 = vmatprep.subr.mxu0 0.0
    %4507 = vmatpush1.xpose.msra.mxu0 0.0
    %4508 = vmatprep.subr.mxu0 0.0
    %4509 = vmatpush1.xpose.msra.mxu0 0.0
    %4510 = vmatprep.subr.mxu0 0.0
    %4511 = vmatpush1.xpose.msra.mxu0 0.0
    %4512 = vmatprep.subr.mxu0 0.0
    %4513 = vmatpush1.xpose.msra.mxu0 0.0
    %4514 = vmatprep.subr.mxu0 0.0
    %4515 = vmatpush1.xpose.msra.mxu0 0.0
    %4516 = vmatprep.subr.mxu0 0.0
    %4517 = vmatpush1.xpose.msra.mxu0 0.0
    %4518 = vmatprep.subr.mxu0 0.0
    %4519 = vmatpush1.xpose.msra.mxu0 0.0
    %4520 = vmatprep.subr.mxu0 0.0
    %4521 = vmatpush1.xpose.msra.mxu0 0.0
    %4522 = vmatprep.subr.mxu0 0.0
    %4523 = vmatpush1.xpose.msra.mxu0 0.0
    %4524 = vmatprep.subr.mxu0 0.0
    %4525 = vmatpush1.xpose.msra.mxu0 0.0
    %4526 = vmatprep.subr.mxu0 0.0
    %4527 = vmatpush1.xpose.msra.mxu0 0.0
    %4528 = vmatprep.subr.mxu0 0.0
    %4529 = vmatpush1.xpose.msra.mxu0 0.0
    %4530 = vmatprep.subr.mxu0 0.0
    %4531 = vmatpush1.xpose.msra.mxu0 0.0
    %4532 = vmatprep.subr.mxu0 0.0
    %4533 = vmatpush1.xpose.msra.mxu0 0.0
    %4534 = vmatprep.subr.mxu0 0.0
    %4535 = vmatpush1.xpose.msra.mxu0 0.0
    %4536 = vmatprep.subr.mxu0 0.0
    %4537 = vmatpush1.xpose.msra.mxu0 0.0
    %4538 = vmatprep.subr.mxu0 0.0
    %4539 = vmatpush1.xpose.msra.mxu0 0.0
    %4540 = vmatprep.subr.mxu0 0.0
    %4541 = vmatpush1.xpose.msra.mxu0 0.0
    %4542 = vmatprep.subr.mxu0 0.0
    %4543 = vmatpush1.xpose.msra.mxu0 0.0
    %4544 = vmatprep.subr.mxu0 0.0
    %4545 = vmatpush1.xpose.msra.mxu0 0.0
    %4546 = vmatprep.subr.mxu0 0.0
    %4547 = vmatpush1.xpose.msra.mxu0 0.0
    %4548 = vmatprep.subr.mxu0 0.0
    %4549 = vmatpush1.xpose.msra.mxu0 0.0
    %4550 = vmatprep.subr.mxu0 0.0
    %4551 = vmatpush1.xpose.msra.mxu0 0.0
    %4552 = vmatprep.subr.mxu0 0.0
    %4553 = vmatpush1.xpose.msra.mxu0 0.0
    %4554 = vmatprep.mubr.f32.mxu0 0.0
    %4555 = vmatmul.mubr.f32.gmra.mrb[0].mxu0 %v4486
    %v4556 = vpop.f32.mrb[0].mxu0
    %v4557 = vadd.f32 0.0, %v4556
    %v4558 = vpop.f32.mrb[0].mxu0
    %4559 = vdwg.mxu0
    %4560 = vrot.lane.b32.xlu0 %v296, 104
    %v4561 = vpop.permute.xlu0 %4560
    %4562 = vrot.lane.b32.xlu0 %v296, 72
    %v4563 = vpop.permute.xlu0 %4562
    %v4564 = vsel %vm328, %v4561, 0
    %v4566 = vsel %vm328, %v4563, 0
    %4568 = vmatprep.subr.mxu0 0.0
    %4569 = vmatpush1.xpose.msra.mxu0 %v4566
    %4570 = vmatprep.subr.mxu0 0.0
    %4571 = vmatpush1.xpose.msra.mxu0 0.0
    %4572 = vmatprep.subr.mxu0 0.0
    %4573 = vmatpush1.xpose.msra.mxu0 0.0
    %4574 = vmatprep.subr.mxu0 0.0
    %4575 = vmatpush1.xpose.msra.mxu0 0.0
    %4576 = vmatprep.subr.mxu0 0.0
    %4577 = vmatpush1.xpose.msra.mxu0 0.0
    %4578 = vmatprep.subr.mxu0 0.0
    %4579 = vmatpush1.xpose.msra.mxu0 0.0
    %4580 = vmatprep.subr.mxu0 0.0
    %4581 = vmatpush1.xpose.msra.mxu0 0.0
    %4582 = vmatprep.subr.mxu0 0.0
    %4583 = vmatpush1.xpose.msra.mxu0 0.0
    %4584 = vmatprep.subr.mxu0 0.0
    %4585 = vmatpush1.xpose.msra.mxu0 0.0
    %4586 = vmatprep.subr.mxu0 0.0
    %4587 = vmatpush1.xpose.msra.mxu0 0.0
    %4588 = vmatprep.subr.mxu0 0.0
    %4589 = vmatpush1.xpose.msra.mxu0 0.0
    %4590 = vmatprep.subr.mxu0 0.0
    %4591 = vmatpush1.xpose.msra.mxu0 0.0
    %4592 = vmatprep.subr.mxu0 0.0
    %4593 = vmatpush1.xpose.msra.mxu0 0.0
    %4594 = vmatprep.subr.mxu0 0.0
    %4595 = vmatpush1.xpose.msra.mxu0 0.0
    %4596 = vmatprep.subr.mxu0 0.0
    %4597 = vmatpush1.xpose.msra.mxu0 0.0
    %4598 = vmatprep.subr.mxu0 0.0
    %4599 = vmatpush1.xpose.msra.mxu0 0.0
    %4600 = vmatprep.subr.mxu0 0.0
    %4601 = vmatpush1.xpose.msra.mxu0 0.0
    %4602 = vmatprep.subr.mxu0 0.0
    %4603 = vmatpush1.xpose.msra.mxu0 0.0
    %4604 = vmatprep.subr.mxu0 0.0
    %4605 = vmatpush1.xpose.msra.mxu0 0.0
    %4606 = vmatprep.subr.mxu0 0.0
    %4607 = vmatpush1.xpose.msra.mxu0 0.0
    %4608 = vmatprep.subr.mxu0 0.0
    %4609 = vmatpush1.xpose.msra.mxu0 0.0
    %4610 = vmatprep.subr.mxu0 0.0
    %4611 = vmatpush1.xpose.msra.mxu0 0.0
    %4612 = vmatprep.subr.mxu0 0.0
    %4613 = vmatpush1.xpose.msra.mxu0 0.0
    %4614 = vmatprep.subr.mxu0 0.0
    %4615 = vmatpush1.xpose.msra.mxu0 0.0
    %4616 = vmatprep.subr.mxu0 0.0
    %4617 = vmatpush1.xpose.msra.mxu0 0.0
    %4618 = vmatprep.subr.mxu0 0.0
    %4619 = vmatpush1.xpose.msra.mxu0 0.0
    %4620 = vmatprep.subr.mxu0 0.0
    %4621 = vmatpush1.xpose.msra.mxu0 0.0
    %4622 = vmatprep.subr.mxu0 0.0
    %4623 = vmatpush1.xpose.msra.mxu0 0.0
    %4624 = vmatprep.subr.mxu0 0.0
    %4625 = vmatpush1.xpose.msra.mxu0 0.0
    %4626 = vmatprep.subr.mxu0 0.0
    %4627 = vmatpush1.xpose.msra.mxu0 0.0
    %4628 = vmatprep.subr.mxu0 0.0
    %4629 = vmatpush1.xpose.msra.mxu0 0.0
    %4630 = vmatprep.subr.mxu0 0.0
    %4631 = vmatpush1.xpose.msra.mxu0 0.0
    %4632 = vmatprep.mubr.f32.mxu0 0.0
    %4633 = vmatmul.mubr.f32.gmra.mrb[0].mxu0 %v4564
    %v4634 = vpop.f32.mrb[0].mxu0
    %v4635 = vadd.f32 0.0, %v4634
    %v4636 = vpop.f32.mrb[0].mxu0
    %4637 = vdwg.mxu0
    %4638 = vrot.lane.b32.xlu0 %v301, 104
    %v4639 = vpop.permute.xlu0 %4638
    %4640 = vrot.lane.b32.xlu0 %v301, 72
    %v4641 = vpop.permute.xlu0 %4640
    %v4642 = vsel %vm328, %v4639, 0
    %v4644 = vsel %vm328, %v4641, 0
    %4646 = vmatprep.subr.mxu0 0.0
    %4647 = vmatpush1.xpose.msra.mxu0 %v4644
    %4648 = vmatprep.subr.mxu0 0.0
    %4649 = vmatpush1.xpose.msra.mxu0 0.0
    %4650 = vmatprep.subr.mxu0 0.0
    %4651 = vmatpush1.xpose.msra.mxu0 0.0
    %4652 = vmatprep.subr.mxu0 0.0
    %4653 = vmatpush1.xpose.msra.mxu0 0.0
    %4654 = vmatprep.subr.mxu0 0.0
    %4655 = vmatpush1.xpose.msra.mxu0 0.0
    %4656 = vmatprep.subr.mxu0 0.0
    %4657 = vmatpush1.xpose.msra.mxu0 0.0
    %4658 = vmatprep.subr.mxu0 0.0
    %4659 = vmatpush1.xpose.msra.mxu0 0.0
    %4660 = vmatprep.subr.mxu0 0.0
    %4661 = vmatpush1.xpose.msra.mxu0 0.0
    %4662 = vmatprep.subr.mxu0 0.0
    %4663 = vmatpush1.xpose.msra.mxu0 0.0
    %4664 = vmatprep.subr.mxu0 0.0
    %4665 = vmatpush1.xpose.msra.mxu0 0.0
    %4666 = vmatprep.subr.mxu0 0.0
    %4667 = vmatpush1.xpose.msra.mxu0 0.0
    %4668 = vmatprep.subr.mxu0 0.0
    %4669 = vmatpush1.xpose.msra.mxu0 0.0
    %4670 = vmatprep.subr.mxu0 0.0
    %4671 = vmatpush1.xpose.msra.mxu0 0.0
    %4672 = vmatprep.subr.mxu0 0.0
    %4673 = vmatpush1.xpose.msra.mxu0 0.0
    %4674 = vmatprep.subr.mxu0 0.0
    %4675 = vmatpush1.xpose.msra.mxu0 0.0
    %4676 = vmatprep.subr.mxu0 0.0
    %4677 = vmatpush1.xpose.msra.mxu0 0.0
    %4678 = vmatprep.subr.mxu0 0.0
    %4679 = vmatpush1.xpose.msra.mxu0 0.0
    %4680 = vmatprep.subr.mxu0 0.0
    %4681 = vmatpush1.xpose.msra.mxu0 0.0
    %4682 = vmatprep.subr.mxu0 0.0
    %4683 = vmatpush1.xpose.msra.mxu0 0.0
    %4684 = vmatprep.subr.mxu0 0.0
    %4685 = vmatpush1.xpose.msra.mxu0 0.0
    %4686 = vmatprep.subr.mxu0 0.0
    %4687 = vmatpush1.xpose.msra.mxu0 0.0
    %4688 = vmatprep.subr.mxu0 0.0
    %4689 = vmatpush1.xpose.msra.mxu0 0.0
    %4690 = vmatprep.subr.mxu0 0.0
    %4691 = vmatpush1.xpose.msra.mxu0 0.0
    %4692 = vmatprep.subr.mxu0 0.0
    %4693 = vmatpush1.xpose.msra.mxu0 0.0
    %4694 = vmatprep.subr.mxu0 0.0
    %4695 = vmatpush1.xpose.msra.mxu0 0.0
    %4696 = vmatprep.subr.mxu0 0.0
    %4697 = vmatpush1.xpose.msra.mxu0 0.0
    %4698 = vmatprep.subr.mxu0 0.0
    %4699 = vmatpush1.xpose.msra.mxu0 0.0
    %4700 = vmatprep.subr.mxu0 0.0
    %4701 = vmatpush1.xpose.msra.mxu0 0.0
    %4702 = vmatprep.subr.mxu0 0.0
    %4703 = vmatpush1.xpose.msra.mxu0 0.0
    %4704 = vmatprep.subr.mxu0 0.0
    %4705 = vmatpush1.xpose.msra.mxu0 0.0
    %4706 = vmatprep.subr.mxu0 0.0
    %4707 = vmatpush1.xpose.msra.mxu0 0.0
    %4708 = vmatprep.subr.mxu0 0.0
    %4709 = vmatpush1.xpose.msra.mxu0 0.0
    %4710 = vmatprep.mubr.f32.mxu0 0.0
    %4711 = vmatmul.mubr.f32.gmra.mrb[0].mxu0 %v4642
    %v4712 = vpop.f32.mrb[0].mxu0
    %v4713 = vadd.f32 0.0, %v4712
    %v4714 = vpop.f32.mrb[0].mxu0
    %4715 = vdwg.mxu0
    %4716 = vrot.lane.b32.xlu0 %v306, 104
    %v4717 = vpop.permute.xlu0 %4716
    %4718 = vrot.lane.b32.xlu0 %v306, 72
    %v4719 = vpop.permute.xlu0 %4718
    %v4720 = vsel %vm328, %v4717, 0
    %v4722 = vsel %vm328, %v4719, 0
    %4724 = vmatprep.subr.mxu0 0.0
    %4725 = vmatpush1.xpose.msra.mxu0 %v4722
    %4726 = vmatprep.subr.mxu0 0.0
    %4727 = vmatpush1.xpose.msra.mxu0 0.0
    %4728 = vmatprep.subr.mxu0 0.0
    %4729 = vmatpush1.xpose.msra.mxu0 0.0
    %4730 = vmatprep.subr.mxu0 0.0
    %4731 = vmatpush1.xpose.msra.mxu0 0.0
    %4732 = vmatprep.subr.mxu0 0.0
    %4733 = vmatpush1.xpose.msra.mxu0 0.0
    %4734 = vmatprep.subr.mxu0 0.0
    %4735 = vmatpush1.xpose.msra.mxu0 0.0
    %4736 = vmatprep.subr.mxu0 0.0
    %4737 = vmatpush1.xpose.msra.mxu0 0.0
    %4738 = vmatprep.subr.mxu0 0.0
    %4739 = vmatpush1.xpose.msra.mxu0 0.0
    %4740 = vmatprep.subr.mxu0 0.0
    %4741 = vmatpush1.xpose.msra.mxu0 0.0
    %4742 = vmatprep.subr.mxu0 0.0
    %4743 = vmatpush1.xpose.msra.mxu0 0.0
    %4744 = vmatprep.subr.mxu0 0.0
    %4745 = vmatpush1.xpose.msra.mxu0 0.0
    %4746 = vmatprep.subr.mxu0 0.0
    %4747 = vmatpush1.xpose.msra.mxu0 0.0
    %4748 = vmatprep.subr.mxu0 0.0
    %4749 = vmatpush1.xpose.msra.mxu0 0.0
    %4750 = vmatprep.subr.mxu0 0.0
    %4751 = vmatpush1.xpose.msra.mxu0 0.0
    %4752 = vmatprep.subr.mxu0 0.0
    %4753 = vmatpush1.xpose.msra.mxu0 0.0
    %4754 = vmatprep.subr.mxu0 0.0
    %4755 = vmatpush1.xpose.msra.mxu0 0.0
    %4756 = vmatprep.subr.mxu0 0.0
    %4757 = vmatpush1.xpose.msra.mxu0 0.0
    %4758 = vmatprep.subr.mxu0 0.0
    %4759 = vmatpush1.xpose.msra.mxu0 0.0
    %4760 = vmatprep.subr.mxu0 0.0
    %4761 = vmatpush1.xpose.msra.mxu0 0.0
    %4762 = vmatprep.subr.mxu0 0.0
    %4763 = vmatpush1.xpose.msra.mxu0 0.0
    %4764 = vmatprep.subr.mxu0 0.0
    %4765 = vmatpush1.xpose.msra.mxu0 0.0
    %4766 = vmatprep.subr.mxu0 0.0
    %4767 = vmatpush1.xpose.msra.mxu0 0.0
    %4768 = vmatprep.subr.mxu0 0.0
    %4769 = vmatpush1.xpose.msra.mxu0 0.0
    %4770 = vmatprep.subr.mxu0 0.0
    %4771 = vmatpush1.xpose.msra.mxu0 0.0
    %4772 = vmatprep.subr.mxu0 0.0
    %4773 = vmatpush1.xpose.msra.mxu0 0.0
    %4774 = vmatprep.subr.mxu0 0.0
    %4775 = vmatpush1.xpose.msra.mxu0 0.0
    %4776 = vmatprep.subr.mxu0 0.0
    %4777 = vmatpush1.xpose.msra.mxu0 0.0
    %4778 = vmatprep.subr.mxu0 0.0
    %4779 = vmatpush1.xpose.msra.mxu0 0.0
    %4780 = vmatprep.subr.mxu0 0.0
    %4781 = vmatpush1.xpose.msra.mxu0 0.0
    %4782 = vmatprep.subr.mxu0 0.0
    %4783 = vmatpush1.xpose.msra.mxu0 0.0
    %4784 = vmatprep.subr.mxu0 0.0
    %4785 = vmatpush1.xpose.msra.mxu0 0.0
    %4786 = vmatprep.subr.mxu0 0.0
    %4787 = vmatpush1.xpose.msra.mxu0 0.0
    %4788 = vmatprep.mubr.f32.mxu0 0.0
    %4789 = vmatmul.mubr.f32.gmra.mrb[0].mxu0 %v4720
    %v4790 = vpop.f32.mrb[0].mxu0
    %v4791 = vadd.f32 0.0, %v4790
    %v4792 = vpop.f32.mrb[0].mxu0
    %4793 = vdwg.mxu0
    %4794 = vrot.lane.b32.xlu0 %v311, 104
    %v4795 = vpop.permute.xlu0 %4794
    %4796 = vrot.lane.b32.xlu0 %v311, 72
    %v4797 = vpop.permute.xlu0 %4796
    %v4798 = vsel %vm328, %v4795, 0
    %v4800 = vsel %vm328, %v4797, 0
    %4802 = vmatprep.subr.mxu0 0.0
    %4803 = vmatpush1.xpose.msra.mxu0 %v4800
    %4804 = vmatprep.subr.mxu0 0.0
    %4805 = vmatpush1.xpose.msra.mxu0 0.0
    %4806 = vmatprep.subr.mxu0 0.0
    %4807 = vmatpush1.xpose.msra.mxu0 0.0
    %4808 = vmatprep.subr.mxu0 0.0
    %4809 = vmatpush1.xpose.msra.mxu0 0.0
    %4810 = vmatprep.subr.mxu0 0.0
    %4811 = vmatpush1.xpose.msra.mxu0 0.0
    %4812 = vmatprep.subr.mxu0 0.0
    %4813 = vmatpush1.xpose.msra.mxu0 0.0
    %4814 = vmatprep.subr.mxu0 0.0
    %4815 = vmatpush1.xpose.msra.mxu0 0.0
    %4816 = vmatprep.subr.mxu0 0.0
    %4817 = vmatpush1.xpose.msra.mxu0 0.0
    %4818 = vmatprep.subr.mxu0 0.0
    %4819 = vmatpush1.xpose.msra.mxu0 0.0
    %4820 = vmatprep.subr.mxu0 0.0
    %4821 = vmatpush1.xpose.msra.mxu0 0.0
    %4822 = vmatprep.subr.mxu0 0.0
    %4823 = vmatpush1.xpose.msra.mxu0 0.0
    %4824 = vmatprep.subr.mxu0 0.0
    %4825 = vmatpush1.xpose.msra.mxu0 0.0
    %4826 = vmatprep.subr.mxu0 0.0
    %4827 = vmatpush1.xpose.msra.mxu0 0.0
    %4828 = vmatprep.subr.mxu0 0.0
    %4829 = vmatpush1.xpose.msra.mxu0 0.0
    %4830 = vmatprep.subr.mxu0 0.0
    %4831 = vmatpush1.xpose.msra.mxu0 0.0
    %4832 = vmatprep.subr.mxu0 0.0
    %4833 = vmatpush1.xpose.msra.mxu0 0.0
    %4834 = vmatprep.subr.mxu0 0.0
    %4835 = vmatpush1.xpose.msra.mxu0 0.0
    %4836 = vmatprep.subr.mxu0 0.0
    %4837 = vmatpush1.xpose.msra.mxu0 0.0
    %4838 = vmatprep.subr.mxu0 0.0
    %4839 = vmatpush1.xpose.msra.mxu0 0.0
    %4840 = vmatprep.subr.mxu0 0.0
    %4841 = vmatpush1.xpose.msra.mxu0 0.0
    %4842 = vmatprep.subr.mxu0 0.0
    %4843 = vmatpush1.xpose.msra.mxu0 0.0
    %4844 = vmatprep.subr.mxu0 0.0
    %4845 = vmatpush1.xpose.msra.mxu0 0.0
    %4846 = vmatprep.subr.mxu0 0.0
    %4847 = vmatpush1.xpose.msra.mxu0 0.0
    %4848 = vmatprep.subr.mxu0 0.0
    %4849 = vmatpush1.xpose.msra.mxu0 0.0
    %4850 = vmatprep.subr.mxu0 0.0
    %4851 = vmatpush1.xpose.msra.mxu0 0.0
    %4852 = vmatprep.subr.mxu0 0.0
    %4853 = vmatpush1.xpose.msra.mxu0 0.0
    %4854 = vmatprep.subr.mxu0 0.0
    %4855 = vmatpush1.xpose.msra.mxu0 0.0
    %4856 = vmatprep.subr.mxu0 0.0
    %4857 = vmatpush1.xpose.msra.mxu0 0.0
    %4858 = vmatprep.subr.mxu0 0.0
    %4859 = vmatpush1.xpose.msra.mxu0 0.0
    %4860 = vmatprep.subr.mxu0 0.0
    %4861 = vmatpush1.xpose.msra.mxu0 0.0
    %4862 = vmatprep.subr.mxu0 0.0
    %4863 = vmatpush1.xpose.msra.mxu0 0.0
    %4864 = vmatprep.subr.mxu0 0.0
    %4865 = vmatpush1.xpose.msra.mxu0 0.0
    %4866 = vmatprep.mubr.f32.mxu0 0.0
    %4867 = vmatmul.mubr.f32.gmra.mrb[0].mxu0 %v4798
    %v4868 = vpop.f32.mrb[0].mxu0
    %v4869 = vadd.f32 0.0, %v4868
    %v4870 = vpop.f32.mrb[0].mxu0
    %4871 = vdwg.mxu0
    %4872 = vrot.lane.b32.xlu0 %v316, 104
    %v4873 = vpop.permute.xlu0 %4872
    %4874 = vrot.lane.b32.xlu0 %v316, 72
    %v4875 = vpop.permute.xlu0 %4874
    %v4876 = vsel %vm328, %v4873, 0
    %v4878 = vsel %vm328, %v4875, 0
    %4880 = vmatprep.subr.mxu0 0.0
    %4881 = vmatpush1.xpose.msra.mxu0 %v4878
    %4882 = vmatprep.subr.mxu0 0.0
    %4883 = vmatpush1.xpose.msra.mxu0 0.0
    %4884 = vmatprep.subr.mxu0 0.0
    %4885 = vmatpush1.xpose.msra.mxu0 0.0
    %4886 = vmatprep.subr.mxu0 0.0
    %4887 = vmatpush1.xpose.msra.mxu0 0.0
    %4888 = vmatprep.subr.mxu0 0.0
    %4889 = vmatpush1.xpose.msra.mxu0 0.0
    %4890 = vmatprep.subr.mxu0 0.0
    %4891 = vmatpush1.xpose.msra.mxu0 0.0
    %4892 = vmatprep.subr.mxu0 0.0
    %4893 = vmatpush1.xpose.msra.mxu0 0.0
    %4894 = vmatprep.subr.mxu0 0.0
    %4895 = vmatpush1.xpose.msra.mxu0 0.0
    %4896 = vmatprep.subr.mxu0 0.0
    %4897 = vmatpush1.xpose.msra.mxu0 0.0
    %4898 = vmatprep.subr.mxu0 0.0
    %4899 = vmatpush1.xpose.msra.mxu0 0.0
    %4900 = vmatprep.subr.mxu0 0.0
    %4901 = vmatpush1.xpose.msra.mxu0 0.0
    %4902 = vmatprep.subr.mxu0 0.0
    %4903 = vmatpush1.xpose.msra.mxu0 0.0
    %4904 = vmatprep.subr.mxu0 0.0
    %4905 = vmatpush1.xpose.msra.mxu0 0.0
    %4906 = vmatprep.subr.mxu0 0.0
    %4907 = vmatpush1.xpose.msra.mxu0 0.0
    %4908 = vmatprep.subr.mxu0 0.0
    %4909 = vmatpush1.xpose.msra.mxu0 0.0
    %4910 = vmatprep.subr.mxu0 0.0
    %4911 = vmatpush1.xpose.msra.mxu0 0.0
    %4912 = vmatprep.subr.mxu0 0.0
    %4913 = vmatpush1.xpose.msra.mxu0 0.0
    %4914 = vmatprep.subr.mxu0 0.0
    %4915 = vmatpush1.xpose.msra.mxu0 0.0
    %4916 = vmatprep.subr.mxu0 0.0
    %4917 = vmatpush1.xpose.msra.mxu0 0.0
    %4918 = vmatprep.subr.mxu0 0.0
    %4919 = vmatpush1.xpose.msra.mxu0 0.0
    %4920 = vmatprep.subr.mxu0 0.0
    %4921 = vmatpush1.xpose.msra.mxu0 0.0
    %4922 = vmatprep.subr.mxu0 0.0
    %4923 = vmatpush1.xpose.msra.mxu0 0.0
    %4924 = vmatprep.subr.mxu0 0.0
    %4925 = vmatpush1.xpose.msra.mxu0 0.0
    %4926 = vmatprep.subr.mxu0 0.0
    %4927 = vmatpush1.xpose.msra.mxu0 0.0
    %4928 = vmatprep.subr.mxu0 0.0
    %4929 = vmatpush1.xpose.msra.mxu0 0.0
    %4930 = vmatprep.subr.mxu0 0.0
    %4931 = vmatpush1.xpose.msra.mxu0 0.0
    %4932 = vmatprep.subr.mxu0 0.0
    %4933 = vmatpush1.xpose.msra.mxu0 0.0
    %4934 = vmatprep.subr.mxu0 0.0
    %4935 = vmatpush1.xpose.msra.mxu0 0.0
    %4936 = vmatprep.subr.mxu0 0.0
    %4937 = vmatpush1.xpose.msra.mxu0 0.0
    %4938 = vmatprep.subr.mxu0 0.0
    %4939 = vmatpush1.xpose.msra.mxu0 0.0
    %4940 = vmatprep.subr.mxu0 0.0
    %4941 = vmatpush1.xpose.msra.mxu0 0.0
    %4942 = vmatprep.subr.mxu0 0.0
    %4943 = vmatpush1.xpose.msra.mxu0 0.0
    %4944 = vmatprep.mubr.f32.mxu0 0.0
    %4945 = vmatmul.mubr.f32.gmra.mrb[0].mxu0 %v4876
    %v4946 = vpop.f32.mrb[0].mxu0
    %v4947 = vadd.f32 0.0, %v4946
    %v4948 = vpop.f32.mrb[0].mxu0
    %4949 = vdwg.mxu0
    %v4950 = vmul.f32 %v4401, 0.17677669
    %v4951 = vmul.f32 %v4479, 0.17677669
    %v4952 = vmul.f32 %v4557, 0.17677669
    %v4953 = vmul.f32 %v4635, 0.17677669
    %v4954 = vmul.f32 %v4713, 0.17677669
    %v4955 = vmul.f32 %v4791, 0.17677669
    %v4956 = vmul.f32 %v4869, 0.17677669
    %v4957 = vmul.f32 %v4947, 0.17677669
    %v4958 = vadd.f32 %v4950, %v324
    %v4959 = vadd.f32 %v4951, %v324
    %v4960 = vadd.f32 %v4952, %v324
    %v4961 = vadd.f32 %v4953, %v324
    %v4962 = vadd.f32 %v4954, %v324
    %v4963 = vadd.f32 %v4955, %v324
    %v4964 = vadd.f32 %v4956, %v324
    %v4965 = vadd.f32 %v4957, %v324
    %v4966 = vsel %vm328, %v4958, -inf
    %4967 = vmax.xlane.f32.xlu0 %v4966
    %v4968 = vpop.xlane.xlu0 %4967
    %v4969 = vsel %vm328, %v4959, -inf
    %4970 = vmax.xlane.f32.xlu0 %v4969
    %v4971 = vpop.xlane.xlu0 %4970
    %v4972 = vsel %vm328, %v4960, -inf
    %4973 = vmax.xlane.f32.xlu0 %v4972
    %v4974 = vpop.xlane.xlu0 %4973
    %v4975 = vsel %vm328, %v4961, -inf
    %4976 = vmax.xlane.f32.xlu0 %v4975
    %v4977 = vpop.xlane.xlu0 %4976
    %v4978 = vsel %vm328, %v4962, -inf
    %4979 = vmax.xlane.f32.xlu0 %v4978
    %v4980 = vpop.xlane.xlu0 %4979
    %v4981 = vsel %vm328, %v4963, -inf
    %4982 = vmax.xlane.f32.xlu0 %v4981
    %v4983 = vpop.xlane.xlu0 %4982
    %v4984 = vsel %vm328, %v4964, -inf
    %4985 = vmax.xlane.f32.xlu0 %v4984
    %v4986 = vpop.xlane.xlu0 %4985
    %v4987 = vsel %vm328, %v4965, -inf
    %4988 = vmax.xlane.f32.xlu0 %v4987
    %v4989 = vpop.xlane.xlu0 %4988
    %v4990 = vsub.f32 %v4958, %v4968
    %v4991 = vsub.f32 %v4959, %v4971
    %v4992 = vsub.f32 %v4960, %v4974
    %v4993 = vsub.f32 %v4961, %v4977
    %v4994 = vsub.f32 %v4962, %v4980
    %v4995 = vsub.f32 %v4963, %v4983
    %v4996 = vsub.f32 %v4964, %v4986
    %v4997 = vsub.f32 %v4965, %v4989
    %v4998 = vmul.f32 %v4990, 1.442695
    %v4999 = vpow.pop %v4998
    %v5000 = vmul.f32 %v4991, 1.442695
    %v5001 = vpow.pop %v5000
    %v5002 = vmul.f32 %v4992, 1.442695
    %v5003 = vpow.pop %v5002
    %v5004 = vmul.f32 %v4993, 1.442695
    %v5005 = vpow.pop %v5004
    %v5006 = vmul.f32 %v4994, 1.442695
    %v5007 = vpow.pop %v5006
    %v5008 = vmul.f32 %v4995, 1.442695
    %v5009 = vpow.pop %v5008
    %v5010 = vmul.f32 %v4996, 1.442695
    %v5011 = vpow.pop %v5010
    %v5012 = vmul.f32 %v4997, 1.442695
    %v5013 = vpow.pop %v5012
    %v5014 = vsel %vm328, %v4999, 0.0
    %5015 = vadd.xlane.f32.xlu0 %v5014
    %v5016 = vpop.xlane.xlu0 %5015
    %v5017 = vsel %vm328, %v5001, 0.0
    %5018 = vadd.xlane.f32.xlu0 %v5017
    %v5019 = vpop.xlane.xlu0 %5018
    %v5020 = vsel %vm328, %v5003, 0.0
    %5021 = vadd.xlane.f32.xlu0 %v5020
    %v5022 = vpop.xlane.xlu0 %5021
    %v5023 = vsel %vm328, %v5005, 0.0
    %5024 = vadd.xlane.f32.xlu0 %v5023
    %v5025 = vpop.xlane.xlu0 %5024
    %v5026 = vsel %vm328, %v5007, 0.0
    %5027 = vadd.xlane.f32.xlu0 %v5026
    %v5028 = vpop.xlane.xlu0 %5027
    %v5029 = vsel %vm328, %v5009, 0.0
    %5030 = vadd.xlane.f32.xlu0 %v5029
    %v5031 = vpop.xlane.xlu0 %5030
    %v5032 = vsel %vm328, %v5011, 0.0
    %5033 = vadd.xlane.f32.xlu0 %v5032
    %v5034 = vpop.xlane.xlu0 %5033
    %v5035 = vsel %vm328, %v5013, 0.0
    %5036 = vadd.xlane.f32.xlu0 %v5035
    %v5037 = vpop.xlane.xlu0 %5036
    %v5038 = vrcp.pop %v5016
    %v5039 = vrcp.pop %v5019
    %v5040 = vrcp.pop %v5022
    %v5041 = vrcp.pop %v5025
    %v5042 = vrcp.pop %v5028
    %v5043 = vrcp.pop %v5031
    %v5044 = vrcp.pop %v5034
    %v5045 = vrcp.pop %v5037
    %v5046 = vmul.f32 %v4999, %v5038
    %v5047 = vmul.f32 %v5001, %v5039
    %v5048 = vmul.f32 %v5003, %v5040
    %v5049 = vmul.f32 %v5005, %v5041
    %v5050 = vmul.f32 %v5007, %v5042
    %v5051 = vmul.f32 %v5009, %v5043
    %v5052 = vmul.f32 %v5011, %v5044
    %v5053 = vmul.f32 %v5013, %v5045
    %5054 = vrot.lane.b32.xlu0 %v281, 40
    %v5055 = vpop.permute.xlu0 %5054
    %v5058 = vsel %vm328, %v5046, 0
    %5060 = vmatprep.subr.mxu0 0.0
    %5061 = vmatpush1.msra.mxu0 %v5055
    %5062 = vmatprep.subr.mxu0 0.0
    %5063 = vmatpush1.msra.mxu0 0.0
    %5064 = vmatprep.subr.mxu0 0.0
    %5065 = vmatpush1.msra.mxu0 0.0
    %5066 = vmatprep.subr.mxu0 0.0
    %5067 = vmatpush1.msra.mxu0 0.0
    %5068 = vmatprep.subr.mxu0 0.0
    %5069 = vmatpush1.msra.mxu0 0.0
    %5070 = vmatprep.subr.mxu0 0.0
    %5071 = vmatpush1.msra.mxu0 0.0
    %5072 = vmatprep.subr.mxu0 0.0
    %5073 = vmatpush1.msra.mxu0 0.0
    %5074 = vmatprep.subr.mxu0 0.0
    %5075 = vmatpush1.msra.mxu0 0.0
    %5076 = vmatprep.subr.mxu0 0.0
    %5077 = vmatpush1.msra.mxu0 0.0
    %5078 = vmatprep.subr.mxu0 0.0
    %5079 = vmatpush1.msra.mxu0 0.0
    %5080 = vmatprep.subr.mxu0 0.0
    %5081 = vmatpush1.msra.mxu0 0.0
    %5082 = vmatprep.subr.mxu0 0.0
    %5083 = vmatpush1.msra.mxu0 0.0
    %5084 = vmatprep.subr.mxu0 0.0
    %5085 = vmatpush1.msra.mxu0 0.0
    %5086 = vmatprep.subr.mxu0 0.0
    %5087 = vmatpush1.msra.mxu0 0.0
    %5088 = vmatprep.subr.mxu0 0.0
    %5089 = vmatpush1.msra.mxu0 0.0
    %5090 = vmatprep.subr.mxu0 0.0
    %5091 = vmatpush1.msra.mxu0 0.0
    %5092 = vmatprep.subr.mxu0 0.0
    %5093 = vmatpush1.msra.mxu0 0.0
    %5094 = vmatprep.subr.mxu0 0.0
    %5095 = vmatpush1.msra.mxu0 0.0
    %5096 = vmatprep.subr.mxu0 0.0
    %5097 = vmatpush1.msra.mxu0 0.0
    %5098 = vmatprep.subr.mxu0 0.0
    %5099 = vmatpush1.msra.mxu0 0.0
    %5100 = vmatprep.subr.mxu0 0.0
    %5101 = vmatpush1.msra.mxu0 0.0
    %5102 = vmatprep.subr.mxu0 0.0
    %5103 = vmatpush1.msra.mxu0 0.0
    %5104 = vmatprep.subr.mxu0 0.0
    %5105 = vmatpush1.msra.mxu0 0.0
    %5106 = vmatprep.subr.mxu0 0.0
    %5107 = vmatpush1.msra.mxu0 0.0
    %5108 = vmatprep.subr.mxu0 0.0
    %5109 = vmatpush1.msra.mxu0 0.0
    %5110 = vmatprep.subr.mxu0 0.0
    %5111 = vmatpush1.msra.mxu0 0.0
    %5112 = vmatprep.subr.mxu0 0.0
    %5113 = vmatpush1.msra.mxu0 0.0
    %5114 = vmatprep.subr.mxu0 0.0
    %5115 = vmatpush1.msra.mxu0 0.0
    %5116 = vmatprep.subr.mxu0 0.0
    %5117 = vmatpush1.msra.mxu0 0.0
    %5118 = vmatprep.subr.mxu0 0.0
    %5119 = vmatpush1.msra.mxu0 0.0
    %5120 = vmatprep.subr.mxu0 0.0
    %5121 = vmatpush1.msra.mxu0 0.0
    %5122 = vmatprep.subr.mxu0 0.0
    %5123 = vmatpush1.msra.mxu0 0.0
    %5124 = vmatprep.mubr.f32.mxu0 0.0
    %5125 = vmatmul.mubr.f32.gmra.mrb[0].mxu0 %v5058
    %v5126 = vpop.f32.mrb[0].mxu0
    %v5127 = vadd.f32 0.0, %v5126
    %v5128 = vpop.f32.mrb[0].mxu0
    %5129 = vdwg.mxu0
    %5130 = vrot.lane.b32.xlu0 %v286, 40
    %v5131 = vpop.permute.xlu0 %5130
    %v5134 = vsel %vm328, %v5047, 0
    %5136 = vmatprep.subr.mxu0 0.0
    %5137 = vmatpush1.msra.mxu0 %v5131
    %5138 = vmatprep.subr.mxu0 0.0
    %5139 = vmatpush1.msra.mxu0 0.0
    %5140 = vmatprep.subr.mxu0 0.0
    %5141 = vmatpush1.msra.mxu0 0.0
    %5142 = vmatprep.subr.mxu0 0.0
    %5143 = vmatpush1.msra.mxu0 0.0
    %5144 = vmatprep.subr.mxu0 0.0
    %5145 = vmatpush1.msra.mxu0 0.0
    %5146 = vmatprep.subr.mxu0 0.0
    %5147 = vmatpush1.msra.mxu0 0.0
    %5148 = vmatprep.subr.mxu0 0.0
    %5149 = vmatpush1.msra.mxu0 0.0
    %5150 = vmatprep.subr.mxu0 0.0
    %5151 = vmatpush1.msra.mxu0 0.0
    %5152 = vmatprep.subr.mxu0 0.0
    %5153 = vmatpush1.msra.mxu0 0.0
    %5154 = vmatprep.subr.mxu0 0.0
    %5155 = vmatpush1.msra.mxu0 0.0
    %5156 = vmatprep.subr.mxu0 0.0
    %5157 = vmatpush1.msra.mxu0 0.0
    %5158 = vmatprep.subr.mxu0 0.0
    %5159 = vmatpush1.msra.mxu0 0.0
    %5160 = vmatprep.subr.mxu0 0.0
    %5161 = vmatpush1.msra.mxu0 0.0
    %5162 = vmatprep.subr.mxu0 0.0
    %5163 = vmatpush1.msra.mxu0 0.0
    %5164 = vmatprep.subr.mxu0 0.0
    %5165 = vmatpush1.msra.mxu0 0.0
    %5166 = vmatprep.subr.mxu0 0.0
    %5167 = vmatpush1.msra.mxu0 0.0
    %5168 = vmatprep.subr.mxu0 0.0
    %5169 = vmatpush1.msra.mxu0 0.0
    %5170 = vmatprep.subr.mxu0 0.0
    %5171 = vmatpush1.msra.mxu0 0.0
    %5172 = vmatprep.subr.mxu0 0.0
    %5173 = vmatpush1.msra.mxu0 0.0
    %5174 = vmatprep.subr.mxu0 0.0
    %5175 = vmatpush1.msra.mxu0 0.0
    %5176 = vmatprep.subr.mxu0 0.0
    %5177 = vmatpush1.msra.mxu0 0.0
    %5178 = vmatprep.subr.mxu0 0.0
    %5179 = vmatpush1.msra.mxu0 0.0
    %5180 = vmatprep.subr.mxu0 0.0
    %5181 = vmatpush1.msra.mxu0 0.0
    %5182 = vmatprep.subr.mxu0 0.0
    %5183 = vmatpush1.msra.mxu0 0.0
    %5184 = vmatprep.subr.mxu0 0.0
    %5185 = vmatpush1.msra.mxu0 0.0
    %5186 = vmatprep.subr.mxu0 0.0
    %5187 = vmatpush1.msra.mxu0 0.0
    %5188 = vmatprep.subr.mxu0 0.0
    %5189 = vmatpush1.msra.mxu0 0.0
    %5190 = vmatprep.subr.mxu0 0.0
    %5191 = vmatpush1.msra.mxu0 0.0
    %5192 = vmatprep.subr.mxu0 0.0
    %5193 = vmatpush1.msra.mxu0 0.0
    %5194 = vmatprep.subr.mxu0 0.0
    %5195 = vmatpush1.msra.mxu0 0.0
    %5196 = vmatprep.subr.mxu0 0.0
    %5197 = vmatpush1.msra.mxu0 0.0
    %5198 = vmatprep.subr.mxu0 0.0
    %5199 = vmatpush1.msra.mxu0 0.0
    %5200 = vmatprep.mubr.f32.mxu0 0.0
    %5201 = vmatmul.mubr.f32.gmra.mrb[0].mxu0 %v5134
    %v5202 = vpop.f32.mrb[0].mxu0
    %v5203 = vadd.f32 0.0, %v5202
    %v5204 = vpop.f32.mrb[0].mxu0
    %5205 = vdwg.mxu0
    %5206 = vrot.lane.b32.xlu0 %v291, 40
    %v5207 = vpop.permute.xlu0 %5206
    %v5210 = vsel %vm328, %v5048, 0
    %5212 = vmatprep.subr.mxu0 0.0
    %5213 = vmatpush1.msra.mxu0 %v5207
    %5214 = vmatprep.subr.mxu0 0.0
    %5215 = vmatpush1.msra.mxu0 0.0
    %5216 = vmatprep.subr.mxu0 0.0
    %5217 = vmatpush1.msra.mxu0 0.0
    %5218 = vmatprep.subr.mxu0 0.0
    %5219 = vmatpush1.msra.mxu0 0.0
    %5220 = vmatprep.subr.mxu0 0.0
    %5221 = vmatpush1.msra.mxu0 0.0
    %5222 = vmatprep.subr.mxu0 0.0
    %5223 = vmatpush1.msra.mxu0 0.0
    %5224 = vmatprep.subr.mxu0 0.0
    %5225 = vmatpush1.msra.mxu0 0.0
    %5226 = vmatprep.subr.mxu0 0.0
    %5227 = vmatpush1.msra.mxu0 0.0
    %5228 = vmatprep.subr.mxu0 0.0
    %5229 = vmatpush1.msra.mxu0 0.0
    %5230 = vmatprep.subr.mxu0 0.0
    %5231 = vmatpush1.msra.mxu0 0.0
    %5232 = vmatprep.subr.mxu0 0.0
    %5233 = vmatpush1.msra.mxu0 0.0
    %5234 = vmatprep.subr.mxu0 0.0
    %5235 = vmatpush1.msra.mxu0 0.0
    %5236 = vmatprep.subr.mxu0 0.0
    %5237 = vmatpush1.msra.mxu0 0.0
    %5238 = vmatprep.subr.mxu0 0.0
    %5239 = vmatpush1.msra.mxu0 0.0
    %5240 = vmatprep.subr.mxu0 0.0
    %5241 = vmatpush1.msra.mxu0 0.0
    %5242 = vmatprep.subr.mxu0 0.0
    %5243 = vmatpush1.msra.mxu0 0.0
    %5244 = vmatprep.subr.mxu0 0.0
    %5245 = vmatpush1.msra.mxu0 0.0
    %5246 = vmatprep.subr.mxu0 0.0
    %5247 = vmatpush1.msra.mxu0 0.0
    %5248 = vmatprep.subr.mxu0 0.0
    %5249 = vmatpush1.msra.mxu0 0.0
    %5250 = vmatprep.subr.mxu0 0.0
    %5251 = vmatpush1.msra.mxu0 0.0
    %5252 = vmatprep.subr.mxu0 0.0
    %5253 = vmatpush1.msra.mxu0 0.0
    %5254 = vmatprep.subr.mxu0 0.0
    %5255 = vmatpush1.msra.mxu0 0.0
    %5256 = vmatprep.subr.mxu0 0.0
    %5257 = vmatpush1.msra.mxu0 0.0
    %5258 = vmatprep.subr.mxu0 0.0
    %5259 = vmatpush1.msra.mxu0 0.0
    %5260 = vmatprep.subr.mxu0 0.0
    %5261 = vmatpush1.msra.mxu0 0.0
    %5262 = vmatprep.subr.mxu0 0.0
    %5263 = vmatpush1.msra.mxu0 0.0
    %5264 = vmatprep.subr.mxu0 0.0
    %5265 = vmatpush1.msra.mxu0 0.0
    %5266 = vmatprep.subr.mxu0 0.0
    %5267 = vmatpush1.msra.mxu0 0.0
    %5268 = vmatprep.subr.mxu0 0.0
    %5269 = vmatpush1.msra.mxu0 0.0
    %5270 = vmatprep.subr.mxu0 0.0
    %5271 = vmatpush1.msra.mxu0 0.0
    %5272 = vmatprep.subr.mxu0 0.0
    %5273 = vmatpush1.msra.mxu0 0.0
    %5274 = vmatprep.subr.mxu0 0.0
    %5275 = vmatpush1.msra.mxu0 0.0
    %5276 = vmatprep.mubr.f32.mxu0 0.0
    %5277 = vmatmul.mubr.f32.gmra.mrb[0].mxu0 %v5210
    %v5278 = vpop.f32.mrb[0].mxu0
    %v5279 = vadd.f32 0.0, %v5278
    %v5280 = vpop.f32.mrb[0].mxu0
    %5281 = vdwg.mxu0
    %5282 = vrot.lane.b32.xlu0 %v296, 40
    %v5283 = vpop.permute.xlu0 %5282
    %v5286 = vsel %vm328, %v5049, 0
    %5288 = vmatprep.subr.mxu0 0.0
    %5289 = vmatpush1.msra.mxu0 %v5283
    %5290 = vmatprep.subr.mxu0 0.0
    %5291 = vmatpush1.msra.mxu0 0.0
    %5292 = vmatprep.subr.mxu0 0.0
    %5293 = vmatpush1.msra.mxu0 0.0
    %5294 = vmatprep.subr.mxu0 0.0
    %5295 = vmatpush1.msra.mxu0 0.0
    %5296 = vmatprep.subr.mxu0 0.0
    %5297 = vmatpush1.msra.mxu0 0.0
    %5298 = vmatprep.subr.mxu0 0.0
    %5299 = vmatpush1.msra.mxu0 0.0
    %5300 = vmatprep.subr.mxu0 0.0
    %5301 = vmatpush1.msra.mxu0 0.0
    %5302 = vmatprep.subr.mxu0 0.0
    %5303 = vmatpush1.msra.mxu0 0.0
    %5304 = vmatprep.subr.mxu0 0.0
    %5305 = vmatpush1.msra.mxu0 0.0
    %5306 = vmatprep.subr.mxu0 0.0
    %5307 = vmatpush1.msra.mxu0 0.0
    %5308 = vmatprep.subr.mxu0 0.0
    %5309 = vmatpush1.msra.mxu0 0.0
    %5310 = vmatprep.subr.mxu0 0.0
    %5311 = vmatpush1.msra.mxu0 0.0
    %5312 = vmatprep.subr.mxu0 0.0
    %5313 = vmatpush1.msra.mxu0 0.0
    %5314 = vmatprep.subr.mxu0 0.0
    %5315 = vmatpush1.msra.mxu0 0.0
    %5316 = vmatprep.subr.mxu0 0.0
    %5317 = vmatpush1.msra.mxu0 0.0
    %5318 = vmatprep.subr.mxu0 0.0
    %5319 = vmatpush1.msra.mxu0 0.0
    %5320 = vmatprep.subr.mxu0 0.0
    %5321 = vmatpush1.msra.mxu0 0.0
    %5322 = vmatprep.subr.mxu0 0.0
    %5323 = vmatpush1.msra.mxu0 0.0
    %5324 = vmatprep.subr.mxu0 0.0
    %5325 = vmatpush1.msra.mxu0 0.0
    %5326 = vmatprep.subr.mxu0 0.0
    %5327 = vmatpush1.msra.mxu0 0.0
    %5328 = vmatprep.subr.mxu0 0.0
    %5329 = vmatpush1.msra.mxu0 0.0
    %5330 = vmatprep.subr.mxu0 0.0
    %5331 = vmatpush1.msra.mxu0 0.0
    %5332 = vmatprep.subr.mxu0 0.0
    %5333 = vmatpush1.msra.mxu0 0.0
    %5334 = vmatprep.subr.mxu0 0.0
    %5335 = vmatpush1.msra.mxu0 0.0
    %5336 = vmatprep.subr.mxu0 0.0
    %5337 = vmatpush1.msra.mxu0 0.0
    %5338 = vmatprep.subr.mxu0 0.0
    %5339 = vmatpush1.msra.mxu0 0.0
    %5340 = vmatprep.subr.mxu0 0.0
    %5341 = vmatpush1.msra.mxu0 0.0
    %5342 = vmatprep.subr.mxu0 0.0
    %5343 = vmatpush1.msra.mxu0 0.0
    %5344 = vmatprep.subr.mxu0 0.0
    %5345 = vmatpush1.msra.mxu0 0.0
    %5346 = vmatprep.subr.mxu0 0.0
    %5347 = vmatpush1.msra.mxu0 0.0
    %5348 = vmatprep.subr.mxu0 0.0
    %5349 = vmatpush1.msra.mxu0 0.0
    %5350 = vmatprep.subr.mxu0 0.0
    %5351 = vmatpush1.msra.mxu0 0.0
    %5352 = vmatprep.mubr.f32.mxu0 0.0
    %5353 = vmatmul.mubr.f32.gmra.mrb[0].mxu0 %v5286
    %v5354 = vpop.f32.mrb[0].mxu0
    %v5355 = vadd.f32 0.0, %v5354
    %v5356 = vpop.f32.mrb[0].mxu0
    %5357 = vdwg.mxu0
    %5358 = vrot.lane.b32.xlu0 %v301, 40
    %v5359 = vpop.permute.xlu0 %5358
    %v5362 = vsel %vm328, %v5050, 0
    %5364 = vmatprep.subr.mxu0 0.0
    %5365 = vmatpush1.msra.mxu0 %v5359
    %5366 = vmatprep.subr.mxu0 0.0
    %5367 = vmatpush1.msra.mxu0 0.0
    %5368 = vmatprep.subr.mxu0 0.0
    %5369 = vmatpush1.msra.mxu0 0.0
    %5370 = vmatprep.subr.mxu0 0.0
    %5371 = vmatpush1.msra.mxu0 0.0
    %5372 = vmatprep.subr.mxu0 0.0
    %5373 = vmatpush1.msra.mxu0 0.0
    %5374 = vmatprep.subr.mxu0 0.0
    %5375 = vmatpush1.msra.mxu0 0.0
    %5376 = vmatprep.subr.mxu0 0.0
    %5377 = vmatpush1.msra.mxu0 0.0
    %5378 = vmatprep.subr.mxu0 0.0
    %5379 = vmatpush1.msra.mxu0 0.0
    %5380 = vmatprep.subr.mxu0 0.0
    %5381 = vmatpush1.msra.mxu0 0.0
    %5382 = vmatprep.subr.mxu0 0.0
    %5383 = vmatpush1.msra.mxu0 0.0
    %5384 = vmatprep.subr.mxu0 0.0
    %5385 = vmatpush1.msra.mxu0 0.0
    %5386 = vmatprep.subr.mxu0 0.0
    %5387 = vmatpush1.msra.mxu0 0.0
    %5388 = vmatprep.subr.mxu0 0.0
    %5389 = vmatpush1.msra.mxu0 0.0
    %5390 = vmatprep.subr.mxu0 0.0
    %5391 = vmatpush1.msra.mxu0 0.0
    %5392 = vmatprep.subr.mxu0 0.0
    %5393 = vmatpush1.msra.mxu0 0.0
    %5394 = vmatprep.subr.mxu0 0.0
    %5395 = vmatpush1.msra.mxu0 0.0
    %5396 = vmatprep.subr.mxu0 0.0
    %5397 = vmatpush1.msra.mxu0 0.0
    %5398 = vmatprep.subr.mxu0 0.0
    %5399 = vmatpush1.msra.mxu0 0.0
    %5400 = vmatprep.subr.mxu0 0.0
    %5401 = vmatpush1.msra.mxu0 0.0
    %5402 = vmatprep.subr.mxu0 0.0
    %5403 = vmatpush1.msra.mxu0 0.0
    %5404 = vmatprep.subr.mxu0 0.0
    %5405 = vmatpush1.msra.mxu0 0.0
    %5406 = vmatprep.subr.mxu0 0.0
    %5407 = vmatpush1.msra.mxu0 0.0
    %5408 = vmatprep.subr.mxu0 0.0
    %5409 = vmatpush1.msra.mxu0 0.0
    %5410 = vmatprep.subr.mxu0 0.0
    %5411 = vmatpush1.msra.mxu0 0.0
    %5412 = vmatprep.subr.mxu0 0.0
    %5413 = vmatpush1.msra.mxu0 0.0
    %5414 = vmatprep.subr.mxu0 0.0
    %5415 = vmatpush1.msra.mxu0 0.0
    %5416 = vmatprep.subr.mxu0 0.0
    %5417 = vmatpush1.msra.mxu0 0.0
    %5418 = vmatprep.subr.mxu0 0.0
    %5419 = vmatpush1.msra.mxu0 0.0
    %5420 = vmatprep.subr.mxu0 0.0
    %5421 = vmatpush1.msra.mxu0 0.0
    %5422 = vmatprep.subr.mxu0 0.0
    %5423 = vmatpush1.msra.mxu0 0.0
    %5424 = vmatprep.subr.mxu0 0.0
    %5425 = vmatpush1.msra.mxu0 0.0
    %5426 = vmatprep.subr.mxu0 0.0
    %5427 = vmatpush1.msra.mxu0 0.0
    %5428 = vmatprep.mubr.f32.mxu0 0.0
    %5429 = vmatmul.mubr.f32.gmra.mrb[0].mxu0 %v5362
    %v5430 = vpop.f32.mrb[0].mxu0
    %v5431 = vadd.f32 0.0, %v5430
    %v5432 = vpop.f32.mrb[0].mxu0
    %5433 = vdwg.mxu0
    %5434 = vrot.lane.b32.xlu0 %v306, 40
    %v5435 = vpop.permute.xlu0 %5434
    %v5438 = vsel %vm328, %v5051, 0
    %5440 = vmatprep.subr.mxu0 0.0
    %5441 = vmatpush1.msra.mxu0 %v5435
    %5442 = vmatprep.subr.mxu0 0.0
    %5443 = vmatpush1.msra.mxu0 0.0
    %5444 = vmatprep.subr.mxu0 0.0
    %5445 = vmatpush1.msra.mxu0 0.0
    %5446 = vmatprep.subr.mxu0 0.0
    %5447 = vmatpush1.msra.mxu0 0.0
    %5448 = vmatprep.subr.mxu0 0.0
    %5449 = vmatpush1.msra.mxu0 0.0
    %5450 = vmatprep.subr.mxu0 0.0
    %5451 = vmatpush1.msra.mxu0 0.0
    %5452 = vmatprep.subr.mxu0 0.0
    %5453 = vmatpush1.msra.mxu0 0.0
    %5454 = vmatprep.subr.mxu0 0.0
    %5455 = vmatpush1.msra.mxu0 0.0
    %5456 = vmatprep.subr.mxu0 0.0
    %5457 = vmatpush1.msra.mxu0 0.0
    %5458 = vmatprep.subr.mxu0 0.0
    %5459 = vmatpush1.msra.mxu0 0.0
    %5460 = vmatprep.subr.mxu0 0.0
    %5461 = vmatpush1.msra.mxu0 0.0
    %5462 = vmatprep.subr.mxu0 0.0
    %5463 = vmatpush1.msra.mxu0 0.0
    %5464 = vmatprep.subr.mxu0 0.0
    %5465 = vmatpush1.msra.mxu0 0.0
    %5466 = vmatprep.subr.mxu0 0.0
    %5467 = vmatpush1.msra.mxu0 0.0
    %5468 = vmatprep.subr.mxu0 0.0
    %5469 = vmatpush1.msra.mxu0 0.0
    %5470 = vmatprep.subr.mxu0 0.0
    %5471 = vmatpush1.msra.mxu0 0.0
    %5472 = vmatprep.subr.mxu0 0.0
    %5473 = vmatpush1.msra.mxu0 0.0
    %5474 = vmatprep.subr.mxu0 0.0
    %5475 = vmatpush1.msra.mxu0 0.0
    %5476 = vmatprep.subr.mxu0 0.0
    %5477 = vmatpush1.msra.mxu0 0.0
    %5478 = vmatprep.subr.mxu0 0.0
    %5479 = vmatpush1.msra.mxu0 0.0
    %5480 = vmatprep.subr.mxu0 0.0
    %5481 = vmatpush1.msra.mxu0 0.0
    %5482 = vmatprep.subr.mxu0 0.0
    %5483 = vmatpush1.msra.mxu0 0.0
    %5484 = vmatprep.subr.mxu0 0.0
    %5485 = vmatpush1.msra.mxu0 0.0
    %5486 = vmatprep.subr.mxu0 0.0
    %5487 = vmatpush1.msra.mxu0 0.0
    %5488 = vmatprep.subr.mxu0 0.0
    %5489 = vmatpush1.msra.mxu0 0.0
    %5490 = vmatprep.subr.mxu0 0.0
    %5491 = vmatpush1.msra.mxu0 0.0
    %5492 = vmatprep.subr.mxu0 0.0
    %5493 = vmatpush1.msra.mxu0 0.0
    %5494 = vmatprep.subr.mxu0 0.0
    %5495 = vmatpush1.msra.mxu0 0.0
    %5496 = vmatprep.subr.mxu0 0.0
    %5497 = vmatpush1.msra.mxu0 0.0
    %5498 = vmatprep.subr.mxu0 0.0
    %5499 = vmatpush1.msra.mxu0 0.0
    %5500 = vmatprep.subr.mxu0 0.0
    %5501 = vmatpush1.msra.mxu0 0.0
    %5502 = vmatprep.subr.mxu0 0.0
    %5503 = vmatpush1.msra.mxu0 0.0
    %5504 = vmatprep.mubr.f32.mxu0 0.0
    %5505 = vmatmul.mubr.f32.gmra.mrb[0].mxu0 %v5438
    %v5506 = vpop.f32.mrb[0].mxu0
    %v5507 = vadd.f32 0.0, %v5506
    %v5508 = vpop.f32.mrb[0].mxu0
    %5509 = vdwg.mxu0
    %5510 = vrot.lane.b32.xlu0 %v311, 40
    %v5511 = vpop.permute.xlu0 %5510
    %v5514 = vsel %vm328, %v5052, 0
    %5516 = vmatprep.subr.mxu0 0.0
    %5517 = vmatpush1.msra.mxu0 %v5511
    %5518 = vmatprep.subr.mxu0 0.0
    %5519 = vmatpush1.msra.mxu0 0.0
    %5520 = vmatprep.subr.mxu0 0.0
    %5521 = vmatpush1.msra.mxu0 0.0
    %5522 = vmatprep.subr.mxu0 0.0
    %5523 = vmatpush1.msra.mxu0 0.0
    %5524 = vmatprep.subr.mxu0 0.0
    %5525 = vmatpush1.msra.mxu0 0.0
    %5526 = vmatprep.subr.mxu0 0.0
    %5527 = vmatpush1.msra.mxu0 0.0
    %5528 = vmatprep.subr.mxu0 0.0
    %5529 = vmatpush1.msra.mxu0 0.0
    %5530 = vmatprep.subr.mxu0 0.0
    %5531 = vmatpush1.msra.mxu0 0.0
    %5532 = vmatprep.subr.mxu0 0.0
    %5533 = vmatpush1.msra.mxu0 0.0
    %5534 = vmatprep.subr.mxu0 0.0
    %5535 = vmatpush1.msra.mxu0 0.0
    %5536 = vmatprep.subr.mxu0 0.0
    %5537 = vmatpush1.msra.mxu0 0.0
    %5538 = vmatprep.subr.mxu0 0.0
    %5539 = vmatpush1.msra.mxu0 0.0
    %5540 = vmatprep.subr.mxu0 0.0
    %5541 = vmatpush1.msra.mxu0 0.0
    %5542 = vmatprep.subr.mxu0 0.0
    %5543 = vmatpush1.msra.mxu0 0.0
    %5544 = vmatprep.subr.mxu0 0.0
    %5545 = vmatpush1.msra.mxu0 0.0
    %5546 = vmatprep.subr.mxu0 0.0
    %5547 = vmatpush1.msra.mxu0 0.0
    %5548 = vmatprep.subr.mxu0 0.0
    %5549 = vmatpush1.msra.mxu0 0.0
    %5550 = vmatprep.subr.mxu0 0.0
    %5551 = vmatpush1.msra.mxu0 0.0
    %5552 = vmatprep.subr.mxu0 0.0
    %5553 = vmatpush1.msra.mxu0 0.0
    %5554 = vmatprep.subr.mxu0 0.0
    %5555 = vmatpush1.msra.mxu0 0.0
    %5556 = vmatprep.subr.mxu0 0.0
    %5557 = vmatpush1.msra.mxu0 0.0
    %5558 = vmatprep.subr.mxu0 0.0
    %5559 = vmatpush1.msra.mxu0 0.0
    %5560 = vmatprep.subr.mxu0 0.0
    %5561 = vmatpush1.msra.mxu0 0.0
    %5562 = vmatprep.subr.mxu0 0.0
    %5563 = vmatpush1.msra.mxu0 0.0
    %5564 = vmatprep.subr.mxu0 0.0
    %5565 = vmatpush1.msra.mxu0 0.0
    %5566 = vmatprep.subr.mxu0 0.0
    %5567 = vmatpush1.msra.mxu0 0.0
    %5568 = vmatprep.subr.mxu0 0.0
    %5569 = vmatpush1.msra.mxu0 0.0
    %5570 = vmatprep.subr.mxu0 0.0
    %5571 = vmatpush1.msra.mxu0 0.0
    %5572 = vmatprep.subr.mxu0 0.0
    %5573 = vmatpush1.msra.mxu0 0.0
    %5574 = vmatprep.subr.mxu0 0.0
    %5575 = vmatpush1.msra.mxu0 0.0
    %5576 = vmatprep.subr.mxu0 0.0
    %5577 = vmatpush1.msra.mxu0 0.0
    %5578 = vmatprep.subr.mxu0 0.0
    %5579 = vmatpush1.msra.mxu0 0.0
    %5580 = vmatprep.mubr.f32.mxu0 0.0
    %5581 = vmatmul.mubr.f32.gmra.mrb[0].mxu0 %v5514
    %v5582 = vpop.f32.mrb[0].mxu0
    %v5583 = vadd.f32 0.0, %v5582
    %v5584 = vpop.f32.mrb[0].mxu0
    %5585 = vdwg.mxu0
    %5586 = vrot.lane.b32.xlu0 %v316, 40
    %v5587 = vpop.permute.xlu0 %5586
    %v5590 = vsel %vm328, %v5053, 0
    %5592 = vmatprep.subr.mxu0 0.0
    %5593 = vmatpush1.msra.mxu0 %v5587
    %5594 = vmatprep.subr.mxu0 0.0
    %5595 = vmatpush1.msra.mxu0 0.0
    %5596 = vmatprep.subr.mxu0 0.0
    %5597 = vmatpush1.msra.mxu0 0.0
    %5598 = vmatprep.subr.mxu0 0.0
    %5599 = vmatpush1.msra.mxu0 0.0
    %5600 = vmatprep.subr.mxu0 0.0
    %5601 = vmatpush1.msra.mxu0 0.0
    %5602 = vmatprep.subr.mxu0 0.0
    %5603 = vmatpush1.msra.mxu0 0.0
    %5604 = vmatprep.subr.mxu0 0.0
    %5605 = vmatpush1.msra.mxu0 0.0
    %5606 = vmatprep.subr.mxu0 0.0
    %5607 = vmatpush1.msra.mxu0 0.0
    %5608 = vmatprep.subr.mxu0 0.0
    %5609 = vmatpush1.msra.mxu0 0.0
    %5610 = vmatprep.subr.mxu0 0.0
    %5611 = vmatpush1.msra.mxu0 0.0
    %5612 = vmatprep.subr.mxu0 0.0
    %5613 = vmatpush1.msra.mxu0 0.0
    %5614 = vmatprep.subr.mxu0 0.0
    %5615 = vmatpush1.msra.mxu0 0.0
    %5616 = vmatprep.subr.mxu0 0.0
    %5617 = vmatpush1.msra.mxu0 0.0
    %5618 = vmatprep.subr.mxu0 0.0
    %5619 = vmatpush1.msra.mxu0 0.0
    %5620 = vmatprep.subr.mxu0 0.0
    %5621 = vmatpush1.msra.mxu0 0.0
    %5622 = vmatprep.subr.mxu0 0.0
    %5623 = vmatpush1.msra.mxu0 0.0
    %5624 = vmatprep.subr.mxu0 0.0
    %5625 = vmatpush1.msra.mxu0 0.0
    %5626 = vmatprep.subr.mxu0 0.0
    %5627 = vmatpush1.msra.mxu0 0.0
    %5628 = vmatprep.subr.mxu0 0.0
    %5629 = vmatpush1.msra.mxu0 0.0
    %5630 = vmatprep.subr.mxu0 0.0
    %5631 = vmatpush1.msra.mxu0 0.0
    %5632 = vmatprep.subr.mxu0 0.0
    %5633 = vmatpush1.msra.mxu0 0.0
    %5634 = vmatprep.subr.mxu0 0.0
    %5635 = vmatpush1.msra.mxu0 0.0
    %5636 = vmatprep.subr.mxu0 0.0
    %5637 = vmatpush1.msra.mxu0 0.0
    %5638 = vmatprep.subr.mxu0 0.0
    %5639 = vmatpush1.msra.mxu0 0.0
    %5640 = vmatprep.subr.mxu0 0.0
    %5641 = vmatpush1.msra.mxu0 0.0
    %5642 = vmatprep.subr.mxu0 0.0
    %5643 = vmatpush1.msra.mxu0 0.0
    %5644 = vmatprep.subr.mxu0 0.0
    %5645 = vmatpush1.msra.mxu0 0.0
    %5646 = vmatprep.subr.mxu0 0.0
    %5647 = vmatpush1.msra.mxu0 0.0
    %5648 = vmatprep.subr.mxu0 0.0
    %5649 = vmatpush1.msra.mxu0 0.0
    %5650 = vmatprep.subr.mxu0 0.0
    %5651 = vmatpush1.msra.mxu0 0.0
    %5652 = vmatprep.subr.mxu0 0.0
    %5653 = vmatpush1.msra.mxu0 0.0
    %5654 = vmatprep.subr.mxu0 0.0
    %5655 = vmatpush1.msra.mxu0 0.0
    %5656 = vmatprep.mubr.f32.mxu0 0.0
    %5657 = vmatmul.mubr.f32.gmra.mrb[0].mxu0 %v5590
    %v5658 = vpop.f32.mrb[0].mxu0
    %v5659 = vadd.f32 0.0, %v5658
    %v5660 = vpop.f32.mrb[0].mxu0
    %5661 = vdwg.mxu0
    %5670 = vrot.lane.b32.xlu0 %v2455, 8
    %v5671 = vpop.permute.xlu0 %5670
    %5672 = vrot.lane.b32.xlu0 %v2531, 8
    %v5673 = vpop.permute.xlu0 %5672
    %5674 = vrot.lane.b32.xlu0 %v2607, 8
    %v5675 = vpop.permute.xlu0 %5674
    %5676 = vrot.lane.b32.xlu0 %v2683, 8
    %v5677 = vpop.permute.xlu0 %5676
    %5678 = vrot.lane.b32.xlu0 %v2759, 8
    %v5679 = vpop.permute.xlu0 %5678
    %5680 = vrot.lane.b32.xlu0 %v2835, 8
    %v5681 = vpop.permute.xlu0 %5680
    %5682 = vrot.lane.b32.xlu0 %v2911, 8
    %v5683 = vpop.permute.xlu0 %5682
    %5684 = vrot.lane.b32.xlu0 %v2987, 8
    %v5685 = vpop.permute.xlu0 %5684
    %5702 = vrot.lane.b32.xlu0 %v3791, 16
    %v5703 = vpop.permute.xlu0 %5702
    %5704 = vrot.lane.b32.xlu0 %v3867, 16
    %v5705 = vpop.permute.xlu0 %5704
    %5706 = vrot.lane.b32.xlu0 %v3943, 16
    %v5707 = vpop.permute.xlu0 %5706
    %5708 = vrot.lane.b32.xlu0 %v4019, 16
    %v5709 = vpop.permute.xlu0 %5708
    %5710 = vrot.lane.b32.xlu0 %v4095, 16
    %v5711 = vpop.permute.xlu0 %5710
    %5712 = vrot.lane.b32.xlu0 %v4171, 16
    %v5713 = vpop.permute.xlu0 %5712
    %5714 = vrot.lane.b32.xlu0 %v4247, 16
    %v5715 = vpop.permute.xlu0 %5714
    %5716 = vrot.lane.b32.xlu0 %v4323, 16
    %v5717 = vpop.permute.xlu0 %5716
    %5734 = vrot.lane.b32.xlu0 %v5127, 24
    %v5735 = vpop.permute.xlu0 %5734
    %5736 = vrot.lane.b32.xlu0 %v5203, 24
    %v5737 = vpop.permute.xlu0 %5736
    %5738 = vrot.lane.b32.xlu0 %v5279, 24
    %v5739 = vpop.permute.xlu0 %5738
    %5740 = vrot.lane.b32.xlu0 %v5355, 24
    %v5741 = vpop.permute.xlu0 %5740
    %5742 = vrot.lane.b32.xlu0 %v5431, 24
    %v5743 = vpop.permute.xlu0 %5742
    %5744 = vrot.lane.b32.xlu0 %v5507, 24
    %v5745 = vpop.permute.xlu0 %5744
    %5746 = vrot.lane.b32.xlu0 %v5583, 24
    %v5747 = vpop.permute.xlu0 %5746
    %5748 = vrot.lane.b32.xlu0 %v5659, 24
    %v5749 = vpop.permute.xlu0 %5748
    %v5758 = vsel %vm328, %v1119, %v5671
    %v5759 = vsel %vm328, %v1195, %v5673
    %v5760 = vsel %vm328, %v1271, %v5675
    %v5761 = vsel %vm328, %v1347, %v5677
    %v5762 = vsel %vm328, %v1423, %v5679
    %v5763 = vsel %vm328, %v1499, %v5681
    %v5764 = vsel %vm328, %v1575, %v5683
    %v5765 = vsel %vm328, %v1651, %v5685
    %vm5766 = vcmask 130048
    %v5767 = vsel %vm5766, %v5758, %v5703
    %v5768 = vsel %vm5766, %v5759, %v5705
    %v5769 = vsel %vm5766, %v5760, %v5707
    %v5770 = vsel %vm5766, %v5761, %v5709
    %v5771 = vsel %vm5766, %v5762, %v5711
    %v5772 = vsel %vm5766, %v5763, %v5713
    %v5773 = vsel %vm5766, %v5764, %v5715
    %v5774 = vsel %vm5766, %v5765, %v5717
    %vm5775 = vcmask 195584
    %v5776 = vsel %vm5775, %v5767, %v5735
    %v5777 = vsel %vm5775, %v5768, %v5737
    %v5778 = vsel %vm5775, %v5769, %v5739
    %v5779 = vsel %vm5775, %v5770, %v5741
    %v5780 = vsel %vm5775, %v5771, %v5743
    %v5781 = vsel %vm5775, %v5772, %v5745
    %v5782 = vsel %vm5775, %v5773, %v5747
    %v5783 = vsel %vm5775, %v5774, %v5749
    %v5784 = vld [vmem:[%s4] sm:$0xff]
    %v5785 = vld [vmem:[%s4 + $0x8] sm:$0xff]
    %v5786 = vld [vmem:[%s4 + $0x10] sm:$0xff]
    %v5787 = vld [vmem:[%s4 + $0x18] sm:$0xff]
    %v5788 = vld [vmem:[%s5] sm:$0x1]
    %v5790 = vlaneseq
    %v5791 = vshrl.u32 %v5790, 7
    %v5792 = vsub.s32 0, %v5791
    %v5793 = vrot.slane %v5788, %v5792
    %v5796 = vsel %vm52, %v5776, 0
    %v5799 = vsel %vm52, %v5777, 0
    %v5802 = vsel %vm52, %v5778, 0
    %v5805 = vsel %vm52, %v5779, 0
    %v5808 = vsel %vm52, %v5780, 0
    %v5811 = vsel %vm52, %v5781, 0
    %v5814 = vsel %vm52, %v5782, 0
    %v5817 = vsel %vm52, %v5783, 0
    %5819 = vmatprep.subr.mxu0 0.0
    %5820 = vmatpush1.msra.mxu0 %v5784
    %5821 = vmatprep.subr.mxu0 0.0
    %5822 = vmatpush1.msra.mxu0 %v5785
    %5823 = vmatprep.subr.mxu0 0.0
    %5824 = vmatpush1.msra.mxu0 %v5786
    %5825 = vmatprep.subr.mxu0 0.0
    %5826 = vmatpush1.msra.mxu0 %v5787
    %5827 = vmatprep.subr.mxu0 0.0
    %5828 = vmatpush1.msra.mxu0 0.0
    %5829 = vmatprep.subr.mxu0 0.0
    %5830 = vmatpush1.msra.mxu0 0.0
    %5831 = vmatprep.subr.mxu0 0.0
    %5832 = vmatpush1.msra.mxu0 0.0
    %5833 = vmatprep.subr.mxu0 0.0
    %5834 = vmatpush1.msra.mxu0 0.0
    %5835 = vmatprep.subr.mxu0 0.0
    %5836 = vmatpush1.msra.mxu0 0.0
    %5837 = vmatprep.subr.mxu0 0.0
    %5838 = vmatpush1.msra.mxu0 0.0
    %5839 = vmatprep.subr.mxu0 0.0
    %5840 = vmatpush1.msra.mxu0 0.0
    %5841 = vmatprep.subr.mxu0 0.0
    %5842 = vmatpush1.msra.mxu0 0.0
    %5843 = vmatprep.subr.mxu0 0.0
    %5844 = vmatpush1.msra.mxu0 0.0
    %5845 = vmatprep.subr.mxu0 0.0
    %5846 = vmatpush1.msra.mxu0 0.0
    %5847 = vmatprep.subr.mxu0 0.0
    %5848 = vmatpush1.msra.mxu0 0.0
    %5849 = vmatprep.subr.mxu0 0.0
    %5850 = vmatpush1.msra.mxu0 0.0
    %5851 = vmatprep.subr.mxu0 0.0
    %5852 = vmatpush1.msra.mxu0 0.0
    %5853 = vmatprep.subr.mxu0 0.0
    %5854 = vmatpush1.msra.mxu0 0.0
    %5855 = vmatprep.subr.mxu0 0.0
    %5856 = vmatpush1.msra.mxu0 0.0
    %5857 = vmatprep.subr.mxu0 0.0
    %5858 = vmatpush1.msra.mxu0 0.0
    %5859 = vmatprep.subr.mxu0 0.0
    %5860 = vmatpush1.msra.mxu0 0.0
    %5861 = vmatprep.subr.mxu0 0.0
    %5862 = vmatpush1.msra.mxu0 0.0
    %5863 = vmatprep.subr.mxu0 0.0
    %5864 = vmatpush1.msra.mxu0 0.0
    %5865 = vmatprep.subr.mxu0 0.0
    %5866 = vmatpush1.msra.mxu0 0.0
    %5867 = vmatprep.subr.mxu0 0.0
    %5868 = vmatpush1.msra.mxu0 0.0
    %5869 = vmatprep.subr.mxu0 0.0
    %5870 = vmatpush1.msra.mxu0 0.0
    %5871 = vmatprep.subr.mxu0 0.0
    %5872 = vmatpush1.msra.mxu0 0.0
    %5873 = vmatprep.subr.mxu0 0.0
    %5874 = vmatpush1.msra.mxu0 0.0
    %5875 = vmatprep.subr.mxu0 0.0
    %5876 = vmatpush1.msra.mxu0 0.0
    %5877 = vmatprep.subr.mxu0 0.0
    %5878 = vmatpush1.msra.mxu0 0.0
    %5879 = vmatprep.subr.mxu0 0.0
    %5880 = vmatpush1.msra.mxu0 0.0
    %5881 = vmatprep.subr.mxu0 0.0
    %5882 = vmatpush1.msra.mxu0 0.0
    %5883 = vmatprep.mubr.f32.mxu0 0.0
    %5884 = vmatmul.mubr.f32.gmra.mrb[0].mxu0 %v5796
    %v5885 = vpop.f32.mrb[0].mxu0
    %v5886 = vadd.f32 %v5793, %v5885
    %v5887 = vpop.f32.mrb[0].mxu0
    %5888 = vmatprep.mubr.f32.mxu0 0.0
    %5889 = vmatmul.mubr.f32.gmra.mrb[0].mxu0 %v5799
    %v5890 = vpop.f32.mrb[0].mxu0
    %v5891 = vadd.f32 %v5793, %v5890
    %v5892 = vpop.f32.mrb[0].mxu0
    %5893 = vmatprep.mubr.f32.mxu0 0.0
    %5894 = vmatmul.mubr.f32.gmra.mrb[0].mxu0 %v5802
    %v5895 = vpop.f32.mrb[0].mxu0
    %v5896 = vadd.f32 %v5793, %v5895
    %v5897 = vpop.f32.mrb[0].mxu0
    %5898 = vmatprep.mubr.f32.mxu0 0.0
    %5899 = vmatmul.mubr.f32.gmra.mrb[0].mxu0 %v5805
    %v5900 = vpop.f32.mrb[0].mxu0
    %v5901 = vadd.f32 %v5793, %v5900
    %v5902 = vpop.f32.mrb[0].mxu0
    %5903 = vmatprep.mubr.f32.mxu0 0.0
    %5904 = vmatmul.mubr.f32.gmra.mrb[0].mxu0 %v5808
    %v5905 = vpop.f32.mrb[0].mxu0
    %v5906 = vadd.f32 %v5793, %v5905
    %v5907 = vpop.f32.mrb[0].mxu0
    %5908 = vmatprep.mubr.f32.mxu0 0.0
    %5909 = vmatmul.mubr.f32.gmra.mrb[0].mxu0 %v5811
    %v5910 = vpop.f32.mrb[0].mxu0
    %v5911 = vadd.f32 %v5793, %v5910
    %v5912 = vpop.f32.mrb[0].mxu0
    %5913 = vmatprep.mubr.f32.mxu0 0.0
    %5914 = vmatmul.mubr.f32.gmra.mrb[0].mxu0 %v5814
    %v5915 = vpop.f32.mrb[0].mxu0
    %v5916 = vadd.f32 %v5793, %v5915
    %v5917 = vpop.f32.mrb[0].mxu0
    %5918 = vmatprep.mubr.f32.mxu0 0.0
    %5919 = vmatmul.mubr.f32.gmra.mrb[0].mxu0 %v5817
    %v5920 = vpop.f32.mrb[0].mxu0
    %v5921 = vadd.f32 %v5793, %v5920
    %v5922 = vpop.f32.mrb[0].mxu0
    %5923 = vdwg.mxu0
    %v5924 = vadd.f32 %v42, %v5886
    %v5925 = vadd.f32 %v43, %v5891
    %v5926 = vadd.f32 %v44, %v5896
    %v5927 = vadd.f32 %v45, %v5901
    %v5928 = vadd.f32 %v46, %v5906
    %v5929 = vadd.f32 %v47, %v5911
    %v5930 = vadd.f32 %v48, %v5916
    %v5931 = vadd.f32 %v49, %v5921
    %v5932 = vld [vmem:[%s6] sm:$0x1]
    %v5933 = vld [vmem:[%s7] sm:$0x1]
    %v5934 = vsel %vm52, %v5924, 0.0
    %5935 = vadd.xlane.f32.xlu0 %v5934
    %v5936 = vpop.xlane.xlu0 %5935
    %v5937 = vsel %vm52, %v5925, 0.0
    %5938 = vadd.xlane.f32.xlu0 %v5937
    %v5939 = vpop.xlane.xlu0 %5938
    %v5940 = vsel %vm52, %v5926, 0.0
    %5941 = vadd.xlane.f32.xlu0 %v5940
    %v5942 = vpop.xlane.xlu0 %5941
    %v5943 = vsel %vm52, %v5927, 0.0
    %5944 = vadd.xlane.f32.xlu0 %v5943
    %v5945 = vpop.xlane.xlu0 %5944
    %v5946 = vsel %vm52, %v5928, 0.0
    %5947 = vadd.xlane.f32.xlu0 %v5946
    %v5948 = vpop.xlane.xlu0 %5947
    %v5949 = vsel %vm52, %v5929, 0.0
    %5950 = vadd.xlane.f32.xlu0 %v5949
    %v5951 = vpop.xlane.xlu0 %5950
    %v5952 = vsel %vm52, %v5930, 0.0
    %5953 = vadd.xlane.f32.xlu0 %v5952
    %v5954 = vpop.xlane.xlu0 %5953
    %v5955 = vsel %vm52, %v5931, 0.0
    %5956 = vadd.xlane.f32.xlu0 %v5955
    %v5957 = vpop.xlane.xlu0 %5956
    %v5958 = vmul.f32 %v5936, %v77
    %v5959 = vmul.f32 %v5939, %v77
    %v5960 = vmul.f32 %v5942, %v77
    %v5961 = vmul.f32 %v5945, %v77
    %v5962 = vmul.f32 %v5948, %v77
    %v5963 = vmul.f32 %v5951, %v77
    %v5964 = vmul.f32 %v5954, %v77
    %v5965 = vmul.f32 %v5957, %v77
    %v5966 = vsub.f32 %v5924, %v5958
    %v5967 = vsub.f32 %v5925, %v5959
    %v5968 = vsub.f32 %v5926, %v5960
    %v5969 = vsub.f32 %v5927, %v5961
    %v5970 = vsub.f32 %v5928, %v5962
    %v5971 = vsub.f32 %v5929, %v5963
    %v5972 = vsub.f32 %v5930, %v5964
    %v5973 = vsub.f32 %v5931, %v5965
    %v5974 = vmul.f32 %v5966, %v5966
    %v5975 = vmul.f32 %v5967, %v5967
    %v5976 = vmul.f32 %v5968, %v5968
    %v5977 = vmul.f32 %v5969, %v5969
    %v5978 = vmul.f32 %v5970, %v5970
    %v5979 = vmul.f32 %v5971, %v5971
    %v5980 = vmul.f32 %v5972, %v5972
    %v5981 = vmul.f32 %v5973, %v5973
    %v5982 = vsel %vm52, %v5974, 0.0
    %5983 = vadd.xlane.f32.xlu0 %v5982
    %v5984 = vpop.xlane.xlu0 %5983
    %v5985 = vsel %vm52, %v5975, 0.0
    %5986 = vadd.xlane.f32.xlu0 %v5985
    %v5987 = vpop.xlane.xlu0 %5986
    %v5988 = vsel %vm52, %v5976, 0.0
    %5989 = vadd.xlane.f32.xlu0 %v5988
    %v5990 = vpop.xlane.xlu0 %5989
    %v5991 = vsel %vm52, %v5977, 0.0
    %5992 = vadd.xlane.f32.xlu0 %v5991
    %v5993 = vpop.xlane.xlu0 %5992
    %v5994 = vsel %vm52, %v5978, 0.0
    %5995 = vadd.xlane.f32.xlu0 %v5994
    %v5996 = vpop.xlane.xlu0 %5995
    %v5997 = vsel %vm52, %v5979, 0.0
    %5998 = vadd.xlane.f32.xlu0 %v5997
    %v5999 = vpop.xlane.xlu0 %5998
    %v6000 = vsel %vm52, %v5980, 0.0
    %6001 = vadd.xlane.f32.xlu0 %v6000
    %v6002 = vpop.xlane.xlu0 %6001
    %v6003 = vsel %vm52, %v5981, 0.0
    %6004 = vadd.xlane.f32.xlu0 %v6003
    %v6005 = vpop.xlane.xlu0 %6004
    %v6006 = vmul.f32 %v5984, %v77
    %v6007 = vmul.f32 %v5987, %v77
    %v6008 = vmul.f32 %v5990, %v77
    %v6009 = vmul.f32 %v5993, %v77
    %v6010 = vmul.f32 %v5996, %v77
    %v6011 = vmul.f32 %v5999, %v77
    %v6012 = vmul.f32 %v6002, %v77
    %v6013 = vmul.f32 %v6005, %v77
    %v6014 = vadd.f32 %v6006, 1e-05
    %v6015 = vadd.f32 %v6007, 1e-05
    %v6016 = vadd.f32 %v6008, 1e-05
    %v6017 = vadd.f32 %v6009, 1e-05
    %v6018 = vadd.f32 %v6010, 1e-05
    %v6019 = vadd.f32 %v6011, 1e-05
    %v6020 = vadd.f32 %v6012, 1e-05
    %v6021 = vadd.f32 %v6013, 1e-05
    %v6022 = vrsqrt.pop %v6014
    %v6023 = vrsqrt.pop %v6015
    %v6024 = vrsqrt.pop %v6016
    %v6025 = vrsqrt.pop %v6017
    %v6026 = vrsqrt.pop %v6018
    %v6027 = vrsqrt.pop %v6019
    %v6028 = vrsqrt.pop %v6020
    %v6029 = vrsqrt.pop %v6021
    %v6030 = vmul.f32 %v5966, %v6022
    %v6031 = vmul.f32 %v5967, %v6023
    %v6032 = vmul.f32 %v5968, %v6024
    %v6033 = vmul.f32 %v5969, %v6025
    %v6034 = vmul.f32 %v5970, %v6026
    %v6035 = vmul.f32 %v5971, %v6027
    %v6036 = vmul.f32 %v5972, %v6028
    %v6037 = vmul.f32 %v5973, %v6029
    %v6039 = vlaneseq
    %v6040 = vshrl.u32 %v6039, 7
    %v6041 = vsub.s32 0, %v6040
    %v6042 = vrot.slane %v5932, %v6041
    %v6044 = vmul.f32 %v6030, %v6042
    %v6045 = vmul.f32 %v6031, %v6042
    %v6046 = vmul.f32 %v6032, %v6042
    %v6047 = vmul.f32 %v6033, %v6042
    %v6048 = vmul.f32 %v6034, %v6042
    %v6049 = vmul.f32 %v6035, %v6042
    %v6050 = vmul.f32 %v6036, %v6042
    %v6051 = vmul.f32 %v6037, %v6042
    %v6053 = vlaneseq
    %v6054 = vshrl.u32 %v6053, 7
    %v6055 = vsub.s32 0, %v6054
    %v6056 = vrot.slane %v5933, %v6055
    %v6058 = vadd.f32 %v6044, %v6056
    %v6059 = vadd.f32 %v6045, %v6056
    %v6060 = vadd.f32 %v6046, %v6056
    %v6061 = vadd.f32 %v6047, %v6056
    %v6062 = vadd.f32 %v6048, %v6056
    %v6063 = vadd.f32 %v6049, %v6056
    %v6064 = vadd.f32 %v6050, %v6056
    %v6065 = vadd.f32 %v6051, %v6056
    %v6066 = vld [vmem:[%s8] sm:$0xff]
    %v6067 = vld [vmem:[%s8 + $0x8] sm:$0xff]
    %v6068 = vld [vmem:[%s8 + $0x10] sm:$0xff]
    %v6069 = vld [vmem:[%s8 + $0x18] sm:$0xff]
    %v6070 = vld [vmem:[%s9] sm:$0x1]
    %v6072 = vlaneseq
    %v6073 = vshrl.u32 %v6072, 7
    %v6074 = vsub.s32 0, %v6073
    %v6075 = vrot.slane %v6070, %v6074
    %v6078 = vsel %vm52, %v6058, 0
    %v6081 = vsel %vm52, %v6059, 0
    %v6084 = vsel %vm52, %v6060, 0
    %v6087 = vsel %vm52, %v6061, 0
    %v6090 = vsel %vm52, %v6062, 0
    %v6093 = vsel %vm52, %v6063, 0
    %v6096 = vsel %vm52, %v6064, 0
    %v6099 = vsel %vm52, %v6065, 0
    %6101 = vmatprep.subr.mxu0 0.0
    %6102 = vmatpush1.msra.mxu0 %v6066
    %6103 = vmatprep.subr.mxu0 0.0
    %6104 = vmatpush1.msra.mxu0 %v6067
    %6105 = vmatprep.subr.mxu0 0.0
    %6106 = vmatpush1.msra.mxu0 %v6068
    %6107 = vmatprep.subr.mxu0 0.0
    %6108 = vmatpush1.msra.mxu0 %v6069
    %6109 = vmatprep.subr.mxu0 0.0
    %6110 = vmatpush1.msra.mxu0 0.0
    %6111 = vmatprep.subr.mxu0 0.0
    %6112 = vmatpush1.msra.mxu0 0.0
    %6113 = vmatprep.subr.mxu0 0.0
    %6114 = vmatpush1.msra.mxu0 0.0
    %6115 = vmatprep.subr.mxu0 0.0
    %6116 = vmatpush1.msra.mxu0 0.0
    %6117 = vmatprep.subr.mxu0 0.0
    %6118 = vmatpush1.msra.mxu0 0.0
    %6119 = vmatprep.subr.mxu0 0.0
    %6120 = vmatpush1.msra.mxu0 0.0
    %6121 = vmatprep.subr.mxu0 0.0
    %6122 = vmatpush1.msra.mxu0 0.0
    %6123 = vmatprep.subr.mxu0 0.0
    %6124 = vmatpush1.msra.mxu0 0.0
    %6125 = vmatprep.subr.mxu0 0.0
    %6126 = vmatpush1.msra.mxu0 0.0
    %6127 = vmatprep.subr.mxu0 0.0
    %6128 = vmatpush1.msra.mxu0 0.0
    %6129 = vmatprep.subr.mxu0 0.0
    %6130 = vmatpush1.msra.mxu0 0.0
    %6131 = vmatprep.subr.mxu0 0.0
    %6132 = vmatpush1.msra.mxu0 0.0
    %6133 = vmatprep.subr.mxu0 0.0
    %6134 = vmatpush1.msra.mxu0 0.0
    %6135 = vmatprep.subr.mxu0 0.0
    %6136 = vmatpush1.msra.mxu0 0.0
    %6137 = vmatprep.subr.mxu0 0.0
    %6138 = vmatpush1.msra.mxu0 0.0
    %6139 = vmatprep.subr.mxu0 0.0
    %6140 = vmatpush1.msra.mxu0 0.0
    %6141 = vmatprep.subr.mxu0 0.0
    %6142 = vmatpush1.msra.mxu0 0.0
    %6143 = vmatprep.subr.mxu0 0.0
    %6144 = vmatpush1.msra.mxu0 0.0
    %6145 = vmatprep.subr.mxu0 0.0
    %6146 = vmatpush1.msra.mxu0 0.0
    %6147 = vmatprep.subr.mxu0 0.0
    %6148 = vmatpush1.msra.mxu0 0.0
    %6149 = vmatprep.subr.mxu0 0.0
    %6150 = vmatpush1.msra.mxu0 0.0
    %6151 = vmatprep.subr.mxu0 0.0
    %6152 = vmatpush1.msra.mxu0 0.0
    %6153 = vmatprep.subr.mxu0 0.0
    %6154 = vmatpush1.msra.mxu0 0.0
    %6155 = vmatprep.subr.mxu0 0.0
    %6156 = vmatpush1.msra.mxu0 0.0
    %6157 = vmatprep.subr.mxu0 0.0
    %6158 = vmatpush1.msra.mxu0 0.0
    %6159 = vmatprep.subr.mxu0 0.0
    %6160 = vmatpush1.msra.mxu0 0.0
    %6161 = vmatprep.subr.mxu0 0.0
    %6162 = vmatpush1.msra.mxu0 0.0
    %6163 = vmatprep.subr.mxu0 0.0
    %6164 = vmatpush1.msra.mxu0 0.0
    %6165 = vmatprep.mubr.f32.mxu0 0.0
    %6166 = vmatmul.mubr.f32.gmra.mrb[0].mxu0 %v6078
    %v6167 = vpop.f32.mrb[0].mxu0
    %v6168 = vadd.f32 %v6075, %v6167
    %v6169 = vpop.f32.mrb[0].mxu0
    %6170 = vmatprep.mubr.f32.mxu0 0.0
    %6171 = vmatmul.mubr.f32.gmra.mrb[0].mxu0 %v6081
    %v6172 = vpop.f32.mrb[0].mxu0
    %v6173 = vadd.f32 %v6075, %v6172
    %v6174 = vpop.f32.mrb[0].mxu0
    %6175 = vmatprep.mubr.f32.mxu0 0.0
    %6176 = vmatmul.mubr.f32.gmra.mrb[0].mxu0 %v6084
    %v6177 = vpop.f32.mrb[0].mxu0
    %v6178 = vadd.f32 %v6075, %v6177
    %v6179 = vpop.f32.mrb[0].mxu0
    %6180 = vmatprep.mubr.f32.mxu0 0.0
    %6181 = vmatmul.mubr.f32.gmra.mrb[0].mxu0 %v6087
    %v6182 = vpop.f32.mrb[0].mxu0
    %v6183 = vadd.f32 %v6075, %v6182
    %v6184 = vpop.f32.mrb[0].mxu0
    %6185 = vmatprep.mubr.f32.mxu0 0.0
    %6186 = vmatmul.mubr.f32.gmra.mrb[0].mxu0 %v6090
    %v6187 = vpop.f32.mrb[0].mxu0
    %v6188 = vadd.f32 %v6075, %v6187
    %v6189 = vpop.f32.mrb[0].mxu0
    %6190 = vmatprep.mubr.f32.mxu0 0.0
    %6191 = vmatmul.mubr.f32.gmra.mrb[0].mxu0 %v6093
    %v6192 = vpop.f32.mrb[0].mxu0
    %v6193 = vadd.f32 %v6075, %v6192
    %v6194 = vpop.f32.mrb[0].mxu0
    %6195 = vmatprep.mubr.f32.mxu0 0.0
    %6196 = vmatmul.mubr.f32.gmra.mrb[0].mxu0 %v6096
    %v6197 = vpop.f32.mrb[0].mxu0
    %v6198 = vadd.f32 %v6075, %v6197
    %v6199 = vpop.f32.mrb[0].mxu0
    %6200 = vmatprep.mubr.f32.mxu0 0.0
    %6201 = vmatmul.mubr.f32.gmra.mrb[0].mxu0 %v6099
    %v6202 = vpop.f32.mrb[0].mxu0
    %v6203 = vadd.f32 %v6075, %v6202
    %v6204 = vpop.f32.mrb[0].mxu0
    %6205 = vdwg.mxu0
    %v6206 = vmax.f32 %v6168, 0.0
    %v6207 = vmax.f32 %v6173, 0.0
    %v6208 = vmax.f32 %v6178, 0.0
    %v6209 = vmax.f32 %v6183, 0.0
    %v6210 = vmax.f32 %v6188, 0.0
    %v6211 = vmax.f32 %v6193, 0.0
    %v6212 = vmax.f32 %v6198, 0.0
    %v6213 = vmax.f32 %v6203, 0.0
    %v6214 = vld [vmem:[%s10] sm:$0xff]
    %v6215 = vld [vmem:[%s10 + $0x8] sm:$0xff]
    %v6216 = vld [vmem:[%s10 + $0x10] sm:$0xff]
    %v6217 = vld [vmem:[%s10 + $0x18] sm:$0xff]
    %v6218 = vld [vmem:[%s10 + $0x20] sm:$0xff]
    %v6219 = vld [vmem:[%s10 + $0x28] sm:$0xff]
    %v6220 = vld [vmem:[%s10 + $0x30] sm:$0xff]
    %v6221 = vld [vmem:[%s10 + $0x38] sm:$0xff]
    %v6222 = vld [vmem:[%s10 + $0x40] sm:$0xff]
    %v6223 = vld [vmem:[%s10 + $0x48] sm:$0xff]
    %v6224 = vld [vmem:[%s10 + $0x50] sm:$0xff]
    %v6225 = vld [vmem:[%s10 + $0x58] sm:$0xff]
    %v6226 = vld [vmem:[%s10 + $0x60] sm:$0xff]
    %v6227 = vld [vmem:[%s10 + $0x68] sm:$0xff]
    %v6228 = vld [vmem:[%s10 + $0x70] sm:$0xff]
    %v6229 = vld [vmem:[%s10 + $0x78] sm:$0xff]
    %v6230 = vld [vmem:[%s11] sm:$0x1]
    %v6232 = vlaneseq
    %v6233 = vshrl.u32 %v6232, 7
    %v6234 = vsub.s32 0, %v6233
    %v6235 = vrot.slane %v6230, %v6234
    %6237 = vmatprep.subr.mxu0 0.0
    %6238 = vmatpush1.msra.mxu0 %v6214
    %6239 = vmatprep.subr.mxu0 0.0
    %6240 = vmatpush1.msra.mxu0 %v6215
    %6241 = vmatprep.subr.mxu0 0.0
    %6242 = vmatpush1.msra.mxu0 %v6216
    %6243 = vmatprep.subr.mxu0 0.0
    %6244 = vmatpush1.msra.mxu0 %v6217
    %6245 = vmatprep.subr.mxu0 0.0
    %6246 = vmatpush1.msra.mxu0 %v6218
    %6247 = vmatprep.subr.mxu0 0.0
    %6248 = vmatpush1.msra.mxu0 %v6219
    %6249 = vmatprep.subr.mxu0 0.0
    %6250 = vmatpush1.msra.mxu0 %v6220
    %6251 = vmatprep.subr.mxu0 0.0
    %6252 = vmatpush1.msra.mxu0 %v6221
    %6253 = vmatprep.subr.mxu0 0.0
    %6254 = vmatpush1.msra.mxu0 %v6222
    %6255 = vmatprep.subr.mxu0 0.0
    %6256 = vmatpush1.msra.mxu0 %v6223
    %6257 = vmatprep.subr.mxu0 0.0
    %6258 = vmatpush1.msra.mxu0 %v6224
    %6259 = vmatprep.subr.mxu0 0.0
    %6260 = vmatpush1.msra.mxu0 %v6225
    %6261 = vmatprep.subr.mxu0 0.0
    %6262 = vmatpush1.msra.mxu0 %v6226
    %6263 = vmatprep.subr.mxu0 0.0
    %6264 = vmatpush1.msra.mxu0 %v6227
    %6265 = vmatprep.subr.mxu0 0.0
    %6266 = vmatpush1.msra.mxu0 %v6228
    %6267 = vmatprep.subr.mxu0 0.0
    %6268 = vmatpush1.msra.mxu0 %v6229
    %6269 = vmatprep.subr.mxu0 0.0
    %6270 = vmatpush1.msra.mxu0 0.0
    %6271 = vmatprep.subr.mxu0 0.0
    %6272 = vmatpush1.msra.mxu0 0.0
    %6273 = vmatprep.subr.mxu0 0.0
    %6274 = vmatpush1.msra.mxu0 0.0
    %6275 = vmatprep.subr.mxu0 0.0
    %6276 = vmatpush1.msra.mxu0 0.0
    %6277 = vmatprep.subr.mxu0 0.0
    %6278 = vmatpush1.msra.mxu0 0.0
    %6279 = vmatprep.subr.mxu0 0.0
    %6280 = vmatpush1.msra.mxu0 0.0
    %6281 = vmatprep.subr.mxu0 0.0
    %6282 = vmatpush1.msra.mxu0 0.0
    %6283 = vmatprep.subr.mxu0 0.0
    %6284 = vmatpush1.msra.mxu0 0.0
    %6285 = vmatprep.subr.mxu0 0.0
    %6286 = vmatpush1.msra.mxu0 0.0
    %6287 = vmatprep.subr.mxu0 0.0
    %6288 = vmatpush1.msra.mxu0 0.0
    %6289 = vmatprep.subr.mxu0 0.0
    %6290 = vmatpush1.msra.mxu0 0.0
    %6291 = vmatprep.subr.mxu0 0.0
    %6292 = vmatpush1.msra.mxu0 0.0
    %6293 = vmatprep.subr.mxu0 0.0
    %6294 = vmatpush1.msra.mxu0 0.0
    %6295 = vmatprep.subr.mxu0 0.0
    %6296 = vmatpush1.msra.mxu0 0.0
    %6297 = vmatprep.subr.mxu0 0.0
    %6298 = vmatpush1.msra.mxu0 0.0
    %6299 = vmatprep.subr.mxu0 0.0
    %6300 = vmatpush1.msra.mxu0 0.0
    %6301 = vmatprep.mubr.f32.mxu0 0.0
    %6302 = vmatmul.mubr.f32.gmra.mrb[0].mxu0 %v6206
    %v6303 = vpop.f32.mrb[0].mxu0
    %v6304 = vadd.f32 %v6235, %v6303
    %v6305 = vpop.f32.mrb[0].mxu0
    %6306 = vmatprep.mubr.f32.mxu0 0.0
    %6307 = vmatmul.mubr.f32.gmra.mrb[0].mxu0 %v6207
    %v6308 = vpop.f32.mrb[0].mxu0
    %v6309 = vadd.f32 %v6235, %v6308
    %v6310 = vpop.f32.mrb[0].mxu0
    %6311 = vmatprep.mubr.f32.mxu0 0.0
    %6312 = vmatmul.mubr.f32.gmra.mrb[0].mxu0 %v6208
    %v6313 = vpop.f32.mrb[0].mxu0
    %v6314 = vadd.f32 %v6235, %v6313
    %v6315 = vpop.f32.mrb[0].mxu0
    %6316 = vmatprep.mubr.f32.mxu0 0.0
    %6317 = vmatmul.mubr.f32.gmra.mrb[0].mxu0 %v6209
    %v6318 = vpop.f32.mrb[0].mxu0
    %v6319 = vadd.f32 %v6235, %v6318
    %v6320 = vpop.f32.mrb[0].mxu0
    %6321 = vmatprep.mubr.f32.mxu0 0.0
    %6322 = vmatmul.mubr.f32.gmra.mrb[0].mxu0 %v6210
    %v6323 = vpop.f32.mrb[0].mxu0
    %v6324 = vadd.f32 %v6235, %v6323
    %v6325 = vpop.f32.mrb[0].mxu0
    %6326 = vmatprep.mubr.f32.mxu0 0.0
    %6327 = vmatmul.mubr.f32.gmra.mrb[0].mxu0 %v6211
    %v6328 = vpop.f32.mrb[0].mxu0
    %v6329 = vadd.f32 %v6235, %v6328
    %v6330 = vpop.f32.mrb[0].mxu0
    %6331 = vmatprep.mubr.f32.mxu0 0.0
    %6332 = vmatmul.mubr.f32.gmra.mrb[0].mxu0 %v6212
    %v6333 = vpop.f32.mrb[0].mxu0
    %v6334 = vadd.f32 %v6235, %v6333
    %v6335 = vpop.f32.mrb[0].mxu0
    %6336 = vmatprep.mubr.f32.mxu0 0.0
    %6337 = vmatmul.mubr.f32.gmra.mrb[0].mxu0 %v6213
    %v6338 = vpop.f32.mrb[0].mxu0
    %v6339 = vadd.f32 %v6235, %v6338
    %v6340 = vpop.f32.mrb[0].mxu0
    %6341 = vdwg.mxu0
    %v6342 = vadd.f32 %v5924, %v6304
    %v6343 = vadd.f32 %v5925, %v6309
    %v6344 = vadd.f32 %v5926, %v6314
    %v6345 = vadd.f32 %v5927, %v6319
    %v6346 = vadd.f32 %v5928, %v6324
    %v6347 = vadd.f32 %v5929, %v6329
    %v6348 = vadd.f32 %v5930, %v6334
    %v6349 = vadd.f32 %v5931, %v6339
    %6350 = vst.msk [vmem:[#allocation2] sm:$0xff] %vm52, %v6342
    %6351 = vst.msk [vmem:[#allocation2 + $0x8] sm:$0xff] %vm52, %v6343
    %6352 = vst.msk [vmem:[#allocation2 + $0x10] sm:$0xff] %vm52, %v6344
    %6353 = vst.msk [vmem:[#allocation2 + $0x18] sm:$0xff] %vm52, %v6345
    %6354 = vst.msk [vmem:[#allocation2 + $0x20] sm:$0xff] %vm52, %v6346
    %6355 = vst.msk [vmem:[#allocation2 + $0x28] sm:$0xff] %vm52, %v6347
    %6356 = vst.msk [vmem:[#allocation2 + $0x30] sm:$0xff] %vm52, %v6348
    %6357 = vst.msk [vmem:[#allocation2 + $0x38] sm:$0xff] %vm52, %v6349
    // Predicated region
    $region50: #{transformer_block.1} parent=1 // pred_check
      _
    $region51: #{transformer_block.1} parent=1 // pred_check_branch
      %6359 = sbr.rel (0) target = $region53
    $region52: #{transformer_block.1} parent=1 // pred_region
      %s6361 = ssub.s32 1024, 1024
      %6362 = vsyncadd [#allocation3], %s6361
      %s6363 = sshll.u32 [#allocation2], 4
      %s6364 = int_to_ptr.vmem [resolvable:$true] %s6363
      %6369 = dma.vmem_to_hbm [thread:$0]  %s6364, 1024, %s12, [#allocation3], 128, 128, 8
    $region53: #{transformer_block.1} parent=1 // pred_fallthru
      _
    // Predicated region
    $region54: #{transformer_block.1} parent=1 // pred_check
      _
    $region55: #{transformer_block.1} parent=1 // pred_check_branch
      %6371 = sbr.rel (0) target = $region57
    $region56: #{transformer_block.1} parent=1 // pred_region
      %6372 = dma.done [#allocation3], 1024
    $region57: #{transformer_block.1} parent=1 // pred_fallthru
      _
    %6373 = vsyncpa [#allocation3], 1

</llo_original>
